<compile_context>
chip_gen: v7x
topology: tpu7x:2x2x1
jax: 0.10.0
libtpu: 0.0.40
codegen_flags: <defaults>
</compile_context>

<pallas_src>
from types import SimpleNamespace

import jax
import jax.numpy as jnp
from jax.experimental import pallas as pl
from jax.experimental.pallas import tpu as pltpu

LRELU_SLOPE = 0.2
BN_EPS = 1e-5
BF16_MIN_CIN = 32      # cast weight-matmul inputs to bf16 when c_in >= this
MIN_C0 = 8             # pad the (1-channel) network input up to this many lanes


def _onehot(l_out, l_in, stride, offset):
    """(l_out, l_in) f32 one-hot: row t is hot at column stride*t + offset.

    Out-of-range targets never match -> all-zero row, which implements the
    conv zero padding for free.
    """
    rows = jax.lax.broadcasted_iota(jnp.int32, (l_out, l_in), 0)
    cols = jax.lax.broadcasted_iota(jnp.int32, (l_out, l_in), 1)
    return jnp.where(cols == stride * rows + offset,
                     jnp.float32(1.0), jnp.float32(0.0))


# ----------------------------------------------------------------------------
# Fused kernel body (fully unrolled; everything lives in VMEM)
# ----------------------------------------------------------------------------
def _make_kernel(configs, n_batch):
    def kernel(*args):
        out_ref = args[-1]
        refs = list(args[:-1])
        x_ref = refs.pop(0)                       # (N, L0, c_in0)

        # per-sample activations, kept as VMEM-resident values all the way
        hs = [x_ref[n] for n in range(n_batch)]

        z = None
        for cfg in configs:
            w = refs.pop(0)[...]                  # (k*c_in, c_out)
            gamma = beta = None
            if cfg.use_bn:
                gamma = refs.pop(0)[...]          # (1, c_out)
                beta = refs.pop(0)[...]           # (1, c_out)

            k, s, p = cfg.k, cfg.stride, cfg.pad
            l_in, l_out, c_in = cfg.l_in, cfg.l_out, cfg.c_in

            # Tap-gather machinery, built once per layer (shared by samples).
            esel = osel = sels = None
            if not (s == 1 and p == 0):
                if s == 2 and p == 1 and k == 4 and l_in == 2 * l_out:
                    # Even/odd de-interleave: 2 one-hot matmuls; the other two
                    # taps are one-row shifts of those (zero row = padding).
                    esel = _onehot(l_out, l_in, 2, 0)
                    osel = _onehot(l_out, l_in, 2, 1)
                else:
                    # Generic fallback: one one-hot per tap.
                    sels = [_onehot(l_out, l_in, s, j - p) for j in range(k)]

            # Per-sample im2col -> row-stacked batch matrix A (N*l_out, k*c_in).
            cols = []
            for n in range(n_batch):
                h = hs[n]                         # (l_in, c_in) f32
                if s == 1 and p == 0:
                    taps = [h[j:j + l_out, :] for j in range(k)]
                elif esel is not None:
                    even = jnp.dot(esel, h, preferred_element_type=jnp.float32)
                    odd = jnp.dot(osel, h, preferred_element_type=jnp.float32)
                    zrow = jnp.zeros((1, c_in), jnp.float32)
                    taps = [
                        jnp.concatenate([zrow, odd[:l_out - 1, :]], axis=0),
                        even,
                        odd,
                        jnp.concatenate([even[1:, :], zrow], axis=0),
                    ]
                else:
                    taps = [jnp.dot(sel, h, preferred_element_type=jnp.float32)
                            for sel in sels]
                cols.append(taps[0] if k == 1
                            else jnp.concatenate(taps, axis=1))
            a = cols[0] if n_batch == 1 else jnp.concatenate(cols, axis=0)

            if cfg.use_bf16:
                a = a.astype(jnp.bfloat16)        # weights already bf16
            z = jnp.dot(a, w, preferred_element_type=jnp.float32)

            if cfg.use_bn:
                # one-pass batch statistics over all N * l_out rows
                inv_cnt = 1.0 / float(n_batch * l_out)
                mean = jnp.sum(z, axis=0, keepdims=True) * inv_cnt
                var = jnp.sum(z * z, axis=0, keepdims=True) * inv_cnt - mean * mean
                var = jnp.maximum(var, 0.0)       # guard one-pass rounding
                scale = gamma * jax.lax.rsqrt(var + BN_EPS)
                shift = beta - mean * scale
                z = z * scale + shift

            if cfg.use_act:
                z = jnp.maximum(z, LRELU_SLOPE * z)

            hs = [z[n * l_out:(n + 1) * l_out, :] for n in range(n_batch)]

        # final z is (N * l_fin, nz) in sample-major row order
        out_ref[...] = z.astype(out_ref.dtype)

    return kernel


# ----------------------------------------------------------------------------
# Wrapper: single pallas_call, whole-array VMEM residency, no grid
# ----------------------------------------------------------------------------
def _pad_weight_cin(w_cat, k, c_in, c_pad):
    w = w_cat.reshape(k, c_in, -1)
    w = jnp.pad(w, ((0, 0), (0, c_pad - c_in), (0, 0)))
    return w.reshape(k * c_pad, -1)


def ecg_encoder_forward(x, layers):
    """x: (N, nc, L) float32 (torch NCL).  Returns (N, nz, L_final)."""
    n, nc, l = x.shape
    x_nlc = jnp.transpose(x, (0, 2, 1)).astype(jnp.float32)   # (N, L, nc)

    # pad the narrow input channel dim (zero channels + zero weight rows)
    c0_pad = max(nc, MIN_C0)
    if c0_pad > nc:
        x_nlc = jnp.pad(x_nlc, ((0, 0), (0, 0), (0, c0_pad - nc)))

    configs = []
    args = [x_nlc]
    l_cur = l
    for idx, layer in enumerate(layers):
        k, s, p = layer["k"], layer["stride"], layer["pad"]
        kc_in, c_out = layer["w"].shape
        c_in = kc_in // k
        w = layer["w"]
        if idx == 0 and c0_pad > c_in:
            w = _pad_weight_cin(w, k, c_in, c0_pad)
            c_in = c0_pad
        l_out = (l_cur + 2 * p - k) // s + 1
        use_bf16 = c_in >= BF16_MIN_CIN
        configs.append(SimpleNamespace(
            k=k, stride=s, pad=p, c_in=c_in, c_out=c_out,
            l_in=l_cur, l_out=l_out,
            use_bn=layer["use_bn"], use_act=layer["use_act"],
            use_bf16=use_bf16))
        args.append(w.astype(jnp.bfloat16) if use_bf16 else w)
        if layer["use_bn"]:
            args.append(layer["gamma"])
            args.append(layer["beta"])
        l_cur = l_out

    nz = configs[-1].c_out
    l_fin = configs[-1].l_out
    vmem = pl.BlockSpec(memory_space=pltpu.MemorySpace.VMEM)
    out2d = pl.pallas_call(
        _make_kernel(configs, n),
        out_shape=jax.ShapeDtypeStruct((n * l_fin, nz), jnp.float32),
        in_specs=[vmem] * len(args),
        out_specs=vmem,
    )(*args)
    # back to torch-style (N, C, L)
    return jnp.transpose(out2d.reshape(n, l_fin, nz), (0, 2, 1))


# ----------------------------------------------------------------------------
# Deterministic parameter construction (bias=False everywhere, like the spec)
# ----------------------------------------------------------------------------
def make_params(key, nc, ndf, nz):
    cfgs = [
        # (c_in,     c_out,    k,  s, p, use_bn, use_act)
        (nc,       ndf,      4,  2, 1, False, True),
        (ndf,      ndf * 2,  4,  2, 1, True,  True),
        (ndf * 2,  ndf * 4,  4,  2, 1, True,  True),
        (ndf * 4,  ndf * 8,  4,  2, 1, True,  True),
        (ndf * 8,  ndf * 16, 4,  2, 1, True,  True),
        (ndf * 16, nz,       10, 1, 0, False, False),
    ]
    layers = []
    for c_in, c_out, k, s, p, use_bn, use_act in cfgs:
        key, kw, kg, kb = jax.random.split(key, 4)
        # PyTorch Conv1d weight layout (c_out, c_in, k), DCGAN-style N(0, 0.02)
        w_oik = 0.02 * jax.random.normal(kw, (c_out, c_in, k), jnp.float32)
        # tap-major, channel-minor rows: (k, c_in, c_out) -> (k*c_in, c_out)
        w_cat = jnp.transpose(w_oik, (2, 1, 0)).reshape(k * c_in, c_out)
        layer = dict(w=w_cat, k=k, stride=s, pad=p,
                     use_bn=use_bn, use_act=use_act)
        if use_bn:
            layer["gamma"] = 1.0 + 0.1 * jax.random.normal(
                kg, (1, c_out), jnp.float32)
            layer["beta"] = 0.1 * jax.random.normal(kb, (1, c_out), jnp.float32)
        layers.append(layer)
    return layers


if __name__ == "__main__":
    # opt.nc=1, opt.ndf=8, opt.nz=16; L=320 -> five stride-2 convs give 10,
    # the final kernel-10 conv reduces it to 1 (output (N, nz, 1)).
    N, NC, NDF, NZ, L = 2, 1, 8, 16, 320

    key = jax.random.PRNGKey(0)
    key, kx = jax.random.split(key)
    x = jax.random.normal(kx, (N, NC, L), jnp.float32)

    layers = make_params(key, NC, NDF, NZ)

    out = jax.block_until_ready(ecg_encoder_forward(x, layers))

    assert out.shape == (N, NZ, 1), out.shape
    assert bool(jnp.all(jnp.isfinite(out)))
    print("KERNEL_OK")
</pallas_src>

<mosaic_0001>
module attributes {stable_mosaic.version = 11 : i64} {
  func.func @kernel(%arg0: memref<2x320x8xf32, #tpu.memory_space<vmem>>, %arg1: memref<32x8xf32, #tpu.memory_space<vmem>>, %arg2: memref<32x16xf32, #tpu.memory_space<vmem>>, %arg3: memref<1x16xf32, #tpu.memory_space<vmem>>, %arg4: memref<1x16xf32, #tpu.memory_space<vmem>>, %arg5: memref<64x32xf32, #tpu.memory_space<vmem>>, %arg6: memref<1x32xf32, #tpu.memory_space<vmem>>, %arg7: memref<1x32xf32, #tpu.memory_space<vmem>>, %arg8: memref<128x64xbf16, #tpu.memory_space<vmem>>, %arg9: memref<1x64xf32, #tpu.memory_space<vmem>>, %arg10: memref<1x64xf32, #tpu.memory_space<vmem>>, %arg11: memref<256x128xbf16, #tpu.memory_space<vmem>>, %arg12: memref<1x128xf32, #tpu.memory_space<vmem>>, %arg13: memref<1x128xf32, #tpu.memory_space<vmem>>, %arg14: memref<1280x16xbf16, #tpu.memory_space<vmem>>, %arg15: memref<2x16xf32, #tpu.memory_space<vmem>>) attributes {dimension_semantics = [], scalar_prefetch = 0 : i64, scratch_operands = 0 : i64, tpu.core_type = #tpu.core_type<tc>} {
    %c0 = arith.constant 0 : index
    %c0_0 = arith.constant 0 : index
    %c0_1 = arith.constant 0 : index
    %0 = vector.load %arg0[%c0, %c0_0, %c0_1] : memref<2x320x8xf32, #tpu.memory_space<vmem>>, vector<1x320x8xf32>
    %1 = vector.shape_cast %0 : vector<1x320x8xf32> to vector<320x8xf32>
    %c1 = arith.constant 1 : index
    %c0_2 = arith.constant 0 : index
    %c0_3 = arith.constant 0 : index
    %2 = vector.load %arg0[%c1, %c0_2, %c0_3] : memref<2x320x8xf32, #tpu.memory_space<vmem>>, vector<1x320x8xf32>
    %3 = vector.shape_cast %2 : vector<1x320x8xf32> to vector<320x8xf32>
    %c0_4 = arith.constant 0 : index
    %c0_5 = arith.constant 0 : index
    %4 = vector.load %arg1[%c0_4, %c0_5] : memref<32x8xf32, #tpu.memory_space<vmem>>, vector<32x8xf32>
    %5 = tpu.iota {dimensions = array<i32: 0>} : vector<160x320xi32>
    %6 = tpu.iota {dimensions = array<i32: 1>} : vector<160x320xi32>
    %c2_i32 = arith.constant 2 : i32
    %7 = vector.broadcast %c2_i32 : i32 to vector<160x320xi32>
    %8 = arith.muli %7, %5 : vector<160x320xi32>
    %c0_i32 = arith.constant 0 : i32
    %9 = vector.broadcast %c0_i32 : i32 to vector<160x320xi32>
    %10 = arith.addi %8, %9 : vector<160x320xi32>
    %11 = arith.cmpi eq, %6, %10 : vector<160x320xi32>
    %cst = arith.constant 1.000000e+00 : f32
    %cst_6 = arith.constant 0.000000e+00 : f32
    %12 = vector.broadcast %cst : f32 to vector<160x320xf32>
    %13 = vector.broadcast %cst_6 : f32 to vector<160x320xf32>
    %14 = arith.select %11, %12, %13 : vector<160x320xi1>, vector<160x320xf32>
    %15 = tpu.iota {dimensions = array<i32: 0>} : vector<160x320xi32>
    %16 = tpu.iota {dimensions = array<i32: 1>} : vector<160x320xi32>
    %c2_i32_7 = arith.constant 2 : i32
    %17 = vector.broadcast %c2_i32_7 : i32 to vector<160x320xi32>
    %18 = arith.muli %17, %15 : vector<160x320xi32>
    %c1_i32 = arith.constant 1 : i32
    %19 = vector.broadcast %c1_i32 : i32 to vector<160x320xi32>
    %20 = arith.addi %18, %19 : vector<160x320xi32>
    %21 = arith.cmpi eq, %16, %20 : vector<160x320xi32>
    %cst_8 = arith.constant 1.000000e+00 : f32
    %cst_9 = arith.constant 0.000000e+00 : f32
    %22 = vector.broadcast %cst_8 : f32 to vector<160x320xf32>
    %23 = vector.broadcast %cst_9 : f32 to vector<160x320xf32>
    %24 = arith.select %21, %22, %23 : vector<160x320xi1>, vector<160x320xf32>
    %cst_10 = arith.constant dense<0.000000e+00> : vector<160x8xf32>
    %25 = tpu.matmul %14, %1, %cst_10 {dimension_numbers = #tpu.dot_dimension_numbers<[1], [0], [0], [1], [0, 0, 1, 1], [], []>} : vector<160x320xf32>, vector<320x8xf32>, vector<160x8xf32> -> vector<160x8xf32>
    %cst_11 = arith.constant dense<0.000000e+00> : vector<160x8xf32>
    %26 = tpu.matmul %24, %1, %cst_11 {dimension_numbers = #tpu.dot_dimension_numbers<[1], [0], [0], [1], [0, 0, 1, 1], [], []>} : vector<160x320xf32>, vector<320x8xf32>, vector<160x8xf32> -> vector<160x8xf32>
    %cst_12 = arith.constant 0.000000e+00 : f32
    %27 = vector.broadcast %cst_12 : f32 to vector<1x8xf32>
    %28 = vector.extract_strided_slice %26 {offsets = [0, 0], sizes = [159, 8], strides = [1, 1]} : vector<160x8xf32> to vector<159x8xf32>
    %29 = tpu.concatenate %27, %28 in 0 : vector<1x8xf32>, vector<159x8xf32> -> vector<160x8xf32>
    %30 = vector.extract_strided_slice %25 {offsets = [1, 0], sizes = [159, 8], strides = [1, 1]} : vector<160x8xf32> to vector<159x8xf32>
    %31 = tpu.concatenate %30, %27 in 0 : vector<159x8xf32>, vector<1x8xf32> -> vector<160x8xf32>
    %32 = tpu.concatenate %29, %25, %26, %31 in 1 : vector<160x8xf32>, vector<160x8xf32>, vector<160x8xf32>, vector<160x8xf32> -> vector<160x32xf32>
    %cst_13 = arith.constant dense<0.000000e+00> : vector<160x8xf32>
    %33 = tpu.matmul %14, %3, %cst_13 {dimension_numbers = #tpu.dot_dimension_numbers<[1], [0], [0], [1], [0, 0, 1, 1], [], []>} : vector<160x320xf32>, vector<320x8xf32>, vector<160x8xf32> -> vector<160x8xf32>
    %cst_14 = arith.constant dense<0.000000e+00> : vector<160x8xf32>
    %34 = tpu.matmul %24, %3, %cst_14 {dimension_numbers = #tpu.dot_dimension_numbers<[1], [0], [0], [1], [0, 0, 1, 1], [], []>} : vector<160x320xf32>, vector<320x8xf32>, vector<160x8xf32> -> vector<160x8xf32>
    %cst_15 = arith.constant 0.000000e+00 : f32
    %35 = vector.broadcast %cst_15 : f32 to vector<1x8xf32>
    %36 = vector.extract_strided_slice %34 {offsets = [0, 0], sizes = [159, 8], strides = [1, 1]} : vector<160x8xf32> to vector<159x8xf32>
    %37 = tpu.concatenate %35, %36 in 0 : vector<1x8xf32>, vector<159x8xf32> -> vector<160x8xf32>
    %38 = vector.extract_strided_slice %33 {offsets = [1, 0], sizes = [159, 8], strides = [1, 1]} : vector<160x8xf32> to vector<159x8xf32>
    %39 = tpu.concatenate %38, %35 in 0 : vector<159x8xf32>, vector<1x8xf32> -> vector<160x8xf32>
    %40 = tpu.concatenate %37, %33, %34, %39 in 1 : vector<160x8xf32>, vector<160x8xf32>, vector<160x8xf32>, vector<160x8xf32> -> vector<160x32xf32>
    %41 = tpu.concatenate %32, %40 in 0 : vector<160x32xf32>, vector<160x32xf32> -> vector<320x32xf32>
    %cst_16 = arith.constant dense<0.000000e+00> : vector<320x8xf32>
    %42 = tpu.matmul %41, %4, %cst_16 {dimension_numbers = #tpu.dot_dimension_numbers<[1], [0], [0], [1], [0, 0, 1, 1], [], []>} : vector<320x32xf32>, vector<32x8xf32>, vector<320x8xf32> -> vector<320x8xf32>
    %cst_17 = arith.constant 2.000000e-01 : f32
    %43 = vector.broadcast %cst_17 : f32 to vector<320x8xf32>
    %44 = arith.mulf %43, %42 : vector<320x8xf32>
    %45 = arith.maximumf %42, %44 : vector<320x8xf32>
    %46 = vector.extract_strided_slice %45 {offsets = [0, 0], sizes = [160, 8], strides = [1, 1]} : vector<320x8xf32> to vector<160x8xf32>
    %47 = vector.extract_strided_slice %45 {offsets = [160, 0], sizes = [160, 8], strides = [1, 1]} : vector<320x8xf32> to vector<160x8xf32>
    %c0_18 = arith.constant 0 : index
    %c0_19 = arith.constant 0 : index
    %48 = vector.load %arg2[%c0_18, %c0_19] : memref<32x16xf32, #tpu.memory_space<vmem>>, vector<32x16xf32>
    %c0_20 = arith.constant 0 : index
    %c0_21 = arith.constant 0 : index
    %49 = vector.load %arg3[%c0_20, %c0_21] : memref<1x16xf32, #tpu.memory_space<vmem>>, vector<1x16xf32>
    %c0_22 = arith.constant 0 : index
    %c0_23 = arith.constant 0 : index
    %50 = vector.load %arg4[%c0_22, %c0_23] : memref<1x16xf32, #tpu.memory_space<vmem>>, vector<1x16xf32>
    %51 = tpu.iota {dimensions = array<i32: 0>} : vector<80x160xi32>
    %52 = tpu.iota {dimensions = array<i32: 1>} : vector<80x160xi32>
    %c2_i32_24 = arith.constant 2 : i32
    %53 = vector.broadcast %c2_i32_24 : i32 to vector<80x160xi32>
    %54 = arith.muli %53, %51 : vector<80x160xi32>
    %c0_i32_25 = arith.constant 0 : i32
    %55 = vector.broadcast %c0_i32_25 : i32 to vector<80x160xi32>
    %56 = arith.addi %54, %55 : vector<80x160xi32>
    %57 = arith.cmpi eq, %52, %56 : vector<80x160xi32>
    %cst_26 = arith.constant 1.000000e+00 : f32
    %cst_27 = arith.constant 0.000000e+00 : f32
    %58 = vector.broadcast %cst_26 : f32 to vector<80x160xf32>
    %59 = vector.broadcast %cst_27 : f32 to vector<80x160xf32>
    %60 = arith.select %57, %58, %59 : vector<80x160xi1>, vector<80x160xf32>
    %61 = tpu.iota {dimensions = array<i32: 0>} : vector<80x160xi32>
    %62 = tpu.iota {dimensions = array<i32: 1>} : vector<80x160xi32>
    %c2_i32_28 = arith.constant 2 : i32
    %63 = vector.broadcast %c2_i32_28 : i32 to vector<80x160xi32>
    %64 = arith.muli %63, %61 : vector<80x160xi32>
    %c1_i32_29 = arith.constant 1 : i32
    %65 = vector.broadcast %c1_i32_29 : i32 to vector<80x160xi32>
    %66 = arith.addi %64, %65 : vector<80x160xi32>
    %67 = arith.cmpi eq, %62, %66 : vector<80x160xi32>
    %cst_30 = arith.constant 1.000000e+00 : f32
    %cst_31 = arith.constant 0.000000e+00 : f32
    %68 = vector.broadcast %cst_30 : f32 to vector<80x160xf32>
    %69 = vector.broadcast %cst_31 : f32 to vector<80x160xf32>
    %70 = arith.select %67, %68, %69 : vector<80x160xi1>, vector<80x160xf32>
    %cst_32 = arith.constant dense<0.000000e+00> : vector<80x8xf32>
    %71 = tpu.matmul %60, %46, %cst_32 {dimension_numbers = #tpu.dot_dimension_numbers<[1], [0], [0], [1], [0, 0, 1, 1], [], []>} : vector<80x160xf32>, vector<160x8xf32>, vector<80x8xf32> -> vector<80x8xf32>
    %cst_33 = arith.constant dense<0.000000e+00> : vector<80x8xf32>
    %72 = tpu.matmul %70, %46, %cst_33 {dimension_numbers = #tpu.dot_dimension_numbers<[1], [0], [0], [1], [0, 0, 1, 1], [], []>} : vector<80x160xf32>, vector<160x8xf32>, vector<80x8xf32> -> vector<80x8xf32>
    %cst_34 = arith.constant 0.000000e+00 : f32
    %73 = vector.broadcast %cst_34 : f32 to vector<1x8xf32>
    %74 = vector.extract_strided_slice %72 {offsets = [0, 0], sizes = [79, 8], strides = [1, 1]} : vector<80x8xf32> to vector<79x8xf32>
    %75 = tpu.concatenate %73, %74 in 0 : vector<1x8xf32>, vector<79x8xf32> -> vector<80x8xf32>
    %76 = vector.extract_strided_slice %71 {offsets = [1, 0], sizes = [79, 8], strides = [1, 1]} : vector<80x8xf32> to vector<79x8xf32>
    %77 = tpu.concatenate %76, %73 in 0 : vector<79x8xf32>, vector<1x8xf32> -> vector<80x8xf32>
    %78 = tpu.concatenate %75, %71, %72, %77 in 1 : vector<80x8xf32>, vector<80x8xf32>, vector<80x8xf32>, vector<80x8xf32> -> vector<80x32xf32>
    %cst_35 = arith.constant dense<0.000000e+00> : vector<80x8xf32>
    %79 = tpu.matmul %60, %47, %cst_35 {dimension_numbers = #tpu.dot_dimension_numbers<[1], [0], [0], [1], [0, 0, 1, 1], [], []>} : vector<80x160xf32>, vector<160x8xf32>, vector<80x8xf32> -> vector<80x8xf32>
    %cst_36 = arith.constant dense<0.000000e+00> : vector<80x8xf32>
    %80 = tpu.matmul %70, %47, %cst_36 {dimension_numbers = #tpu.dot_dimension_numbers<[1], [0], [0], [1], [0, 0, 1, 1], [], []>} : vector<80x160xf32>, vector<160x8xf32>, vector<80x8xf32> -> vector<80x8xf32>
    %cst_37 = arith.constant 0.000000e+00 : f32
    %81 = vector.broadcast %cst_37 : f32 to vector<1x8xf32>
    %82 = vector.extract_strided_slice %80 {offsets = [0, 0], sizes = [79, 8], strides = [1, 1]} : vector<80x8xf32> to vector<79x8xf32>
    %83 = tpu.concatenate %81, %82 in 0 : vector<1x8xf32>, vector<79x8xf32> -> vector<80x8xf32>
    %84 = vector.extract_strided_slice %79 {offsets = [1, 0], sizes = [79, 8], strides = [1, 1]} : vector<80x8xf32> to vector<79x8xf32>
    %85 = tpu.concatenate %84, %81 in 0 : vector<79x8xf32>, vector<1x8xf32> -> vector<80x8xf32>
    %86 = tpu.concatenate %83, %79, %80, %85 in 1 : vector<80x8xf32>, vector<80x8xf32>, vector<80x8xf32>, vector<80x8xf32> -> vector<80x32xf32>
    %87 = tpu.concatenate %78, %86 in 0 : vector<80x32xf32>, vector<80x32xf32> -> vector<160x32xf32>
    %cst_38 = arith.constant dense<0.000000e+00> : vector<160x16xf32>
    %88 = tpu.matmul %87, %48, %cst_38 {dimension_numbers = #tpu.dot_dimension_numbers<[1], [0], [0], [1], [0, 0, 1, 1], [], []>} : vector<160x32xf32>, vector<32x16xf32>, vector<160x16xf32> -> vector<160x16xf32>
    %cst_39 = arith.constant dense<0.000000e+00> : vector<16xf32>
    %89 = vector.multi_reduction <add>, %88, %cst_39 [0] : vector<160x16xf32> to vector<16xf32>
    %90 = vector.shape_cast %89 : vector<16xf32> to vector<1x16xf32>
    %cst_40 = arith.constant 6.250000e-03 : f32
    %91 = vector.broadcast %cst_40 : f32 to vector<1x16xf32>
    %92 = arith.mulf %90, %91 : vector<1x16xf32>
    %93 = arith.mulf %88, %88 : vector<160x16xf32>
    %cst_41 = arith.constant dense<0.000000e+00> : vector<16xf32>
    %94 = vector.multi_reduction <add>, %93, %cst_41 [0] : vector<160x16xf32> to vector<16xf32>
    %95 = vector.shape_cast %94 : vector<16xf32> to vector<1x16xf32>
    %cst_42 = arith.constant 6.250000e-03 : f32
    %96 = vector.broadcast %cst_42 : f32 to vector<1x16xf32>
    %97 = arith.mulf %95, %96 : vector<1x16xf32>
    %98 = arith.mulf %92, %92 : vector<1x16xf32>
    %99 = arith.subf %97, %98 : vector<1x16xf32>
    %cst_43 = arith.constant 0.000000e+00 : f32
    %100 = vector.broadcast %cst_43 : f32 to vector<1x16xf32>
    %101 = arith.maximumf %99, %100 : vector<1x16xf32>
    %cst_44 = arith.constant 9.99999974E-6 : f32
    %102 = vector.broadcast %cst_44 : f32 to vector<1x16xf32>
    %103 = arith.addf %101, %102 : vector<1x16xf32>
    %104 = math.rsqrt %103 : vector<1x16xf32>
    %105 = arith.mulf %49, %104 : vector<1x16xf32>
    %106 = arith.mulf %92, %105 : vector<1x16xf32>
    %107 = arith.subf %50, %106 : vector<1x16xf32>
    %108 = vector.broadcast %105 : vector<1x16xf32> to vector<160x16xf32>
    %109 = arith.mulf %88, %108 : vector<160x16xf32>
    %110 = vector.broadcast %107 : vector<1x16xf32> to vector<160x16xf32>
    %111 = arith.addf %109, %110 : vector<160x16xf32>
    %cst_45 = arith.constant 2.000000e-01 : f32
    %112 = vector.broadcast %cst_45 : f32 to vector<160x16xf32>
    %113 = arith.mulf %112, %111 : vector<160x16xf32>
    %114 = arith.maximumf %111, %113 : vector<160x16xf32>
    %115 = vector.extract_strided_slice %114 {offsets = [0, 0], sizes = [80, 16], strides = [1, 1]} : vector<160x16xf32> to vector<80x16xf32>
    %116 = vector.extract_strided_slice %114 {offsets = [80, 0], sizes = [80, 16], strides = [1, 1]} : vector<160x16xf32> to vector<80x16xf32>
    %c0_46 = arith.constant 0 : index
    %c0_47 = arith.constant 0 : index
    %117 = vector.load %arg5[%c0_46, %c0_47] : memref<64x32xf32, #tpu.memory_space<vmem>>, vector<64x32xf32>
    %c0_48 = arith.constant 0 : index
    %c0_49 = arith.constant 0 : index
    %118 = vector.load %arg6[%c0_48, %c0_49] : memref<1x32xf32, #tpu.memory_space<vmem>>, vector<1x32xf32>
    %c0_50 = arith.constant 0 : index
    %c0_51 = arith.constant 0 : index
    %119 = vector.load %arg7[%c0_50, %c0_51] : memref<1x32xf32, #tpu.memory_space<vmem>>, vector<1x32xf32>
    %120 = tpu.iota {dimensions = array<i32: 0>} : vector<40x80xi32>
    %121 = tpu.iota {dimensions = array<i32: 1>} : vector<40x80xi32>
    %c2_i32_52 = arith.constant 2 : i32
    %122 = vector.broadcast %c2_i32_52 : i32 to vector<40x80xi32>
    %123 = arith.muli %122, %120 : vector<40x80xi32>
    %c0_i32_53 = arith.constant 0 : i32
    %124 = vector.broadcast %c0_i32_53 : i32 to vector<40x80xi32>
    %125 = arith.addi %123, %124 : vector<40x80xi32>
    %126 = arith.cmpi eq, %121, %125 : vector<40x80xi32>
    %cst_54 = arith.constant 1.000000e+00 : f32
    %cst_55 = arith.constant 0.000000e+00 : f32
    %127 = vector.broadcast %cst_54 : f32 to vector<40x80xf32>
    %128 = vector.broadcast %cst_55 : f32 to vector<40x80xf32>
    %129 = arith.select %126, %127, %128 : vector<40x80xi1>, vector<40x80xf32>
    %130 = tpu.iota {dimensions = array<i32: 0>} : vector<40x80xi32>
    %131 = tpu.iota {dimensions = array<i32: 1>} : vector<40x80xi32>
    %c2_i32_56 = arith.constant 2 : i32
    %132 = vector.broadcast %c2_i32_56 : i32 to vector<40x80xi32>
    %133 = arith.muli %132, %130 : vector<40x80xi32>
    %c1_i32_57 = arith.constant 1 : i32
    %134 = vector.broadcast %c1_i32_57 : i32 to vector<40x80xi32>
    %135 = arith.addi %133, %134 : vector<40x80xi32>
    %136 = arith.cmpi eq, %131, %135 : vector<40x80xi32>
    %cst_58 = arith.constant 1.000000e+00 : f32
    %cst_59 = arith.constant 0.000000e+00 : f32
    %137 = vector.broadcast %cst_58 : f32 to vector<40x80xf32>
    %138 = vector.broadcast %cst_59 : f32 to vector<40x80xf32>
    %139 = arith.select %136, %137, %138 : vector<40x80xi1>, vector<40x80xf32>
    %cst_60 = arith.constant dense<0.000000e+00> : vector<40x16xf32>
    %140 = tpu.matmul %129, %115, %cst_60 {dimension_numbers = #tpu.dot_dimension_numbers<[1], [0], [0], [1], [0, 0, 1, 1], [], []>} : vector<40x80xf32>, vector<80x16xf32>, vector<40x16xf32> -> vector<40x16xf32>
    %cst_61 = arith.constant dense<0.000000e+00> : vector<40x16xf32>
    %141 = tpu.matmul %139, %115, %cst_61 {dimension_numbers = #tpu.dot_dimension_numbers<[1], [0], [0], [1], [0, 0, 1, 1], [], []>} : vector<40x80xf32>, vector<80x16xf32>, vector<40x16xf32> -> vector<40x16xf32>
    %cst_62 = arith.constant 0.000000e+00 : f32
    %142 = vector.broadcast %cst_62 : f32 to vector<1x16xf32>
    %143 = vector.extract_strided_slice %141 {offsets = [0, 0], sizes = [39, 16], strides = [1, 1]} : vector<40x16xf32> to vector<39x16xf32>
    %144 = tpu.concatenate %142, %143 in 0 : vector<1x16xf32>, vector<39x16xf32> -> vector<40x16xf32>
    %145 = vector.extract_strided_slice %140 {offsets = [1, 0], sizes = [39, 16], strides = [1, 1]} : vector<40x16xf32> to vector<39x16xf32>
    %146 = tpu.concatenate %145, %142 in 0 : vector<39x16xf32>, vector<1x16xf32> -> vector<40x16xf32>
    %147 = tpu.concatenate %144, %140, %141, %146 in 1 : vector<40x16xf32>, vector<40x16xf32>, vector<40x16xf32>, vector<40x16xf32> -> vector<40x64xf32>
    %cst_63 = arith.constant dense<0.000000e+00> : vector<40x16xf32>
    %148 = tpu.matmul %129, %116, %cst_63 {dimension_numbers = #tpu.dot_dimension_numbers<[1], [0], [0], [1], [0, 0, 1, 1], [], []>} : vector<40x80xf32>, vector<80x16xf32>, vector<40x16xf32> -> vector<40x16xf32>
    %cst_64 = arith.constant dense<0.000000e+00> : vector<40x16xf32>
    %149 = tpu.matmul %139, %116, %cst_64 {dimension_numbers = #tpu.dot_dimension_numbers<[1], [0], [0], [1], [0, 0, 1, 1], [], []>} : vector<40x80xf32>, vector<80x16xf32>, vector<40x16xf32> -> vector<40x16xf32>
    %cst_65 = arith.constant 0.000000e+00 : f32
    %150 = vector.broadcast %cst_65 : f32 to vector<1x16xf32>
    %151 = vector.extract_strided_slice %149 {offsets = [0, 0], sizes = [39, 16], strides = [1, 1]} : vector<40x16xf32> to vector<39x16xf32>
    %152 = tpu.concatenate %150, %151 in 0 : vector<1x16xf32>, vector<39x16xf32> -> vector<40x16xf32>
    %153 = vector.extract_strided_slice %148 {offsets = [1, 0], sizes = [39, 16], strides = [1, 1]} : vector<40x16xf32> to vector<39x16xf32>
    %154 = tpu.concatenate %153, %150 in 0 : vector<39x16xf32>, vector<1x16xf32> -> vector<40x16xf32>
    %155 = tpu.concatenate %152, %148, %149, %154 in 1 : vector<40x16xf32>, vector<40x16xf32>, vector<40x16xf32>, vector<40x16xf32> -> vector<40x64xf32>
    %156 = tpu.concatenate %147, %155 in 0 : vector<40x64xf32>, vector<40x64xf32> -> vector<80x64xf32>
    %cst_66 = arith.constant dense<0.000000e+00> : vector<80x32xf32>
    %157 = tpu.matmul %156, %117, %cst_66 {dimension_numbers = #tpu.dot_dimension_numbers<[1], [0], [0], [1], [0, 0, 1, 1], [], []>} : vector<80x64xf32>, vector<64x32xf32>, vector<80x32xf32> -> vector<80x32xf32>
    %cst_67 = arith.constant dense<0.000000e+00> : vector<32xf32>
    %158 = vector.multi_reduction <add>, %157, %cst_67 [0] : vector<80x32xf32> to vector<32xf32>
    %159 = vector.shape_cast %158 : vector<32xf32> to vector<1x32xf32>
    %cst_68 = arith.constant 1.250000e-02 : f32
    %160 = vector.broadcast %cst_68 : f32 to vector<1x32xf32>
    %161 = arith.mulf %159, %160 : vector<1x32xf32>
    %162 = arith.mulf %157, %157 : vector<80x32xf32>
    %cst_69 = arith.constant dense<0.000000e+00> : vector<32xf32>
    %163 = vector.multi_reduction <add>, %162, %cst_69 [0] : vector<80x32xf32> to vector<32xf32>
    %164 = vector.shape_cast %163 : vector<32xf32> to vector<1x32xf32>
    %cst_70 = arith.constant 1.250000e-02 : f32
    %165 = vector.broadcast %cst_70 : f32 to vector<1x32xf32>
    %166 = arith.mulf %164, %165 : vector<1x32xf32>
    %167 = arith.mulf %161, %161 : vector<1x32xf32>
    %168 = arith.subf %166, %167 : vector<1x32xf32>
    %cst_71 = arith.constant 0.000000e+00 : f32
    %169 = vector.broadcast %cst_71 : f32 to vector<1x32xf32>
    %170 = arith.maximumf %168, %169 : vector<1x32xf32>
    %cst_72 = arith.constant 9.99999974E-6 : f32
    %171 = vector.broadcast %cst_72 : f32 to vector<1x32xf32>
    %172 = arith.addf %170, %171 : vector<1x32xf32>
    %173 = math.rsqrt %172 : vector<1x32xf32>
    %174 = arith.mulf %118, %173 : vector<1x32xf32>
    %175 = arith.mulf %161, %174 : vector<1x32xf32>
    %176 = arith.subf %119, %175 : vector<1x32xf32>
    %177 = vector.broadcast %174 : vector<1x32xf32> to vector<80x32xf32>
    %178 = arith.mulf %157, %177 : vector<80x32xf32>
    %179 = vector.broadcast %176 : vector<1x32xf32> to vector<80x32xf32>
    %180 = arith.addf %178, %179 : vector<80x32xf32>
    %cst_73 = arith.constant 2.000000e-01 : f32
    %181 = vector.broadcast %cst_73 : f32 to vector<80x32xf32>
    %182 = arith.mulf %181, %180 : vector<80x32xf32>
    %183 = arith.maximumf %180, %182 : vector<80x32xf32>
    %184 = vector.extract_strided_slice %183 {offsets = [0, 0], sizes = [40, 32], strides = [1, 1]} : vector<80x32xf32> to vector<40x32xf32>
    %185 = vector.extract_strided_slice %183 {offsets = [40, 0], sizes = [40, 32], strides = [1, 1]} : vector<80x32xf32> to vector<40x32xf32>
    %c0_74 = arith.constant 0 : index
    %c0_75 = arith.constant 0 : index
    %186 = vector.load %arg8[%c0_74, %c0_75] : memref<128x64xbf16, #tpu.memory_space<vmem>>, vector<128x64xbf16>
    %c0_76 = arith.constant 0 : index
    %c0_77 = arith.constant 0 : index
    %187 = vector.load %arg9[%c0_76, %c0_77] : memref<1x64xf32, #tpu.memory_space<vmem>>, vector<1x64xf32>
    %c0_78 = arith.constant 0 : index
    %c0_79 = arith.constant 0 : index
    %188 = vector.load %arg10[%c0_78, %c0_79] : memref<1x64xf32, #tpu.memory_space<vmem>>, vector<1x64xf32>
    %189 = tpu.iota {dimensions = array<i32: 0>} : vector<20x40xi32>
    %190 = tpu.iota {dimensions = array<i32: 1>} : vector<20x40xi32>
    %c2_i32_80 = arith.constant 2 : i32
    %191 = vector.broadcast %c2_i32_80 : i32 to vector<20x40xi32>
    %192 = arith.muli %191, %189 : vector<20x40xi32>
    %c0_i32_81 = arith.constant 0 : i32
    %193 = vector.broadcast %c0_i32_81 : i32 to vector<20x40xi32>
    %194 = arith.addi %192, %193 : vector<20x40xi32>
    %195 = arith.cmpi eq, %190, %194 : vector<20x40xi32>
    %cst_82 = arith.constant 1.000000e+00 : f32
    %cst_83 = arith.constant 0.000000e+00 : f32
    %196 = vector.broadcast %cst_82 : f32 to vector<20x40xf32>
    %197 = vector.broadcast %cst_83 : f32 to vector<20x40xf32>
    %198 = arith.select %195, %196, %197 : vector<20x40xi1>, vector<20x40xf32>
    %199 = tpu.iota {dimensions = array<i32: 0>} : vector<20x40xi32>
    %200 = tpu.iota {dimensions = array<i32: 1>} : vector<20x40xi32>
    %c2_i32_84 = arith.constant 2 : i32
    %201 = vector.broadcast %c2_i32_84 : i32 to vector<20x40xi32>
    %202 = arith.muli %201, %199 : vector<20x40xi32>
    %c1_i32_85 = arith.constant 1 : i32
    %203 = vector.broadcast %c1_i32_85 : i32 to vector<20x40xi32>
    %204 = arith.addi %202, %203 : vector<20x40xi32>
    %205 = arith.cmpi eq, %200, %204 : vector<20x40xi32>
    %cst_86 = arith.constant 1.000000e+00 : f32
    %cst_87 = arith.constant 0.000000e+00 : f32
    %206 = vector.broadcast %cst_86 : f32 to vector<20x40xf32>
    %207 = vector.broadcast %cst_87 : f32 to vector<20x40xf32>
    %208 = arith.select %205, %206, %207 : vector<20x40xi1>, vector<20x40xf32>
    %cst_88 = arith.constant dense<0.000000e+00> : vector<20x32xf32>
    %209 = tpu.matmul %198, %184, %cst_88 {dimension_numbers = #tpu.dot_dimension_numbers<[1], [0], [0], [1], [0, 0, 1, 1], [], []>} : vector<20x40xf32>, vector<40x32xf32>, vector<20x32xf32> -> vector<20x32xf32>
    %cst_89 = arith.constant dense<0.000000e+00> : vector<20x32xf32>
    %210 = tpu.matmul %208, %184, %cst_89 {dimension_numbers = #tpu.dot_dimension_numbers<[1], [0], [0], [1], [0, 0, 1, 1], [], []>} : vector<20x40xf32>, vector<40x32xf32>, vector<20x32xf32> -> vector<20x32xf32>
    %cst_90 = arith.constant 0.000000e+00 : f32
    %211 = vector.broadcast %cst_90 : f32 to vector<1x32xf32>
    %212 = vector.extract_strided_slice %210 {offsets = [0, 0], sizes = [19, 32], strides = [1, 1]} : vector<20x32xf32> to vector<19x32xf32>
    %213 = tpu.concatenate %211, %212 in 0 : vector<1x32xf32>, vector<19x32xf32> -> vector<20x32xf32>
    %214 = vector.extract_strided_slice %209 {offsets = [1, 0], sizes = [19, 32], strides = [1, 1]} : vector<20x32xf32> to vector<19x32xf32>
    %215 = tpu.concatenate %214, %211 in 0 : vector<19x32xf32>, vector<1x32xf32> -> vector<20x32xf32>
    %216 = tpu.concatenate %213, %209, %210, %215 in 1 : vector<20x32xf32>, vector<20x32xf32>, vector<20x32xf32>, vector<20x32xf32> -> vector<20x128xf32>
    %cst_91 = arith.constant dense<0.000000e+00> : vector<20x32xf32>
    %217 = tpu.matmul %198, %185, %cst_91 {dimension_numbers = #tpu.dot_dimension_numbers<[1], [0], [0], [1], [0, 0, 1, 1], [], []>} : vector<20x40xf32>, vector<40x32xf32>, vector<20x32xf32> -> vector<20x32xf32>
    %cst_92 = arith.constant dense<0.000000e+00> : vector<20x32xf32>
    %218 = tpu.matmul %208, %185, %cst_92 {dimension_numbers = #tpu.dot_dimension_numbers<[1], [0], [0], [1], [0, 0, 1, 1], [], []>} : vector<20x40xf32>, vector<40x32xf32>, vector<20x32xf32> -> vector<20x32xf32>
    %cst_93 = arith.constant 0.000000e+00 : f32
    %219 = vector.broadcast %cst_93 : f32 to vector<1x32xf32>
    %220 = vector.extract_strided_slice %218 {offsets = [0, 0], sizes = [19, 32], strides = [1, 1]} : vector<20x32xf32> to vector<19x32xf32>
    %221 = tpu.concatenate %219, %220 in 0 : vector<1x32xf32>, vector<19x32xf32> -> vector<20x32xf32>
    %222 = vector.extract_strided_slice %217 {offsets = [1, 0], sizes = [19, 32], strides = [1, 1]} : vector<20x32xf32> to vector<19x32xf32>
    %223 = tpu.concatenate %222, %219 in 0 : vector<19x32xf32>, vector<1x32xf32> -> vector<20x32xf32>
    %224 = tpu.concatenate %221, %217, %218, %223 in 1 : vector<20x32xf32>, vector<20x32xf32>, vector<20x32xf32>, vector<20x32xf32> -> vector<20x128xf32>
    %225 = tpu.concatenate %216, %224 in 0 : vector<20x128xf32>, vector<20x128xf32> -> vector<40x128xf32>
    %226 = arith.truncf %225 : vector<40x128xf32> to vector<40x128xbf16>
    %cst_94 = arith.constant dense<0.000000e+00> : vector<40x64xf32>
    %227 = tpu.matmul %226, %186, %cst_94 {dimension_numbers = #tpu.dot_dimension_numbers<[1], [0], [0], [1], [0, 0, 1, 1], [], []>} : vector<40x128xbf16>, vector<128x64xbf16>, vector<40x64xf32> -> vector<40x64xf32>
    %cst_95 = arith.constant dense<0.000000e+00> : vector<64xf32>
    %228 = vector.multi_reduction <add>, %227, %cst_95 [0] : vector<40x64xf32> to vector<64xf32>
    %229 = vector.shape_cast %228 : vector<64xf32> to vector<1x64xf32>
    %cst_96 = arith.constant 2.500000e-02 : f32
    %230 = vector.broadcast %cst_96 : f32 to vector<1x64xf32>
    %231 = arith.mulf %229, %230 : vector<1x64xf32>
    %232 = arith.mulf %227, %227 : vector<40x64xf32>
    %cst_97 = arith.constant dense<0.000000e+00> : vector<64xf32>
    %233 = vector.multi_reduction <add>, %232, %cst_97 [0] : vector<40x64xf32> to vector<64xf32>
    %234 = vector.shape_cast %233 : vector<64xf32> to vector<1x64xf32>
    %cst_98 = arith.constant 2.500000e-02 : f32
    %235 = vector.broadcast %cst_98 : f32 to vector<1x64xf32>
    %236 = arith.mulf %234, %235 : vector<1x64xf32>
    %237 = arith.mulf %231, %231 : vector<1x64xf32>
    %238 = arith.subf %236, %237 : vector<1x64xf32>
    %cst_99 = arith.constant 0.000000e+00 : f32
    %239 = vector.broadcast %cst_99 : f32 to vector<1x64xf32>
    %240 = arith.maximumf %238, %239 : vector<1x64xf32>
    %cst_100 = arith.constant 9.99999974E-6 : f32
    %241 = vector.broadcast %cst_100 : f32 to vector<1x64xf32>
    %242 = arith.addf %240, %241 : vector<1x64xf32>
    %243 = math.rsqrt %242 : vector<1x64xf32>
    %244 = arith.mulf %187, %243 : vector<1x64xf32>
    %245 = arith.mulf %231, %244 : vector<1x64xf32>
    %246 = arith.subf %188, %245 : vector<1x64xf32>
    %247 = vector.broadcast %244 : vector<1x64xf32> to vector<40x64xf32>
    %248 = arith.mulf %227, %247 : vector<40x64xf32>
    %249 = vector.broadcast %246 : vector<1x64xf32> to vector<40x64xf32>
    %250 = arith.addf %248, %249 : vector<40x64xf32>
    %cst_101 = arith.constant 2.000000e-01 : f32
    %251 = vector.broadcast %cst_101 : f32 to vector<40x64xf32>
    %252 = arith.mulf %251, %250 : vector<40x64xf32>
    %253 = arith.maximumf %250, %252 : vector<40x64xf32>
    %254 = vector.extract_strided_slice %253 {offsets = [0, 0], sizes = [20, 64], strides = [1, 1]} : vector<40x64xf32> to vector<20x64xf32>
    %255 = vector.extract_strided_slice %253 {offsets = [20, 0], sizes = [20, 64], strides = [1, 1]} : vector<40x64xf32> to vector<20x64xf32>
    %c0_102 = arith.constant 0 : index
    %c0_103 = arith.constant 0 : index
    %256 = vector.load %arg11[%c0_102, %c0_103] : memref<256x128xbf16, #tpu.memory_space<vmem>>, vector<256x128xbf16>
    %c0_104 = arith.constant 0 : index
    %c0_105 = arith.constant 0 : index
    %257 = vector.load %arg12[%c0_104, %c0_105] : memref<1x128xf32, #tpu.memory_space<vmem>>, vector<1x128xf32>
    %c0_106 = arith.constant 0 : index
    %c0_107 = arith.constant 0 : index
    %258 = vector.load %arg13[%c0_106, %c0_107] : memref<1x128xf32, #tpu.memory_space<vmem>>, vector<1x128xf32>
    %259 = tpu.iota {dimensions = array<i32: 0>} : vector<10x20xi32>
    %260 = tpu.iota {dimensions = array<i32: 1>} : vector<10x20xi32>
    %c2_i32_108 = arith.constant 2 : i32
    %261 = vector.broadcast %c2_i32_108 : i32 to vector<10x20xi32>
    %262 = arith.muli %261, %259 : vector<10x20xi32>
    %c0_i32_109 = arith.constant 0 : i32
    %263 = vector.broadcast %c0_i32_109 : i32 to vector<10x20xi32>
    %264 = arith.addi %262, %263 : vector<10x20xi32>
    %265 = arith.cmpi eq, %260, %264 : vector<10x20xi32>
    %cst_110 = arith.constant 1.000000e+00 : f32
    %cst_111 = arith.constant 0.000000e+00 : f32
    %266 = vector.broadcast %cst_110 : f32 to vector<10x20xf32>
    %267 = vector.broadcast %cst_111 : f32 to vector<10x20xf32>
    %268 = arith.select %265, %266, %267 : vector<10x20xi1>, vector<10x20xf32>
    %269 = tpu.iota {dimensions = array<i32: 0>} : vector<10x20xi32>
    %270 = tpu.iota {dimensions = array<i32: 1>} : vector<10x20xi32>
    %c2_i32_112 = arith.constant 2 : i32
    %271 = vector.broadcast %c2_i32_112 : i32 to vector<10x20xi32>
    %272 = arith.muli %271, %269 : vector<10x20xi32>
    %c1_i32_113 = arith.constant 1 : i32
    %273 = vector.broadcast %c1_i32_113 : i32 to vector<10x20xi32>
    %274 = arith.addi %272, %273 : vector<10x20xi32>
    %275 = arith.cmpi eq, %270, %274 : vector<10x20xi32>
    %cst_114 = arith.constant 1.000000e+00 : f32
    %cst_115 = arith.constant 0.000000e+00 : f32
    %276 = vector.broadcast %cst_114 : f32 to vector<10x20xf32>
    %277 = vector.broadcast %cst_115 : f32 to vector<10x20xf32>
    %278 = arith.select %275, %276, %277 : vector<10x20xi1>, vector<10x20xf32>
    %cst_116 = arith.constant dense<0.000000e+00> : vector<10x64xf32>
    %279 = tpu.matmul %268, %254, %cst_116 {dimension_numbers = #tpu.dot_dimension_numbers<[1], [0], [0], [1], [0, 0, 1, 1], [], []>} : vector<10x20xf32>, vector<20x64xf32>, vector<10x64xf32> -> vector<10x64xf32>
    %cst_117 = arith.constant dense<0.000000e+00> : vector<10x64xf32>
    %280 = tpu.matmul %278, %254, %cst_117 {dimension_numbers = #tpu.dot_dimension_numbers<[1], [0], [0], [1], [0, 0, 1, 1], [], []>} : vector<10x20xf32>, vector<20x64xf32>, vector<10x64xf32> -> vector<10x64xf32>
    %cst_118 = arith.constant 0.000000e+00 : f32
    %281 = vector.broadcast %cst_118 : f32 to vector<1x64xf32>
    %282 = vector.extract_strided_slice %280 {offsets = [0, 0], sizes = [9, 64], strides = [1, 1]} : vector<10x64xf32> to vector<9x64xf32>
    %283 = tpu.concatenate %281, %282 in 0 : vector<1x64xf32>, vector<9x64xf32> -> vector<10x64xf32>
    %284 = vector.extract_strided_slice %279 {offsets = [1, 0], sizes = [9, 64], strides = [1, 1]} : vector<10x64xf32> to vector<9x64xf32>
    %285 = tpu.concatenate %284, %281 in 0 : vector<9x64xf32>, vector<1x64xf32> -> vector<10x64xf32>
    %286 = tpu.concatenate %283, %279, %280, %285 in 1 : vector<10x64xf32>, vector<10x64xf32>, vector<10x64xf32>, vector<10x64xf32> -> vector<10x256xf32>
    %cst_119 = arith.constant dense<0.000000e+00> : vector<10x64xf32>
    %287 = tpu.matmul %268, %255, %cst_119 {dimension_numbers = #tpu.dot_dimension_numbers<[1], [0], [0], [1], [0, 0, 1, 1], [], []>} : vector<10x20xf32>, vector<20x64xf32>, vector<10x64xf32> -> vector<10x64xf32>
    %cst_120 = arith.constant dense<0.000000e+00> : vector<10x64xf32>
    %288 = tpu.matmul %278, %255, %cst_120 {dimension_numbers = #tpu.dot_dimension_numbers<[1], [0], [0], [1], [0, 0, 1, 1], [], []>} : vector<10x20xf32>, vector<20x64xf32>, vector<10x64xf32> -> vector<10x64xf32>
    %cst_121 = arith.constant 0.000000e+00 : f32
    %289 = vector.broadcast %cst_121 : f32 to vector<1x64xf32>
    %290 = vector.extract_strided_slice %288 {offsets = [0, 0], sizes = [9, 64], strides = [1, 1]} : vector<10x64xf32> to vector<9x64xf32>
    %291 = tpu.concatenate %289, %290 in 0 : vector<1x64xf32>, vector<9x64xf32> -> vector<10x64xf32>
    %292 = vector.extract_strided_slice %287 {offsets = [1, 0], sizes = [9, 64], strides = [1, 1]} : vector<10x64xf32> to vector<9x64xf32>
    %293 = tpu.concatenate %292, %289 in 0 : vector<9x64xf32>, vector<1x64xf32> -> vector<10x64xf32>
    %294 = tpu.concatenate %291, %287, %288, %293 in 1 : vector<10x64xf32>, vector<10x64xf32>, vector<10x64xf32>, vector<10x64xf32> -> vector<10x256xf32>
    %295 = tpu.concatenate %286, %294 in 0 : vector<10x256xf32>, vector<10x256xf32> -> vector<20x256xf32>
    %296 = arith.truncf %295 : vector<20x256xf32> to vector<20x256xbf16>
    %cst_122 = arith.constant dense<0.000000e+00> : vector<20x128xf32>
    %297 = tpu.matmul %296, %256, %cst_122 {dimension_numbers = #tpu.dot_dimension_numbers<[1], [0], [0], [1], [0, 0, 1, 1], [], []>} : vector<20x256xbf16>, vector<256x128xbf16>, vector<20x128xf32> -> vector<20x128xf32>
    %cst_123 = arith.constant dense<0.000000e+00> : vector<128xf32>
    %298 = vector.multi_reduction <add>, %297, %cst_123 [0] : vector<20x128xf32> to vector<128xf32>
    %299 = vector.shape_cast %298 : vector<128xf32> to vector<1x128xf32>
    %cst_124 = arith.constant 5.000000e-02 : f32
    %300 = vector.broadcast %cst_124 : f32 to vector<1x128xf32>
    %301 = arith.mulf %299, %300 : vector<1x128xf32>
    %302 = arith.mulf %297, %297 : vector<20x128xf32>
    %cst_125 = arith.constant dense<0.000000e+00> : vector<128xf32>
    %303 = vector.multi_reduction <add>, %302, %cst_125 [0] : vector<20x128xf32> to vector<128xf32>
    %304 = vector.shape_cast %303 : vector<128xf32> to vector<1x128xf32>
    %cst_126 = arith.constant 5.000000e-02 : f32
    %305 = vector.broadcast %cst_126 : f32 to vector<1x128xf32>
    %306 = arith.mulf %304, %305 : vector<1x128xf32>
    %307 = arith.mulf %301, %301 : vector<1x128xf32>
    %308 = arith.subf %306, %307 : vector<1x128xf32>
    %cst_127 = arith.constant 0.000000e+00 : f32
    %309 = vector.broadcast %cst_127 : f32 to vector<1x128xf32>
    %310 = arith.maximumf %308, %309 : vector<1x128xf32>
    %cst_128 = arith.constant 9.99999974E-6 : f32
    %311 = vector.broadcast %cst_128 : f32 to vector<1x128xf32>
    %312 = arith.addf %310, %311 : vector<1x128xf32>
    %313 = math.rsqrt %312 : vector<1x128xf32>
    %314 = arith.mulf %257, %313 : vector<1x128xf32>
    %315 = arith.mulf %301, %314 : vector<1x128xf32>
    %316 = arith.subf %258, %315 : vector<1x128xf32>
    %317 = vector.broadcast %314 : vector<1x128xf32> to vector<20x128xf32>
    %318 = arith.mulf %297, %317 : vector<20x128xf32>
    %319 = vector.broadcast %316 : vector<1x128xf32> to vector<20x128xf32>
    %320 = arith.addf %318, %319 : vector<20x128xf32>
    %cst_129 = arith.constant 2.000000e-01 : f32
    %321 = vector.broadcast %cst_129 : f32 to vector<20x128xf32>
    %322 = arith.mulf %321, %320 : vector<20x128xf32>
    %323 = arith.maximumf %320, %322 : vector<20x128xf32>
    %324 = vector.extract_strided_slice %323 {offsets = [0, 0], sizes = [10, 128], strides = [1, 1]} : vector<20x128xf32> to vector<10x128xf32>
    %325 = vector.extract_strided_slice %323 {offsets = [10, 0], sizes = [10, 128], strides = [1, 1]} : vector<20x128xf32> to vector<10x128xf32>
    %c0_130 = arith.constant 0 : index
    %c0_131 = arith.constant 0 : index
    %326 = vector.load %arg14[%c0_130, %c0_131] : memref<1280x16xbf16, #tpu.memory_space<vmem>>, vector<1280x16xbf16>
    %327 = vector.extract_strided_slice %324 {offsets = [0, 0], sizes = [1, 128], strides = [1, 1]} : vector<10x128xf32> to vector<1x128xf32>
    %328 = vector.extract_strided_slice %324 {offsets = [1, 0], sizes = [1, 128], strides = [1, 1]} : vector<10x128xf32> to vector<1x128xf32>
    %329 = vector.extract_strided_slice %324 {offsets = [2, 0], sizes = [1, 128], strides = [1, 1]} : vector<10x128xf32> to vector<1x128xf32>
    %330 = vector.extract_strided_slice %324 {offsets = [3, 0], sizes = [1, 128], strides = [1, 1]} : vector<10x128xf32> to vector<1x128xf32>
    %331 = vector.extract_strided_slice %324 {offsets = [4, 0], sizes = [1, 128], strides = [1, 1]} : vector<10x128xf32> to vector<1x128xf32>
    %332 = vector.extract_strided_slice %324 {offsets = [5, 0], sizes = [1, 128], strides = [1, 1]} : vector<10x128xf32> to vector<1x128xf32>
    %333 = vector.extract_strided_slice %324 {offsets = [6, 0], sizes = [1, 128], strides = [1, 1]} : vector<10x128xf32> to vector<1x128xf32>
    %334 = vector.extract_strided_slice %324 {offsets = [7, 0], sizes = [1, 128], strides = [1, 1]} : vector<10x128xf32> to vector<1x128xf32>
    %335 = vector.extract_strided_slice %324 {offsets = [8, 0], sizes = [1, 128], strides = [1, 1]} : vector<10x128xf32> to vector<1x128xf32>
    %336 = vector.extract_strided_slice %324 {offsets = [9, 0], sizes = [1, 128], strides = [1, 1]} : vector<10x128xf32> to vector<1x128xf32>
    %337 = tpu.concatenate %327, %328, %329, %330, %331, %332, %333, %334, %335, %336 in 1 : vector<1x128xf32>, vector<1x128xf32>, vector<1x128xf32>, vector<1x128xf32>, vector<1x128xf32>, vector<1x128xf32>, vector<1x128xf32>, vector<1x128xf32>, vector<1x128xf32>, vector<1x128xf32> -> vector<1x1280xf32>
    %338 = vector.extract_strided_slice %325 {offsets = [0, 0], sizes = [1, 128], strides = [1, 1]} : vector<10x128xf32> to vector<1x128xf32>
    %339 = vector.extract_strided_slice %325 {offsets = [1, 0], sizes = [1, 128], strides = [1, 1]} : vector<10x128xf32> to vector<1x128xf32>
    %340 = vector.extract_strided_slice %325 {offsets = [2, 0], sizes = [1, 128], strides = [1, 1]} : vector<10x128xf32> to vector<1x128xf32>
    %341 = vector.extract_strided_slice %325 {offsets = [3, 0], sizes = [1, 128], strides = [1, 1]} : vector<10x128xf32> to vector<1x128xf32>
    %342 = vector.extract_strided_slice %325 {offsets = [4, 0], sizes = [1, 128], strides = [1, 1]} : vector<10x128xf32> to vector<1x128xf32>
    %343 = vector.extract_strided_slice %325 {offsets = [5, 0], sizes = [1, 128], strides = [1, 1]} : vector<10x128xf32> to vector<1x128xf32>
    %344 = vector.extract_strided_slice %325 {offsets = [6, 0], sizes = [1, 128], strides = [1, 1]} : vector<10x128xf32> to vector<1x128xf32>
    %345 = vector.extract_strided_slice %325 {offsets = [7, 0], sizes = [1, 128], strides = [1, 1]} : vector<10x128xf32> to vector<1x128xf32>
    %346 = vector.extract_strided_slice %325 {offsets = [8, 0], sizes = [1, 128], strides = [1, 1]} : vector<10x128xf32> to vector<1x128xf32>
    %347 = vector.extract_strided_slice %325 {offsets = [9, 0], sizes = [1, 128], strides = [1, 1]} : vector<10x128xf32> to vector<1x128xf32>
    %348 = tpu.concatenate %338, %339, %340, %341, %342, %343, %344, %345, %346, %347 in 1 : vector<1x128xf32>, vector<1x128xf32>, vector<1x128xf32>, vector<1x128xf32>, vector<1x128xf32>, vector<1x128xf32>, vector<1x128xf32>, vector<1x128xf32>, vector<1x128xf32>, vector<1x128xf32> -> vector<1x1280xf32>
    %349 = tpu.concatenate %337, %348 in 0 : vector<1x1280xf32>, vector<1x1280xf32> -> vector<2x1280xf32>
    %350 = arith.truncf %349 : vector<2x1280xf32> to vector<2x1280xbf16>
    %cst_132 = arith.constant dense<0.000000e+00> : vector<2x16xf32>
    %351 = tpu.matmul %350, %326, %cst_132 {dimension_numbers = #tpu.dot_dimension_numbers<[1], [0], [0], [1], [0, 0, 1, 1], [], []>} : vector<2x1280xbf16>, vector<1280x16xbf16>, vector<2x16xf32> -> vector<2x16xf32>
    %c0_133 = arith.constant 0 : index
    %c0_134 = arith.constant 0 : index
    %352 = vector.load %arg15[%c0_133, %c0_134] : memref<2x16xf32, #tpu.memory_space<vmem>>, vector<2x16xf32>
    tpu.vector_store %arg15[%c0_133, %c0_134], %351 {strides = array<i32>} : memref<2x16xf32, #tpu.memory_space<vmem>>, vector<2x16xf32>,
    return
  }
}

</mosaic_0001>

<llo_original>
// kernel: tpu_custom_call.1
$region0: #{tpu_custom_call.1}
  #allocation0 [shape = 'u32[]', space=smem, size = 0x4, offset = 0x4, fixed_abs, tag = 'smem constant byte address 0x4 - core index']
  #allocation1 [shape = 'u32[144,128]{1,0:T(1,128)}', space=vmem, size = 0x12000, scoped, tag = 'internal scratch']
  %s0 = inlined_call_operand.vmem [shape: f32[2,320,8], index: 0, kind: input, shape index: {}]
  %s1 = inlined_call_operand.vmem [shape: f32[32,8], index: 1, kind: input, shape index: {}]
  %s2 = inlined_call_operand.vmem [shape: f32[32,16], index: 2, kind: input, shape index: {}]
  %s3 = inlined_call_operand.vmem [shape: f32[1,16], index: 3, kind: input, shape index: {}]
  %s4 = inlined_call_operand.vmem [shape: f32[1,16], index: 4, kind: input, shape index: {}]
  %s5 = inlined_call_operand.vmem [shape: f32[64,32], index: 5, kind: input, shape index: {}]
  %s6 = inlined_call_operand.vmem [shape: f32[1,32], index: 6, kind: input, shape index: {}]
  %s7 = inlined_call_operand.vmem [shape: f32[1,32], index: 7, kind: input, shape index: {}]
  %s8 = inlined_call_operand.vmem [shape: bf16[128,64], index: 8, kind: input, shape index: {}]
  %s9 = inlined_call_operand.vmem [shape: f32[1,64], index: 9, kind: input, shape index: {}]
  %s10 = inlined_call_operand.vmem [shape: f32[1,64], index: 10, kind: input, shape index: {}]
  %s11 = inlined_call_operand.vmem [shape: bf16[256,128], index: 11, kind: input, shape index: {}]
  %s12 = inlined_call_operand.vmem [shape: f32[1,128], index: 12, kind: input, shape index: {}]
  %s13 = inlined_call_operand.vmem [shape: f32[1,128], index: 13, kind: input, shape index: {}]
  %s14 = inlined_call_operand.vmem [shape: bf16[1280,16], index: 14, kind: input, shape index: {}]
  %s15 = inlined_call_operand.hbm [shape: f32[2,16], index: 15, kind: output, shape index: {}]
  %s16 = sld [smem:[#allocation0]]
  $region70: #{tpu_custom_call.1} parent=0
    _
  %s18 = ssub.s32 1, %s16
  %s19 = scalar_select 0, %s18, %s16
  $region1: #{tpu_custom_call.1} parent=0
    #allocation2 [shape = 'u8[1024]{0}', space=vmem, size = 0x400, scoped, tag = 'output window, operand 0, single buffered']
    #allocation3 [shape = 's32[1]{0}', space=sflag, size = 0x4, scoped, tag = 'scoped memory for tpu_custom_call.1']
    %20 = vsyncpa [#allocation3], 0
    // Predicated region
    $region2: #{tpu_custom_call.1} parent=1 // pred_check
      _
    $region3: #{tpu_custom_call.1} parent=1 // pred_check_branch
      %22 = sbr.rel (0) target = $region5
    $region4: #{tpu_custom_call.1} parent=1 // pred_region
      _
    $region5: #{tpu_custom_call.1} parent=1 // pred_fallthru
      _
    // Predicated region
    $region6: #{tpu_custom_call.1} parent=1 // pred_check
      _
    $region7: #{tpu_custom_call.1} parent=1 // pred_check_branch
      %24 = sbr.rel (0) target = $region9
    $region8: #{tpu_custom_call.1} parent=1 // pred_region
      _
    $region9: #{tpu_custom_call.1} parent=1 // pred_fallthru
      _
    // Predicated region
    $region10: #{tpu_custom_call.1} parent=1 // pred_check
      _
    $region11: #{tpu_custom_call.1} parent=1 // pred_check_branch
      %26 = sbr.rel (0) target = $region13
    $region12: #{tpu_custom_call.1} parent=1 // pred_region
      _
    $region13: #{tpu_custom_call.1} parent=1 // pred_fallthru
      _
    // Predicated region
    $region14: #{tpu_custom_call.1} parent=1 // pred_check
      _
    $region15: #{tpu_custom_call.1} parent=1 // pred_check_branch
      %28 = sbr.rel (0) target = $region17
    $region16: #{tpu_custom_call.1} parent=1 // pred_region
      _
    $region17: #{tpu_custom_call.1} parent=1 // pred_fallthru
      _
    // Predicated region
    $region18: #{tpu_custom_call.1} parent=1 // pred_check
      _
    $region19: #{tpu_custom_call.1} parent=1 // pred_check_branch
      %30 = sbr.rel (0) target = $region21
    $region20: #{tpu_custom_call.1} parent=1 // pred_region
      _
    $region21: #{tpu_custom_call.1} parent=1 // pred_fallthru
      _
    // Predicated region
    $region22: #{tpu_custom_call.1} parent=1 // pred_check
      _
    $region23: #{tpu_custom_call.1} parent=1 // pred_check_branch
      %32 = sbr.rel (0) target = $region25
    $region24: #{tpu_custom_call.1} parent=1 // pred_region
      _
    $region25: #{tpu_custom_call.1} parent=1 // pred_fallthru
      _
    // Predicated region
    $region26: #{tpu_custom_call.1} parent=1 // pred_check
      _
    $region27: #{tpu_custom_call.1} parent=1 // pred_check_branch
      %34 = sbr.rel (0) target = $region29
    $region28: #{tpu_custom_call.1} parent=1 // pred_region
      _
    $region29: #{tpu_custom_call.1} parent=1 // pred_fallthru
      _
    // Predicated region
    $region30: #{tpu_custom_call.1} parent=1 // pred_check
      _
    $region31: #{tpu_custom_call.1} parent=1 // pred_check_branch
      %36 = sbr.rel (0) target = $region33
    $region32: #{tpu_custom_call.1} parent=1 // pred_region
      _
    $region33: #{tpu_custom_call.1} parent=1 // pred_fallthru
      _
    // Predicated region
    $region34: #{tpu_custom_call.1} parent=1 // pred_check
      _
    $region35: #{tpu_custom_call.1} parent=1 // pred_check_branch
      %38 = sbr.rel (0) target = $region37
    $region36: #{tpu_custom_call.1} parent=1 // pred_region
      _
    $region37: #{tpu_custom_call.1} parent=1 // pred_fallthru
      _
    // Predicated region
    $region38: #{tpu_custom_call.1} parent=1 // pred_check
      _
    $region39: #{tpu_custom_call.1} parent=1 // pred_check_branch
      %40 = sbr.rel (0) target = $region41
    $region40: #{tpu_custom_call.1} parent=1 // pred_region
      _
    $region41: #{tpu_custom_call.1} parent=1 // pred_fallthru
      _
    // Predicated region
    $region42: #{tpu_custom_call.1} parent=1 // pred_check
      _
    $region43: #{tpu_custom_call.1} parent=1 // pred_check_branch
      %42 = sbr.rel (0) target = $region45
    $region44: #{tpu_custom_call.1} parent=1 // pred_region
      _
    $region45: #{tpu_custom_call.1} parent=1 // pred_fallthru
      _
    // Predicated region
    $region46: #{tpu_custom_call.1} parent=1 // pred_check
      _
    $region47: #{tpu_custom_call.1} parent=1 // pred_check_branch
      %44 = sbr.rel (0) target = $region49
    $region48: #{tpu_custom_call.1} parent=1 // pred_region
      _
    $region49: #{tpu_custom_call.1} parent=1 // pred_fallthru
      _
    // Predicated region
    $region50: #{tpu_custom_call.1} parent=1 // pred_check
      _
    $region51: #{tpu_custom_call.1} parent=1 // pred_check_branch
      %46 = sbr.rel (0) target = $region53
    $region52: #{tpu_custom_call.1} parent=1 // pred_region
      _
    $region53: #{tpu_custom_call.1} parent=1 // pred_fallthru
      _
    // Predicated region
    $region54: #{tpu_custom_call.1} parent=1 // pred_check
      _
    $region55: #{tpu_custom_call.1} parent=1 // pred_check_branch
      %48 = sbr.rel (0) target = $region57
    $region56: #{tpu_custom_call.1} parent=1 // pred_region
      _
    $region57: #{tpu_custom_call.1} parent=1 // pred_fallthru
      _
    // Predicated region
    $region58: #{tpu_custom_call.1} parent=1 // pred_check
      _
    $region59: #{tpu_custom_call.1} parent=1 // pred_check_branch
      %50 = sbr.rel (0) target = $region61
    $region60: #{tpu_custom_call.1} parent=1 // pred_region
      _
    $region61: #{tpu_custom_call.1} parent=1 // pred_fallthru
      _
    %v52 = vld [vmem:[%s0] sm:$0xff]
    %v53 = vld [vmem:[%s0 + $0x8] sm:$0xff]
    %v54 = vld [vmem:[%s0 + $0x10] sm:$0xff]
    %v55 = vld [vmem:[%s0 + $0x18] sm:$0xff]
    %v56 = vld [vmem:[%s0 + $0x20] sm:$0xff]
    %v57 = vld [vmem:[%s0 + $0x28] sm:$0xff]
    %v58 = vld [vmem:[%s0 + $0x30] sm:$0xff]
    %v59 = vld [vmem:[%s0 + $0x38] sm:$0xff]
    %v60 = vld [vmem:[%s0 + $0x40] sm:$0xff]
    %v61 = vld [vmem:[%s0 + $0x48] sm:$0xff]
    %v62 = vld [vmem:[%s0 + $0x50] sm:$0xff]
    %v63 = vld [vmem:[%s0 + $0x58] sm:$0xff]
    %v64 = vld [vmem:[%s0 + $0x60] sm:$0xff]
    %v65 = vld [vmem:[%s0 + $0x68] sm:$0xff]
    %v66 = vld [vmem:[%s0 + $0x70] sm:$0xff]
    %v67 = vld [vmem:[%s0 + $0x78] sm:$0xff]
    %v68 = vld [vmem:[%s0 + $0x80] sm:$0xff]
    %v69 = vld [vmem:[%s0 + $0x88] sm:$0xff]
    %v70 = vld [vmem:[%s0 + $0x90] sm:$0xff]
    %v71 = vld [vmem:[%s0 + $0x98] sm:$0xff]
    %v72 = vld [vmem:[%s0 + $0xa0] sm:$0xff]
    %v73 = vld [vmem:[%s0 + $0xa8] sm:$0xff]
    %v74 = vld [vmem:[%s0 + $0xb0] sm:$0xff]
    %v75 = vld [vmem:[%s0 + $0xb8] sm:$0xff]
    %v76 = vld [vmem:[%s0 + $0xc0] sm:$0xff]
    %v77 = vld [vmem:[%s0 + $0xc8] sm:$0xff]
    %v78 = vld [vmem:[%s0 + $0xd0] sm:$0xff]
    %v79 = vld [vmem:[%s0 + $0xd8] sm:$0xff]
    %v80 = vld [vmem:[%s0 + $0xe0] sm:$0xff]
    %v81 = vld [vmem:[%s0 + $0xe8] sm:$0xff]
    %v82 = vld [vmem:[%s0 + $0xf0] sm:$0xff]
    %v83 = vld [vmem:[%s0 + $0xf8] sm:$0xff]
    %v84 = vld [vmem:[%s0 + $0x100] sm:$0xff]
    %v85 = vld [vmem:[%s0 + $0x108] sm:$0xff]
    %v86 = vld [vmem:[%s0 + $0x110] sm:$0xff]
    %v87 = vld [vmem:[%s0 + $0x118] sm:$0xff]
    %v88 = vld [vmem:[%s0 + $0x120] sm:$0xff]
    %v89 = vld [vmem:[%s0 + $0x128] sm:$0xff]
    %v90 = vld [vmem:[%s0 + $0x130] sm:$0xff]
    %v91 = vld [vmem:[%s0 + $0x138] sm:$0xff]
    %s92 = scalar_lea.vmem %s0, 320
    %v93 = vld [vmem:[%s92] sm:$0xff]
    %v94 = vld [vmem:[%s92 + $0x8] sm:$0xff]
    %v95 = vld [vmem:[%s92 + $0x10] sm:$0xff]
    %v96 = vld [vmem:[%s92 + $0x18] sm:$0xff]
    %v97 = vld [vmem:[%s92 + $0x20] sm:$0xff]
    %v98 = vld [vmem:[%s92 + $0x28] sm:$0xff]
    %v99 = vld [vmem:[%s92 + $0x30] sm:$0xff]
    %v100 = vld [vmem:[%s92 + $0x38] sm:$0xff]
    %v101 = vld [vmem:[%s92 + $0x40] sm:$0xff]
    %v102 = vld [vmem:[%s92 + $0x48] sm:$0xff]
    %v103 = vld [vmem:[%s92 + $0x50] sm:$0xff]
    %v104 = vld [vmem:[%s92 + $0x58] sm:$0xff]
    %v105 = vld [vmem:[%s92 + $0x60] sm:$0xff]
    %v106 = vld [vmem:[%s92 + $0x68] sm:$0xff]
    %v107 = vld [vmem:[%s92 + $0x70] sm:$0xff]
    %v108 = vld [vmem:[%s92 + $0x78] sm:$0xff]
    %v109 = vld [vmem:[%s92 + $0x80] sm:$0xff]
    %v110 = vld [vmem:[%s92 + $0x88] sm:$0xff]
    %v111 = vld [vmem:[%s92 + $0x90] sm:$0xff]
    %v112 = vld [vmem:[%s92 + $0x98] sm:$0xff]
    %v113 = vld [vmem:[%s92 + $0xa0] sm:$0xff]
    %v114 = vld [vmem:[%s92 + $0xa8] sm:$0xff]
    %v115 = vld [vmem:[%s92 + $0xb0] sm:$0xff]
    %v116 = vld [vmem:[%s92 + $0xb8] sm:$0xff]
    %v117 = vld [vmem:[%s92 + $0xc0] sm:$0xff]
    %v118 = vld [vmem:[%s92 + $0xc8] sm:$0xff]
    %v119 = vld [vmem:[%s92 + $0xd0] sm:$0xff]
    %v120 = vld [vmem:[%s92 + $0xd8] sm:$0xff]
    %v121 = vld [vmem:[%s92 + $0xe0] sm:$0xff]
    %v122 = vld [vmem:[%s92 + $0xe8] sm:$0xff]
    %v123 = vld [vmem:[%s92 + $0xf0] sm:$0xff]
    %v124 = vld [vmem:[%s92 + $0xf8] sm:$0xff]
    %v125 = vld [vmem:[%s92 + $0x100] sm:$0xff]
    %v126 = vld [vmem:[%s92 + $0x108] sm:$0xff]
    %v127 = vld [vmem:[%s92 + $0x110] sm:$0xff]
    %v128 = vld [vmem:[%s92 + $0x118] sm:$0xff]
    %v129 = vld [vmem:[%s92 + $0x120] sm:$0xff]
    %v130 = vld [vmem:[%s92 + $0x128] sm:$0xff]
    %v131 = vld [vmem:[%s92 + $0x130] sm:$0xff]
    %v132 = vld [vmem:[%s92 + $0x138] sm:$0xff]
    %v133 = vld [vmem:[%s1] sm:$0xff]
    %v134 = vld [vmem:[%s1 + $0x8] sm:$0xff]
    %v135 = vld [vmem:[%s1 + $0x10] sm:$0xff]
    %v136 = vld [vmem:[%s1 + $0x18] sm:$0xff]
    %v137 = vlaneseq
    %v138 = vshrl.u32 %v137, 7
    %v139 = vadd.s32 %v138, 8
    %v140 = vadd.s32 %v138, 16
    %v141 = vadd.s32 %v138, 24
    %v142 = vadd.s32 %v138, 32
    %v143 = vadd.s32 %v138, 40
    %v144 = vadd.s32 %v138, 48
    %v145 = vadd.s32 %v138, 56
    %v146 = vadd.s32 %v138, 64
    %v147 = vadd.s32 %v138, 72
    %v148 = vadd.s32 %v138, 80
    %v149 = vadd.s32 %v138, 88
    %v150 = vadd.s32 %v138, 96
    %v151 = vadd.s32 %v138, 104
    %v152 = vadd.s32 %v138, 112
    %v153 = vadd.s32 %v138, 120
    %v154 = vadd.s32 %v138, 128
    %v155 = vadd.s32 %v138, 136
    %v156 = vadd.s32 %v138, 144
    %v157 = vadd.s32 %v138, 152
    %v158 = vlaneseq
    %v159 = vand.u32 %v158, 127
    %v160 = vadd.s32 %v159, 128
    %v161 = vadd.s32 %v159, 256
    %v162 = vmul.u32 %v138, 2
    %v163 = vmul.u32 %v139, 2
    %v164 = vmul.u32 %v140, 2
    %v165 = vmul.u32 %v141, 2
    %v166 = vmul.u32 %v142, 2
    %v167 = vmul.u32 %v143, 2
    %v168 = vmul.u32 %v144, 2
    %v169 = vmul.u32 %v145, 2
    %v170 = vmul.u32 %v146, 2
    %v171 = vmul.u32 %v147, 2
    %v172 = vmul.u32 %v148, 2
    %v173 = vmul.u32 %v149, 2
    %v174 = vmul.u32 %v150, 2
    %v175 = vmul.u32 %v151, 2
    %v176 = vmul.u32 %v152, 2
    %v177 = vmul.u32 %v153, 2
    %v178 = vmul.u32 %v154, 2
    %v179 = vmul.u32 %v155, 2
    %v180 = vmul.u32 %v156, 2
    %v181 = vmul.u32 %v157, 2
    %vm182 = vcmp.eq.s32.totalorder %v159, %v162
    %vm183 = vcmp.eq.s32.totalorder %v160, %v162
    %vm184 = vcmp.eq.s32.totalorder %v161, %v162
    %vm185 = vcmp.eq.s32.totalorder %v159, %v163
    %vm186 = vcmp.eq.s32.totalorder %v160, %v163
    %vm187 = vcmp.eq.s32.totalorder %v161, %v163
    %vm188 = vcmp.eq.s32.totalorder %v159, %v164
    %vm189 = vcmp.eq.s32.totalorder %v160, %v164
    %vm190 = vcmp.eq.s32.totalorder %v161, %v164
    %vm191 = vcmp.eq.s32.totalorder %v159, %v165
    %vm192 = vcmp.eq.s32.totalorder %v160, %v165
    %vm193 = vcmp.eq.s32.totalorder %v161, %v165
    %vm194 = vcmp.eq.s32.totalorder %v159, %v166
    %vm195 = vcmp.eq.s32.totalorder %v160, %v166
    %vm196 = vcmp.eq.s32.totalorder %v161, %v166
    %vm197 = vcmp.eq.s32.totalorder %v159, %v167
    %vm198 = vcmp.eq.s32.totalorder %v160, %v167
    %vm199 = vcmp.eq.s32.totalorder %v161, %v167
    %vm200 = vcmp.eq.s32.totalorder %v159, %v168
    %vm201 = vcmp.eq.s32.totalorder %v160, %v168
    %vm202 = vcmp.eq.s32.totalorder %v161, %v168
    %vm203 = vcmp.eq.s32.totalorder %v159, %v169
    %vm204 = vcmp.eq.s32.totalorder %v160, %v169
    %vm205 = vcmp.eq.s32.totalorder %v161, %v169
    %vm206 = vcmp.eq.s32.totalorder %v159, %v170
    %vm207 = vcmp.eq.s32.totalorder %v160, %v170
    %vm208 = vcmp.eq.s32.totalorder %v161, %v170
    %vm209 = vcmp.eq.s32.totalorder %v159, %v171
    %vm210 = vcmp.eq.s32.totalorder %v160, %v171
    %vm211 = vcmp.eq.s32.totalorder %v161, %v171
    %vm212 = vcmp.eq.s32.totalorder %v159, %v172
    %vm213 = vcmp.eq.s32.totalorder %v160, %v172
    %vm214 = vcmp.eq.s32.totalorder %v161, %v172
    %vm215 = vcmp.eq.s32.totalorder %v159, %v173
    %vm216 = vcmp.eq.s32.totalorder %v160, %v173
    %vm217 = vcmp.eq.s32.totalorder %v161, %v173
    %vm218 = vcmp.eq.s32.totalorder %v159, %v174
    %vm219 = vcmp.eq.s32.totalorder %v160, %v174
    %vm220 = vcmp.eq.s32.totalorder %v161, %v174
    %vm221 = vcmp.eq.s32.totalorder %v159, %v175
    %vm222 = vcmp.eq.s32.totalorder %v160, %v175
    %vm223 = vcmp.eq.s32.totalorder %v161, %v175
    %vm224 = vcmp.eq.s32.totalorder %v159, %v176
    %vm225 = vcmp.eq.s32.totalorder %v160, %v176
    %vm226 = vcmp.eq.s32.totalorder %v161, %v176
    %vm227 = vcmp.eq.s32.totalorder %v159, %v177
    %vm228 = vcmp.eq.s32.totalorder %v160, %v177
    %vm229 = vcmp.eq.s32.totalorder %v161, %v177
    %vm230 = vcmp.eq.s32.totalorder %v159, %v178
    %vm231 = vcmp.eq.s32.totalorder %v160, %v178
    %vm232 = vcmp.eq.s32.totalorder %v161, %v178
    %vm233 = vcmp.eq.s32.totalorder %v159, %v179
    %vm234 = vcmp.eq.s32.totalorder %v160, %v179
    %vm235 = vcmp.eq.s32.totalorder %v161, %v179
    %vm236 = vcmp.eq.s32.totalorder %v159, %v180
    %vm237 = vcmp.eq.s32.totalorder %v160, %v180
    %vm238 = vcmp.eq.s32.totalorder %v161, %v180
    %vm239 = vcmp.eq.s32.totalorder %v159, %v181
    %vm240 = vcmp.eq.s32.totalorder %v160, %v181
    %vm241 = vcmp.eq.s32.totalorder %v161, %v181
    %v242 = vsel %vm182, 1.0, 0.0
    %v243 = vsel %vm183, 1.0, 0.0
    %v244 = vsel %vm184, 1.0, 0.0
    %v245 = vsel %vm185, 1.0, 0.0
    %v246 = vsel %vm186, 1.0, 0.0
    %v247 = vsel %vm187, 1.0, 0.0
    %v248 = vsel %vm188, 1.0, 0.0
    %v249 = vsel %vm189, 1.0, 0.0
    %v250 = vsel %vm190, 1.0, 0.0
    %v251 = vsel %vm191, 1.0, 0.0
    %v252 = vsel %vm192, 1.0, 0.0
    %v253 = vsel %vm193, 1.0, 0.0
    %v254 = vsel %vm194, 1.0, 0.0
    %v255 = vsel %vm195, 1.0, 0.0
    %v256 = vsel %vm196, 1.0, 0.0
    %v257 = vsel %vm197, 1.0, 0.0
    %v258 = vsel %vm198, 1.0, 0.0
    %v259 = vsel %vm199, 1.0, 0.0
    %v260 = vsel %vm200, 1.0, 0.0
    %v261 = vsel %vm201, 1.0, 0.0
    %v262 = vsel %vm202, 1.0, 0.0
    %v263 = vsel %vm203, 1.0, 0.0
    %v264 = vsel %vm204, 1.0, 0.0
    %v265 = vsel %vm205, 1.0, 0.0
    %v266 = vsel %vm206, 1.0, 0.0
    %v267 = vsel %vm207, 1.0, 0.0
    %v268 = vsel %vm208, 1.0, 0.0
    %v269 = vsel %vm209, 1.0, 0.0
    %v270 = vsel %vm210, 1.0, 0.0
    %v271 = vsel %vm211, 1.0, 0.0
    %v272 = vsel %vm212, 1.0, 0.0
    %v273 = vsel %vm213, 1.0, 0.0
    %v274 = vsel %vm214, 1.0, 0.0
    %v275 = vsel %vm215, 1.0, 0.0
    %v276 = vsel %vm216, 1.0, 0.0
    %v277 = vsel %vm217, 1.0, 0.0
    %v278 = vsel %vm218, 1.0, 0.0
    %v279 = vsel %vm219, 1.0, 0.0
    %v280 = vsel %vm220, 1.0, 0.0
    %v281 = vsel %vm221, 1.0, 0.0
    %v282 = vsel %vm222, 1.0, 0.0
    %v283 = vsel %vm223, 1.0, 0.0
    %v284 = vsel %vm224, 1.0, 0.0
    %v285 = vsel %vm225, 1.0, 0.0
    %v286 = vsel %vm226, 1.0, 0.0
    %v287 = vsel %vm227, 1.0, 0.0
    %v288 = vsel %vm228, 1.0, 0.0
    %v289 = vsel %vm229, 1.0, 0.0
    %v290 = vsel %vm230, 1.0, 0.0
    %v291 = vsel %vm231, 1.0, 0.0
    %v292 = vsel %vm232, 1.0, 0.0
    %v293 = vsel %vm233, 1.0, 0.0
    %v294 = vsel %vm234, 1.0, 0.0
    %v295 = vsel %vm235, 1.0, 0.0
    %v296 = vsel %vm236, 1.0, 0.0
    %v297 = vsel %vm237, 1.0, 0.0
    %v298 = vsel %vm238, 1.0, 0.0
    %v299 = vsel %vm239, 1.0, 0.0
    %v300 = vsel %vm240, 1.0, 0.0
    %v301 = vsel %vm241, 1.0, 0.0
    %v302 = vadd.s32 %v162, 1
    %v303 = vadd.s32 %v163, 1
    %v304 = vadd.s32 %v164, 1
    %v305 = vadd.s32 %v165, 1
    %v306 = vadd.s32 %v166, 1
    %v307 = vadd.s32 %v167, 1
    %v308 = vadd.s32 %v168, 1
    %v309 = vadd.s32 %v169, 1
    %v310 = vadd.s32 %v170, 1
    %v311 = vadd.s32 %v171, 1
    %v312 = vadd.s32 %v172, 1
    %v313 = vadd.s32 %v173, 1
    %v314 = vadd.s32 %v174, 1
    %v315 = vadd.s32 %v175, 1
    %v316 = vadd.s32 %v176, 1
    %v317 = vadd.s32 %v177, 1
    %v318 = vadd.s32 %v178, 1
    %v319 = vadd.s32 %v179, 1
    %v320 = vadd.s32 %v180, 1
    %v321 = vadd.s32 %v181, 1
    %vm322 = vcmp.eq.s32.totalorder %v159, %v302
    %vm323 = vcmp.eq.s32.totalorder %v160, %v302
    %vm324 = vcmp.eq.s32.totalorder %v161, %v302
    %vm325 = vcmp.eq.s32.totalorder %v159, %v303
    %vm326 = vcmp.eq.s32.totalorder %v160, %v303
    %vm327 = vcmp.eq.s32.totalorder %v161, %v303
    %vm328 = vcmp.eq.s32.totalorder %v159, %v304
    %vm329 = vcmp.eq.s32.totalorder %v160, %v304
    %vm330 = vcmp.eq.s32.totalorder %v161, %v304
    %vm331 = vcmp.eq.s32.totalorder %v159, %v305
    %vm332 = vcmp.eq.s32.totalorder %v160, %v305
    %vm333 = vcmp.eq.s32.totalorder %v161, %v305
    %vm334 = vcmp.eq.s32.totalorder %v159, %v306
    %vm335 = vcmp.eq.s32.totalorder %v160, %v306
    %vm336 = vcmp.eq.s32.totalorder %v161, %v306
    %vm337 = vcmp.eq.s32.totalorder %v159, %v307
    %vm338 = vcmp.eq.s32.totalorder %v160, %v307
    %vm339 = vcmp.eq.s32.totalorder %v161, %v307
    %vm340 = vcmp.eq.s32.totalorder %v159, %v308
    %vm341 = vcmp.eq.s32.totalorder %v160, %v308
    %vm342 = vcmp.eq.s32.totalorder %v161, %v308
    %vm343 = vcmp.eq.s32.totalorder %v159, %v309
    %vm344 = vcmp.eq.s32.totalorder %v160, %v309
    %vm345 = vcmp.eq.s32.totalorder %v161, %v309
    %vm346 = vcmp.eq.s32.totalorder %v159, %v310
    %vm347 = vcmp.eq.s32.totalorder %v160, %v310
    %vm348 = vcmp.eq.s32.totalorder %v161, %v310
    %vm349 = vcmp.eq.s32.totalorder %v159, %v311
    %vm350 = vcmp.eq.s32.totalorder %v160, %v311
    %vm351 = vcmp.eq.s32.totalorder %v161, %v311
    %vm352 = vcmp.eq.s32.totalorder %v159, %v312
    %vm353 = vcmp.eq.s32.totalorder %v160, %v312
    %vm354 = vcmp.eq.s32.totalorder %v161, %v312
    %vm355 = vcmp.eq.s32.totalorder %v159, %v313
    %vm356 = vcmp.eq.s32.totalorder %v160, %v313
    %vm357 = vcmp.eq.s32.totalorder %v161, %v313
    %vm358 = vcmp.eq.s32.totalorder %v159, %v314
    %vm359 = vcmp.eq.s32.totalorder %v160, %v314
    %vm360 = vcmp.eq.s32.totalorder %v161, %v314
    %vm361 = vcmp.eq.s32.totalorder %v159, %v315
    %vm362 = vcmp.eq.s32.totalorder %v160, %v315
    %vm363 = vcmp.eq.s32.totalorder %v161, %v315
    %vm364 = vcmp.eq.s32.totalorder %v159, %v316
    %vm365 = vcmp.eq.s32.totalorder %v160, %v316
    %vm366 = vcmp.eq.s32.totalorder %v161, %v316
    %vm367 = vcmp.eq.s32.totalorder %v159, %v317
    %vm368 = vcmp.eq.s32.totalorder %v160, %v317
    %vm369 = vcmp.eq.s32.totalorder %v161, %v317
    %vm370 = vcmp.eq.s32.totalorder %v159, %v318
    %vm371 = vcmp.eq.s32.totalorder %v160, %v318
    %vm372 = vcmp.eq.s32.totalorder %v161, %v318
    %vm373 = vcmp.eq.s32.totalorder %v159, %v319
    %vm374 = vcmp.eq.s32.totalorder %v160, %v319
    %vm375 = vcmp.eq.s32.totalorder %v161, %v319
    %vm376 = vcmp.eq.s32.totalorder %v159, %v320
    %vm377 = vcmp.eq.s32.totalorder %v160, %v320
    %vm378 = vcmp.eq.s32.totalorder %v161, %v320
    %vm379 = vcmp.eq.s32.totalorder %v159, %v321
    %vm380 = vcmp.eq.s32.totalorder %v160, %v321
    %vm381 = vcmp.eq.s32.totalorder %v161, %v321
    %v382 = vsel %vm322, 1.0, 0.0
    %v383 = vsel %vm323, 1.0, 0.0
    %v384 = vsel %vm324, 1.0, 0.0
    %v385 = vsel %vm325, 1.0, 0.0
    %v386 = vsel %vm326, 1.0, 0.0
    %v387 = vsel %vm327, 1.0, 0.0
    %v388 = vsel %vm328, 1.0, 0.0
    %v389 = vsel %vm329, 1.0, 0.0
    %v390 = vsel %vm330, 1.0, 0.0
    %v391 = vsel %vm331, 1.0, 0.0
    %v392 = vsel %vm332, 1.0, 0.0
    %v393 = vsel %vm333, 1.0, 0.0
    %v394 = vsel %vm334, 1.0, 0.0
    %v395 = vsel %vm335, 1.0, 0.0
    %v396 = vsel %vm336, 1.0, 0.0
    %v397 = vsel %vm337, 1.0, 0.0
    %v398 = vsel %vm338, 1.0, 0.0
    %v399 = vsel %vm339, 1.0, 0.0
    %v400 = vsel %vm340, 1.0, 0.0
    %v401 = vsel %vm341, 1.0, 0.0
    %v402 = vsel %vm342, 1.0, 0.0
    %v403 = vsel %vm343, 1.0, 0.0
    %v404 = vsel %vm344, 1.0, 0.0
    %v405 = vsel %vm345, 1.0, 0.0
    %v406 = vsel %vm346, 1.0, 0.0
    %v407 = vsel %vm347, 1.0, 0.0
    %v408 = vsel %vm348, 1.0, 0.0
    %v409 = vsel %vm349, 1.0, 0.0
    %v410 = vsel %vm350, 1.0, 0.0
    %v411 = vsel %vm351, 1.0, 0.0
    %v412 = vsel %vm352, 1.0, 0.0
    %v413 = vsel %vm353, 1.0, 0.0
    %v414 = vsel %vm354, 1.0, 0.0
    %v415 = vsel %vm355, 1.0, 0.0
    %v416 = vsel %vm356, 1.0, 0.0
    %v417 = vsel %vm357, 1.0, 0.0
    %v418 = vsel %vm358, 1.0, 0.0
    %v419 = vsel %vm359, 1.0, 0.0
    %v420 = vsel %vm360, 1.0, 0.0
    %v421 = vsel %vm361, 1.0, 0.0
    %v422 = vsel %vm362, 1.0, 0.0
    %v423 = vsel %vm363, 1.0, 0.0
    %v424 = vsel %vm364, 1.0, 0.0
    %v425 = vsel %vm365, 1.0, 0.0
    %v426 = vsel %vm366, 1.0, 0.0
    %v427 = vsel %vm367, 1.0, 0.0
    %v428 = vsel %vm368, 1.0, 0.0
    %v429 = vsel %vm369, 1.0, 0.0
    %v430 = vsel %vm370, 1.0, 0.0
    %v431 = vsel %vm371, 1.0, 0.0
    %v432 = vsel %vm372, 1.0, 0.0
    %v433 = vsel %vm373, 1.0, 0.0
    %v434 = vsel %vm374, 1.0, 0.0
    %v435 = vsel %vm375, 1.0, 0.0
    %v436 = vsel %vm376, 1.0, 0.0
    %v437 = vsel %vm377, 1.0, 0.0
    %v438 = vsel %vm378, 1.0, 0.0
    %v439 = vsel %vm379, 1.0, 0.0
    %v440 = vsel %vm380, 1.0, 0.0
    %v441 = vsel %vm381, 1.0, 0.0
    %vm442 = vcmask 523264
    %v444 = vsel %vm442, %v244, 0
    %v447 = vsel %vm442, %v247, 0
    %v450 = vsel %vm442, %v250, 0
    %v453 = vsel %vm442, %v253, 0
    %v456 = vsel %vm442, %v256, 0
    %v459 = vsel %vm442, %v259, 0
    %v462 = vsel %vm442, %v262, 0
    %v465 = vsel %vm442, %v265, 0
    %v468 = vsel %vm442, %v268, 0
    %v471 = vsel %vm442, %v271, 0
    %v474 = vsel %vm442, %v274, 0
    %v477 = vsel %vm442, %v277, 0
    %v480 = vsel %vm442, %v280, 0
    %v483 = vsel %vm442, %v283, 0
    %v486 = vsel %vm442, %v286, 0
    %v489 = vsel %vm442, %v289, 0
    %v492 = vsel %vm442, %v292, 0
    %v495 = vsel %vm442, %v295, 0
    %v498 = vsel %vm442, %v298, 0
    %v501 = vsel %vm442, %v301, 0
    %503 = vmatprep.subr.mxu0 0.0
    %504 = vmatpush1.msra.mxu0 %v52
    %505 = vmatprep.subr.mxu0 0.0
    %506 = vmatpush1.msra.mxu0 %v53
    %507 = vmatprep.subr.mxu0 0.0
    %508 = vmatpush1.msra.mxu0 %v54
    %509 = vmatprep.subr.mxu0 0.0
    %510 = vmatpush1.msra.mxu0 %v55
    %511 = vmatprep.subr.mxu0 0.0
    %512 = vmatpush1.msra.mxu0 %v56
    %513 = vmatprep.subr.mxu0 0.0
    %514 = vmatpush1.msra.mxu0 %v57
    %515 = vmatprep.subr.mxu0 0.0
    %516 = vmatpush1.msra.mxu0 %v58
    %517 = vmatprep.subr.mxu0 0.0
    %518 = vmatpush1.msra.mxu0 %v59
    %519 = vmatprep.subr.mxu0 0.0
    %520 = vmatpush1.msra.mxu0 %v60
    %521 = vmatprep.subr.mxu0 0.0
    %522 = vmatpush1.msra.mxu0 %v61
    %523 = vmatprep.subr.mxu0 0.0
    %524 = vmatpush1.msra.mxu0 %v62
    %525 = vmatprep.subr.mxu0 0.0
    %526 = vmatpush1.msra.mxu0 %v63
    %527 = vmatprep.subr.mxu0 0.0
    %528 = vmatpush1.msra.mxu0 %v64
    %529 = vmatprep.subr.mxu0 0.0
    %530 = vmatpush1.msra.mxu0 %v65
    %531 = vmatprep.subr.mxu0 0.0
    %532 = vmatpush1.msra.mxu0 %v66
    %533 = vmatprep.subr.mxu0 0.0
    %534 = vmatpush1.msra.mxu0 %v67
    %535 = vmatprep.subr.mxu0 0.0
    %536 = vmatpush1.msra.mxu0 %v68
    %537 = vmatprep.subr.mxu0 0.0
    %538 = vmatpush1.msra.mxu0 %v69
    %539 = vmatprep.subr.mxu0 0.0
    %540 = vmatpush1.msra.mxu0 %v70
    %541 = vmatprep.subr.mxu0 0.0
    %542 = vmatpush1.msra.mxu0 %v71
    %543 = vmatprep.subr.mxu0 0.0
    %544 = vmatpush1.msra.mxu0 %v72
    %545 = vmatprep.subr.mxu0 0.0
    %546 = vmatpush1.msra.mxu0 %v73
    %547 = vmatprep.subr.mxu0 0.0
    %548 = vmatpush1.msra.mxu0 %v74
    %549 = vmatprep.subr.mxu0 0.0
    %550 = vmatpush1.msra.mxu0 %v75
    %551 = vmatprep.subr.mxu0 0.0
    %552 = vmatpush1.msra.mxu0 %v76
    %553 = vmatprep.subr.mxu0 0.0
    %554 = vmatpush1.msra.mxu0 %v77
    %555 = vmatprep.subr.mxu0 0.0
    %556 = vmatpush1.msra.mxu0 %v78
    %557 = vmatprep.subr.mxu0 0.0
    %558 = vmatpush1.msra.mxu0 %v79
    %559 = vmatprep.subr.mxu0 0.0
    %560 = vmatpush1.msra.mxu0 %v80
    %561 = vmatprep.subr.mxu0 0.0
    %562 = vmatpush1.msra.mxu0 %v81
    %563 = vmatprep.subr.mxu0 0.0
    %564 = vmatpush1.msra.mxu0 %v82
    %565 = vmatprep.subr.mxu0 0.0
    %566 = vmatpush1.msra.mxu0 %v83
    %567 = vmatprep.mubr.f32.mxu0 %v243
    %568 = vmatmul.mubr.f32.gmra.mrb[0].mxu0 %v242
    %v569 = vpop.f32.mrb[0].mxu0
    %v570 = vadd.f32 0.0, %v569
    %v571 = vpop.f32.mrb[0].mxu0
    %572 = vmatprep.mubr.f32.mxu0 %v246
    %573 = vmatmul.mubr.f32.gmra.mrb[0].mxu0 %v245
    %v574 = vpop.f32.mrb[0].mxu0
    %v575 = vadd.f32 0.0, %v574
    %v576 = vpop.f32.mrb[0].mxu0
    %577 = vmatprep.mubr.f32.mxu0 %v249
    %578 = vmatmul.mubr.f32.gmra.mrb[0].mxu0 %v248
    %v579 = vpop.f32.mrb[0].mxu0
    %v580 = vadd.f32 0.0, %v579
    %v581 = vpop.f32.mrb[0].mxu0
    %582 = vmatprep.mubr.f32.mxu0 %v252
    %583 = vmatmul.mubr.f32.gmra.mrb[0].mxu0 %v251
    %v584 = vpop.f32.mrb[0].mxu0
    %v585 = vadd.f32 0.0, %v584
    %v586 = vpop.f32.mrb[0].mxu0
    %587 = vmatprep.mubr.f32.mxu0 %v255
    %588 = vmatmul.mubr.f32.gmra.mrb[0].mxu0 %v254
    %v589 = vpop.f32.mrb[0].mxu0
    %v590 = vadd.f32 0.0, %v589
    %v591 = vpop.f32.mrb[0].mxu0
    %592 = vmatprep.mubr.f32.mxu0 %v258
    %593 = vmatmul.mubr.f32.gmra.mrb[0].mxu0 %v257
    %v594 = vpop.f32.mrb[0].mxu0
    %v595 = vadd.f32 0.0, %v594
    %v596 = vpop.f32.mrb[0].mxu0
    %597 = vmatprep.mubr.f32.mxu0 %v261
    %598 = vmatmul.mubr.f32.gmra.mrb[0].mxu0 %v260
    %v599 = vpop.f32.mrb[0].mxu0
    %v600 = vadd.f32 0.0, %v599
    %v601 = vpop.f32.mrb[0].mxu0
    %602 = vmatprep.mubr.f32.mxu0 %v264
    %603 = vmatmul.mubr.f32.gmra.mrb[0].mxu0 %v263
    %v604 = vpop.f32.mrb[0].mxu0
    %v605 = vadd.f32 0.0, %v604
    %v606 = vpop.f32.mrb[0].mxu0
    %607 = vmatprep.mubr.f32.mxu0 %v267
    %608 = vmatmul.mubr.f32.gmra.mrb[0].mxu0 %v266
    %v609 = vpop.f32.mrb[0].mxu0
    %v610 = vadd.f32 0.0, %v609
    %v611 = vpop.f32.mrb[0].mxu0
    %612 = vmatprep.mubr.f32.mxu0 %v270
    %613 = vmatmul.mubr.f32.gmra.mrb[0].mxu0 %v269
    %v614 = vpop.f32.mrb[0].mxu0
    %v615 = vadd.f32 0.0, %v614
    %v616 = vpop.f32.mrb[0].mxu0
    %617 = vmatprep.mubr.f32.mxu0 %v273
    %618 = vmatmul.mubr.f32.gmra.mrb[0].mxu0 %v272
    %v619 = vpop.f32.mrb[0].mxu0
    %v620 = vadd.f32 0.0, %v619
    %v621 = vpop.f32.mrb[0].mxu0
    %622 = vmatprep.mubr.f32.mxu0 %v276
    %623 = vmatmul.mubr.f32.gmra.mrb[0].mxu0 %v275
    %v624 = vpop.f32.mrb[0].mxu0
    %v625 = vadd.f32 0.0, %v624
    %v626 = vpop.f32.mrb[0].mxu0
    %627 = vmatprep.mubr.f32.mxu0 %v279
    %628 = vmatmul.mubr.f32.gmra.mrb[0].mxu0 %v278
    %v629 = vpop.f32.mrb[0].mxu0
    %v630 = vadd.f32 0.0, %v629
    %v631 = vpop.f32.mrb[0].mxu0
    %632 = vmatprep.mubr.f32.mxu0 %v282
    %633 = vmatmul.mubr.f32.gmra.mrb[0].mxu0 %v281
    %v634 = vpop.f32.mrb[0].mxu0
    %v635 = vadd.f32 0.0, %v634
    %v636 = vpop.f32.mrb[0].mxu0
    %637 = vmatprep.mubr.f32.mxu0 %v285
    %638 = vmatmul.mubr.f32.gmra.mrb[0].mxu0 %v284
    %v639 = vpop.f32.mrb[0].mxu0
    %v640 = vadd.f32 0.0, %v639
    %v641 = vpop.f32.mrb[0].mxu0
    %642 = vmatprep.mubr.f32.mxu0 %v288
    %643 = vmatmul.mubr.f32.gmra.mrb[0].mxu0 %v287
    %v644 = vpop.f32.mrb[0].mxu0
    %v645 = vadd.f32 0.0, %v644
    %v646 = vpop.f32.mrb[0].mxu0
    %647 = vmatprep.mubr.f32.mxu0 %v291
    %648 = vmatmul.mubr.f32.gmra.mrb[0].mxu0 %v290
    %v649 = vpop.f32.mrb[0].mxu0
    %v650 = vadd.f32 0.0, %v649
    %v651 = vpop.f32.mrb[0].mxu0
    %652 = vmatprep.mubr.f32.mxu0 %v294
    %653 = vmatmul.mubr.f32.gmra.mrb[0].mxu0 %v293
    %v654 = vpop.f32.mrb[0].mxu0
    %v655 = vadd.f32 0.0, %v654
    %v656 = vpop.f32.mrb[0].mxu0
    %657 = vmatprep.mubr.f32.mxu0 %v297
    %658 = vmatmul.mubr.f32.gmra.mrb[0].mxu0 %v296
    %v659 = vpop.f32.mrb[0].mxu0
    %v660 = vadd.f32 0.0, %v659
    %v661 = vpop.f32.mrb[0].mxu0
    %662 = vmatprep.mubr.f32.mxu0 %v300
    %663 = vmatmul.mubr.f32.gmra.mrb[0].mxu0 %v299
    %v664 = vpop.f32.mrb[0].mxu0
    %v665 = vadd.f32 0.0, %v664
    %v666 = vpop.f32.mrb[0].mxu0
    %667 = vdwg.mxu0
    %668 = vmatprep.subr.mxu0 0.0
    %669 = vmatpush1.msra.mxu0 %v84
    %670 = vmatprep.subr.mxu0 0.0
    %671 = vmatpush1.msra.mxu0 %v85
    %672 = vmatprep.subr.mxu0 0.0
    %673 = vmatpush1.msra.mxu0 %v86
    %674 = vmatprep.subr.mxu0 0.0
    %675 = vmatpush1.msra.mxu0 %v87
    %676 = vmatprep.subr.mxu0 0.0
    %677 = vmatpush1.msra.mxu0 %v88
    %678 = vmatprep.subr.mxu0 0.0
    %679 = vmatpush1.msra.mxu0 %v89
    %680 = vmatprep.subr.mxu0 0.0
    %681 = vmatpush1.msra.mxu0 %v90
    %682 = vmatprep.subr.mxu0 0.0
    %683 = vmatpush1.msra.mxu0 %v91
    %684 = vmatprep.subr.mxu0 0.0
    %685 = vmatpush1.msra.mxu0 0.0
    %686 = vmatprep.subr.mxu0 0.0
    %687 = vmatpush1.msra.mxu0 0.0
    %688 = vmatprep.subr.mxu0 0.0
    %689 = vmatpush1.msra.mxu0 0.0
    %690 = vmatprep.subr.mxu0 0.0
    %691 = vmatpush1.msra.mxu0 0.0
    %692 = vmatprep.subr.mxu0 0.0
    %693 = vmatpush1.msra.mxu0 0.0
    %694 = vmatprep.subr.mxu0 0.0
    %695 = vmatpush1.msra.mxu0 0.0
    %696 = vmatprep.subr.mxu0 0.0
    %697 = vmatpush1.msra.mxu0 0.0
    %698 = vmatprep.subr.mxu0 0.0
    %699 = vmatpush1.msra.mxu0 0.0
    %700 = vmatprep.subr.mxu0 0.0
    %701 = vmatpush1.msra.mxu0 0.0
    %702 = vmatprep.subr.mxu0 0.0
    %703 = vmatpush1.msra.mxu0 0.0
    %704 = vmatprep.subr.mxu0 0.0
    %705 = vmatpush1.msra.mxu0 0.0
    %706 = vmatprep.subr.mxu0 0.0
    %707 = vmatpush1.msra.mxu0 0.0
    %708 = vmatprep.subr.mxu0 0.0
    %709 = vmatpush1.msra.mxu0 0.0
    %710 = vmatprep.subr.mxu0 0.0
    %711 = vmatpush1.msra.mxu0 0.0
    %712 = vmatprep.subr.mxu0 0.0
    %713 = vmatpush1.msra.mxu0 0.0
    %714 = vmatprep.subr.mxu0 0.0
    %715 = vmatpush1.msra.mxu0 0.0
    %716 = vmatprep.subr.mxu0 0.0
    %717 = vmatpush1.msra.mxu0 0.0
    %718 = vmatprep.subr.mxu0 0.0
    %719 = vmatpush1.msra.mxu0 0.0
    %720 = vmatprep.subr.mxu0 0.0
    %721 = vmatpush1.msra.mxu0 0.0
    %722 = vmatprep.subr.mxu0 0.0
    %723 = vmatpush1.msra.mxu0 0.0
    %724 = vmatprep.subr.mxu0 0.0
    %725 = vmatpush1.msra.mxu0 0.0
    %726 = vmatprep.subr.mxu0 0.0
    %727 = vmatpush1.msra.mxu0 0.0
    %728 = vmatprep.subr.mxu0 0.0
    %729 = vmatpush1.msra.mxu0 0.0
    %730 = vmatprep.subr.mxu0 0.0
    %731 = vmatpush1.msra.mxu0 0.0
    %732 = vmatprep.mubr.f32.mxu0 0.0
    %733 = vmatmul.mubr.f32.gmra.mrb[0].mxu0 %v444
    %v734 = vpop.f32.mrb[0].mxu0
    %v735 = vadd.f32 %v570, %v734
    %v736 = vpop.f32.mrb[0].mxu0
    %737 = vmatprep.mubr.f32.mxu0 0.0
    %738 = vmatmul.mubr.f32.gmra.mrb[0].mxu0 %v447
    %v739 = vpop.f32.mrb[0].mxu0
    %v740 = vadd.f32 %v575, %v739
    %v741 = vpop.f32.mrb[0].mxu0
    %742 = vmatprep.mubr.f32.mxu0 0.0
    %743 = vmatmul.mubr.f32.gmra.mrb[0].mxu0 %v450
    %v744 = vpop.f32.mrb[0].mxu0
    %v745 = vadd.f32 %v580, %v744
    %v746 = vpop.f32.mrb[0].mxu0
    %747 = vmatprep.mubr.f32.mxu0 0.0
    %748 = vmatmul.mubr.f32.gmra.mrb[0].mxu0 %v453
    %v749 = vpop.f32.mrb[0].mxu0
    %v750 = vadd.f32 %v585, %v749
    %v751 = vpop.f32.mrb[0].mxu0
    %752 = vmatprep.mubr.f32.mxu0 0.0
    %753 = vmatmul.mubr.f32.gmra.mrb[0].mxu0 %v456
    %v754 = vpop.f32.mrb[0].mxu0
    %v755 = vadd.f32 %v590, %v754
    %v756 = vpop.f32.mrb[0].mxu0
    %757 = vmatprep.mubr.f32.mxu0 0.0
    %758 = vmatmul.mubr.f32.gmra.mrb[0].mxu0 %v459
    %v759 = vpop.f32.mrb[0].mxu0
    %v760 = vadd.f32 %v595, %v759
    %v761 = vpop.f32.mrb[0].mxu0
    %762 = vmatprep.mubr.f32.mxu0 0.0
    %763 = vmatmul.mubr.f32.gmra.mrb[0].mxu0 %v462
    %v764 = vpop.f32.mrb[0].mxu0
    %v765 = vadd.f32 %v600, %v764
    %v766 = vpop.f32.mrb[0].mxu0
    %767 = vmatprep.mubr.f32.mxu0 0.0
    %768 = vmatmul.mubr.f32.gmra.mrb[0].mxu0 %v465
    %v769 = vpop.f32.mrb[0].mxu0
    %v770 = vadd.f32 %v605, %v769
    %v771 = vpop.f32.mrb[0].mxu0
    %772 = vmatprep.mubr.f32.mxu0 0.0
    %773 = vmatmul.mubr.f32.gmra.mrb[0].mxu0 %v468
    %v774 = vpop.f32.mrb[0].mxu0
    %v775 = vadd.f32 %v610, %v774
    %v776 = vpop.f32.mrb[0].mxu0
    %777 = vmatprep.mubr.f32.mxu0 0.0
    %778 = vmatmul.mubr.f32.gmra.mrb[0].mxu0 %v471
    %v779 = vpop.f32.mrb[0].mxu0
    %v780 = vadd.f32 %v615, %v779
    %v781 = vpop.f32.mrb[0].mxu0
    %782 = vmatprep.mubr.f32.mxu0 0.0
    %783 = vmatmul.mubr.f32.gmra.mrb[0].mxu0 %v474
    %v784 = vpop.f32.mrb[0].mxu0
    %v785 = vadd.f32 %v620, %v784
    %v786 = vpop.f32.mrb[0].mxu0
    %787 = vmatprep.mubr.f32.mxu0 0.0
    %788 = vmatmul.mubr.f32.gmra.mrb[0].mxu0 %v477
    %v789 = vpop.f32.mrb[0].mxu0
    %v790 = vadd.f32 %v625, %v789
    %v791 = vpop.f32.mrb[0].mxu0
    %792 = vmatprep.mubr.f32.mxu0 0.0
    %793 = vmatmul.mubr.f32.gmra.mrb[0].mxu0 %v480
    %v794 = vpop.f32.mrb[0].mxu0
    %v795 = vadd.f32 %v630, %v794
    %v796 = vpop.f32.mrb[0].mxu0
    %797 = vmatprep.mubr.f32.mxu0 0.0
    %798 = vmatmul.mubr.f32.gmra.mrb[0].mxu0 %v483
    %v799 = vpop.f32.mrb[0].mxu0
    %v800 = vadd.f32 %v635, %v799
    %v801 = vpop.f32.mrb[0].mxu0
    %802 = vmatprep.mubr.f32.mxu0 0.0
    %803 = vmatmul.mubr.f32.gmra.mrb[0].mxu0 %v486
    %v804 = vpop.f32.mrb[0].mxu0
    %v805 = vadd.f32 %v640, %v804
    %v806 = vpop.f32.mrb[0].mxu0
    %807 = vmatprep.mubr.f32.mxu0 0.0
    %808 = vmatmul.mubr.f32.gmra.mrb[0].mxu0 %v489
    %v809 = vpop.f32.mrb[0].mxu0
    %v810 = vadd.f32 %v645, %v809
    %v811 = vpop.f32.mrb[0].mxu0
    %812 = vmatprep.mubr.f32.mxu0 0.0
    %813 = vmatmul.mubr.f32.gmra.mrb[0].mxu0 %v492
    %v814 = vpop.f32.mrb[0].mxu0
    %v815 = vadd.f32 %v650, %v814
    %v816 = vpop.f32.mrb[0].mxu0
    %817 = vmatprep.mubr.f32.mxu0 0.0
    %818 = vmatmul.mubr.f32.gmra.mrb[0].mxu0 %v495
    %v819 = vpop.f32.mrb[0].mxu0
    %v820 = vadd.f32 %v655, %v819
    %v821 = vpop.f32.mrb[0].mxu0
    %822 = vmatprep.mubr.f32.mxu0 0.0
    %823 = vmatmul.mubr.f32.gmra.mrb[0].mxu0 %v498
    %v824 = vpop.f32.mrb[0].mxu0
    %v825 = vadd.f32 %v660, %v824
    %v826 = vpop.f32.mrb[0].mxu0
    %827 = vmatprep.mubr.f32.mxu0 0.0
    %828 = vmatmul.mubr.f32.gmra.mrb[0].mxu0 %v501
    %v829 = vpop.f32.mrb[0].mxu0
    %v830 = vadd.f32 %v665, %v829
    %v831 = vpop.f32.mrb[0].mxu0
    %832 = vdwg.mxu0
    %v834 = vsel %vm442, %v384, 0
    %v837 = vsel %vm442, %v387, 0
    %v840 = vsel %vm442, %v390, 0
    %v843 = vsel %vm442, %v393, 0
    %v846 = vsel %vm442, %v396, 0
    %v849 = vsel %vm442, %v399, 0
    %v852 = vsel %vm442, %v402, 0
    %v855 = vsel %vm442, %v405, 0
    %v858 = vsel %vm442, %v408, 0
    %v861 = vsel %vm442, %v411, 0
    %v864 = vsel %vm442, %v414, 0
    %v867 = vsel %vm442, %v417, 0
    %v870 = vsel %vm442, %v420, 0
    %v873 = vsel %vm442, %v423, 0
    %v876 = vsel %vm442, %v426, 0
    %v879 = vsel %vm442, %v429, 0
    %v882 = vsel %vm442, %v432, 0
    %v885 = vsel %vm442, %v435, 0
    %v888 = vsel %vm442, %v438, 0
    %v891 = vsel %vm442, %v441, 0
    %893 = vmatprep.subr.mxu0 0.0
    %894 = vmatpush1.msra.mxu0 %v52
    %895 = vmatprep.subr.mxu0 0.0
    %896 = vmatpush1.msra.mxu0 %v53
    %897 = vmatprep.subr.mxu0 0.0
    %898 = vmatpush1.msra.mxu0 %v54
    %899 = vmatprep.subr.mxu0 0.0
    %900 = vmatpush1.msra.mxu0 %v55
    %901 = vmatprep.subr.mxu0 0.0
    %902 = vmatpush1.msra.mxu0 %v56
    %903 = vmatprep.subr.mxu0 0.0
    %904 = vmatpush1.msra.mxu0 %v57
    %905 = vmatprep.subr.mxu0 0.0
    %906 = vmatpush1.msra.mxu0 %v58
    %907 = vmatprep.subr.mxu0 0.0
    %908 = vmatpush1.msra.mxu0 %v59
    %909 = vmatprep.subr.mxu0 0.0
    %910 = vmatpush1.msra.mxu0 %v60
    %911 = vmatprep.subr.mxu0 0.0
    %912 = vmatpush1.msra.mxu0 %v61
    %913 = vmatprep.subr.mxu0 0.0
    %914 = vmatpush1.msra.mxu0 %v62
    %915 = vmatprep.subr.mxu0 0.0
    %916 = vmatpush1.msra.mxu0 %v63
    %917 = vmatprep.subr.mxu0 0.0
    %918 = vmatpush1.msra.mxu0 %v64
    %919 = vmatprep.subr.mxu0 0.0
    %920 = vmatpush1.msra.mxu0 %v65
    %921 = vmatprep.subr.mxu0 0.0
    %922 = vmatpush1.msra.mxu0 %v66
    %923 = vmatprep.subr.mxu0 0.0
    %924 = vmatpush1.msra.mxu0 %v67
    %925 = vmatprep.subr.mxu0 0.0
    %926 = vmatpush1.msra.mxu0 %v68
    %927 = vmatprep.subr.mxu0 0.0
    %928 = vmatpush1.msra.mxu0 %v69
    %929 = vmatprep.subr.mxu0 0.0
    %930 = vmatpush1.msra.mxu0 %v70
    %931 = vmatprep.subr.mxu0 0.0
    %932 = vmatpush1.msra.mxu0 %v71
    %933 = vmatprep.subr.mxu0 0.0
    %934 = vmatpush1.msra.mxu0 %v72
    %935 = vmatprep.subr.mxu0 0.0
    %936 = vmatpush1.msra.mxu0 %v73
    %937 = vmatprep.subr.mxu0 0.0
    %938 = vmatpush1.msra.mxu0 %v74
    %939 = vmatprep.subr.mxu0 0.0
    %940 = vmatpush1.msra.mxu0 %v75
    %941 = vmatprep.subr.mxu0 0.0
    %942 = vmatpush1.msra.mxu0 %v76
    %943 = vmatprep.subr.mxu0 0.0
    %944 = vmatpush1.msra.mxu0 %v77
    %945 = vmatprep.subr.mxu0 0.0
    %946 = vmatpush1.msra.mxu0 %v78
    %947 = vmatprep.subr.mxu0 0.0
    %948 = vmatpush1.msra.mxu0 %v79
    %949 = vmatprep.subr.mxu0 0.0
    %950 = vmatpush1.msra.mxu0 %v80
    %951 = vmatprep.subr.mxu0 0.0
    %952 = vmatpush1.msra.mxu0 %v81
    %953 = vmatprep.subr.mxu0 0.0
    %954 = vmatpush1.msra.mxu0 %v82
    %955 = vmatprep.subr.mxu0 0.0
    %956 = vmatpush1.msra.mxu0 %v83
    %957 = vmatprep.mubr.f32.mxu0 %v383
    %958 = vmatmul.mubr.f32.gmra.mrb[0].mxu0 %v382
    %v959 = vpop.f32.mrb[0].mxu0
    %v960 = vadd.f32 0.0, %v959
    %v961 = vpop.f32.mrb[0].mxu0
    %962 = vmatprep.mubr.f32.mxu0 %v386
    %963 = vmatmul.mubr.f32.gmra.mrb[0].mxu0 %v385
    %v964 = vpop.f32.mrb[0].mxu0
    %v965 = vadd.f32 0.0, %v964
    %v966 = vpop.f32.mrb[0].mxu0
    %967 = vmatprep.mubr.f32.mxu0 %v389
    %968 = vmatmul.mubr.f32.gmra.mrb[0].mxu0 %v388
    %v969 = vpop.f32.mrb[0].mxu0
    %v970 = vadd.f32 0.0, %v969
    %v971 = vpop.f32.mrb[0].mxu0
    %972 = vmatprep.mubr.f32.mxu0 %v392
    %973 = vmatmul.mubr.f32.gmra.mrb[0].mxu0 %v391
    %v974 = vpop.f32.mrb[0].mxu0
    %v975 = vadd.f32 0.0, %v974
    %v976 = vpop.f32.mrb[0].mxu0
    %977 = vmatprep.mubr.f32.mxu0 %v395
    %978 = vmatmul.mubr.f32.gmra.mrb[0].mxu0 %v394
    %v979 = vpop.f32.mrb[0].mxu0
    %v980 = vadd.f32 0.0, %v979
    %v981 = vpop.f32.mrb[0].mxu0
    %982 = vmatprep.mubr.f32.mxu0 %v398
    %983 = vmatmul.mubr.f32.gmra.mrb[0].mxu0 %v397
    %v984 = vpop.f32.mrb[0].mxu0
    %v985 = vadd.f32 0.0, %v984
    %v986 = vpop.f32.mrb[0].mxu0
    %987 = vmatprep.mubr.f32.mxu0 %v401
    %988 = vmatmul.mubr.f32.gmra.mrb[0].mxu0 %v400
    %v989 = vpop.f32.mrb[0].mxu0
    %v990 = vadd.f32 0.0, %v989
    %v991 = vpop.f32.mrb[0].mxu0
    %992 = vmatprep.mubr.f32.mxu0 %v404
    %993 = vmatmul.mubr.f32.gmra.mrb[0].mxu0 %v403
    %v994 = vpop.f32.mrb[0].mxu0
    %v995 = vadd.f32 0.0, %v994
    %v996 = vpop.f32.mrb[0].mxu0
    %997 = vmatprep.mubr.f32.mxu0 %v407
    %998 = vmatmul.mubr.f32.gmra.mrb[0].mxu0 %v406
    %v999 = vpop.f32.mrb[0].mxu0
    %v1000 = vadd.f32 0.0, %v999
    %v1001 = vpop.f32.mrb[0].mxu0
    %1002 = vmatprep.mubr.f32.mxu0 %v410
    %1003 = vmatmul.mubr.f32.gmra.mrb[0].mxu0 %v409
    %v1004 = vpop.f32.mrb[0].mxu0
    %v1005 = vadd.f32 0.0, %v1004
    %v1006 = vpop.f32.mrb[0].mxu0
    %1007 = vmatprep.mubr.f32.mxu0 %v413
    %1008 = vmatmul.mubr.f32.gmra.mrb[0].mxu0 %v412
    %v1009 = vpop.f32.mrb[0].mxu0
    %v1010 = vadd.f32 0.0, %v1009
    %v1011 = vpop.f32.mrb[0].mxu0
    %1012 = vmatprep.mubr.f32.mxu0 %v416
    %1013 = vmatmul.mubr.f32.gmra.mrb[0].mxu0 %v415
    %v1014 = vpop.f32.mrb[0].mxu0
    %v1015 = vadd.f32 0.0, %v1014
    %v1016 = vpop.f32.mrb[0].mxu0
    %1017 = vmatprep.mubr.f32.mxu0 %v419
    %1018 = vmatmul.mubr.f32.gmra.mrb[0].mxu0 %v418
    %v1019 = vpop.f32.mrb[0].mxu0
    %v1020 = vadd.f32 0.0, %v1019
    %v1021 = vpop.f32.mrb[0].mxu0
    %1022 = vmatprep.mubr.f32.mxu0 %v422
    %1023 = vmatmul.mubr.f32.gmra.mrb[0].mxu0 %v421
    %v1024 = vpop.f32.mrb[0].mxu0
    %v1025 = vadd.f32 0.0, %v1024
    %v1026 = vpop.f32.mrb[0].mxu0
    %1027 = vmatprep.mubr.f32.mxu0 %v425
    %1028 = vmatmul.mubr.f32.gmra.mrb[0].mxu0 %v424
    %v1029 = vpop.f32.mrb[0].mxu0
    %v1030 = vadd.f32 0.0, %v1029
    %v1031 = vpop.f32.mrb[0].mxu0
    %1032 = vmatprep.mubr.f32.mxu0 %v428
    %1033 = vmatmul.mubr.f32.gmra.mrb[0].mxu0 %v427
    %v1034 = vpop.f32.mrb[0].mxu0
    %v1035 = vadd.f32 0.0, %v1034
    %v1036 = vpop.f32.mrb[0].mxu0
    %1037 = vmatprep.mubr.f32.mxu0 %v431
    %1038 = vmatmul.mubr.f32.gmra.mrb[0].mxu0 %v430
    %v1039 = vpop.f32.mrb[0].mxu0
    %v1040 = vadd.f32 0.0, %v1039
    %v1041 = vpop.f32.mrb[0].mxu0
    %1042 = vmatprep.mubr.f32.mxu0 %v434
    %1043 = vmatmul.mubr.f32.gmra.mrb[0].mxu0 %v433
    %v1044 = vpop.f32.mrb[0].mxu0
    %v1045 = vadd.f32 0.0, %v1044
    %v1046 = vpop.f32.mrb[0].mxu0
    %1047 = vmatprep.mubr.f32.mxu0 %v437
    %1048 = vmatmul.mubr.f32.gmra.mrb[0].mxu0 %v436
    %v1049 = vpop.f32.mrb[0].mxu0
    %v1050 = vadd.f32 0.0, %v1049
    %v1051 = vpop.f32.mrb[0].mxu0
    %1052 = vmatprep.mubr.f32.mxu0 %v440
    %1053 = vmatmul.mubr.f32.gmra.mrb[0].mxu0 %v439
    %v1054 = vpop.f32.mrb[0].mxu0
    %v1055 = vadd.f32 0.0, %v1054
    %v1056 = vpop.f32.mrb[0].mxu0
    %1057 = vdwg.mxu0
    %1058 = vmatprep.subr.mxu0 0.0
    %1059 = vmatpush1.msra.mxu0 %v84
    %1060 = vmatprep.subr.mxu0 0.0
    %1061 = vmatpush1.msra.mxu0 %v85
    %1062 = vmatprep.subr.mxu0 0.0
    %1063 = vmatpush1.msra.mxu0 %v86
    %1064 = vmatprep.subr.mxu0 0.0
    %1065 = vmatpush1.msra.mxu0 %v87
    %1066 = vmatprep.subr.mxu0 0.0
    %1067 = vmatpush1.msra.mxu0 %v88
    %1068 = vmatprep.subr.mxu0 0.0
    %1069 = vmatpush1.msra.mxu0 %v89
    %1070 = vmatprep.subr.mxu0 0.0
    %1071 = vmatpush1.msra.mxu0 %v90
    %1072 = vmatprep.subr.mxu0 0.0
    %1073 = vmatpush1.msra.mxu0 %v91
    %1074 = vmatprep.subr.mxu0 0.0
    %1075 = vmatpush1.msra.mxu0 0.0
    %1076 = vmatprep.subr.mxu0 0.0
    %1077 = vmatpush1.msra.mxu0 0.0
    %1078 = vmatprep.subr.mxu0 0.0
    %1079 = vmatpush1.msra.mxu0 0.0
    %1080 = vmatprep.subr.mxu0 0.0
    %1081 = vmatpush1.msra.mxu0 0.0
    %1082 = vmatprep.subr.mxu0 0.0
    %1083 = vmatpush1.msra.mxu0 0.0
    %1084 = vmatprep.subr.mxu0 0.0
    %1085 = vmatpush1.msra.mxu0 0.0
    %1086 = vmatprep.subr.mxu0 0.0
    %1087 = vmatpush1.msra.mxu0 0.0
    %1088 = vmatprep.subr.mxu0 0.0
    %1089 = vmatpush1.msra.mxu0 0.0
    %1090 = vmatprep.subr.mxu0 0.0
    %1091 = vmatpush1.msra.mxu0 0.0
    %1092 = vmatprep.subr.mxu0 0.0
    %1093 = vmatpush1.msra.mxu0 0.0
    %1094 = vmatprep.subr.mxu0 0.0
    %1095 = vmatpush1.msra.mxu0 0.0
    %1096 = vmatprep.subr.mxu0 0.0
    %1097 = vmatpush1.msra.mxu0 0.0
    %1098 = vmatprep.subr.mxu0 0.0
    %1099 = vmatpush1.msra.mxu0 0.0
    %1100 = vmatprep.subr.mxu0 0.0
    %1101 = vmatpush1.msra.mxu0 0.0
    %1102 = vmatprep.subr.mxu0 0.0
    %1103 = vmatpush1.msra.mxu0 0.0
    %1104 = vmatprep.subr.mxu0 0.0
    %1105 = vmatpush1.msra.mxu0 0.0
    %1106 = vmatprep.subr.mxu0 0.0
    %1107 = vmatpush1.msra.mxu0 0.0
    %1108 = vmatprep.subr.mxu0 0.0
    %1109 = vmatpush1.msra.mxu0 0.0
    %1110 = vmatprep.subr.mxu0 0.0
    %1111 = vmatpush1.msra.mxu0 0.0
    %1112 = vmatprep.subr.mxu0 0.0
    %1113 = vmatpush1.msra.mxu0 0.0
    %1114 = vmatprep.subr.mxu0 0.0
    %1115 = vmatpush1.msra.mxu0 0.0
    %1116 = vmatprep.subr.mxu0 0.0
    %1117 = vmatpush1.msra.mxu0 0.0
    %1118 = vmatprep.subr.mxu0 0.0
    %1119 = vmatpush1.msra.mxu0 0.0
    %1120 = vmatprep.subr.mxu0 0.0
    %1121 = vmatpush1.msra.mxu0 0.0
    %1122 = vmatprep.mubr.f32.mxu0 0.0
    %1123 = vmatmul.mubr.f32.gmra.mrb[0].mxu0 %v834
    %v1124 = vpop.f32.mrb[0].mxu0
    %v1125 = vadd.f32 %v960, %v1124
    %v1126 = vpop.f32.mrb[0].mxu0
    %1127 = vmatprep.mubr.f32.mxu0 0.0
    %1128 = vmatmul.mubr.f32.gmra.mrb[0].mxu0 %v837
    %v1129 = vpop.f32.mrb[0].mxu0
    %v1130 = vadd.f32 %v965, %v1129
    %v1131 = vpop.f32.mrb[0].mxu0
    %1132 = vmatprep.mubr.f32.mxu0 0.0
    %1133 = vmatmul.mubr.f32.gmra.mrb[0].mxu0 %v840
    %v1134 = vpop.f32.mrb[0].mxu0
    %v1135 = vadd.f32 %v970, %v1134
    %v1136 = vpop.f32.mrb[0].mxu0
    %1137 = vmatprep.mubr.f32.mxu0 0.0
    %1138 = vmatmul.mubr.f32.gmra.mrb[0].mxu0 %v843
    %v1139 = vpop.f32.mrb[0].mxu0
    %v1140 = vadd.f32 %v975, %v1139
    %v1141 = vpop.f32.mrb[0].mxu0
    %1142 = vmatprep.mubr.f32.mxu0 0.0
    %1143 = vmatmul.mubr.f32.gmra.mrb[0].mxu0 %v846
    %v1144 = vpop.f32.mrb[0].mxu0
    %v1145 = vadd.f32 %v980, %v1144
    %v1146 = vpop.f32.mrb[0].mxu0
    %1147 = vmatprep.mubr.f32.mxu0 0.0
    %1148 = vmatmul.mubr.f32.gmra.mrb[0].mxu0 %v849
    %v1149 = vpop.f32.mrb[0].mxu0
    %v1150 = vadd.f32 %v985, %v1149
    %v1151 = vpop.f32.mrb[0].mxu0
    %1152 = vmatprep.mubr.f32.mxu0 0.0
    %1153 = vmatmul.mubr.f32.gmra.mrb[0].mxu0 %v852
    %v1154 = vpop.f32.mrb[0].mxu0
    %v1155 = vadd.f32 %v990, %v1154
    %v1156 = vpop.f32.mrb[0].mxu0
    %1157 = vmatprep.mubr.f32.mxu0 0.0
    %1158 = vmatmul.mubr.f32.gmra.mrb[0].mxu0 %v855
    %v1159 = vpop.f32.mrb[0].mxu0
    %v1160 = vadd.f32 %v995, %v1159
    %v1161 = vpop.f32.mrb[0].mxu0
    %1162 = vmatprep.mubr.f32.mxu0 0.0
    %1163 = vmatmul.mubr.f32.gmra.mrb[0].mxu0 %v858
    %v1164 = vpop.f32.mrb[0].mxu0
    %v1165 = vadd.f32 %v1000, %v1164
    %v1166 = vpop.f32.mrb[0].mxu0
    %1167 = vmatprep.mubr.f32.mxu0 0.0
    %1168 = vmatmul.mubr.f32.gmra.mrb[0].mxu0 %v861
    %v1169 = vpop.f32.mrb[0].mxu0
    %v1170 = vadd.f32 %v1005, %v1169
    %v1171 = vpop.f32.mrb[0].mxu0
    %1172 = vmatprep.mubr.f32.mxu0 0.0
    %1173 = vmatmul.mubr.f32.gmra.mrb[0].mxu0 %v864
    %v1174 = vpop.f32.mrb[0].mxu0
    %v1175 = vadd.f32 %v1010, %v1174
    %v1176 = vpop.f32.mrb[0].mxu0
    %1177 = vmatprep.mubr.f32.mxu0 0.0
    %1178 = vmatmul.mubr.f32.gmra.mrb[0].mxu0 %v867
    %v1179 = vpop.f32.mrb[0].mxu0
    %v1180 = vadd.f32 %v1015, %v1179
    %v1181 = vpop.f32.mrb[0].mxu0
    %1182 = vmatprep.mubr.f32.mxu0 0.0
    %1183 = vmatmul.mubr.f32.gmra.mrb[0].mxu0 %v870
    %v1184 = vpop.f32.mrb[0].mxu0
    %v1185 = vadd.f32 %v1020, %v1184
    %v1186 = vpop.f32.mrb[0].mxu0
    %1187 = vmatprep.mubr.f32.mxu0 0.0
    %1188 = vmatmul.mubr.f32.gmra.mrb[0].mxu0 %v873
    %v1189 = vpop.f32.mrb[0].mxu0
    %v1190 = vadd.f32 %v1025, %v1189
    %v1191 = vpop.f32.mrb[0].mxu0
    %1192 = vmatprep.mubr.f32.mxu0 0.0
    %1193 = vmatmul.mubr.f32.gmra.mrb[0].mxu0 %v876
    %v1194 = vpop.f32.mrb[0].mxu0
    %v1195 = vadd.f32 %v1030, %v1194
    %v1196 = vpop.f32.mrb[0].mxu0
    %1197 = vmatprep.mubr.f32.mxu0 0.0
    %1198 = vmatmul.mubr.f32.gmra.mrb[0].mxu0 %v879
    %v1199 = vpop.f32.mrb[0].mxu0
    %v1200 = vadd.f32 %v1035, %v1199
    %v1201 = vpop.f32.mrb[0].mxu0
    %1202 = vmatprep.mubr.f32.mxu0 0.0
    %1203 = vmatmul.mubr.f32.gmra.mrb[0].mxu0 %v882
    %v1204 = vpop.f32.mrb[0].mxu0
    %v1205 = vadd.f32 %v1040, %v1204
    %v1206 = vpop.f32.mrb[0].mxu0
    %1207 = vmatprep.mubr.f32.mxu0 0.0
    %1208 = vmatmul.mubr.f32.gmra.mrb[0].mxu0 %v885
    %v1209 = vpop.f32.mrb[0].mxu0
    %v1210 = vadd.f32 %v1045, %v1209
    %v1211 = vpop.f32.mrb[0].mxu0
    %1212 = vmatprep.mubr.f32.mxu0 0.0
    %1213 = vmatmul.mubr.f32.gmra.mrb[0].mxu0 %v888
    %v1214 = vpop.f32.mrb[0].mxu0
    %v1215 = vadd.f32 %v1050, %v1214
    %v1216 = vpop.f32.mrb[0].mxu0
    %1217 = vmatprep.mubr.f32.mxu0 0.0
    %1218 = vmatmul.mubr.f32.gmra.mrb[0].mxu0 %v891
    %v1219 = vpop.f32.mrb[0].mxu0
    %v1220 = vadd.f32 %v1055, %v1219
    %v1221 = vpop.f32.mrb[0].mxu0
    %1222 = vdwg.mxu0
    %vm1243 = vcmask 1040384
    %v1244 = vrot.slane %v1125, 7
    %v1245 = vrot.slane %v1130, 7
    %v1246 = vsel %vm1243, %v1244, %v1245
    %v1247 = vrot.slane %v1135, 7
    %v1248 = vsel %vm1243, %v1245, %v1247
    %v1249 = vrot.slane %v1140, 7
    %v1250 = vsel %vm1243, %v1247, %v1249
    %v1251 = vrot.slane %v1145, 7
    %v1252 = vsel %vm1243, %v1249, %v1251
    %v1253 = vrot.slane %v1150, 7
    %v1254 = vsel %vm1243, %v1251, %v1253
    %v1255 = vrot.slane %v1155, 7
    %v1256 = vsel %vm1243, %v1253, %v1255
    %v1257 = vrot.slane %v1160, 7
    %v1258 = vsel %vm1243, %v1255, %v1257
    %v1259 = vrot.slane %v1165, 7
    %v1260 = vsel %vm1243, %v1257, %v1259
    %v1261 = vrot.slane %v1170, 7
    %v1262 = vsel %vm1243, %v1259, %v1261
    %v1263 = vrot.slane %v1175, 7
    %v1264 = vsel %vm1243, %v1261, %v1263
    %v1265 = vrot.slane %v1180, 7
    %v1266 = vsel %vm1243, %v1263, %v1265
    %v1267 = vrot.slane %v1185, 7
    %v1268 = vsel %vm1243, %v1265, %v1267
    %v1269 = vrot.slane %v1190, 7
    %v1270 = vsel %vm1243, %v1267, %v1269
    %v1271 = vrot.slane %v1195, 7
    %v1272 = vsel %vm1243, %v1269, %v1271
    %v1273 = vrot.slane %v1200, 7
    %v1274 = vsel %vm1243, %v1271, %v1273
    %v1275 = vrot.slane %v1205, 7
    %v1276 = vsel %vm1243, %v1273, %v1275
    %v1277 = vrot.slane %v1210, 7
    %v1278 = vsel %vm1243, %v1275, %v1277
    %v1279 = vrot.slane %v1215, 7
    %v1280 = vsel %vm1243, %v1277, %v1279
    %v1281 = vrot.slane %v1220, 7
    %v1282 = vsel %vm1243, %v1279, %v1281
    %v1303 = vsel %vm1243, 0.0, %v1244
    %vm1324 = vcmask 1046528
    %v1325 = vrot.slane %v735, 1
    %v1326 = vrot.slane %v740, 1
    %v1327 = vsel %vm1324, %v1325, %v1326
    %v1328 = vrot.slane %v745, 1
    %v1329 = vsel %vm1324, %v1326, %v1328
    %v1330 = vrot.slane %v750, 1
    %v1331 = vsel %vm1324, %v1328, %v1330
    %v1332 = vrot.slane %v755, 1
    %v1333 = vsel %vm1324, %v1330, %v1332
    %v1334 = vrot.slane %v760, 1
    %v1335 = vsel %vm1324, %v1332, %v1334
    %v1336 = vrot.slane %v765, 1
    %v1337 = vsel %vm1324, %v1334, %v1336
    %v1338 = vrot.slane %v770, 1
    %v1339 = vsel %vm1324, %v1336, %v1338
    %v1340 = vrot.slane %v775, 1
    %v1341 = vsel %vm1324, %v1338, %v1340
    %v1342 = vrot.slane %v780, 1
    %v1343 = vsel %vm1324, %v1340, %v1342
    %v1344 = vrot.slane %v785, 1
    %v1345 = vsel %vm1324, %v1342, %v1344
    %v1346 = vrot.slane %v790, 1
    %v1347 = vsel %vm1324, %v1344, %v1346
    %v1348 = vrot.slane %v795, 1
    %v1349 = vsel %vm1324, %v1346, %v1348
    %v1350 = vrot.slane %v800, 1
    %v1351 = vsel %vm1324, %v1348, %v1350
    %v1352 = vrot.slane %v805, 1
    %v1353 = vsel %vm1324, %v1350, %v1352
    %v1354 = vrot.slane %v810, 1
    %v1355 = vsel %vm1324, %v1352, %v1354
    %v1356 = vrot.slane %v815, 1
    %v1357 = vsel %vm1324, %v1354, %v1356
    %v1358 = vrot.slane %v820, 1
    %v1359 = vsel %vm1324, %v1356, %v1358
    %v1360 = vrot.slane %v825, 1
    %v1361 = vsel %vm1324, %v1358, %v1360
    %v1362 = vrot.slane %v830, 1
    %v1363 = vsel %vm1324, %v1360, %v1362
    %v1365 = vsel %vm1324, %v1362, 0.0
    %1366 = vrot.lane.b32.xlu0 %v735, 8
    %v1367 = vpop.permute.xlu0 %1366
    %1368 = vrot.lane.b32.xlu0 %v740, 8
    %v1369 = vpop.permute.xlu0 %1368
    %1370 = vrot.lane.b32.xlu0 %v745, 8
    %v1371 = vpop.permute.xlu0 %1370
    %1372 = vrot.lane.b32.xlu0 %v750, 8
    %v1373 = vpop.permute.xlu0 %1372
    %1374 = vrot.lane.b32.xlu0 %v755, 8
    %v1375 = vpop.permute.xlu0 %1374
    %1376 = vrot.lane.b32.xlu0 %v760, 8
    %v1377 = vpop.permute.xlu0 %1376
    %1378 = vrot.lane.b32.xlu0 %v765, 8
    %v1379 = vpop.permute.xlu0 %1378
    %1380 = vrot.lane.b32.xlu0 %v770, 8
    %v1381 = vpop.permute.xlu0 %1380
    %1382 = vrot.lane.b32.xlu0 %v775, 8
    %v1383 = vpop.permute.xlu0 %1382
    %1384 = vrot.lane.b32.xlu0 %v780, 8
    %v1385 = vpop.permute.xlu0 %1384
    %1386 = vrot.lane.b32.xlu0 %v785, 8
    %v1387 = vpop.permute.xlu0 %1386
    %1388 = vrot.lane.b32.xlu0 %v790, 8
    %v1389 = vpop.permute.xlu0 %1388
    %1390 = vrot.lane.b32.xlu0 %v795, 8
    %v1391 = vpop.permute.xlu0 %1390
    %1392 = vrot.lane.b32.xlu0 %v800, 8
    %v1393 = vpop.permute.xlu0 %1392
    %1394 = vrot.lane.b32.xlu0 %v805, 8
    %v1395 = vpop.permute.xlu0 %1394
    %1396 = vrot.lane.b32.xlu0 %v810, 8
    %v1397 = vpop.permute.xlu0 %1396
    %1398 = vrot.lane.b32.xlu0 %v815, 8
    %v1399 = vpop.permute.xlu0 %1398
    %1400 = vrot.lane.b32.xlu0 %v820, 8
    %v1401 = vpop.permute.xlu0 %1400
    %1402 = vrot.lane.b32.xlu0 %v825, 8
    %v1403 = vpop.permute.xlu0 %1402
    %1404 = vrot.lane.b32.xlu0 %v830, 8
    %v1405 = vpop.permute.xlu0 %1404
    %1426 = vrot.lane.b32.xlu0 %v1125, 16
    %v1427 = vpop.permute.xlu0 %1426
    %1428 = vrot.lane.b32.xlu0 %v1130, 16
    %v1429 = vpop.permute.xlu0 %1428
    %1430 = vrot.lane.b32.xlu0 %v1135, 16
    %v1431 = vpop.permute.xlu0 %1430
    %1432 = vrot.lane.b32.xlu0 %v1140, 16
    %v1433 = vpop.permute.xlu0 %1432
    %1434 = vrot.lane.b32.xlu0 %v1145, 16
    %v1435 = vpop.permute.xlu0 %1434
    %1436 = vrot.lane.b32.xlu0 %v1150, 16
    %v1437 = vpop.permute.xlu0 %1436
    %1438 = vrot.lane.b32.xlu0 %v1155, 16
    %v1439 = vpop.permute.xlu0 %1438
    %1440 = vrot.lane.b32.xlu0 %v1160, 16
    %v1441 = vpop.permute.xlu0 %1440
    %1442 = vrot.lane.b32.xlu0 %v1165, 16
    %v1443 = vpop.permute.xlu0 %1442
    %1444 = vrot.lane.b32.xlu0 %v1170, 16
    %v1445 = vpop.permute.xlu0 %1444
    %1446 = vrot.lane.b32.xlu0 %v1175, 16
    %v1447 = vpop.permute.xlu0 %1446
    %1448 = vrot.lane.b32.xlu0 %v1180, 16
    %v1449 = vpop.permute.xlu0 %1448
    %1450 = vrot.lane.b32.xlu0 %v1185, 16
    %v1451 = vpop.permute.xlu0 %1450
    %1452 = vrot.lane.b32.xlu0 %v1190, 16
    %v1453 = vpop.permute.xlu0 %1452
    %1454 = vrot.lane.b32.xlu0 %v1195, 16
    %v1455 = vpop.permute.xlu0 %1454
    %1456 = vrot.lane.b32.xlu0 %v1200, 16
    %v1457 = vpop.permute.xlu0 %1456
    %1458 = vrot.lane.b32.xlu0 %v1205, 16
    %v1459 = vpop.permute.xlu0 %1458
    %1460 = vrot.lane.b32.xlu0 %v1210, 16
    %v1461 = vpop.permute.xlu0 %1460
    %1462 = vrot.lane.b32.xlu0 %v1215, 16
    %v1463 = vpop.permute.xlu0 %1462
    %1464 = vrot.lane.b32.xlu0 %v1220, 16
    %v1465 = vpop.permute.xlu0 %1464
    %1487 = vrot.lane.b32.xlu0 %v1327, 24
    %v1488 = vpop.permute.xlu0 %1487
    %1489 = vrot.lane.b32.xlu0 %v1329, 24
    %v1490 = vpop.permute.xlu0 %1489
    %1491 = vrot.lane.b32.xlu0 %v1331, 24
    %v1492 = vpop.permute.xlu0 %1491
    %1493 = vrot.lane.b32.xlu0 %v1333, 24
    %v1494 = vpop.permute.xlu0 %1493
    %1495 = vrot.lane.b32.xlu0 %v1335, 24
    %v1496 = vpop.permute.xlu0 %1495
    %1497 = vrot.lane.b32.xlu0 %v1337, 24
    %v1498 = vpop.permute.xlu0 %1497
    %1499 = vrot.lane.b32.xlu0 %v1339, 24
    %v1500 = vpop.permute.xlu0 %1499
    %1501 = vrot.lane.b32.xlu0 %v1341, 24
    %v1502 = vpop.permute.xlu0 %1501
    %1503 = vrot.lane.b32.xlu0 %v1343, 24
    %v1504 = vpop.permute.xlu0 %1503
    %1505 = vrot.lane.b32.xlu0 %v1345, 24
    %v1506 = vpop.permute.xlu0 %1505
    %1507 = vrot.lane.b32.xlu0 %v1347, 24
    %v1508 = vpop.permute.xlu0 %1507
    %1509 = vrot.lane.b32.xlu0 %v1349, 24
    %v1510 = vpop.permute.xlu0 %1509
    %1511 = vrot.lane.b32.xlu0 %v1351, 24
    %v1512 = vpop.permute.xlu0 %1511
    %1513 = vrot.lane.b32.xlu0 %v1353, 24
    %v1514 = vpop.permute.xlu0 %1513
    %1515 = vrot.lane.b32.xlu0 %v1355, 24
    %v1516 = vpop.permute.xlu0 %1515
    %1517 = vrot.lane.b32.xlu0 %v1357, 24
    %v1518 = vpop.permute.xlu0 %1517
    %1519 = vrot.lane.b32.xlu0 %v1359, 24
    %v1520 = vpop.permute.xlu0 %1519
    %1521 = vrot.lane.b32.xlu0 %v1361, 24
    %v1522 = vpop.permute.xlu0 %1521
    %1523 = vrot.lane.b32.xlu0 %v1363, 24
    %v1524 = vpop.permute.xlu0 %1523
    %1525 = vrot.lane.b32.xlu0 %v1365, 24
    %v1526 = vpop.permute.xlu0 %1525
    %vm1547 = vcmask 64512
    %v1548 = vsel %vm1547, %v1303, %v1367
    %v1549 = vsel %vm1547, %v1246, %v1369
    %v1550 = vsel %vm1547, %v1248, %v1371
    %v1551 = vsel %vm1547, %v1250, %v1373
    %v1552 = vsel %vm1547, %v1252, %v1375
    %v1553 = vsel %vm1547, %v1254, %v1377
    %v1554 = vsel %vm1547, %v1256, %v1379
    %v1555 = vsel %vm1547, %v1258, %v1381
    %v1556 = vsel %vm1547, %v1260, %v1383
    %v1557 = vsel %vm1547, %v1262, %v1385
    %v1558 = vsel %vm1547, %v1264, %v1387
    %v1559 = vsel %vm1547, %v1266, %v1389
    %v1560 = vsel %vm1547, %v1268, %v1391
    %v1561 = vsel %vm1547, %v1270, %v1393
    %v1562 = vsel %vm1547, %v1272, %v1395
    %v1563 = vsel %vm1547, %v1274, %v1397
    %v1564 = vsel %vm1547, %v1276, %v1399
    %v1565 = vsel %vm1547, %v1278, %v1401
    %v1566 = vsel %vm1547, %v1280, %v1403
    %v1567 = vsel %vm1547, %v1282, %v1405
    %vm1568 = vcmask 130048
    %v1569 = vsel %vm1568, %v1548, %v1427
    %v1570 = vsel %vm1568, %v1549, %v1429
    %v1571 = vsel %vm1568, %v1550, %v1431
    %v1572 = vsel %vm1568, %v1551, %v1433
    %v1573 = vsel %vm1568, %v1552, %v1435
    %v1574 = vsel %vm1568, %v1553, %v1437
    %v1575 = vsel %vm1568, %v1554, %v1439
    %v1576 = vsel %vm1568, %v1555, %v1441
    %v1577 = vsel %vm1568, %v1556, %v1443
    %v1578 = vsel %vm1568, %v1557, %v1445
    %v1579 = vsel %vm1568, %v1558, %v1447
    %v1580 = vsel %vm1568, %v1559, %v1449
    %v1581 = vsel %vm1568, %v1560, %v1451
    %v1582 = vsel %vm1568, %v1561, %v1453
    %v1583 = vsel %vm1568, %v1562, %v1455
    %v1584 = vsel %vm1568, %v1563, %v1457
    %v1585 = vsel %vm1568, %v1564, %v1459
    %v1586 = vsel %vm1568, %v1565, %v1461
    %v1587 = vsel %vm1568, %v1566, %v1463
    %v1588 = vsel %vm1568, %v1567, %v1465
    %vm1589 = vcmask 195584
    %v1590 = vsel %vm1589, %v1569, %v1488
    %v1591 = vsel %vm1589, %v1570, %v1490
    %v1592 = vsel %vm1589, %v1571, %v1492
    %v1593 = vsel %vm1589, %v1572, %v1494
    %v1594 = vsel %vm1589, %v1573, %v1496
    %v1595 = vsel %vm1589, %v1574, %v1498
    %v1596 = vsel %vm1589, %v1575, %v1500
    %v1597 = vsel %vm1589, %v1576, %v1502
    %v1598 = vsel %vm1589, %v1577, %v1504
    %v1599 = vsel %vm1589, %v1578, %v1506
    %v1600 = vsel %vm1589, %v1579, %v1508
    %v1601 = vsel %vm1589, %v1580, %v1510
    %v1602 = vsel %vm1589, %v1581, %v1512
    %v1603 = vsel %vm1589, %v1582, %v1514
    %v1604 = vsel %vm1589, %v1583, %v1516
    %v1605 = vsel %vm1589, %v1584, %v1518
    %v1606 = vsel %vm1589, %v1585, %v1520
    %v1607 = vsel %vm1589, %v1586, %v1522
    %v1608 = vsel %vm1589, %v1587, %v1524
    %v1609 = vsel %vm1589, %v1588, %v1526
    %1610 = vmatprep.subr.mxu0 0.0
    %1611 = vmatpush1.msra.mxu0 %v93
    %1612 = vmatprep.subr.mxu0 0.0
    %1613 = vmatpush1.msra.mxu0 %v94
    %1614 = vmatprep.subr.mxu0 0.0
    %1615 = vmatpush1.msra.mxu0 %v95
    %1616 = vmatprep.subr.mxu0 0.0
    %1617 = vmatpush1.msra.mxu0 %v96
    %1618 = vmatprep.subr.mxu0 0.0
    %1619 = vmatpush1.msra.mxu0 %v97
    %1620 = vmatprep.subr.mxu0 0.0
    %1621 = vmatpush1.msra.mxu0 %v98
    %1622 = vmatprep.subr.mxu0 0.0
    %1623 = vmatpush1.msra.mxu0 %v99
    %1624 = vmatprep.subr.mxu0 0.0
    %1625 = vmatpush1.msra.mxu0 %v100
    %1626 = vmatprep.subr.mxu0 0.0
    %1627 = vmatpush1.msra.mxu0 %v101
    %1628 = vmatprep.subr.mxu0 0.0
    %1629 = vmatpush1.msra.mxu0 %v102
    %1630 = vmatprep.subr.mxu0 0.0
    %1631 = vmatpush1.msra.mxu0 %v103
    %1632 = vmatprep.subr.mxu0 0.0
    %1633 = vmatpush1.msra.mxu0 %v104
    %1634 = vmatprep.subr.mxu0 0.0
    %1635 = vmatpush1.msra.mxu0 %v105
    %1636 = vmatprep.subr.mxu0 0.0
    %1637 = vmatpush1.msra.mxu0 %v106
    %1638 = vmatprep.subr.mxu0 0.0
    %1639 = vmatpush1.msra.mxu0 %v107
    %1640 = vmatprep.subr.mxu0 0.0
    %1641 = vmatpush1.msra.mxu0 %v108
    %1642 = vmatprep.subr.mxu0 0.0
    %1643 = vmatpush1.msra.mxu0 %v109
    %1644 = vmatprep.subr.mxu0 0.0
    %1645 = vmatpush1.msra.mxu0 %v110
    %1646 = vmatprep.subr.mxu0 0.0
    %1647 = vmatpush1.msra.mxu0 %v111
    %1648 = vmatprep.subr.mxu0 0.0
    %1649 = vmatpush1.msra.mxu0 %v112
    %1650 = vmatprep.subr.mxu0 0.0
    %1651 = vmatpush1.msra.mxu0 %v113
    %1652 = vmatprep.subr.mxu0 0.0
    %1653 = vmatpush1.msra.mxu0 %v114
    %1654 = vmatprep.subr.mxu0 0.0
    %1655 = vmatpush1.msra.mxu0 %v115
    %1656 = vmatprep.subr.mxu0 0.0
    %1657 = vmatpush1.msra.mxu0 %v116
    %1658 = vmatprep.subr.mxu0 0.0
    %1659 = vmatpush1.msra.mxu0 %v117
    %1660 = vmatprep.subr.mxu0 0.0
    %1661 = vmatpush1.msra.mxu0 %v118
    %1662 = vmatprep.subr.mxu0 0.0
    %1663 = vmatpush1.msra.mxu0 %v119
    %1664 = vmatprep.subr.mxu0 0.0
    %1665 = vmatpush1.msra.mxu0 %v120
    %1666 = vmatprep.subr.mxu0 0.0
    %1667 = vmatpush1.msra.mxu0 %v121
    %1668 = vmatprep.subr.mxu0 0.0
    %1669 = vmatpush1.msra.mxu0 %v122
    %1670 = vmatprep.subr.mxu0 0.0
    %1671 = vmatpush1.msra.mxu0 %v123
    %1672 = vmatprep.subr.mxu0 0.0
    %1673 = vmatpush1.msra.mxu0 %v124
    %1674 = vmatprep.mubr.f32.mxu0 %v243
    %1675 = vmatmul.mubr.f32.gmra.mrb[0].mxu0 %v242
    %v1676 = vpop.f32.mrb[0].mxu0
    %v1677 = vadd.f32 0.0, %v1676
    %v1678 = vpop.f32.mrb[0].mxu0
    %1679 = vmatprep.mubr.f32.mxu0 %v246
    %1680 = vmatmul.mubr.f32.gmra.mrb[0].mxu0 %v245
    %v1681 = vpop.f32.mrb[0].mxu0
    %v1682 = vadd.f32 0.0, %v1681
    %v1683 = vpop.f32.mrb[0].mxu0
    %1684 = vmatprep.mubr.f32.mxu0 %v249
    %1685 = vmatmul.mubr.f32.gmra.mrb[0].mxu0 %v248
    %v1686 = vpop.f32.mrb[0].mxu0
    %v1687 = vadd.f32 0.0, %v1686
    %v1688 = vpop.f32.mrb[0].mxu0
    %1689 = vmatprep.mubr.f32.mxu0 %v252
    %1690 = vmatmul.mubr.f32.gmra.mrb[0].mxu0 %v251
    %v1691 = vpop.f32.mrb[0].mxu0
    %v1692 = vadd.f32 0.0, %v1691
    %v1693 = vpop.f32.mrb[0].mxu0
    %1694 = vmatprep.mubr.f32.mxu0 %v255
    %1695 = vmatmul.mubr.f32.gmra.mrb[0].mxu0 %v254
    %v1696 = vpop.f32.mrb[0].mxu0
    %v1697 = vadd.f32 0.0, %v1696
    %v1698 = vpop.f32.mrb[0].mxu0
    %1699 = vmatprep.mubr.f32.mxu0 %v258
    %1700 = vmatmul.mubr.f32.gmra.mrb[0].mxu0 %v257
    %v1701 = vpop.f32.mrb[0].mxu0
    %v1702 = vadd.f32 0.0, %v1701
    %v1703 = vpop.f32.mrb[0].mxu0
    %1704 = vmatprep.mubr.f32.mxu0 %v261
    %1705 = vmatmul.mubr.f32.gmra.mrb[0].mxu0 %v260
    %v1706 = vpop.f32.mrb[0].mxu0
    %v1707 = vadd.f32 0.0, %v1706
    %v1708 = vpop.f32.mrb[0].mxu0
    %1709 = vmatprep.mubr.f32.mxu0 %v264
    %1710 = vmatmul.mubr.f32.gmra.mrb[0].mxu0 %v263
    %v1711 = vpop.f32.mrb[0].mxu0
    %v1712 = vadd.f32 0.0, %v1711
    %v1713 = vpop.f32.mrb[0].mxu0
    %1714 = vmatprep.mubr.f32.mxu0 %v267
    %1715 = vmatmul.mubr.f32.gmra.mrb[0].mxu0 %v266
    %v1716 = vpop.f32.mrb[0].mxu0
    %v1717 = vadd.f32 0.0, %v1716
    %v1718 = vpop.f32.mrb[0].mxu0
    %1719 = vmatprep.mubr.f32.mxu0 %v270
    %1720 = vmatmul.mubr.f32.gmra.mrb[0].mxu0 %v269
    %v1721 = vpop.f32.mrb[0].mxu0
    %v1722 = vadd.f32 0.0, %v1721
    %v1723 = vpop.f32.mrb[0].mxu0
    %1724 = vmatprep.mubr.f32.mxu0 %v273
    %1725 = vmatmul.mubr.f32.gmra.mrb[0].mxu0 %v272
    %v1726 = vpop.f32.mrb[0].mxu0
    %v1727 = vadd.f32 0.0, %v1726
    %v1728 = vpop.f32.mrb[0].mxu0
    %1729 = vmatprep.mubr.f32.mxu0 %v276
    %1730 = vmatmul.mubr.f32.gmra.mrb[0].mxu0 %v275
    %v1731 = vpop.f32.mrb[0].mxu0
    %v1732 = vadd.f32 0.0, %v1731
    %v1733 = vpop.f32.mrb[0].mxu0
    %1734 = vmatprep.mubr.f32.mxu0 %v279
    %1735 = vmatmul.mubr.f32.gmra.mrb[0].mxu0 %v278
    %v1736 = vpop.f32.mrb[0].mxu0
    %v1737 = vadd.f32 0.0, %v1736
    %v1738 = vpop.f32.mrb[0].mxu0
    %1739 = vmatprep.mubr.f32.mxu0 %v282
    %1740 = vmatmul.mubr.f32.gmra.mrb[0].mxu0 %v281
    %v1741 = vpop.f32.mrb[0].mxu0
    %v1742 = vadd.f32 0.0, %v1741
    %v1743 = vpop.f32.mrb[0].mxu0
    %1744 = vmatprep.mubr.f32.mxu0 %v285
    %1745 = vmatmul.mubr.f32.gmra.mrb[0].mxu0 %v284
    %v1746 = vpop.f32.mrb[0].mxu0
    %v1747 = vadd.f32 0.0, %v1746
    %v1748 = vpop.f32.mrb[0].mxu0
    %1749 = vmatprep.mubr.f32.mxu0 %v288
    %1750 = vmatmul.mubr.f32.gmra.mrb[0].mxu0 %v287
    %v1751 = vpop.f32.mrb[0].mxu0
    %v1752 = vadd.f32 0.0, %v1751
    %v1753 = vpop.f32.mrb[0].mxu0
    %1754 = vmatprep.mubr.f32.mxu0 %v291
    %1755 = vmatmul.mubr.f32.gmra.mrb[0].mxu0 %v290
    %v1756 = vpop.f32.mrb[0].mxu0
    %v1757 = vadd.f32 0.0, %v1756
    %v1758 = vpop.f32.mrb[0].mxu0
    %1759 = vmatprep.mubr.f32.mxu0 %v294
    %1760 = vmatmul.mubr.f32.gmra.mrb[0].mxu0 %v293
    %v1761 = vpop.f32.mrb[0].mxu0
    %v1762 = vadd.f32 0.0, %v1761
    %v1763 = vpop.f32.mrb[0].mxu0
    %1764 = vmatprep.mubr.f32.mxu0 %v297
    %1765 = vmatmul.mubr.f32.gmra.mrb[0].mxu0 %v296
    %v1766 = vpop.f32.mrb[0].mxu0
    %v1767 = vadd.f32 0.0, %v1766
    %v1768 = vpop.f32.mrb[0].mxu0
    %1769 = vmatprep.mubr.f32.mxu0 %v300
    %1770 = vmatmul.mubr.f32.gmra.mrb[0].mxu0 %v299
    %v1771 = vpop.f32.mrb[0].mxu0
    %v1772 = vadd.f32 0.0, %v1771
    %v1773 = vpop.f32.mrb[0].mxu0
    %1774 = vdwg.mxu0
    %1775 = vmatprep.subr.mxu0 0.0
    %1776 = vmatpush1.msra.mxu0 %v125
    %1777 = vmatprep.subr.mxu0 0.0
    %1778 = vmatpush1.msra.mxu0 %v126
    %1779 = vmatprep.subr.mxu0 0.0
    %1780 = vmatpush1.msra.mxu0 %v127
    %1781 = vmatprep.subr.mxu0 0.0
    %1782 = vmatpush1.msra.mxu0 %v128
    %1783 = vmatprep.subr.mxu0 0.0
    %1784 = vmatpush1.msra.mxu0 %v129
    %1785 = vmatprep.subr.mxu0 0.0
    %1786 = vmatpush1.msra.mxu0 %v130
    %1787 = vmatprep.subr.mxu0 0.0
    %1788 = vmatpush1.msra.mxu0 %v131
    %1789 = vmatprep.subr.mxu0 0.0
    %1790 = vmatpush1.msra.mxu0 %v132
    %1791 = vmatprep.subr.mxu0 0.0
    %1792 = vmatpush1.msra.mxu0 0.0
    %1793 = vmatprep.subr.mxu0 0.0
    %1794 = vmatpush1.msra.mxu0 0.0
    %1795 = vmatprep.subr.mxu0 0.0
    %1796 = vmatpush1.msra.mxu0 0.0
    %1797 = vmatprep.subr.mxu0 0.0
    %1798 = vmatpush1.msra.mxu0 0.0
    %1799 = vmatprep.subr.mxu0 0.0
    %1800 = vmatpush1.msra.mxu0 0.0
    %1801 = vmatprep.subr.mxu0 0.0
    %1802 = vmatpush1.msra.mxu0 0.0
    %1803 = vmatprep.subr.mxu0 0.0
    %1804 = vmatpush1.msra.mxu0 0.0
    %1805 = vmatprep.subr.mxu0 0.0
    %1806 = vmatpush1.msra.mxu0 0.0
    %1807 = vmatprep.subr.mxu0 0.0
    %1808 = vmatpush1.msra.mxu0 0.0
    %1809 = vmatprep.subr.mxu0 0.0
    %1810 = vmatpush1.msra.mxu0 0.0
    %1811 = vmatprep.subr.mxu0 0.0
    %1812 = vmatpush1.msra.mxu0 0.0
    %1813 = vmatprep.subr.mxu0 0.0
    %1814 = vmatpush1.msra.mxu0 0.0
    %1815 = vmatprep.subr.mxu0 0.0
    %1816 = vmatpush1.msra.mxu0 0.0
    %1817 = vmatprep.subr.mxu0 0.0
    %1818 = vmatpush1.msra.mxu0 0.0
    %1819 = vmatprep.subr.mxu0 0.0
    %1820 = vmatpush1.msra.mxu0 0.0
    %1821 = vmatprep.subr.mxu0 0.0
    %1822 = vmatpush1.msra.mxu0 0.0
    %1823 = vmatprep.subr.mxu0 0.0
    %1824 = vmatpush1.msra.mxu0 0.0
    %1825 = vmatprep.subr.mxu0 0.0
    %1826 = vmatpush1.msra.mxu0 0.0
    %1827 = vmatprep.subr.mxu0 0.0
    %1828 = vmatpush1.msra.mxu0 0.0
    %1829 = vmatprep.subr.mxu0 0.0
    %1830 = vmatpush1.msra.mxu0 0.0
    %1831 = vmatprep.subr.mxu0 0.0
    %1832 = vmatpush1.msra.mxu0 0.0
    %1833 = vmatprep.subr.mxu0 0.0
    %1834 = vmatpush1.msra.mxu0 0.0
    %1835 = vmatprep.subr.mxu0 0.0
    %1836 = vmatpush1.msra.mxu0 0.0
    %1837 = vmatprep.subr.mxu0 0.0
    %1838 = vmatpush1.msra.mxu0 0.0
    %1839 = vmatprep.mubr.f32.mxu0 0.0
    %1840 = vmatmul.mubr.f32.gmra.mrb[0].mxu0 %v444
    %v1841 = vpop.f32.mrb[0].mxu0
    %v1842 = vadd.f32 %v1677, %v1841
    %v1843 = vpop.f32.mrb[0].mxu0
    %1844 = vmatprep.mubr.f32.mxu0 0.0
    %1845 = vmatmul.mubr.f32.gmra.mrb[0].mxu0 %v447
    %v1846 = vpop.f32.mrb[0].mxu0
    %v1847 = vadd.f32 %v1682, %v1846
    %v1848 = vpop.f32.mrb[0].mxu0
    %1849 = vmatprep.mubr.f32.mxu0 0.0
    %1850 = vmatmul.mubr.f32.gmra.mrb[0].mxu0 %v450
    %v1851 = vpop.f32.mrb[0].mxu0
    %v1852 = vadd.f32 %v1687, %v1851
    %v1853 = vpop.f32.mrb[0].mxu0
    %1854 = vmatprep.mubr.f32.mxu0 0.0
    %1855 = vmatmul.mubr.f32.gmra.mrb[0].mxu0 %v453
    %v1856 = vpop.f32.mrb[0].mxu0
    %v1857 = vadd.f32 %v1692, %v1856
    %v1858 = vpop.f32.mrb[0].mxu0
    %1859 = vmatprep.mubr.f32.mxu0 0.0
    %1860 = vmatmul.mubr.f32.gmra.mrb[0].mxu0 %v456
    %v1861 = vpop.f32.mrb[0].mxu0
    %v1862 = vadd.f32 %v1697, %v1861
    %v1863 = vpop.f32.mrb[0].mxu0
    %1864 = vmatprep.mubr.f32.mxu0 0.0
    %1865 = vmatmul.mubr.f32.gmra.mrb[0].mxu0 %v459
    %v1866 = vpop.f32.mrb[0].mxu0
    %v1867 = vadd.f32 %v1702, %v1866
    %v1868 = vpop.f32.mrb[0].mxu0
    %1869 = vmatprep.mubr.f32.mxu0 0.0
    %1870 = vmatmul.mubr.f32.gmra.mrb[0].mxu0 %v462
    %v1871 = vpop.f32.mrb[0].mxu0
    %v1872 = vadd.f32 %v1707, %v1871
    %v1873 = vpop.f32.mrb[0].mxu0
    %1874 = vmatprep.mubr.f32.mxu0 0.0
    %1875 = vmatmul.mubr.f32.gmra.mrb[0].mxu0 %v465
    %v1876 = vpop.f32.mrb[0].mxu0
    %v1877 = vadd.f32 %v1712, %v1876
    %v1878 = vpop.f32.mrb[0].mxu0
    %1879 = vmatprep.mubr.f32.mxu0 0.0
    %1880 = vmatmul.mubr.f32.gmra.mrb[0].mxu0 %v468
    %v1881 = vpop.f32.mrb[0].mxu0
    %v1882 = vadd.f32 %v1717, %v1881
    %v1883 = vpop.f32.mrb[0].mxu0
    %1884 = vmatprep.mubr.f32.mxu0 0.0
    %1885 = vmatmul.mubr.f32.gmra.mrb[0].mxu0 %v471
    %v1886 = vpop.f32.mrb[0].mxu0
    %v1887 = vadd.f32 %v1722, %v1886
    %v1888 = vpop.f32.mrb[0].mxu0
    %1889 = vmatprep.mubr.f32.mxu0 0.0
    %1890 = vmatmul.mubr.f32.gmra.mrb[0].mxu0 %v474
    %v1891 = vpop.f32.mrb[0].mxu0
    %v1892 = vadd.f32 %v1727, %v1891
    %v1893 = vpop.f32.mrb[0].mxu0
    %1894 = vmatprep.mubr.f32.mxu0 0.0
    %1895 = vmatmul.mubr.f32.gmra.mrb[0].mxu0 %v477
    %v1896 = vpop.f32.mrb[0].mxu0
    %v1897 = vadd.f32 %v1732, %v1896
    %v1898 = vpop.f32.mrb[0].mxu0
    %1899 = vmatprep.mubr.f32.mxu0 0.0
    %1900 = vmatmul.mubr.f32.gmra.mrb[0].mxu0 %v480
    %v1901 = vpop.f32.mrb[0].mxu0
    %v1902 = vadd.f32 %v1737, %v1901
    %v1903 = vpop.f32.mrb[0].mxu0
    %1904 = vmatprep.mubr.f32.mxu0 0.0
    %1905 = vmatmul.mubr.f32.gmra.mrb[0].mxu0 %v483
    %v1906 = vpop.f32.mrb[0].mxu0
    %v1907 = vadd.f32 %v1742, %v1906
    %v1908 = vpop.f32.mrb[0].mxu0
    %1909 = vmatprep.mubr.f32.mxu0 0.0
    %1910 = vmatmul.mubr.f32.gmra.mrb[0].mxu0 %v486
    %v1911 = vpop.f32.mrb[0].mxu0
    %v1912 = vadd.f32 %v1747, %v1911
    %v1913 = vpop.f32.mrb[0].mxu0
    %1914 = vmatprep.mubr.f32.mxu0 0.0
    %1915 = vmatmul.mubr.f32.gmra.mrb[0].mxu0 %v489
    %v1916 = vpop.f32.mrb[0].mxu0
    %v1917 = vadd.f32 %v1752, %v1916
    %v1918 = vpop.f32.mrb[0].mxu0
    %1919 = vmatprep.mubr.f32.mxu0 0.0
    %1920 = vmatmul.mubr.f32.gmra.mrb[0].mxu0 %v492
    %v1921 = vpop.f32.mrb[0].mxu0
    %v1922 = vadd.f32 %v1757, %v1921
    %v1923 = vpop.f32.mrb[0].mxu0
    %1924 = vmatprep.mubr.f32.mxu0 0.0
    %1925 = vmatmul.mubr.f32.gmra.mrb[0].mxu0 %v495
    %v1926 = vpop.f32.mrb[0].mxu0
    %v1927 = vadd.f32 %v1762, %v1926
    %v1928 = vpop.f32.mrb[0].mxu0
    %1929 = vmatprep.mubr.f32.mxu0 0.0
    %1930 = vmatmul.mubr.f32.gmra.mrb[0].mxu0 %v498
    %v1931 = vpop.f32.mrb[0].mxu0
    %v1932 = vadd.f32 %v1767, %v1931
    %v1933 = vpop.f32.mrb[0].mxu0
    %1934 = vmatprep.mubr.f32.mxu0 0.0
    %1935 = vmatmul.mubr.f32.gmra.mrb[0].mxu0 %v501
    %v1936 = vpop.f32.mrb[0].mxu0
    %v1937 = vadd.f32 %v1772, %v1936
    %v1938 = vpop.f32.mrb[0].mxu0
    %1939 = vdwg.mxu0
    %1940 = vmatprep.subr.mxu0 0.0
    %1941 = vmatpush1.msra.mxu0 %v93
    %1942 = vmatprep.subr.mxu0 0.0
    %1943 = vmatpush1.msra.mxu0 %v94
    %1944 = vmatprep.subr.mxu0 0.0
    %1945 = vmatpush1.msra.mxu0 %v95
    %1946 = vmatprep.subr.mxu0 0.0
    %1947 = vmatpush1.msra.mxu0 %v96
    %1948 = vmatprep.subr.mxu0 0.0
    %1949 = vmatpush1.msra.mxu0 %v97
    %1950 = vmatprep.subr.mxu0 0.0
    %1951 = vmatpush1.msra.mxu0 %v98
    %1952 = vmatprep.subr.mxu0 0.0
    %1953 = vmatpush1.msra.mxu0 %v99
    %1954 = vmatprep.subr.mxu0 0.0
    %1955 = vmatpush1.msra.mxu0 %v100
    %1956 = vmatprep.subr.mxu0 0.0
    %1957 = vmatpush1.msra.mxu0 %v101
    %1958 = vmatprep.subr.mxu0 0.0
    %1959 = vmatpush1.msra.mxu0 %v102
    %1960 = vmatprep.subr.mxu0 0.0
    %1961 = vmatpush1.msra.mxu0 %v103
    %1962 = vmatprep.subr.mxu0 0.0
    %1963 = vmatpush1.msra.mxu0 %v104
    %1964 = vmatprep.subr.mxu0 0.0
    %1965 = vmatpush1.msra.mxu0 %v105
    %1966 = vmatprep.subr.mxu0 0.0
    %1967 = vmatpush1.msra.mxu0 %v106
    %1968 = vmatprep.subr.mxu0 0.0
    %1969 = vmatpush1.msra.mxu0 %v107
    %1970 = vmatprep.subr.mxu0 0.0
    %1971 = vmatpush1.msra.mxu0 %v108
    %1972 = vmatprep.subr.mxu0 0.0
    %1973 = vmatpush1.msra.mxu0 %v109
    %1974 = vmatprep.subr.mxu0 0.0
    %1975 = vmatpush1.msra.mxu0 %v110
    %1976 = vmatprep.subr.mxu0 0.0
    %1977 = vmatpush1.msra.mxu0 %v111
    %1978 = vmatprep.subr.mxu0 0.0
    %1979 = vmatpush1.msra.mxu0 %v112
    %1980 = vmatprep.subr.mxu0 0.0
    %1981 = vmatpush1.msra.mxu0 %v113
    %1982 = vmatprep.subr.mxu0 0.0
    %1983 = vmatpush1.msra.mxu0 %v114
    %1984 = vmatprep.subr.mxu0 0.0
    %1985 = vmatpush1.msra.mxu0 %v115
    %1986 = vmatprep.subr.mxu0 0.0
    %1987 = vmatpush1.msra.mxu0 %v116
    %1988 = vmatprep.subr.mxu0 0.0
    %1989 = vmatpush1.msra.mxu0 %v117
    %1990 = vmatprep.subr.mxu0 0.0
    %1991 = vmatpush1.msra.mxu0 %v118
    %1992 = vmatprep.subr.mxu0 0.0
    %1993 = vmatpush1.msra.mxu0 %v119
    %1994 = vmatprep.subr.mxu0 0.0
    %1995 = vmatpush1.msra.mxu0 %v120
    %1996 = vmatprep.subr.mxu0 0.0
    %1997 = vmatpush1.msra.mxu0 %v121
    %1998 = vmatprep.subr.mxu0 0.0
    %1999 = vmatpush1.msra.mxu0 %v122
    %2000 = vmatprep.subr.mxu0 0.0
    %2001 = vmatpush1.msra.mxu0 %v123
    %2002 = vmatprep.subr.mxu0 0.0
    %2003 = vmatpush1.msra.mxu0 %v124
    %2004 = vmatprep.mubr.f32.mxu0 %v383
    %2005 = vmatmul.mubr.f32.gmra.mrb[0].mxu0 %v382
    %v2006 = vpop.f32.mrb[0].mxu0
    %v2007 = vadd.f32 0.0, %v2006
    %v2008 = vpop.f32.mrb[0].mxu0
    %2009 = vmatprep.mubr.f32.mxu0 %v386
    %2010 = vmatmul.mubr.f32.gmra.mrb[0].mxu0 %v385
    %v2011 = vpop.f32.mrb[0].mxu0
    %v2012 = vadd.f32 0.0, %v2011
    %v2013 = vpop.f32.mrb[0].mxu0
    %2014 = vmatprep.mubr.f32.mxu0 %v389
    %2015 = vmatmul.mubr.f32.gmra.mrb[0].mxu0 %v388
    %v2016 = vpop.f32.mrb[0].mxu0
    %v2017 = vadd.f32 0.0, %v2016
    %v2018 = vpop.f32.mrb[0].mxu0
    %2019 = vmatprep.mubr.f32.mxu0 %v392
    %2020 = vmatmul.mubr.f32.gmra.mrb[0].mxu0 %v391
    %v2021 = vpop.f32.mrb[0].mxu0
    %v2022 = vadd.f32 0.0, %v2021
    %v2023 = vpop.f32.mrb[0].mxu0
    %2024 = vmatprep.mubr.f32.mxu0 %v395
    %2025 = vmatmul.mubr.f32.gmra.mrb[0].mxu0 %v394
    %v2026 = vpop.f32.mrb[0].mxu0
    %v2027 = vadd.f32 0.0, %v2026
    %v2028 = vpop.f32.mrb[0].mxu0
    %2029 = vmatprep.mubr.f32.mxu0 %v398
    %2030 = vmatmul.mubr.f32.gmra.mrb[0].mxu0 %v397
    %v2031 = vpop.f32.mrb[0].mxu0
    %v2032 = vadd.f32 0.0, %v2031
    %v2033 = vpop.f32.mrb[0].mxu0
    %2034 = vmatprep.mubr.f32.mxu0 %v401
    %2035 = vmatmul.mubr.f32.gmra.mrb[0].mxu0 %v400
    %v2036 = vpop.f32.mrb[0].mxu0
    %v2037 = vadd.f32 0.0, %v2036
    %v2038 = vpop.f32.mrb[0].mxu0
    %2039 = vmatprep.mubr.f32.mxu0 %v404
    %2040 = vmatmul.mubr.f32.gmra.mrb[0].mxu0 %v403
    %v2041 = vpop.f32.mrb[0].mxu0
    %v2042 = vadd.f32 0.0, %v2041
    %v2043 = vpop.f32.mrb[0].mxu0
    %2044 = vmatprep.mubr.f32.mxu0 %v407
    %2045 = vmatmul.mubr.f32.gmra.mrb[0].mxu0 %v406
    %v2046 = vpop.f32.mrb[0].mxu0
    %v2047 = vadd.f32 0.0, %v2046
    %v2048 = vpop.f32.mrb[0].mxu0
    %2049 = vmatprep.mubr.f32.mxu0 %v410
    %2050 = vmatmul.mubr.f32.gmra.mrb[0].mxu0 %v409
    %v2051 = vpop.f32.mrb[0].mxu0
    %v2052 = vadd.f32 0.0, %v2051
    %v2053 = vpop.f32.mrb[0].mxu0
    %2054 = vmatprep.mubr.f32.mxu0 %v413
    %2055 = vmatmul.mubr.f32.gmra.mrb[0].mxu0 %v412
    %v2056 = vpop.f32.mrb[0].mxu0
    %v2057 = vadd.f32 0.0, %v2056
    %v2058 = vpop.f32.mrb[0].mxu0
    %2059 = vmatprep.mubr.f32.mxu0 %v416
    %2060 = vmatmul.mubr.f32.gmra.mrb[0].mxu0 %v415
    %v2061 = vpop.f32.mrb[0].mxu0
    %v2062 = vadd.f32 0.0, %v2061
    %v2063 = vpop.f32.mrb[0].mxu0
    %2064 = vmatprep.mubr.f32.mxu0 %v419
    %2065 = vmatmul.mubr.f32.gmra.mrb[0].mxu0 %v418
    %v2066 = vpop.f32.mrb[0].mxu0
    %v2067 = vadd.f32 0.0, %v2066
    %v2068 = vpop.f32.mrb[0].mxu0
    %2069 = vmatprep.mubr.f32.mxu0 %v422
    %2070 = vmatmul.mubr.f32.gmra.mrb[0].mxu0 %v421
    %v2071 = vpop.f32.mrb[0].mxu0
    %v2072 = vadd.f32 0.0, %v2071
    %v2073 = vpop.f32.mrb[0].mxu0
    %2074 = vmatprep.mubr.f32.mxu0 %v425
    %2075 = vmatmul.mubr.f32.gmra.mrb[0].mxu0 %v424
    %v2076 = vpop.f32.mrb[0].mxu0
    %v2077 = vadd.f32 0.0, %v2076
    %v2078 = vpop.f32.mrb[0].mxu0
    %2079 = vmatprep.mubr.f32.mxu0 %v428
    %2080 = vmatmul.mubr.f32.gmra.mrb[0].mxu0 %v427
    %v2081 = vpop.f32.mrb[0].mxu0
    %v2082 = vadd.f32 0.0, %v2081
    %v2083 = vpop.f32.mrb[0].mxu0
    %2084 = vmatprep.mubr.f32.mxu0 %v431
    %2085 = vmatmul.mubr.f32.gmra.mrb[0].mxu0 %v430
    %v2086 = vpop.f32.mrb[0].mxu0
    %v2087 = vadd.f32 0.0, %v2086
    %v2088 = vpop.f32.mrb[0].mxu0
    %2089 = vmatprep.mubr.f32.mxu0 %v434
    %2090 = vmatmul.mubr.f32.gmra.mrb[0].mxu0 %v433
    %v2091 = vpop.f32.mrb[0].mxu0
    %v2092 = vadd.f32 0.0, %v2091
    %v2093 = vpop.f32.mrb[0].mxu0
    %2094 = vmatprep.mubr.f32.mxu0 %v437
    %2095 = vmatmul.mubr.f32.gmra.mrb[0].mxu0 %v436
    %v2096 = vpop.f32.mrb[0].mxu0
    %v2097 = vadd.f32 0.0, %v2096
    %v2098 = vpop.f32.mrb[0].mxu0
    %2099 = vmatprep.mubr.f32.mxu0 %v440
    %2100 = vmatmul.mubr.f32.gmra.mrb[0].mxu0 %v439
    %v2101 = vpop.f32.mrb[0].mxu0
    %v2102 = vadd.f32 0.0, %v2101
    %v2103 = vpop.f32.mrb[0].mxu0
    %2104 = vdwg.mxu0
    %2105 = vmatprep.subr.mxu0 0.0
    %2106 = vmatpush1.msra.mxu0 %v125
    %2107 = vmatprep.subr.mxu0 0.0
    %2108 = vmatpush1.msra.mxu0 %v126
    %2109 = vmatprep.subr.mxu0 0.0
    %2110 = vmatpush1.msra.mxu0 %v127
    %2111 = vmatprep.subr.mxu0 0.0
    %2112 = vmatpush1.msra.mxu0 %v128
    %2113 = vmatprep.subr.mxu0 0.0
    %2114 = vmatpush1.msra.mxu0 %v129
    %2115 = vmatprep.subr.mxu0 0.0
    %2116 = vmatpush1.msra.mxu0 %v130
    %2117 = vmatprep.subr.mxu0 0.0
    %2118 = vmatpush1.msra.mxu0 %v131
    %2119 = vmatprep.subr.mxu0 0.0
    %2120 = vmatpush1.msra.mxu0 %v132
    %2121 = vmatprep.subr.mxu0 0.0
    %2122 = vmatpush1.msra.mxu0 0.0
    %2123 = vmatprep.subr.mxu0 0.0
    %2124 = vmatpush1.msra.mxu0 0.0
    %2125 = vmatprep.subr.mxu0 0.0
    %2126 = vmatpush1.msra.mxu0 0.0
    %2127 = vmatprep.subr.mxu0 0.0
    %2128 = vmatpush1.msra.mxu0 0.0
    %2129 = vmatprep.subr.mxu0 0.0
    %2130 = vmatpush1.msra.mxu0 0.0
    %2131 = vmatprep.subr.mxu0 0.0
    %2132 = vmatpush1.msra.mxu0 0.0
    %2133 = vmatprep.subr.mxu0 0.0
    %2134 = vmatpush1.msra.mxu0 0.0
    %2135 = vmatprep.subr.mxu0 0.0
    %2136 = vmatpush1.msra.mxu0 0.0
    %2137 = vmatprep.subr.mxu0 0.0
    %2138 = vmatpush1.msra.mxu0 0.0
    %2139 = vmatprep.subr.mxu0 0.0
    %2140 = vmatpush1.msra.mxu0 0.0
    %2141 = vmatprep.subr.mxu0 0.0
    %2142 = vmatpush1.msra.mxu0 0.0
    %2143 = vmatprep.subr.mxu0 0.0
    %2144 = vmatpush1.msra.mxu0 0.0
    %2145 = vmatprep.subr.mxu0 0.0
    %2146 = vmatpush1.msra.mxu0 0.0
    %2147 = vmatprep.subr.mxu0 0.0
    %2148 = vmatpush1.msra.mxu0 0.0
    %2149 = vmatprep.subr.mxu0 0.0
    %2150 = vmatpush1.msra.mxu0 0.0
    %2151 = vmatprep.subr.mxu0 0.0
    %2152 = vmatpush1.msra.mxu0 0.0
    %2153 = vmatprep.subr.mxu0 0.0
    %2154 = vmatpush1.msra.mxu0 0.0
    %2155 = vmatprep.subr.mxu0 0.0
    %2156 = vmatpush1.msra.mxu0 0.0
    %2157 = vmatprep.subr.mxu0 0.0
    %2158 = vmatpush1.msra.mxu0 0.0
    %2159 = vmatprep.subr.mxu0 0.0
    %2160 = vmatpush1.msra.mxu0 0.0
    %2161 = vmatprep.subr.mxu0 0.0
    %2162 = vmatpush1.msra.mxu0 0.0
    %2163 = vmatprep.subr.mxu0 0.0
    %2164 = vmatpush1.msra.mxu0 0.0
    %2165 = vmatprep.subr.mxu0 0.0
    %2166 = vmatpush1.msra.mxu0 0.0
    %2167 = vmatprep.subr.mxu0 0.0
    %2168 = vmatpush1.msra.mxu0 0.0
    %2169 = vmatprep.mubr.f32.mxu0 0.0
    %2170 = vmatmul.mubr.f32.gmra.mrb[0].mxu0 %v834
    %v2171 = vpop.f32.mrb[0].mxu0
    %v2172 = vadd.f32 %v2007, %v2171
    %v2173 = vpop.f32.mrb[0].mxu0
    %2174 = vmatprep.mubr.f32.mxu0 0.0
    %2175 = vmatmul.mubr.f32.gmra.mrb[0].mxu0 %v837
    %v2176 = vpop.f32.mrb[0].mxu0
    %v2177 = vadd.f32 %v2012, %v2176
    %v2178 = vpop.f32.mrb[0].mxu0
    %2179 = vmatprep.mubr.f32.mxu0 0.0
    %2180 = vmatmul.mubr.f32.gmra.mrb[0].mxu0 %v840
    %v2181 = vpop.f32.mrb[0].mxu0
    %v2182 = vadd.f32 %v2017, %v2181
    %v2183 = vpop.f32.mrb[0].mxu0
    %2184 = vmatprep.mubr.f32.mxu0 0.0
    %2185 = vmatmul.mubr.f32.gmra.mrb[0].mxu0 %v843
    %v2186 = vpop.f32.mrb[0].mxu0
    %v2187 = vadd.f32 %v2022, %v2186
    %v2188 = vpop.f32.mrb[0].mxu0
    %2189 = vmatprep.mubr.f32.mxu0 0.0
    %2190 = vmatmul.mubr.f32.gmra.mrb[0].mxu0 %v846
    %v2191 = vpop.f32.mrb[0].mxu0
    %v2192 = vadd.f32 %v2027, %v2191
    %v2193 = vpop.f32.mrb[0].mxu0
    %2194 = vmatprep.mubr.f32.mxu0 0.0
    %2195 = vmatmul.mubr.f32.gmra.mrb[0].mxu0 %v849
    %v2196 = vpop.f32.mrb[0].mxu0
    %v2197 = vadd.f32 %v2032, %v2196
    %v2198 = vpop.f32.mrb[0].mxu0
    %2199 = vmatprep.mubr.f32.mxu0 0.0
    %2200 = vmatmul.mubr.f32.gmra.mrb[0].mxu0 %v852
    %v2201 = vpop.f32.mrb[0].mxu0
    %v2202 = vadd.f32 %v2037, %v2201
    %v2203 = vpop.f32.mrb[0].mxu0
    %2204 = vmatprep.mubr.f32.mxu0 0.0
    %2205 = vmatmul.mubr.f32.gmra.mrb[0].mxu0 %v855
    %v2206 = vpop.f32.mrb[0].mxu0
    %v2207 = vadd.f32 %v2042, %v2206
    %v2208 = vpop.f32.mrb[0].mxu0
    %2209 = vmatprep.mubr.f32.mxu0 0.0
    %2210 = vmatmul.mubr.f32.gmra.mrb[0].mxu0 %v858
    %v2211 = vpop.f32.mrb[0].mxu0
    %v2212 = vadd.f32 %v2047, %v2211
    %v2213 = vpop.f32.mrb[0].mxu0
    %2214 = vmatprep.mubr.f32.mxu0 0.0
    %2215 = vmatmul.mubr.f32.gmra.mrb[0].mxu0 %v861
    %v2216 = vpop.f32.mrb[0].mxu0
    %v2217 = vadd.f32 %v2052, %v2216
    %v2218 = vpop.f32.mrb[0].mxu0
    %2219 = vmatprep.mubr.f32.mxu0 0.0
    %2220 = vmatmul.mubr.f32.gmra.mrb[0].mxu0 %v864
    %v2221 = vpop.f32.mrb[0].mxu0
    %v2222 = vadd.f32 %v2057, %v2221
    %v2223 = vpop.f32.mrb[0].mxu0
    %2224 = vmatprep.mubr.f32.mxu0 0.0
    %2225 = vmatmul.mubr.f32.gmra.mrb[0].mxu0 %v867
    %v2226 = vpop.f32.mrb[0].mxu0
    %v2227 = vadd.f32 %v2062, %v2226
    %v2228 = vpop.f32.mrb[0].mxu0
    %2229 = vmatprep.mubr.f32.mxu0 0.0
    %2230 = vmatmul.mubr.f32.gmra.mrb[0].mxu0 %v870
    %v2231 = vpop.f32.mrb[0].mxu0
    %v2232 = vadd.f32 %v2067, %v2231
    %v2233 = vpop.f32.mrb[0].mxu0
    %2234 = vmatprep.mubr.f32.mxu0 0.0
    %2235 = vmatmul.mubr.f32.gmra.mrb[0].mxu0 %v873
    %v2236 = vpop.f32.mrb[0].mxu0
    %v2237 = vadd.f32 %v2072, %v2236
    %v2238 = vpop.f32.mrb[0].mxu0
    %2239 = vmatprep.mubr.f32.mxu0 0.0
    %2240 = vmatmul.mubr.f32.gmra.mrb[0].mxu0 %v876
    %v2241 = vpop.f32.mrb[0].mxu0
    %v2242 = vadd.f32 %v2077, %v2241
    %v2243 = vpop.f32.mrb[0].mxu0
    %2244 = vmatprep.mubr.f32.mxu0 0.0
    %2245 = vmatmul.mubr.f32.gmra.mrb[0].mxu0 %v879
    %v2246 = vpop.f32.mrb[0].mxu0
    %v2247 = vadd.f32 %v2082, %v2246
    %v2248 = vpop.f32.mrb[0].mxu0
    %2249 = vmatprep.mubr.f32.mxu0 0.0
    %2250 = vmatmul.mubr.f32.gmra.mrb[0].mxu0 %v882
    %v2251 = vpop.f32.mrb[0].mxu0
    %v2252 = vadd.f32 %v2087, %v2251
    %v2253 = vpop.f32.mrb[0].mxu0
    %2254 = vmatprep.mubr.f32.mxu0 0.0
    %2255 = vmatmul.mubr.f32.gmra.mrb[0].mxu0 %v885
    %v2256 = vpop.f32.mrb[0].mxu0
    %v2257 = vadd.f32 %v2092, %v2256
    %v2258 = vpop.f32.mrb[0].mxu0
    %2259 = vmatprep.mubr.f32.mxu0 0.0
    %2260 = vmatmul.mubr.f32.gmra.mrb[0].mxu0 %v888
    %v2261 = vpop.f32.mrb[0].mxu0
    %v2262 = vadd.f32 %v2097, %v2261
    %v2263 = vpop.f32.mrb[0].mxu0
    %2264 = vmatprep.mubr.f32.mxu0 0.0
    %2265 = vmatmul.mubr.f32.gmra.mrb[0].mxu0 %v891
    %v2266 = vpop.f32.mrb[0].mxu0
    %v2267 = vadd.f32 %v2102, %v2266
    %v2268 = vpop.f32.mrb[0].mxu0
    %2269 = vdwg.mxu0
    %v2290 = vrot.slane %v2172, 7
    %v2291 = vrot.slane %v2177, 7
    %v2292 = vsel %vm1243, %v2290, %v2291
    %v2293 = vrot.slane %v2182, 7
    %v2294 = vsel %vm1243, %v2291, %v2293
    %v2295 = vrot.slane %v2187, 7
    %v2296 = vsel %vm1243, %v2293, %v2295
    %v2297 = vrot.slane %v2192, 7
    %v2298 = vsel %vm1243, %v2295, %v2297
    %v2299 = vrot.slane %v2197, 7
    %v2300 = vsel %vm1243, %v2297, %v2299
    %v2301 = vrot.slane %v2202, 7
    %v2302 = vsel %vm1243, %v2299, %v2301
    %v2303 = vrot.slane %v2207, 7
    %v2304 = vsel %vm1243, %v2301, %v2303
    %v2305 = vrot.slane %v2212, 7
    %v2306 = vsel %vm1243, %v2303, %v2305
    %v2307 = vrot.slane %v2217, 7
    %v2308 = vsel %vm1243, %v2305, %v2307
    %v2309 = vrot.slane %v2222, 7
    %v2310 = vsel %vm1243, %v2307, %v2309
    %v2311 = vrot.slane %v2227, 7
    %v2312 = vsel %vm1243, %v2309, %v2311
    %v2313 = vrot.slane %v2232, 7
    %v2314 = vsel %vm1243, %v2311, %v2313
    %v2315 = vrot.slane %v2237, 7
    %v2316 = vsel %vm1243, %v2313, %v2315
    %v2317 = vrot.slane %v2242, 7
    %v2318 = vsel %vm1243, %v2315, %v2317
    %v2319 = vrot.slane %v2247, 7
    %v2320 = vsel %vm1243, %v2317, %v2319
    %v2321 = vrot.slane %v2252, 7
    %v2322 = vsel %vm1243, %v2319, %v2321
    %v2323 = vrot.slane %v2257, 7
    %v2324 = vsel %vm1243, %v2321, %v2323
    %v2325 = vrot.slane %v2262, 7
    %v2326 = vsel %vm1243, %v2323, %v2325
    %v2327 = vrot.slane %v2267, 7
    %v2328 = vsel %vm1243, %v2325, %v2327
    %v2349 = vsel %vm1243, 0.0, %v2290
    %v2370 = vrot.slane %v1842, 1
    %v2371 = vrot.slane %v1847, 1
    %v2372 = vsel %vm1324, %v2370, %v2371
    %v2373 = vrot.slane %v1852, 1
    %v2374 = vsel %vm1324, %v2371, %v2373
    %v2375 = vrot.slane %v1857, 1
    %v2376 = vsel %vm1324, %v2373, %v2375
    %v2377 = vrot.slane %v1862, 1
    %v2378 = vsel %vm1324, %v2375, %v2377
    %v2379 = vrot.slane %v1867, 1
    %v2380 = vsel %vm1324, %v2377, %v2379
    %v2381 = vrot.slane %v1872, 1
    %v2382 = vsel %vm1324, %v2379, %v2381
    %v2383 = vrot.slane %v1877, 1
    %v2384 = vsel %vm1324, %v2381, %v2383
    %v2385 = vrot.slane %v1882, 1
    %v2386 = vsel %vm1324, %v2383, %v2385
    %v2387 = vrot.slane %v1887, 1
    %v2388 = vsel %vm1324, %v2385, %v2387
    %v2389 = vrot.slane %v1892, 1
    %v2390 = vsel %vm1324, %v2387, %v2389
    %v2391 = vrot.slane %v1897, 1
    %v2392 = vsel %vm1324, %v2389, %v2391
    %v2393 = vrot.slane %v1902, 1
    %v2394 = vsel %vm1324, %v2391, %v2393
    %v2395 = vrot.slane %v1907, 1
    %v2396 = vsel %vm1324, %v2393, %v2395
    %v2397 = vrot.slane %v1912, 1
    %v2398 = vsel %vm1324, %v2395, %v2397
    %v2399 = vrot.slane %v1917, 1
    %v2400 = vsel %vm1324, %v2397, %v2399
    %v2401 = vrot.slane %v1922, 1
    %v2402 = vsel %vm1324, %v2399, %v2401
    %v2403 = vrot.slane %v1927, 1
    %v2404 = vsel %vm1324, %v2401, %v2403
    %v2405 = vrot.slane %v1932, 1
    %v2406 = vsel %vm1324, %v2403, %v2405
    %v2407 = vrot.slane %v1937, 1
    %v2408 = vsel %vm1324, %v2405, %v2407
    %v2410 = vsel %vm1324, %v2407, 0.0
    %2411 = vrot.lane.b32.xlu0 %v1842, 8
    %v2412 = vpop.permute.xlu0 %2411
    %2413 = vrot.lane.b32.xlu0 %v1847, 8
    %v2414 = vpop.permute.xlu0 %2413
    %2415 = vrot.lane.b32.xlu0 %v1852, 8
    %v2416 = vpop.permute.xlu0 %2415
    %2417 = vrot.lane.b32.xlu0 %v1857, 8
    %v2418 = vpop.permute.xlu0 %2417
    %2419 = vrot.lane.b32.xlu0 %v1862, 8
    %v2420 = vpop.permute.xlu0 %2419
    %2421 = vrot.lane.b32.xlu0 %v1867, 8
    %v2422 = vpop.permute.xlu0 %2421
    %2423 = vrot.lane.b32.xlu0 %v1872, 8
    %v2424 = vpop.permute.xlu0 %2423
    %2425 = vrot.lane.b32.xlu0 %v1877, 8
    %v2426 = vpop.permute.xlu0 %2425
    %2427 = vrot.lane.b32.xlu0 %v1882, 8
    %v2428 = vpop.permute.xlu0 %2427
    %2429 = vrot.lane.b32.xlu0 %v1887, 8
    %v2430 = vpop.permute.xlu0 %2429
    %2431 = vrot.lane.b32.xlu0 %v1892, 8
    %v2432 = vpop.permute.xlu0 %2431
    %2433 = vrot.lane.b32.xlu0 %v1897, 8
    %v2434 = vpop.permute.xlu0 %2433
    %2435 = vrot.lane.b32.xlu0 %v1902, 8
    %v2436 = vpop.permute.xlu0 %2435
    %2437 = vrot.lane.b32.xlu0 %v1907, 8
    %v2438 = vpop.permute.xlu0 %2437
    %2439 = vrot.lane.b32.xlu0 %v1912, 8
    %v2440 = vpop.permute.xlu0 %2439
    %2441 = vrot.lane.b32.xlu0 %v1917, 8
    %v2442 = vpop.permute.xlu0 %2441
    %2443 = vrot.lane.b32.xlu0 %v1922, 8
    %v2444 = vpop.permute.xlu0 %2443
    %2445 = vrot.lane.b32.xlu0 %v1927, 8
    %v2446 = vpop.permute.xlu0 %2445
    %2447 = vrot.lane.b32.xlu0 %v1932, 8
    %v2448 = vpop.permute.xlu0 %2447
    %2449 = vrot.lane.b32.xlu0 %v1937, 8
    %v2450 = vpop.permute.xlu0 %2449
    %2471 = vrot.lane.b32.xlu0 %v2172, 16
    %v2472 = vpop.permute.xlu0 %2471
    %2473 = vrot.lane.b32.xlu0 %v2177, 16
    %v2474 = vpop.permute.xlu0 %2473
    %2475 = vrot.lane.b32.xlu0 %v2182, 16
    %v2476 = vpop.permute.xlu0 %2475
    %2477 = vrot.lane.b32.xlu0 %v2187, 16
    %v2478 = vpop.permute.xlu0 %2477
    %2479 = vrot.lane.b32.xlu0 %v2192, 16
    %v2480 = vpop.permute.xlu0 %2479
    %2481 = vrot.lane.b32.xlu0 %v2197, 16
    %v2482 = vpop.permute.xlu0 %2481
    %2483 = vrot.lane.b32.xlu0 %v2202, 16
    %v2484 = vpop.permute.xlu0 %2483
    %2485 = vrot.lane.b32.xlu0 %v2207, 16
    %v2486 = vpop.permute.xlu0 %2485
    %2487 = vrot.lane.b32.xlu0 %v2212, 16
    %v2488 = vpop.permute.xlu0 %2487
    %2489 = vrot.lane.b32.xlu0 %v2217, 16
    %v2490 = vpop.permute.xlu0 %2489
    %2491 = vrot.lane.b32.xlu0 %v2222, 16
    %v2492 = vpop.permute.xlu0 %2491
    %2493 = vrot.lane.b32.xlu0 %v2227, 16
    %v2494 = vpop.permute.xlu0 %2493
    %2495 = vrot.lane.b32.xlu0 %v2232, 16
    %v2496 = vpop.permute.xlu0 %2495
    %2497 = vrot.lane.b32.xlu0 %v2237, 16
    %v2498 = vpop.permute.xlu0 %2497
    %2499 = vrot.lane.b32.xlu0 %v2242, 16
    %v2500 = vpop.permute.xlu0 %2499
    %2501 = vrot.lane.b32.xlu0 %v2247, 16
    %v2502 = vpop.permute.xlu0 %2501
    %2503 = vrot.lane.b32.xlu0 %v2252, 16
    %v2504 = vpop.permute.xlu0 %2503
    %2505 = vrot.lane.b32.xlu0 %v2257, 16
    %v2506 = vpop.permute.xlu0 %2505
    %2507 = vrot.lane.b32.xlu0 %v2262, 16
    %v2508 = vpop.permute.xlu0 %2507
    %2509 = vrot.lane.b32.xlu0 %v2267, 16
    %v2510 = vpop.permute.xlu0 %2509
    %2532 = vrot.lane.b32.xlu0 %v2372, 24
    %v2533 = vpop.permute.xlu0 %2532
    %2534 = vrot.lane.b32.xlu0 %v2374, 24
    %v2535 = vpop.permute.xlu0 %2534
    %2536 = vrot.lane.b32.xlu0 %v2376, 24
    %v2537 = vpop.permute.xlu0 %2536
    %2538 = vrot.lane.b32.xlu0 %v2378, 24
    %v2539 = vpop.permute.xlu0 %2538
    %2540 = vrot.lane.b32.xlu0 %v2380, 24
    %v2541 = vpop.permute.xlu0 %2540
    %2542 = vrot.lane.b32.xlu0 %v2382, 24
    %v2543 = vpop.permute.xlu0 %2542
    %2544 = vrot.lane.b32.xlu0 %v2384, 24
    %v2545 = vpop.permute.xlu0 %2544
    %2546 = vrot.lane.b32.xlu0 %v2386, 24
    %v2547 = vpop.permute.xlu0 %2546
    %2548 = vrot.lane.b32.xlu0 %v2388, 24
    %v2549 = vpop.permute.xlu0 %2548
    %2550 = vrot.lane.b32.xlu0 %v2390, 24
    %v2551 = vpop.permute.xlu0 %2550
    %2552 = vrot.lane.b32.xlu0 %v2392, 24
    %v2553 = vpop.permute.xlu0 %2552
    %2554 = vrot.lane.b32.xlu0 %v2394, 24
    %v2555 = vpop.permute.xlu0 %2554
    %2556 = vrot.lane.b32.xlu0 %v2396, 24
    %v2557 = vpop.permute.xlu0 %2556
    %2558 = vrot.lane.b32.xlu0 %v2398, 24
    %v2559 = vpop.permute.xlu0 %2558
    %2560 = vrot.lane.b32.xlu0 %v2400, 24
    %v2561 = vpop.permute.xlu0 %2560
    %2562 = vrot.lane.b32.xlu0 %v2402, 24
    %v2563 = vpop.permute.xlu0 %2562
    %2564 = vrot.lane.b32.xlu0 %v2404, 24
    %v2565 = vpop.permute.xlu0 %2564
    %2566 = vrot.lane.b32.xlu0 %v2406, 24
    %v2567 = vpop.permute.xlu0 %2566
    %2568 = vrot.lane.b32.xlu0 %v2408, 24
    %v2569 = vpop.permute.xlu0 %2568
    %2570 = vrot.lane.b32.xlu0 %v2410, 24
    %v2571 = vpop.permute.xlu0 %2570
    %v2592 = vsel %vm1547, %v2349, %v2412
    %v2593 = vsel %vm1547, %v2292, %v2414
    %v2594 = vsel %vm1547, %v2294, %v2416
    %v2595 = vsel %vm1547, %v2296, %v2418
    %v2596 = vsel %vm1547, %v2298, %v2420
    %v2597 = vsel %vm1547, %v2300, %v2422
    %v2598 = vsel %vm1547, %v2302, %v2424
    %v2599 = vsel %vm1547, %v2304, %v2426
    %v2600 = vsel %vm1547, %v2306, %v2428
    %v2601 = vsel %vm1547, %v2308, %v2430
    %v2602 = vsel %vm1547, %v2310, %v2432
    %v2603 = vsel %vm1547, %v2312, %v2434
    %v2604 = vsel %vm1547, %v2314, %v2436
    %v2605 = vsel %vm1547, %v2316, %v2438
    %v2606 = vsel %vm1547, %v2318, %v2440
    %v2607 = vsel %vm1547, %v2320, %v2442
    %v2608 = vsel %vm1547, %v2322, %v2444
    %v2609 = vsel %vm1547, %v2324, %v2446
    %v2610 = vsel %vm1547, %v2326, %v2448
    %v2611 = vsel %vm1547, %v2328, %v2450
    %v2612 = vsel %vm1568, %v2592, %v2472
    %v2613 = vsel %vm1568, %v2593, %v2474
    %v2614 = vsel %vm1568, %v2594, %v2476
    %v2615 = vsel %vm1568, %v2595, %v2478
    %v2616 = vsel %vm1568, %v2596, %v2480
    %v2617 = vsel %vm1568, %v2597, %v2482
    %v2618 = vsel %vm1568, %v2598, %v2484
    %v2619 = vsel %vm1568, %v2599, %v2486
    %v2620 = vsel %vm1568, %v2600, %v2488
    %v2621 = vsel %vm1568, %v2601, %v2490
    %v2622 = vsel %vm1568, %v2602, %v2492
    %v2623 = vsel %vm1568, %v2603, %v2494
    %v2624 = vsel %vm1568, %v2604, %v2496
    %v2625 = vsel %vm1568, %v2605, %v2498
    %v2626 = vsel %vm1568, %v2606, %v2500
    %v2627 = vsel %vm1568, %v2607, %v2502
    %v2628 = vsel %vm1568, %v2608, %v2504
    %v2629 = vsel %vm1568, %v2609, %v2506
    %v2630 = vsel %vm1568, %v2610, %v2508
    %v2631 = vsel %vm1568, %v2611, %v2510
    %v2632 = vsel %vm1589, %v2612, %v2533
    %v2633 = vsel %vm1589, %v2613, %v2535
    %v2634 = vsel %vm1589, %v2614, %v2537
    %v2635 = vsel %vm1589, %v2615, %v2539
    %v2636 = vsel %vm1589, %v2616, %v2541
    %v2637 = vsel %vm1589, %v2617, %v2543
    %v2638 = vsel %vm1589, %v2618, %v2545
    %v2639 = vsel %vm1589, %v2619, %v2547
    %v2640 = vsel %vm1589, %v2620, %v2549
    %v2641 = vsel %vm1589, %v2621, %v2551
    %v2642 = vsel %vm1589, %v2622, %v2553
    %v2643 = vsel %vm1589, %v2623, %v2555
    %v2644 = vsel %vm1589, %v2624, %v2557
    %v2645 = vsel %vm1589, %v2625, %v2559
    %v2646 = vsel %vm1589, %v2626, %v2561
    %v2647 = vsel %vm1589, %v2627, %v2563
    %v2648 = vsel %vm1589, %v2628, %v2565
    %v2649 = vsel %vm1589, %v2629, %v2567
    %v2650 = vsel %vm1589, %v2630, %v2569
    %v2651 = vsel %vm1589, %v2631, %v2571
    %vm2652 = vcmask 261120
    %v2654 = vsel %vm2652, %v1590, 0
    %v2657 = vsel %vm2652, %v1591, 0
    %v2660 = vsel %vm2652, %v1592, 0
    %v2663 = vsel %vm2652, %v1593, 0
    %v2666 = vsel %vm2652, %v1594, 0
    %v2669 = vsel %vm2652, %v1595, 0
    %v2672 = vsel %vm2652, %v1596, 0
    %v2675 = vsel %vm2652, %v1597, 0
    %v2678 = vsel %vm2652, %v1598, 0
    %v2681 = vsel %vm2652, %v1599, 0
    %v2684 = vsel %vm2652, %v1600, 0
    %v2687 = vsel %vm2652, %v1601, 0
    %v2690 = vsel %vm2652, %v1602, 0
    %v2693 = vsel %vm2652, %v1603, 0
    %v2696 = vsel %vm2652, %v1604, 0
    %v2699 = vsel %vm2652, %v1605, 0
    %v2702 = vsel %vm2652, %v1606, 0
    %v2705 = vsel %vm2652, %v1607, 0
    %v2708 = vsel %vm2652, %v1608, 0
    %v2711 = vsel %vm2652, %v1609, 0
    %v2714 = vsel %vm2652, %v2632, 0
    %v2717 = vsel %vm2652, %v2633, 0
    %v2720 = vsel %vm2652, %v2634, 0
    %v2723 = vsel %vm2652, %v2635, 0
    %v2726 = vsel %vm2652, %v2636, 0
    %v2729 = vsel %vm2652, %v2637, 0
    %v2732 = vsel %vm2652, %v2638, 0
    %v2735 = vsel %vm2652, %v2639, 0
    %v2738 = vsel %vm2652, %v2640, 0
    %v2741 = vsel %vm2652, %v2641, 0
    %v2744 = vsel %vm2652, %v2642, 0
    %v2747 = vsel %vm2652, %v2643, 0
    %v2750 = vsel %vm2652, %v2644, 0
    %v2753 = vsel %vm2652, %v2645, 0
    %v2756 = vsel %vm2652, %v2646, 0
    %v2759 = vsel %vm2652, %v2647, 0
    %v2762 = vsel %vm2652, %v2648, 0
    %v2765 = vsel %vm2652, %v2649, 0
    %v2768 = vsel %vm2652, %v2650, 0
    %v2771 = vsel %vm2652, %v2651, 0
    %2773 = vmatprep.subr.mxu0 0.0
    %2774 = vmatpush1.msra.mxu0 %v133
    %2775 = vmatprep.subr.mxu0 0.0
    %2776 = vmatpush1.msra.mxu0 %v134
    %2777 = vmatprep.subr.mxu0 0.0
    %2778 = vmatpush1.msra.mxu0 %v135
    %2779 = vmatprep.subr.mxu0 0.0
    %2780 = vmatpush1.msra.mxu0 %v136
    %2781 = vmatprep.subr.mxu0 0.0
    %2782 = vmatpush1.msra.mxu0 0.0
    %2783 = vmatprep.subr.mxu0 0.0
    %2784 = vmatpush1.msra.mxu0 0.0
    %2785 = vmatprep.subr.mxu0 0.0
    %2786 = vmatpush1.msra.mxu0 0.0
    %2787 = vmatprep.subr.mxu0 0.0
    %2788 = vmatpush1.msra.mxu0 0.0
    %2789 = vmatprep.subr.mxu0 0.0
    %2790 = vmatpush1.msra.mxu0 0.0
    %2791 = vmatprep.subr.mxu0 0.0
    %2792 = vmatpush1.msra.mxu0 0.0
    %2793 = vmatprep.subr.mxu0 0.0
    %2794 = vmatpush1.msra.mxu0 0.0
    %2795 = vmatprep.subr.mxu0 0.0
    %2796 = vmatpush1.msra.mxu0 0.0
    %2797 = vmatprep.subr.mxu0 0.0
    %2798 = vmatpush1.msra.mxu0 0.0
    %2799 = vmatprep.subr.mxu0 0.0
    %2800 = vmatpush1.msra.mxu0 0.0
    %2801 = vmatprep.subr.mxu0 0.0
    %2802 = vmatpush1.msra.mxu0 0.0
    %2803 = vmatprep.subr.mxu0 0.0
    %2804 = vmatpush1.msra.mxu0 0.0
    %2805 = vmatprep.subr.mxu0 0.0
    %2806 = vmatpush1.msra.mxu0 0.0
    %2807 = vmatprep.subr.mxu0 0.0
    %2808 = vmatpush1.msra.mxu0 0.0
    %2809 = vmatprep.subr.mxu0 0.0
    %2810 = vmatpush1.msra.mxu0 0.0
    %2811 = vmatprep.subr.mxu0 0.0
    %2812 = vmatpush1.msra.mxu0 0.0
    %2813 = vmatprep.subr.mxu0 0.0
    %2814 = vmatpush1.msra.mxu0 0.0
    %2815 = vmatprep.subr.mxu0 0.0
    %2816 = vmatpush1.msra.mxu0 0.0
    %2817 = vmatprep.subr.mxu0 0.0
    %2818 = vmatpush1.msra.mxu0 0.0
    %2819 = vmatprep.subr.mxu0 0.0
    %2820 = vmatpush1.msra.mxu0 0.0
    %2821 = vmatprep.subr.mxu0 0.0
    %2822 = vmatpush1.msra.mxu0 0.0
    %2823 = vmatprep.subr.mxu0 0.0
    %2824 = vmatpush1.msra.mxu0 0.0
    %2825 = vmatprep.subr.mxu0 0.0
    %2826 = vmatpush1.msra.mxu0 0.0
    %2827 = vmatprep.subr.mxu0 0.0
    %2828 = vmatpush1.msra.mxu0 0.0
    %2829 = vmatprep.subr.mxu0 0.0
    %2830 = vmatpush1.msra.mxu0 0.0
    %2831 = vmatprep.subr.mxu0 0.0
    %2832 = vmatpush1.msra.mxu0 0.0
    %2833 = vmatprep.subr.mxu0 0.0
    %2834 = vmatpush1.msra.mxu0 0.0
    %2835 = vmatprep.subr.mxu0 0.0
    %2836 = vmatpush1.msra.mxu0 0.0
    %2837 = vmatprep.mubr.f32.mxu0 0.0
    %2838 = vmatmul.mubr.f32.gmra.mrb[0].mxu0 %v2654
    %v2839 = vpop.f32.mrb[0].mxu0
    %v2840 = vadd.f32 0.0, %v2839
    %v2841 = vpop.f32.mrb[0].mxu0
    %2842 = vmatprep.mubr.f32.mxu0 0.0
    %2843 = vmatmul.mubr.f32.gmra.mrb[0].mxu0 %v2657
    %v2844 = vpop.f32.mrb[0].mxu0
    %v2845 = vadd.f32 0.0, %v2844
    %v2846 = vpop.f32.mrb[0].mxu0
    %2847 = vmatprep.mubr.f32.mxu0 0.0
    %2848 = vmatmul.mubr.f32.gmra.mrb[0].mxu0 %v2660
    %v2849 = vpop.f32.mrb[0].mxu0
    %v2850 = vadd.f32 0.0, %v2849
    %v2851 = vpop.f32.mrb[0].mxu0
    %2852 = vmatprep.mubr.f32.mxu0 0.0
    %2853 = vmatmul.mubr.f32.gmra.mrb[0].mxu0 %v2663
    %v2854 = vpop.f32.mrb[0].mxu0
    %v2855 = vadd.f32 0.0, %v2854
    %v2856 = vpop.f32.mrb[0].mxu0
    %2857 = vmatprep.mubr.f32.mxu0 0.0
    %2858 = vmatmul.mubr.f32.gmra.mrb[0].mxu0 %v2666
    %v2859 = vpop.f32.mrb[0].mxu0
    %v2860 = vadd.f32 0.0, %v2859
    %v2861 = vpop.f32.mrb[0].mxu0
    %2862 = vmatprep.mubr.f32.mxu0 0.0
    %2863 = vmatmul.mubr.f32.gmra.mrb[0].mxu0 %v2669
    %v2864 = vpop.f32.mrb[0].mxu0
    %v2865 = vadd.f32 0.0, %v2864
    %v2866 = vpop.f32.mrb[0].mxu0
    %2867 = vmatprep.mubr.f32.mxu0 0.0
    %2868 = vmatmul.mubr.f32.gmra.mrb[0].mxu0 %v2672
    %v2869 = vpop.f32.mrb[0].mxu0
    %v2870 = vadd.f32 0.0, %v2869
    %v2871 = vpop.f32.mrb[0].mxu0
    %2872 = vmatprep.mubr.f32.mxu0 0.0
    %2873 = vmatmul.mubr.f32.gmra.mrb[0].mxu0 %v2675
    %v2874 = vpop.f32.mrb[0].mxu0
    %v2875 = vadd.f32 0.0, %v2874
    %v2876 = vpop.f32.mrb[0].mxu0
    %2877 = vmatprep.mubr.f32.mxu0 0.0
    %2878 = vmatmul.mubr.f32.gmra.mrb[0].mxu0 %v2678
    %v2879 = vpop.f32.mrb[0].mxu0
    %v2880 = vadd.f32 0.0, %v2879
    %v2881 = vpop.f32.mrb[0].mxu0
    %2882 = vmatprep.mubr.f32.mxu0 0.0
    %2883 = vmatmul.mubr.f32.gmra.mrb[0].mxu0 %v2681
    %v2884 = vpop.f32.mrb[0].mxu0
    %v2885 = vadd.f32 0.0, %v2884
    %v2886 = vpop.f32.mrb[0].mxu0
    %2887 = vmatprep.mubr.f32.mxu0 0.0
    %2888 = vmatmul.mubr.f32.gmra.mrb[0].mxu0 %v2684
    %v2889 = vpop.f32.mrb[0].mxu0
    %v2890 = vadd.f32 0.0, %v2889
    %v2891 = vpop.f32.mrb[0].mxu0
    %2892 = vmatprep.mubr.f32.mxu0 0.0
    %2893 = vmatmul.mubr.f32.gmra.mrb[0].mxu0 %v2687
    %v2894 = vpop.f32.mrb[0].mxu0
    %v2895 = vadd.f32 0.0, %v2894
    %v2896 = vpop.f32.mrb[0].mxu0
    %2897 = vmatprep.mubr.f32.mxu0 0.0
    %2898 = vmatmul.mubr.f32.gmra.mrb[0].mxu0 %v2690
    %v2899 = vpop.f32.mrb[0].mxu0
    %v2900 = vadd.f32 0.0, %v2899
    %v2901 = vpop.f32.mrb[0].mxu0
    %2902 = vmatprep.mubr.f32.mxu0 0.0
    %2903 = vmatmul.mubr.f32.gmra.mrb[0].mxu0 %v2693
    %v2904 = vpop.f32.mrb[0].mxu0
    %v2905 = vadd.f32 0.0, %v2904
    %v2906 = vpop.f32.mrb[0].mxu0
    %2907 = vmatprep.mubr.f32.mxu0 0.0
    %2908 = vmatmul.mubr.f32.gmra.mrb[0].mxu0 %v2696
    %v2909 = vpop.f32.mrb[0].mxu0
    %v2910 = vadd.f32 0.0, %v2909
    %v2911 = vpop.f32.mrb[0].mxu0
    %2912 = vmatprep.mubr.f32.mxu0 0.0
    %2913 = vmatmul.mubr.f32.gmra.mrb[0].mxu0 %v2699
    %v2914 = vpop.f32.mrb[0].mxu0
    %v2915 = vadd.f32 0.0, %v2914
    %v2916 = vpop.f32.mrb[0].mxu0
    %2917 = vmatprep.mubr.f32.mxu0 0.0
    %2918 = vmatmul.mubr.f32.gmra.mrb[0].mxu0 %v2702
    %v2919 = vpop.f32.mrb[0].mxu0
    %v2920 = vadd.f32 0.0, %v2919
    %v2921 = vpop.f32.mrb[0].mxu0
    %2922 = vmatprep.mubr.f32.mxu0 0.0
    %2923 = vmatmul.mubr.f32.gmra.mrb[0].mxu0 %v2705
    %v2924 = vpop.f32.mrb[0].mxu0
    %v2925 = vadd.f32 0.0, %v2924
    %v2926 = vpop.f32.mrb[0].mxu0
    %2927 = vmatprep.mubr.f32.mxu0 0.0
    %2928 = vmatmul.mubr.f32.gmra.mrb[0].mxu0 %v2708
    %v2929 = vpop.f32.mrb[0].mxu0
    %v2930 = vadd.f32 0.0, %v2929
    %v2931 = vpop.f32.mrb[0].mxu0
    %2932 = vmatprep.mubr.f32.mxu0 0.0
    %2933 = vmatmul.mubr.f32.gmra.mrb[0].mxu0 %v2711
    %v2934 = vpop.f32.mrb[0].mxu0
    %v2935 = vadd.f32 0.0, %v2934
    %v2936 = vpop.f32.mrb[0].mxu0
    %2937 = vmatprep.mubr.f32.mxu0 0.0
    %2938 = vmatmul.mubr.f32.gmra.mrb[0].mxu0 %v2714
    %v2939 = vpop.f32.mrb[0].mxu0
    %v2940 = vadd.f32 0.0, %v2939
    %v2941 = vpop.f32.mrb[0].mxu0
    %2942 = vmatprep.mubr.f32.mxu0 0.0
    %2943 = vmatmul.mubr.f32.gmra.mrb[0].mxu0 %v2717
    %v2944 = vpop.f32.mrb[0].mxu0
    %v2945 = vadd.f32 0.0, %v2944
    %v2946 = vpop.f32.mrb[0].mxu0
    %2947 = vmatprep.mubr.f32.mxu0 0.0
    %2948 = vmatmul.mubr.f32.gmra.mrb[0].mxu0 %v2720
    %v2949 = vpop.f32.mrb[0].mxu0
    %v2950 = vadd.f32 0.0, %v2949
    %v2951 = vpop.f32.mrb[0].mxu0
    %2952 = vmatprep.mubr.f32.mxu0 0.0
    %2953 = vmatmul.mubr.f32.gmra.mrb[0].mxu0 %v2723
    %v2954 = vpop.f32.mrb[0].mxu0
    %v2955 = vadd.f32 0.0, %v2954
    %v2956 = vpop.f32.mrb[0].mxu0
    %2957 = vmatprep.mubr.f32.mxu0 0.0
    %2958 = vmatmul.mubr.f32.gmra.mrb[0].mxu0 %v2726
    %v2959 = vpop.f32.mrb[0].mxu0
    %v2960 = vadd.f32 0.0, %v2959
    %v2961 = vpop.f32.mrb[0].mxu0
    %2962 = vmatprep.mubr.f32.mxu0 0.0
    %2963 = vmatmul.mubr.f32.gmra.mrb[0].mxu0 %v2729
    %v2964 = vpop.f32.mrb[0].mxu0
    %v2965 = vadd.f32 0.0, %v2964
    %v2966 = vpop.f32.mrb[0].mxu0
    %2967 = vmatprep.mubr.f32.mxu0 0.0
    %2968 = vmatmul.mubr.f32.gmra.mrb[0].mxu0 %v2732
    %v2969 = vpop.f32.mrb[0].mxu0
    %v2970 = vadd.f32 0.0, %v2969
    %v2971 = vpop.f32.mrb[0].mxu0
    %2972 = vmatprep.mubr.f32.mxu0 0.0
    %2973 = vmatmul.mubr.f32.gmra.mrb[0].mxu0 %v2735
    %v2974 = vpop.f32.mrb[0].mxu0
    %v2975 = vadd.f32 0.0, %v2974
    %v2976 = vpop.f32.mrb[0].mxu0
    %2977 = vmatprep.mubr.f32.mxu0 0.0
    %2978 = vmatmul.mubr.f32.gmra.mrb[0].mxu0 %v2738
    %v2979 = vpop.f32.mrb[0].mxu0
    %v2980 = vadd.f32 0.0, %v2979
    %v2981 = vpop.f32.mrb[0].mxu0
    %2982 = vmatprep.mubr.f32.mxu0 0.0
    %2983 = vmatmul.mubr.f32.gmra.mrb[0].mxu0 %v2741
    %v2984 = vpop.f32.mrb[0].mxu0
    %v2985 = vadd.f32 0.0, %v2984
    %v2986 = vpop.f32.mrb[0].mxu0
    %2987 = vmatprep.mubr.f32.mxu0 0.0
    %2988 = vmatmul.mubr.f32.gmra.mrb[0].mxu0 %v2744
    %v2989 = vpop.f32.mrb[0].mxu0
    %v2990 = vadd.f32 0.0, %v2989
    %v2991 = vpop.f32.mrb[0].mxu0
    %2992 = vmatprep.mubr.f32.mxu0 0.0
    %2993 = vmatmul.mubr.f32.gmra.mrb[0].mxu0 %v2747
    %v2994 = vpop.f32.mrb[0].mxu0
    %v2995 = vadd.f32 0.0, %v2994
    %v2996 = vpop.f32.mrb[0].mxu0
    %2997 = vmatprep.mubr.f32.mxu0 0.0
    %2998 = vmatmul.mubr.f32.gmra.mrb[0].mxu0 %v2750
    %v2999 = vpop.f32.mrb[0].mxu0
    %v3000 = vadd.f32 0.0, %v2999
    %v3001 = vpop.f32.mrb[0].mxu0
    %3002 = vmatprep.mubr.f32.mxu0 0.0
    %3003 = vmatmul.mubr.f32.gmra.mrb[0].mxu0 %v2753
    %v3004 = vpop.f32.mrb[0].mxu0
    %v3005 = vadd.f32 0.0, %v3004
    %v3006 = vpop.f32.mrb[0].mxu0
    %3007 = vmatprep.mubr.f32.mxu0 0.0
    %3008 = vmatmul.mubr.f32.gmra.mrb[0].mxu0 %v2756
    %v3009 = vpop.f32.mrb[0].mxu0
    %v3010 = vadd.f32 0.0, %v3009
    %v3011 = vpop.f32.mrb[0].mxu0
    %3012 = vmatprep.mubr.f32.mxu0 0.0
    %3013 = vmatmul.mubr.f32.gmra.mrb[0].mxu0 %v2759
    %v3014 = vpop.f32.mrb[0].mxu0
    %v3015 = vadd.f32 0.0, %v3014
    %v3016 = vpop.f32.mrb[0].mxu0
    %3017 = vmatprep.mubr.f32.mxu0 0.0
    %3018 = vmatmul.mubr.f32.gmra.mrb[0].mxu0 %v2762
    %v3019 = vpop.f32.mrb[0].mxu0
    %v3020 = vadd.f32 0.0, %v3019
    %v3021 = vpop.f32.mrb[0].mxu0
    %3022 = vmatprep.mubr.f32.mxu0 0.0
    %3023 = vmatmul.mubr.f32.gmra.mrb[0].mxu0 %v2765
    %v3024 = vpop.f32.mrb[0].mxu0
    %v3025 = vadd.f32 0.0, %v3024
    %v3026 = vpop.f32.mrb[0].mxu0
    %3027 = vmatprep.mubr.f32.mxu0 0.0
    %3028 = vmatmul.mubr.f32.gmra.mrb[0].mxu0 %v2768
    %v3029 = vpop.f32.mrb[0].mxu0
    %v3030 = vadd.f32 0.0, %v3029
    %v3031 = vpop.f32.mrb[0].mxu0
    %3032 = vmatprep.mubr.f32.mxu0 0.0
    %3033 = vmatmul.mubr.f32.gmra.mrb[0].mxu0 %v2771
    %v3034 = vpop.f32.mrb[0].mxu0
    %v3035 = vadd.f32 0.0, %v3034
    %v3036 = vpop.f32.mrb[0].mxu0
    %3037 = vdwg.mxu0
    %v3038 = vmul.f32 %v2840, 0.2
    %v3039 = vmul.f32 %v2845, 0.2
    %v3040 = vmul.f32 %v2850, 0.2
    %v3041 = vmul.f32 %v2855, 0.2
    %v3042 = vmul.f32 %v2860, 0.2
    %v3043 = vmul.f32 %v2865, 0.2
    %v3044 = vmul.f32 %v2870, 0.2
    %v3045 = vmul.f32 %v2875, 0.2
    %v3046 = vmul.f32 %v2880, 0.2
    %v3047 = vmul.f32 %v2885, 0.2
    %v3048 = vmul.f32 %v2890, 0.2
    %v3049 = vmul.f32 %v2895, 0.2
    %v3050 = vmul.f32 %v2900, 0.2
    %v3051 = vmul.f32 %v2905, 0.2
    %v3052 = vmul.f32 %v2910, 0.2
    %v3053 = vmul.f32 %v2915, 0.2
    %v3054 = vmul.f32 %v2920, 0.2
    %v3055 = vmul.f32 %v2925, 0.2
    %v3056 = vmul.f32 %v2930, 0.2
    %v3057 = vmul.f32 %v2935, 0.2
    %v3058 = vmul.f32 %v2940, 0.2
    %v3059 = vmul.f32 %v2945, 0.2
    %v3060 = vmul.f32 %v2950, 0.2
    %v3061 = vmul.f32 %v2955, 0.2
    %v3062 = vmul.f32 %v2960, 0.2
    %v3063 = vmul.f32 %v2965, 0.2
    %v3064 = vmul.f32 %v2970, 0.2
    %v3065 = vmul.f32 %v2975, 0.2
    %v3066 = vmul.f32 %v2980, 0.2
    %v3067 = vmul.f32 %v2985, 0.2
    %v3068 = vmul.f32 %v2990, 0.2
    %v3069 = vmul.f32 %v2995, 0.2
    %v3070 = vmul.f32 %v3000, 0.2
    %v3071 = vmul.f32 %v3005, 0.2
    %v3072 = vmul.f32 %v3010, 0.2
    %v3073 = vmul.f32 %v3015, 0.2
    %v3074 = vmul.f32 %v3020, 0.2
    %v3075 = vmul.f32 %v3025, 0.2
    %v3076 = vmul.f32 %v3030, 0.2
    %v3077 = vmul.f32 %v3035, 0.2
    %v3078 = vmax.f32 %v2840, %v3038
    %v3079 = vmax.f32 %v2845, %v3039
    %v3080 = vmax.f32 %v2850, %v3040
    %v3081 = vmax.f32 %v2855, %v3041
    %v3082 = vmax.f32 %v2860, %v3042
    %v3083 = vmax.f32 %v2865, %v3043
    %v3084 = vmax.f32 %v2870, %v3044
    %v3085 = vmax.f32 %v2875, %v3045
    %v3086 = vmax.f32 %v2880, %v3046
    %v3087 = vmax.f32 %v2885, %v3047
    %v3088 = vmax.f32 %v2890, %v3048
    %v3089 = vmax.f32 %v2895, %v3049
    %v3090 = vmax.f32 %v2900, %v3050
    %v3091 = vmax.f32 %v2905, %v3051
    %v3092 = vmax.f32 %v2910, %v3052
    %v3093 = vmax.f32 %v2915, %v3053
    %v3094 = vmax.f32 %v2920, %v3054
    %v3095 = vmax.f32 %v2925, %v3055
    %v3096 = vmax.f32 %v2930, %v3056
    %v3097 = vmax.f32 %v2935, %v3057
    %v3098 = vmax.f32 %v2940, %v3058
    %v3099 = vmax.f32 %v2945, %v3059
    %v3100 = vmax.f32 %v2950, %v3060
    %v3101 = vmax.f32 %v2955, %v3061
    %v3102 = vmax.f32 %v2960, %v3062
    %v3103 = vmax.f32 %v2965, %v3063
    %v3104 = vmax.f32 %v2970, %v3064
    %v3105 = vmax.f32 %v2975, %v3065
    %v3106 = vmax.f32 %v2980, %v3066
    %v3107 = vmax.f32 %v2985, %v3067
    %v3108 = vmax.f32 %v2990, %v3068
    %v3109 = vmax.f32 %v2995, %v3069
    %v3110 = vmax.f32 %v3000, %v3070
    %v3111 = vmax.f32 %v3005, %v3071
    %v3112 = vmax.f32 %v3010, %v3072
    %v3113 = vmax.f32 %v3015, %v3073
    %v3114 = vmax.f32 %v3020, %v3074
    %v3115 = vmax.f32 %v3025, %v3075
    %v3116 = vmax.f32 %v3030, %v3076
    %v3117 = vmax.f32 %v3035, %v3077
    %v3118 = vld [vmem:[%s2] sm:$0xff]
    %v3119 = vld [vmem:[%s2 + $0x8] sm:$0xff]
    %v3120 = vld [vmem:[%s2 + $0x10] sm:$0xff]
    %v3121 = vld [vmem:[%s2 + $0x18] sm:$0xff]
    %v3122 = vld [vmem:[%s3] sm:$0x1]
    %v3123 = vld [vmem:[%s4] sm:$0x1]
    %v3125 = vsel %vm2652, %v243, 0
    %v3128 = vsel %vm2652, %v246, 0
    %v3131 = vsel %vm2652, %v249, 0
    %v3134 = vsel %vm2652, %v252, 0
    %v3137 = vsel %vm2652, %v255, 0
    %v3140 = vsel %vm2652, %v258, 0
    %v3143 = vsel %vm2652, %v261, 0
    %v3146 = vsel %vm2652, %v264, 0
    %v3149 = vsel %vm2652, %v267, 0
    %v3152 = vsel %vm2652, %v270, 0
    %3154 = vmatprep.subr.mxu0 0.0
    %3155 = vmatpush1.msra.mxu0 %v3078
    %3156 = vmatprep.subr.mxu0 0.0
    %3157 = vmatpush1.msra.mxu0 %v3079
    %3158 = vmatprep.subr.mxu0 0.0
    %3159 = vmatpush1.msra.mxu0 %v3080
    %3160 = vmatprep.subr.mxu0 0.0
    %3161 = vmatpush1.msra.mxu0 %v3081
    %3162 = vmatprep.subr.mxu0 0.0
    %3163 = vmatpush1.msra.mxu0 %v3082
    %3164 = vmatprep.subr.mxu0 0.0
    %3165 = vmatpush1.msra.mxu0 %v3083
    %3166 = vmatprep.subr.mxu0 0.0
    %3167 = vmatpush1.msra.mxu0 %v3084
    %3168 = vmatprep.subr.mxu0 0.0
    %3169 = vmatpush1.msra.mxu0 %v3085
    %3170 = vmatprep.subr.mxu0 0.0
    %3171 = vmatpush1.msra.mxu0 %v3086
    %3172 = vmatprep.subr.mxu0 0.0
    %3173 = vmatpush1.msra.mxu0 %v3087
    %3174 = vmatprep.subr.mxu0 0.0
    %3175 = vmatpush1.msra.mxu0 %v3088
    %3176 = vmatprep.subr.mxu0 0.0
    %3177 = vmatpush1.msra.mxu0 %v3089
    %3178 = vmatprep.subr.mxu0 0.0
    %3179 = vmatpush1.msra.mxu0 %v3090
    %3180 = vmatprep.subr.mxu0 0.0
    %3181 = vmatpush1.msra.mxu0 %v3091
    %3182 = vmatprep.subr.mxu0 0.0
    %3183 = vmatpush1.msra.mxu0 %v3092
    %3184 = vmatprep.subr.mxu0 0.0
    %3185 = vmatpush1.msra.mxu0 %v3093
    %3186 = vmatprep.subr.mxu0 0.0
    %3187 = vmatpush1.msra.mxu0 %v3094
    %3188 = vmatprep.subr.mxu0 0.0
    %3189 = vmatpush1.msra.mxu0 %v3095
    %3190 = vmatprep.subr.mxu0 0.0
    %3191 = vmatpush1.msra.mxu0 %v3096
    %3192 = vmatprep.subr.mxu0 0.0
    %3193 = vmatpush1.msra.mxu0 %v3097
    %3194 = vmatprep.subr.mxu0 0.0
    %3195 = vmatpush1.msra.mxu0 0.0
    %3196 = vmatprep.subr.mxu0 0.0
    %3197 = vmatpush1.msra.mxu0 0.0
    %3198 = vmatprep.subr.mxu0 0.0
    %3199 = vmatpush1.msra.mxu0 0.0
    %3200 = vmatprep.subr.mxu0 0.0
    %3201 = vmatpush1.msra.mxu0 0.0
    %3202 = vmatprep.subr.mxu0 0.0
    %3203 = vmatpush1.msra.mxu0 0.0
    %3204 = vmatprep.subr.mxu0 0.0
    %3205 = vmatpush1.msra.mxu0 0.0
    %3206 = vmatprep.subr.mxu0 0.0
    %3207 = vmatpush1.msra.mxu0 0.0
    %3208 = vmatprep.subr.mxu0 0.0
    %3209 = vmatpush1.msra.mxu0 0.0
    %3210 = vmatprep.subr.mxu0 0.0
    %3211 = vmatpush1.msra.mxu0 0.0
    %3212 = vmatprep.subr.mxu0 0.0
    %3213 = vmatpush1.msra.mxu0 0.0
    %3214 = vmatprep.subr.mxu0 0.0
    %3215 = vmatpush1.msra.mxu0 0.0
    %3216 = vmatprep.subr.mxu0 0.0
    %3217 = vmatpush1.msra.mxu0 0.0
    %3218 = vmatprep.mubr.f32.mxu0 %v3125
    %3219 = vmatmul.mubr.f32.gmra.mrb[0].mxu0 %v242
    %v3220 = vpop.f32.mrb[0].mxu0
    %v3221 = vadd.f32 0.0, %v3220
    %v3222 = vpop.f32.mrb[0].mxu0
    %3223 = vmatprep.mubr.f32.mxu0 %v3128
    %3224 = vmatmul.mubr.f32.gmra.mrb[0].mxu0 %v245
    %v3225 = vpop.f32.mrb[0].mxu0
    %v3226 = vadd.f32 0.0, %v3225
    %v3227 = vpop.f32.mrb[0].mxu0
    %3228 = vmatprep.mubr.f32.mxu0 %v3131
    %3229 = vmatmul.mubr.f32.gmra.mrb[0].mxu0 %v248
    %v3230 = vpop.f32.mrb[0].mxu0
    %v3231 = vadd.f32 0.0, %v3230
    %v3232 = vpop.f32.mrb[0].mxu0
    %3233 = vmatprep.mubr.f32.mxu0 %v3134
    %3234 = vmatmul.mubr.f32.gmra.mrb[0].mxu0 %v251
    %v3235 = vpop.f32.mrb[0].mxu0
    %v3236 = vadd.f32 0.0, %v3235
    %v3237 = vpop.f32.mrb[0].mxu0
    %3238 = vmatprep.mubr.f32.mxu0 %v3137
    %3239 = vmatmul.mubr.f32.gmra.mrb[0].mxu0 %v254
    %v3240 = vpop.f32.mrb[0].mxu0
    %v3241 = vadd.f32 0.0, %v3240
    %v3242 = vpop.f32.mrb[0].mxu0
    %3243 = vmatprep.mubr.f32.mxu0 %v3140
    %3244 = vmatmul.mubr.f32.gmra.mrb[0].mxu0 %v257
    %v3245 = vpop.f32.mrb[0].mxu0
    %v3246 = vadd.f32 0.0, %v3245
    %v3247 = vpop.f32.mrb[0].mxu0
    %3248 = vmatprep.mubr.f32.mxu0 %v3143
    %3249 = vmatmul.mubr.f32.gmra.mrb[0].mxu0 %v260
    %v3250 = vpop.f32.mrb[0].mxu0
    %v3251 = vadd.f32 0.0, %v3250
    %v3252 = vpop.f32.mrb[0].mxu0
    %3253 = vmatprep.mubr.f32.mxu0 %v3146
    %3254 = vmatmul.mubr.f32.gmra.mrb[0].mxu0 %v263
    %v3255 = vpop.f32.mrb[0].mxu0
    %v3256 = vadd.f32 0.0, %v3255
    %v3257 = vpop.f32.mrb[0].mxu0
    %3258 = vmatprep.mubr.f32.mxu0 %v3149
    %3259 = vmatmul.mubr.f32.gmra.mrb[0].mxu0 %v266
    %v3260 = vpop.f32.mrb[0].mxu0
    %v3261 = vadd.f32 0.0, %v3260
    %v3262 = vpop.f32.mrb[0].mxu0
    %3263 = vmatprep.mubr.f32.mxu0 %v3152
    %3264 = vmatmul.mubr.f32.gmra.mrb[0].mxu0 %v269
    %v3265 = vpop.f32.mrb[0].mxu0
    %v3266 = vadd.f32 0.0, %v3265
    %v3267 = vpop.f32.mrb[0].mxu0
    %3268 = vdwg.mxu0
    %v3270 = vsel %vm2652, %v383, 0
    %v3273 = vsel %vm2652, %v386, 0
    %v3276 = vsel %vm2652, %v389, 0
    %v3279 = vsel %vm2652, %v392, 0
    %v3282 = vsel %vm2652, %v395, 0
    %v3285 = vsel %vm2652, %v398, 0
    %v3288 = vsel %vm2652, %v401, 0
    %v3291 = vsel %vm2652, %v404, 0
    %v3294 = vsel %vm2652, %v407, 0
    %v3297 = vsel %vm2652, %v410, 0
    %3299 = vmatprep.subr.mxu0 0.0
    %3300 = vmatpush1.msra.mxu0 %v3078
    %3301 = vmatprep.subr.mxu0 0.0
    %3302 = vmatpush1.msra.mxu0 %v3079
    %3303 = vmatprep.subr.mxu0 0.0
    %3304 = vmatpush1.msra.mxu0 %v3080
    %3305 = vmatprep.subr.mxu0 0.0
    %3306 = vmatpush1.msra.mxu0 %v3081
    %3307 = vmatprep.subr.mxu0 0.0
    %3308 = vmatpush1.msra.mxu0 %v3082
    %3309 = vmatprep.subr.mxu0 0.0
    %3310 = vmatpush1.msra.mxu0 %v3083
    %3311 = vmatprep.subr.mxu0 0.0
    %3312 = vmatpush1.msra.mxu0 %v3084
    %3313 = vmatprep.subr.mxu0 0.0
    %3314 = vmatpush1.msra.mxu0 %v3085
    %3315 = vmatprep.subr.mxu0 0.0
    %3316 = vmatpush1.msra.mxu0 %v3086
    %3317 = vmatprep.subr.mxu0 0.0
    %3318 = vmatpush1.msra.mxu0 %v3087
    %3319 = vmatprep.subr.mxu0 0.0
    %3320 = vmatpush1.msra.mxu0 %v3088
    %3321 = vmatprep.subr.mxu0 0.0
    %3322 = vmatpush1.msra.mxu0 %v3089
    %3323 = vmatprep.subr.mxu0 0.0
    %3324 = vmatpush1.msra.mxu0 %v3090
    %3325 = vmatprep.subr.mxu0 0.0
    %3326 = vmatpush1.msra.mxu0 %v3091
    %3327 = vmatprep.subr.mxu0 0.0
    %3328 = vmatpush1.msra.mxu0 %v3092
    %3329 = vmatprep.subr.mxu0 0.0
    %3330 = vmatpush1.msra.mxu0 %v3093
    %3331 = vmatprep.subr.mxu0 0.0
    %3332 = vmatpush1.msra.mxu0 %v3094
    %3333 = vmatprep.subr.mxu0 0.0
    %3334 = vmatpush1.msra.mxu0 %v3095
    %3335 = vmatprep.subr.mxu0 0.0
    %3336 = vmatpush1.msra.mxu0 %v3096
    %3337 = vmatprep.subr.mxu0 0.0
    %3338 = vmatpush1.msra.mxu0 %v3097
    %3339 = vmatprep.subr.mxu0 0.0
    %3340 = vmatpush1.msra.mxu0 0.0
    %3341 = vmatprep.subr.mxu0 0.0
    %3342 = vmatpush1.msra.mxu0 0.0
    %3343 = vmatprep.subr.mxu0 0.0
    %3344 = vmatpush1.msra.mxu0 0.0
    %3345 = vmatprep.subr.mxu0 0.0
    %3346 = vmatpush1.msra.mxu0 0.0
    %3347 = vmatprep.subr.mxu0 0.0
    %3348 = vmatpush1.msra.mxu0 0.0
    %3349 = vmatprep.subr.mxu0 0.0
    %3350 = vmatpush1.msra.mxu0 0.0
    %3351 = vmatprep.subr.mxu0 0.0
    %3352 = vmatpush1.msra.mxu0 0.0
    %3353 = vmatprep.subr.mxu0 0.0
    %3354 = vmatpush1.msra.mxu0 0.0
    %3355 = vmatprep.subr.mxu0 0.0
    %3356 = vmatpush1.msra.mxu0 0.0
    %3357 = vmatprep.subr.mxu0 0.0
    %3358 = vmatpush1.msra.mxu0 0.0
    %3359 = vmatprep.subr.mxu0 0.0
    %3360 = vmatpush1.msra.mxu0 0.0
    %3361 = vmatprep.subr.mxu0 0.0
    %3362 = vmatpush1.msra.mxu0 0.0
    %3363 = vmatprep.mubr.f32.mxu0 %v3270
    %3364 = vmatmul.mubr.f32.gmra.mrb[0].mxu0 %v382
    %v3365 = vpop.f32.mrb[0].mxu0
    %v3366 = vadd.f32 0.0, %v3365
    %v3367 = vpop.f32.mrb[0].mxu0
    %3368 = vmatprep.mubr.f32.mxu0 %v3273
    %3369 = vmatmul.mubr.f32.gmra.mrb[0].mxu0 %v385
    %v3370 = vpop.f32.mrb[0].mxu0
    %v3371 = vadd.f32 0.0, %v3370
    %v3372 = vpop.f32.mrb[0].mxu0
    %3373 = vmatprep.mubr.f32.mxu0 %v3276
    %3374 = vmatmul.mubr.f32.gmra.mrb[0].mxu0 %v388
    %v3375 = vpop.f32.mrb[0].mxu0
    %v3376 = vadd.f32 0.0, %v3375
    %v3377 = vpop.f32.mrb[0].mxu0
    %3378 = vmatprep.mubr.f32.mxu0 %v3279
    %3379 = vmatmul.mubr.f32.gmra.mrb[0].mxu0 %v391
    %v3380 = vpop.f32.mrb[0].mxu0
    %v3381 = vadd.f32 0.0, %v3380
    %v3382 = vpop.f32.mrb[0].mxu0
    %3383 = vmatprep.mubr.f32.mxu0 %v3282
    %3384 = vmatmul.mubr.f32.gmra.mrb[0].mxu0 %v394
    %v3385 = vpop.f32.mrb[0].mxu0
    %v3386 = vadd.f32 0.0, %v3385
    %v3387 = vpop.f32.mrb[0].mxu0
    %3388 = vmatprep.mubr.f32.mxu0 %v3285
    %3389 = vmatmul.mubr.f32.gmra.mrb[0].mxu0 %v397
    %v3390 = vpop.f32.mrb[0].mxu0
    %v3391 = vadd.f32 0.0, %v3390
    %v3392 = vpop.f32.mrb[0].mxu0
    %3393 = vmatprep.mubr.f32.mxu0 %v3288
    %3394 = vmatmul.mubr.f32.gmra.mrb[0].mxu0 %v400
    %v3395 = vpop.f32.mrb[0].mxu0
    %v3396 = vadd.f32 0.0, %v3395
    %v3397 = vpop.f32.mrb[0].mxu0
    %3398 = vmatprep.mubr.f32.mxu0 %v3291
    %3399 = vmatmul.mubr.f32.gmra.mrb[0].mxu0 %v403
    %v3400 = vpop.f32.mrb[0].mxu0
    %v3401 = vadd.f32 0.0, %v3400
    %v3402 = vpop.f32.mrb[0].mxu0
    %3403 = vmatprep.mubr.f32.mxu0 %v3294
    %3404 = vmatmul.mubr.f32.gmra.mrb[0].mxu0 %v406
    %v3405 = vpop.f32.mrb[0].mxu0
    %v3406 = vadd.f32 0.0, %v3405
    %v3407 = vpop.f32.mrb[0].mxu0
    %3408 = vmatprep.mubr.f32.mxu0 %v3297
    %3409 = vmatmul.mubr.f32.gmra.mrb[0].mxu0 %v409
    %v3410 = vpop.f32.mrb[0].mxu0
    %v3411 = vadd.f32 0.0, %v3410
    %v3412 = vpop.f32.mrb[0].mxu0
    %3413 = vdwg.mxu0
    %v3424 = vrot.slane %v3366, 7
    %v3425 = vrot.slane %v3371, 7
    %v3426 = vsel %vm1243, %v3424, %v3425
    %v3427 = vrot.slane %v3376, 7
    %v3428 = vsel %vm1243, %v3425, %v3427
    %v3429 = vrot.slane %v3381, 7
    %v3430 = vsel %vm1243, %v3427, %v3429
    %v3431 = vrot.slane %v3386, 7
    %v3432 = vsel %vm1243, %v3429, %v3431
    %v3433 = vrot.slane %v3391, 7
    %v3434 = vsel %vm1243, %v3431, %v3433
    %v3435 = vrot.slane %v3396, 7
    %v3436 = vsel %vm1243, %v3433, %v3435
    %v3437 = vrot.slane %v3401, 7
    %v3438 = vsel %vm1243, %v3435, %v3437
    %v3439 = vrot.slane %v3406, 7
    %v3440 = vsel %vm1243, %v3437, %v3439
    %v3441 = vrot.slane %v3411, 7
    %v3442 = vsel %vm1243, %v3439, %v3441
    %v3453 = vsel %vm1243, 0.0, %v3424
    %v3464 = vrot.slane %v3221, 1
    %v3465 = vrot.slane %v3226, 1
    %v3466 = vsel %vm1324, %v3464, %v3465
    %v3467 = vrot.slane %v3231, 1
    %v3468 = vsel %vm1324, %v3465, %v3467
    %v3469 = vrot.slane %v3236, 1
    %v3470 = vsel %vm1324, %v3467, %v3469
    %v3471 = vrot.slane %v3241, 1
    %v3472 = vsel %vm1324, %v3469, %v3471
    %v3473 = vrot.slane %v3246, 1
    %v3474 = vsel %vm1324, %v3471, %v3473
    %v3475 = vrot.slane %v3251, 1
    %v3476 = vsel %vm1324, %v3473, %v3475
    %v3477 = vrot.slane %v3256, 1
    %v3478 = vsel %vm1324, %v3475, %v3477
    %v3479 = vrot.slane %v3261, 1
    %v3480 = vsel %vm1324, %v3477, %v3479
    %v3481 = vrot.slane %v3266, 1
    %v3482 = vsel %vm1324, %v3479, %v3481
    %v3484 = vsel %vm1324, %v3481, 0.0
    %3485 = vrot.lane.b32.xlu0 %v3221, 8
    %v3486 = vpop.permute.xlu0 %3485
    %3487 = vrot.lane.b32.xlu0 %v3226, 8
    %v3488 = vpop.permute.xlu0 %3487
    %3489 = vrot.lane.b32.xlu0 %v3231, 8
    %v3490 = vpop.permute.xlu0 %3489
    %3491 = vrot.lane.b32.xlu0 %v3236, 8
    %v3492 = vpop.permute.xlu0 %3491
    %3493 = vrot.lane.b32.xlu0 %v3241, 8
    %v3494 = vpop.permute.xlu0 %3493
    %3495 = vrot.lane.b32.xlu0 %v3246, 8
    %v3496 = vpop.permute.xlu0 %3495
    %3497 = vrot.lane.b32.xlu0 %v3251, 8
    %v3498 = vpop.permute.xlu0 %3497
    %3499 = vrot.lane.b32.xlu0 %v3256, 8
    %v3500 = vpop.permute.xlu0 %3499
    %3501 = vrot.lane.b32.xlu0 %v3261, 8
    %v3502 = vpop.permute.xlu0 %3501
    %3503 = vrot.lane.b32.xlu0 %v3266, 8
    %v3504 = vpop.permute.xlu0 %3503
    %3515 = vrot.lane.b32.xlu0 %v3366, 16
    %v3516 = vpop.permute.xlu0 %3515
    %3517 = vrot.lane.b32.xlu0 %v3371, 16
    %v3518 = vpop.permute.xlu0 %3517
    %3519 = vrot.lane.b32.xlu0 %v3376, 16
    %v3520 = vpop.permute.xlu0 %3519
    %3521 = vrot.lane.b32.xlu0 %v3381, 16
    %v3522 = vpop.permute.xlu0 %3521
    %3523 = vrot.lane.b32.xlu0 %v3386, 16
    %v3524 = vpop.permute.xlu0 %3523
    %3525 = vrot.lane.b32.xlu0 %v3391, 16
    %v3526 = vpop.permute.xlu0 %3525
    %3527 = vrot.lane.b32.xlu0 %v3396, 16
    %v3528 = vpop.permute.xlu0 %3527
    %3529 = vrot.lane.b32.xlu0 %v3401, 16
    %v3530 = vpop.permute.xlu0 %3529
    %3531 = vrot.lane.b32.xlu0 %v3406, 16
    %v3532 = vpop.permute.xlu0 %3531
    %3533 = vrot.lane.b32.xlu0 %v3411, 16
    %v3534 = vpop.permute.xlu0 %3533
    %3546 = vrot.lane.b32.xlu0 %v3466, 24
    %v3547 = vpop.permute.xlu0 %3546
    %3548 = vrot.lane.b32.xlu0 %v3468, 24
    %v3549 = vpop.permute.xlu0 %3548
    %3550 = vrot.lane.b32.xlu0 %v3470, 24
    %v3551 = vpop.permute.xlu0 %3550
    %3552 = vrot.lane.b32.xlu0 %v3472, 24
    %v3553 = vpop.permute.xlu0 %3552
    %3554 = vrot.lane.b32.xlu0 %v3474, 24
    %v3555 = vpop.permute.xlu0 %3554
    %3556 = vrot.lane.b32.xlu0 %v3476, 24
    %v3557 = vpop.permute.xlu0 %3556
    %3558 = vrot.lane.b32.xlu0 %v3478, 24
    %v3559 = vpop.permute.xlu0 %3558
    %3560 = vrot.lane.b32.xlu0 %v3480, 24
    %v3561 = vpop.permute.xlu0 %3560
    %3562 = vrot.lane.b32.xlu0 %v3482, 24
    %v3563 = vpop.permute.xlu0 %3562
    %3564 = vrot.lane.b32.xlu0 %v3484, 24
    %v3565 = vpop.permute.xlu0 %3564
    %v3576 = vsel %vm1547, %v3453, %v3486
    %v3577 = vsel %vm1547, %v3426, %v3488
    %v3578 = vsel %vm1547, %v3428, %v3490
    %v3579 = vsel %vm1547, %v3430, %v3492
    %v3580 = vsel %vm1547, %v3432, %v3494
    %v3581 = vsel %vm1547, %v3434, %v3496
    %v3582 = vsel %vm1547, %v3436, %v3498
    %v3583 = vsel %vm1547, %v3438, %v3500
    %v3584 = vsel %vm1547, %v3440, %v3502
    %v3585 = vsel %vm1547, %v3442, %v3504
    %v3586 = vsel %vm1568, %v3576, %v3516
    %v3587 = vsel %vm1568, %v3577, %v3518
    %v3588 = vsel %vm1568, %v3578, %v3520
    %v3589 = vsel %vm1568, %v3579, %v3522
    %v3590 = vsel %vm1568, %v3580, %v3524
    %v3591 = vsel %vm1568, %v3581, %v3526
    %v3592 = vsel %vm1568, %v3582, %v3528
    %v3593 = vsel %vm1568, %v3583, %v3530
    %v3594 = vsel %vm1568, %v3584, %v3532
    %v3595 = vsel %vm1568, %v3585, %v3534
    %v3596 = vsel %vm1589, %v3586, %v3547
    %v3597 = vsel %vm1589, %v3587, %v3549
    %v3598 = vsel %vm1589, %v3588, %v3551
    %v3599 = vsel %vm1589, %v3589, %v3553
    %v3600 = vsel %vm1589, %v3590, %v3555
    %v3601 = vsel %vm1589, %v3591, %v3557
    %v3602 = vsel %vm1589, %v3592, %v3559
    %v3603 = vsel %vm1589, %v3593, %v3561
    %v3604 = vsel %vm1589, %v3594, %v3563
    %v3605 = vsel %vm1589, %v3595, %v3565
    %3606 = vmatprep.subr.mxu0 0.0
    %3607 = vmatpush1.msra.mxu0 %v3098
    %3608 = vmatprep.subr.mxu0 0.0
    %3609 = vmatpush1.msra.mxu0 %v3099
    %3610 = vmatprep.subr.mxu0 0.0
    %3611 = vmatpush1.msra.mxu0 %v3100
    %3612 = vmatprep.subr.mxu0 0.0
    %3613 = vmatpush1.msra.mxu0 %v3101
    %3614 = vmatprep.subr.mxu0 0.0
    %3615 = vmatpush1.msra.mxu0 %v3102
    %3616 = vmatprep.subr.mxu0 0.0
    %3617 = vmatpush1.msra.mxu0 %v3103
    %3618 = vmatprep.subr.mxu0 0.0
    %3619 = vmatpush1.msra.mxu0 %v3104
    %3620 = vmatprep.subr.mxu0 0.0
    %3621 = vmatpush1.msra.mxu0 %v3105
    %3622 = vmatprep.subr.mxu0 0.0
    %3623 = vmatpush1.msra.mxu0 %v3106
    %3624 = vmatprep.subr.mxu0 0.0
    %3625 = vmatpush1.msra.mxu0 %v3107
    %3626 = vmatprep.subr.mxu0 0.0
    %3627 = vmatpush1.msra.mxu0 %v3108
    %3628 = vmatprep.subr.mxu0 0.0
    %3629 = vmatpush1.msra.mxu0 %v3109
    %3630 = vmatprep.subr.mxu0 0.0
    %3631 = vmatpush1.msra.mxu0 %v3110
    %3632 = vmatprep.subr.mxu0 0.0
    %3633 = vmatpush1.msra.mxu0 %v3111
    %3634 = vmatprep.subr.mxu0 0.0
    %3635 = vmatpush1.msra.mxu0 %v3112
    %3636 = vmatprep.subr.mxu0 0.0
    %3637 = vmatpush1.msra.mxu0 %v3113
    %3638 = vmatprep.subr.mxu0 0.0
    %3639 = vmatpush1.msra.mxu0 %v3114
    %3640 = vmatprep.subr.mxu0 0.0
    %3641 = vmatpush1.msra.mxu0 %v3115
    %3642 = vmatprep.subr.mxu0 0.0
    %3643 = vmatpush1.msra.mxu0 %v3116
    %3644 = vmatprep.subr.mxu0 0.0
    %3645 = vmatpush1.msra.mxu0 %v3117
    %3646 = vmatprep.subr.mxu0 0.0
    %3647 = vmatpush1.msra.mxu0 0.0
    %3648 = vmatprep.subr.mxu0 0.0
    %3649 = vmatpush1.msra.mxu0 0.0
    %3650 = vmatprep.subr.mxu0 0.0
    %3651 = vmatpush1.msra.mxu0 0.0
    %3652 = vmatprep.subr.mxu0 0.0
    %3653 = vmatpush1.msra.mxu0 0.0
    %3654 = vmatprep.subr.mxu0 0.0
    %3655 = vmatpush1.msra.mxu0 0.0
    %3656 = vmatprep.subr.mxu0 0.0
    %3657 = vmatpush1.msra.mxu0 0.0
    %3658 = vmatprep.subr.mxu0 0.0
    %3659 = vmatpush1.msra.mxu0 0.0
    %3660 = vmatprep.subr.mxu0 0.0
    %3661 = vmatpush1.msra.mxu0 0.0
    %3662 = vmatprep.subr.mxu0 0.0
    %3663 = vmatpush1.msra.mxu0 0.0
    %3664 = vmatprep.subr.mxu0 0.0
    %3665 = vmatpush1.msra.mxu0 0.0
    %3666 = vmatprep.subr.mxu0 0.0
    %3667 = vmatpush1.msra.mxu0 0.0
    %3668 = vmatprep.subr.mxu0 0.0
    %3669 = vmatpush1.msra.mxu0 0.0
    %3670 = vmatprep.mubr.f32.mxu0 %v3125
    %3671 = vmatmul.mubr.f32.gmra.mrb[0].mxu0 %v242
    %v3672 = vpop.f32.mrb[0].mxu0
    %v3673 = vadd.f32 0.0, %v3672
    %v3674 = vpop.f32.mrb[0].mxu0
    %3675 = vmatprep.mubr.f32.mxu0 %v3128
    %3676 = vmatmul.mubr.f32.gmra.mrb[0].mxu0 %v245
    %v3677 = vpop.f32.mrb[0].mxu0
    %v3678 = vadd.f32 0.0, %v3677
    %v3679 = vpop.f32.mrb[0].mxu0
    %3680 = vmatprep.mubr.f32.mxu0 %v3131
    %3681 = vmatmul.mubr.f32.gmra.mrb[0].mxu0 %v248
    %v3682 = vpop.f32.mrb[0].mxu0
    %v3683 = vadd.f32 0.0, %v3682
    %v3684 = vpop.f32.mrb[0].mxu0
    %3685 = vmatprep.mubr.f32.mxu0 %v3134
    %3686 = vmatmul.mubr.f32.gmra.mrb[0].mxu0 %v251
    %v3687 = vpop.f32.mrb[0].mxu0
    %v3688 = vadd.f32 0.0, %v3687
    %v3689 = vpop.f32.mrb[0].mxu0
    %3690 = vmatprep.mubr.f32.mxu0 %v3137
    %3691 = vmatmul.mubr.f32.gmra.mrb[0].mxu0 %v254
    %v3692 = vpop.f32.mrb[0].mxu0
    %v3693 = vadd.f32 0.0, %v3692
    %v3694 = vpop.f32.mrb[0].mxu0
    %3695 = vmatprep.mubr.f32.mxu0 %v3140
    %3696 = vmatmul.mubr.f32.gmra.mrb[0].mxu0 %v257
    %v3697 = vpop.f32.mrb[0].mxu0
    %v3698 = vadd.f32 0.0, %v3697
    %v3699 = vpop.f32.mrb[0].mxu0
    %3700 = vmatprep.mubr.f32.mxu0 %v3143
    %3701 = vmatmul.mubr.f32.gmra.mrb[0].mxu0 %v260
    %v3702 = vpop.f32.mrb[0].mxu0
    %v3703 = vadd.f32 0.0, %v3702
    %v3704 = vpop.f32.mrb[0].mxu0
    %3705 = vmatprep.mubr.f32.mxu0 %v3146
    %3706 = vmatmul.mubr.f32.gmra.mrb[0].mxu0 %v263
    %v3707 = vpop.f32.mrb[0].mxu0
    %v3708 = vadd.f32 0.0, %v3707
    %v3709 = vpop.f32.mrb[0].mxu0
    %3710 = vmatprep.mubr.f32.mxu0 %v3149
    %3711 = vmatmul.mubr.f32.gmra.mrb[0].mxu0 %v266
    %v3712 = vpop.f32.mrb[0].mxu0
    %v3713 = vadd.f32 0.0, %v3712
    %v3714 = vpop.f32.mrb[0].mxu0
    %3715 = vmatprep.mubr.f32.mxu0 %v3152
    %3716 = vmatmul.mubr.f32.gmra.mrb[0].mxu0 %v269
    %v3717 = vpop.f32.mrb[0].mxu0
    %v3718 = vadd.f32 0.0, %v3717
    %v3719 = vpop.f32.mrb[0].mxu0
    %3720 = vdwg.mxu0
    %3721 = vmatprep.subr.mxu0 0.0
    %3722 = vmatpush1.msra.mxu0 %v3098
    %3723 = vmatprep.subr.mxu0 0.0
    %3724 = vmatpush1.msra.mxu0 %v3099
    %3725 = vmatprep.subr.mxu0 0.0
    %3726 = vmatpush1.msra.mxu0 %v3100
    %3727 = vmatprep.subr.mxu0 0.0
    %3728 = vmatpush1.msra.mxu0 %v3101
    %3729 = vmatprep.subr.mxu0 0.0
    %3730 = vmatpush1.msra.mxu0 %v3102
    %3731 = vmatprep.subr.mxu0 0.0
    %3732 = vmatpush1.msra.mxu0 %v3103
    %3733 = vmatprep.subr.mxu0 0.0
    %3734 = vmatpush1.msra.mxu0 %v3104
    %3735 = vmatprep.subr.mxu0 0.0
    %3736 = vmatpush1.msra.mxu0 %v3105
    %3737 = vmatprep.subr.mxu0 0.0
    %3738 = vmatpush1.msra.mxu0 %v3106
    %3739 = vmatprep.subr.mxu0 0.0
    %3740 = vmatpush1.msra.mxu0 %v3107
    %3741 = vmatprep.subr.mxu0 0.0
    %3742 = vmatpush1.msra.mxu0 %v3108
    %3743 = vmatprep.subr.mxu0 0.0
    %3744 = vmatpush1.msra.mxu0 %v3109
    %3745 = vmatprep.subr.mxu0 0.0
    %3746 = vmatpush1.msra.mxu0 %v3110
    %3747 = vmatprep.subr.mxu0 0.0
    %3748 = vmatpush1.msra.mxu0 %v3111
    %3749 = vmatprep.subr.mxu0 0.0
    %3750 = vmatpush1.msra.mxu0 %v3112
    %3751 = vmatprep.subr.mxu0 0.0
    %3752 = vmatpush1.msra.mxu0 %v3113
    %3753 = vmatprep.subr.mxu0 0.0
    %3754 = vmatpush1.msra.mxu0 %v3114
    %3755 = vmatprep.subr.mxu0 0.0
    %3756 = vmatpush1.msra.mxu0 %v3115
    %3757 = vmatprep.subr.mxu0 0.0
    %3758 = vmatpush1.msra.mxu0 %v3116
    %3759 = vmatprep.subr.mxu0 0.0
    %3760 = vmatpush1.msra.mxu0 %v3117
    %3761 = vmatprep.subr.mxu0 0.0
    %3762 = vmatpush1.msra.mxu0 0.0
    %3763 = vmatprep.subr.mxu0 0.0
    %3764 = vmatpush1.msra.mxu0 0.0
    %3765 = vmatprep.subr.mxu0 0.0
    %3766 = vmatpush1.msra.mxu0 0.0
    %3767 = vmatprep.subr.mxu0 0.0
    %3768 = vmatpush1.msra.mxu0 0.0
    %3769 = vmatprep.subr.mxu0 0.0
    %3770 = vmatpush1.msra.mxu0 0.0
    %3771 = vmatprep.subr.mxu0 0.0
    %3772 = vmatpush1.msra.mxu0 0.0
    %3773 = vmatprep.subr.mxu0 0.0
    %3774 = vmatpush1.msra.mxu0 0.0
    %3775 = vmatprep.subr.mxu0 0.0
    %3776 = vmatpush1.msra.mxu0 0.0
    %3777 = vmatprep.subr.mxu0 0.0
    %3778 = vmatpush1.msra.mxu0 0.0
    %3779 = vmatprep.subr.mxu0 0.0
    %3780 = vmatpush1.msra.mxu0 0.0
    %3781 = vmatprep.subr.mxu0 0.0
    %3782 = vmatpush1.msra.mxu0 0.0
    %3783 = vmatprep.subr.mxu0 0.0
    %3784 = vmatpush1.msra.mxu0 0.0
    %3785 = vmatprep.mubr.f32.mxu0 %v3270
    %3786 = vmatmul.mubr.f32.gmra.mrb[0].mxu0 %v382
    %v3787 = vpop.f32.mrb[0].mxu0
    %v3788 = vadd.f32 0.0, %v3787
    %v3789 = vpop.f32.mrb[0].mxu0
    %3790 = vmatprep.mubr.f32.mxu0 %v3273
    %3791 = vmatmul.mubr.f32.gmra.mrb[0].mxu0 %v385
    %v3792 = vpop.f32.mrb[0].mxu0
    %v3793 = vadd.f32 0.0, %v3792
    %v3794 = vpop.f32.mrb[0].mxu0
    %3795 = vmatprep.mubr.f32.mxu0 %v3276
    %3796 = vmatmul.mubr.f32.gmra.mrb[0].mxu0 %v388
    %v3797 = vpop.f32.mrb[0].mxu0
    %v3798 = vadd.f32 0.0, %v3797
    %v3799 = vpop.f32.mrb[0].mxu0
    %3800 = vmatprep.mubr.f32.mxu0 %v3279
    %3801 = vmatmul.mubr.f32.gmra.mrb[0].mxu0 %v391
    %v3802 = vpop.f32.mrb[0].mxu0
    %v3803 = vadd.f32 0.0, %v3802
    %v3804 = vpop.f32.mrb[0].mxu0
    %3805 = vmatprep.mubr.f32.mxu0 %v3282
    %3806 = vmatmul.mubr.f32.gmra.mrb[0].mxu0 %v394
    %v3807 = vpop.f32.mrb[0].mxu0
    %v3808 = vadd.f32 0.0, %v3807
    %v3809 = vpop.f32.mrb[0].mxu0
    %3810 = vmatprep.mubr.f32.mxu0 %v3285
    %3811 = vmatmul.mubr.f32.gmra.mrb[0].mxu0 %v397
    %v3812 = vpop.f32.mrb[0].mxu0
    %v3813 = vadd.f32 0.0, %v3812
    %v3814 = vpop.f32.mrb[0].mxu0
    %3815 = vmatprep.mubr.f32.mxu0 %v3288
    %3816 = vmatmul.mubr.f32.gmra.mrb[0].mxu0 %v400
    %v3817 = vpop.f32.mrb[0].mxu0
    %v3818 = vadd.f32 0.0, %v3817
    %v3819 = vpop.f32.mrb[0].mxu0
    %3820 = vmatprep.mubr.f32.mxu0 %v3291
    %3821 = vmatmul.mubr.f32.gmra.mrb[0].mxu0 %v403
    %v3822 = vpop.f32.mrb[0].mxu0
    %v3823 = vadd.f32 0.0, %v3822
    %v3824 = vpop.f32.mrb[0].mxu0
    %3825 = vmatprep.mubr.f32.mxu0 %v3294
    %3826 = vmatmul.mubr.f32.gmra.mrb[0].mxu0 %v406
    %v3827 = vpop.f32.mrb[0].mxu0
    %v3828 = vadd.f32 0.0, %v3827
    %v3829 = vpop.f32.mrb[0].mxu0
    %3830 = vmatprep.mubr.f32.mxu0 %v3297
    %3831 = vmatmul.mubr.f32.gmra.mrb[0].mxu0 %v409
    %v3832 = vpop.f32.mrb[0].mxu0
    %v3833 = vadd.f32 0.0, %v3832
    %v3834 = vpop.f32.mrb[0].mxu0
    %3835 = vdwg.mxu0
    %v3846 = vrot.slane %v3788, 7
    %v3847 = vrot.slane %v3793, 7
    %v3848 = vsel %vm1243, %v3846, %v3847
    %v3849 = vrot.slane %v3798, 7
    %v3850 = vsel %vm1243, %v3847, %v3849
    %v3851 = vrot.slane %v3803, 7
    %v3852 = vsel %vm1243, %v3849, %v3851
    %v3853 = vrot.slane %v3808, 7
    %v3854 = vsel %vm1243, %v3851, %v3853
    %v3855 = vrot.slane %v3813, 7
    %v3856 = vsel %vm1243, %v3853, %v3855
    %v3857 = vrot.slane %v3818, 7
    %v3858 = vsel %vm1243, %v3855, %v3857
    %v3859 = vrot.slane %v3823, 7
    %v3860 = vsel %vm1243, %v3857, %v3859
    %v3861 = vrot.slane %v3828, 7
    %v3862 = vsel %vm1243, %v3859, %v3861
    %v3863 = vrot.slane %v3833, 7
    %v3864 = vsel %vm1243, %v3861, %v3863
    %v3875 = vsel %vm1243, 0.0, %v3846
    %v3886 = vrot.slane %v3673, 1
    %v3887 = vrot.slane %v3678, 1
    %v3888 = vsel %vm1324, %v3886, %v3887
    %v3889 = vrot.slane %v3683, 1
    %v3890 = vsel %vm1324, %v3887, %v3889
    %v3891 = vrot.slane %v3688, 1
    %v3892 = vsel %vm1324, %v3889, %v3891
    %v3893 = vrot.slane %v3693, 1
    %v3894 = vsel %vm1324, %v3891, %v3893
    %v3895 = vrot.slane %v3698, 1
    %v3896 = vsel %vm1324, %v3893, %v3895
    %v3897 = vrot.slane %v3703, 1
    %v3898 = vsel %vm1324, %v3895, %v3897
    %v3899 = vrot.slane %v3708, 1
    %v3900 = vsel %vm1324, %v3897, %v3899
    %v3901 = vrot.slane %v3713, 1
    %v3902 = vsel %vm1324, %v3899, %v3901
    %v3903 = vrot.slane %v3718, 1
    %v3904 = vsel %vm1324, %v3901, %v3903
    %v3906 = vsel %vm1324, %v3903, 0.0
    %3907 = vrot.lane.b32.xlu0 %v3673, 8
    %v3908 = vpop.permute.xlu0 %3907
    %3909 = vrot.lane.b32.xlu0 %v3678, 8
    %v3910 = vpop.permute.xlu0 %3909
    %3911 = vrot.lane.b32.xlu0 %v3683, 8
    %v3912 = vpop.permute.xlu0 %3911
    %3913 = vrot.lane.b32.xlu0 %v3688, 8
    %v3914 = vpop.permute.xlu0 %3913
    %3915 = vrot.lane.b32.xlu0 %v3693, 8
    %v3916 = vpop.permute.xlu0 %3915
    %3917 = vrot.lane.b32.xlu0 %v3698, 8
    %v3918 = vpop.permute.xlu0 %3917
    %3919 = vrot.lane.b32.xlu0 %v3703, 8
    %v3920 = vpop.permute.xlu0 %3919
    %3921 = vrot.lane.b32.xlu0 %v3708, 8
    %v3922 = vpop.permute.xlu0 %3921
    %3923 = vrot.lane.b32.xlu0 %v3713, 8
    %v3924 = vpop.permute.xlu0 %3923
    %3925 = vrot.lane.b32.xlu0 %v3718, 8
    %v3926 = vpop.permute.xlu0 %3925
    %3937 = vrot.lane.b32.xlu0 %v3788, 16
    %v3938 = vpop.permute.xlu0 %3937
    %3939 = vrot.lane.b32.xlu0 %v3793, 16
    %v3940 = vpop.permute.xlu0 %3939
    %3941 = vrot.lane.b32.xlu0 %v3798, 16
    %v3942 = vpop.permute.xlu0 %3941
    %3943 = vrot.lane.b32.xlu0 %v3803, 16
    %v3944 = vpop.permute.xlu0 %3943
    %3945 = vrot.lane.b32.xlu0 %v3808, 16
    %v3946 = vpop.permute.xlu0 %3945
    %3947 = vrot.lane.b32.xlu0 %v3813, 16
    %v3948 = vpop.permute.xlu0 %3947
    %3949 = vrot.lane.b32.xlu0 %v3818, 16
    %v3950 = vpop.permute.xlu0 %3949
    %3951 = vrot.lane.b32.xlu0 %v3823, 16
    %v3952 = vpop.permute.xlu0 %3951
    %3953 = vrot.lane.b32.xlu0 %v3828, 16
    %v3954 = vpop.permute.xlu0 %3953
    %3955 = vrot.lane.b32.xlu0 %v3833, 16
    %v3956 = vpop.permute.xlu0 %3955
    %3968 = vrot.lane.b32.xlu0 %v3888, 24
    %v3969 = vpop.permute.xlu0 %3968
    %3970 = vrot.lane.b32.xlu0 %v3890, 24
    %v3971 = vpop.permute.xlu0 %3970
    %3972 = vrot.lane.b32.xlu0 %v3892, 24
    %v3973 = vpop.permute.xlu0 %3972
    %3974 = vrot.lane.b32.xlu0 %v3894, 24
    %v3975 = vpop.permute.xlu0 %3974
    %3976 = vrot.lane.b32.xlu0 %v3896, 24
    %v3977 = vpop.permute.xlu0 %3976
    %3978 = vrot.lane.b32.xlu0 %v3898, 24
    %v3979 = vpop.permute.xlu0 %3978
    %3980 = vrot.lane.b32.xlu0 %v3900, 24
    %v3981 = vpop.permute.xlu0 %3980
    %3982 = vrot.lane.b32.xlu0 %v3902, 24
    %v3983 = vpop.permute.xlu0 %3982
    %3984 = vrot.lane.b32.xlu0 %v3904, 24
    %v3985 = vpop.permute.xlu0 %3984
    %3986 = vrot.lane.b32.xlu0 %v3906, 24
    %v3987 = vpop.permute.xlu0 %3986
    %v3998 = vsel %vm1547, %v3875, %v3908
    %v3999 = vsel %vm1547, %v3848, %v3910
    %v4000 = vsel %vm1547, %v3850, %v3912
    %v4001 = vsel %vm1547, %v3852, %v3914
    %v4002 = vsel %vm1547, %v3854, %v3916
    %v4003 = vsel %vm1547, %v3856, %v3918
    %v4004 = vsel %vm1547, %v3858, %v3920
    %v4005 = vsel %vm1547, %v3860, %v3922
    %v4006 = vsel %vm1547, %v3862, %v3924
    %v4007 = vsel %vm1547, %v3864, %v3926
    %v4008 = vsel %vm1568, %v3998, %v3938
    %v4009 = vsel %vm1568, %v3999, %v3940
    %v4010 = vsel %vm1568, %v4000, %v3942
    %v4011 = vsel %vm1568, %v4001, %v3944
    %v4012 = vsel %vm1568, %v4002, %v3946
    %v4013 = vsel %vm1568, %v4003, %v3948
    %v4014 = vsel %vm1568, %v4004, %v3950
    %v4015 = vsel %vm1568, %v4005, %v3952
    %v4016 = vsel %vm1568, %v4006, %v3954
    %v4017 = vsel %vm1568, %v4007, %v3956
    %v4018 = vsel %vm1589, %v4008, %v3969
    %v4019 = vsel %vm1589, %v4009, %v3971
    %v4020 = vsel %vm1589, %v4010, %v3973
    %v4021 = vsel %vm1589, %v4011, %v3975
    %v4022 = vsel %vm1589, %v4012, %v3977
    %v4023 = vsel %vm1589, %v4013, %v3979
    %v4024 = vsel %vm1589, %v4014, %v3981
    %v4025 = vsel %vm1589, %v4015, %v3983
    %v4026 = vsel %vm1589, %v4016, %v3985
    %v4027 = vsel %vm1589, %v4017, %v3987
    %v4029 = vsel %vm2652, %v3596, 0
    %v4032 = vsel %vm2652, %v3597, 0
    %v4035 = vsel %vm2652, %v3598, 0
    %v4038 = vsel %vm2652, %v3599, 0
    %v4041 = vsel %vm2652, %v3600, 0
    %v4044 = vsel %vm2652, %v3601, 0
    %v4047 = vsel %vm2652, %v3602, 0
    %v4050 = vsel %vm2652, %v3603, 0
    %v4053 = vsel %vm2652, %v3604, 0
    %v4056 = vsel %vm2652, %v3605, 0
    %v4059 = vsel %vm2652, %v4018, 0
    %v4062 = vsel %vm2652, %v4019, 0
    %v4065 = vsel %vm2652, %v4020, 0
    %v4068 = vsel %vm2652, %v4021, 0
    %v4071 = vsel %vm2652, %v4022, 0
    %v4074 = vsel %vm2652, %v4023, 0
    %v4077 = vsel %vm2652, %v4024, 0
    %v4080 = vsel %vm2652, %v4025, 0
    %v4083 = vsel %vm2652, %v4026, 0
    %v4086 = vsel %vm2652, %v4027, 0
    %4088 = vmatprep.subr.mxu0 0.0
    %4089 = vmatpush1.msra.mxu0 %v3118
    %4090 = vmatprep.subr.mxu0 0.0
    %4091 = vmatpush1.msra.mxu0 %v3119
    %4092 = vmatprep.subr.mxu0 0.0
    %4093 = vmatpush1.msra.mxu0 %v3120
    %4094 = vmatprep.subr.mxu0 0.0
    %4095 = vmatpush1.msra.mxu0 %v3121
    %4096 = vmatprep.subr.mxu0 0.0
    %4097 = vmatpush1.msra.mxu0 0.0
    %4098 = vmatprep.subr.mxu0 0.0
    %4099 = vmatpush1.msra.mxu0 0.0
    %4100 = vmatprep.subr.mxu0 0.0
    %4101 = vmatpush1.msra.mxu0 0.0
    %4102 = vmatprep.subr.mxu0 0.0
    %4103 = vmatpush1.msra.mxu0 0.0
    %4104 = vmatprep.subr.mxu0 0.0
    %4105 = vmatpush1.msra.mxu0 0.0
    %4106 = vmatprep.subr.mxu0 0.0
    %4107 = vmatpush1.msra.mxu0 0.0
    %4108 = vmatprep.subr.mxu0 0.0
    %4109 = vmatpush1.msra.mxu0 0.0
    %4110 = vmatprep.subr.mxu0 0.0
    %4111 = vmatpush1.msra.mxu0 0.0
    %4112 = vmatprep.subr.mxu0 0.0
    %4113 = vmatpush1.msra.mxu0 0.0
    %4114 = vmatprep.subr.mxu0 0.0
    %4115 = vmatpush1.msra.mxu0 0.0
    %4116 = vmatprep.subr.mxu0 0.0
    %4117 = vmatpush1.msra.mxu0 0.0
    %4118 = vmatprep.subr.mxu0 0.0
    %4119 = vmatpush1.msra.mxu0 0.0
    %4120 = vmatprep.subr.mxu0 0.0
    %4121 = vmatpush1.msra.mxu0 0.0
    %4122 = vmatprep.subr.mxu0 0.0
    %4123 = vmatpush1.msra.mxu0 0.0
    %4124 = vmatprep.subr.mxu0 0.0
    %4125 = vmatpush1.msra.mxu0 0.0
    %4126 = vmatprep.subr.mxu0 0.0
    %4127 = vmatpush1.msra.mxu0 0.0
    %4128 = vmatprep.subr.mxu0 0.0
    %4129 = vmatpush1.msra.mxu0 0.0
    %4130 = vmatprep.subr.mxu0 0.0
    %4131 = vmatpush1.msra.mxu0 0.0
    %4132 = vmatprep.subr.mxu0 0.0
    %4133 = vmatpush1.msra.mxu0 0.0
    %4134 = vmatprep.subr.mxu0 0.0
    %4135 = vmatpush1.msra.mxu0 0.0
    %4136 = vmatprep.subr.mxu0 0.0
    %4137 = vmatpush1.msra.mxu0 0.0
    %4138 = vmatprep.subr.mxu0 0.0
    %4139 = vmatpush1.msra.mxu0 0.0
    %4140 = vmatprep.subr.mxu0 0.0
    %4141 = vmatpush1.msra.mxu0 0.0
    %4142 = vmatprep.subr.mxu0 0.0
    %4143 = vmatpush1.msra.mxu0 0.0
    %4144 = vmatprep.subr.mxu0 0.0
    %4145 = vmatpush1.msra.mxu0 0.0
    %4146 = vmatprep.subr.mxu0 0.0
    %4147 = vmatpush1.msra.mxu0 0.0
    %4148 = vmatprep.subr.mxu0 0.0
    %4149 = vmatpush1.msra.mxu0 0.0
    %4150 = vmatprep.subr.mxu0 0.0
    %4151 = vmatpush1.msra.mxu0 0.0
    %4152 = vmatprep.mubr.f32.mxu0 0.0
    %4153 = vmatmul.mubr.f32.gmra.mrb[0].mxu0 %v4029
    %v4154 = vpop.f32.mrb[0].mxu0
    %v4155 = vadd.f32 0.0, %v4154
    %v4156 = vpop.f32.mrb[0].mxu0
    %4157 = vmatprep.mubr.f32.mxu0 0.0
    %4158 = vmatmul.mubr.f32.gmra.mrb[0].mxu0 %v4032
    %v4159 = vpop.f32.mrb[0].mxu0
    %v4160 = vadd.f32 0.0, %v4159
    %v4161 = vpop.f32.mrb[0].mxu0
    %4162 = vmatprep.mubr.f32.mxu0 0.0
    %4163 = vmatmul.mubr.f32.gmra.mrb[0].mxu0 %v4035
    %v4164 = vpop.f32.mrb[0].mxu0
    %v4165 = vadd.f32 0.0, %v4164
    %v4166 = vpop.f32.mrb[0].mxu0
    %4167 = vmatprep.mubr.f32.mxu0 0.0
    %4168 = vmatmul.mubr.f32.gmra.mrb[0].mxu0 %v4038
    %v4169 = vpop.f32.mrb[0].mxu0
    %v4170 = vadd.f32 0.0, %v4169
    %v4171 = vpop.f32.mrb[0].mxu0
    %4172 = vmatprep.mubr.f32.mxu0 0.0
    %4173 = vmatmul.mubr.f32.gmra.mrb[0].mxu0 %v4041
    %v4174 = vpop.f32.mrb[0].mxu0
    %v4175 = vadd.f32 0.0, %v4174
    %v4176 = vpop.f32.mrb[0].mxu0
    %4177 = vmatprep.mubr.f32.mxu0 0.0
    %4178 = vmatmul.mubr.f32.gmra.mrb[0].mxu0 %v4044
    %v4179 = vpop.f32.mrb[0].mxu0
    %v4180 = vadd.f32 0.0, %v4179
    %v4181 = vpop.f32.mrb[0].mxu0
    %4182 = vmatprep.mubr.f32.mxu0 0.0
    %4183 = vmatmul.mubr.f32.gmra.mrb[0].mxu0 %v4047
    %v4184 = vpop.f32.mrb[0].mxu0
    %v4185 = vadd.f32 0.0, %v4184
    %v4186 = vpop.f32.mrb[0].mxu0
    %4187 = vmatprep.mubr.f32.mxu0 0.0
    %4188 = vmatmul.mubr.f32.gmra.mrb[0].mxu0 %v4050
    %v4189 = vpop.f32.mrb[0].mxu0
    %v4190 = vadd.f32 0.0, %v4189
    %v4191 = vpop.f32.mrb[0].mxu0
    %4192 = vmatprep.mubr.f32.mxu0 0.0
    %4193 = vmatmul.mubr.f32.gmra.mrb[0].mxu0 %v4053
    %v4194 = vpop.f32.mrb[0].mxu0
    %v4195 = vadd.f32 0.0, %v4194
    %v4196 = vpop.f32.mrb[0].mxu0
    %4197 = vmatprep.mubr.f32.mxu0 0.0
    %4198 = vmatmul.mubr.f32.gmra.mrb[0].mxu0 %v4056
    %v4199 = vpop.f32.mrb[0].mxu0
    %v4200 = vadd.f32 0.0, %v4199
    %v4201 = vpop.f32.mrb[0].mxu0
    %4202 = vmatprep.mubr.f32.mxu0 0.0
    %4203 = vmatmul.mubr.f32.gmra.mrb[0].mxu0 %v4059
    %v4204 = vpop.f32.mrb[0].mxu0
    %v4205 = vadd.f32 0.0, %v4204
    %v4206 = vpop.f32.mrb[0].mxu0
    %4207 = vmatprep.mubr.f32.mxu0 0.0
    %4208 = vmatmul.mubr.f32.gmra.mrb[0].mxu0 %v4062
    %v4209 = vpop.f32.mrb[0].mxu0
    %v4210 = vadd.f32 0.0, %v4209
    %v4211 = vpop.f32.mrb[0].mxu0
    %4212 = vmatprep.mubr.f32.mxu0 0.0
    %4213 = vmatmul.mubr.f32.gmra.mrb[0].mxu0 %v4065
    %v4214 = vpop.f32.mrb[0].mxu0
    %v4215 = vadd.f32 0.0, %v4214
    %v4216 = vpop.f32.mrb[0].mxu0
    %4217 = vmatprep.mubr.f32.mxu0 0.0
    %4218 = vmatmul.mubr.f32.gmra.mrb[0].mxu0 %v4068
    %v4219 = vpop.f32.mrb[0].mxu0
    %v4220 = vadd.f32 0.0, %v4219
    %v4221 = vpop.f32.mrb[0].mxu0
    %4222 = vmatprep.mubr.f32.mxu0 0.0
    %4223 = vmatmul.mubr.f32.gmra.mrb[0].mxu0 %v4071
    %v4224 = vpop.f32.mrb[0].mxu0
    %v4225 = vadd.f32 0.0, %v4224
    %v4226 = vpop.f32.mrb[0].mxu0
    %4227 = vmatprep.mubr.f32.mxu0 0.0
    %4228 = vmatmul.mubr.f32.gmra.mrb[0].mxu0 %v4074
    %v4229 = vpop.f32.mrb[0].mxu0
    %v4230 = vadd.f32 0.0, %v4229
    %v4231 = vpop.f32.mrb[0].mxu0
    %4232 = vmatprep.mubr.f32.mxu0 0.0
    %4233 = vmatmul.mubr.f32.gmra.mrb[0].mxu0 %v4077
    %v4234 = vpop.f32.mrb[0].mxu0
    %v4235 = vadd.f32 0.0, %v4234
    %v4236 = vpop.f32.mrb[0].mxu0
    %4237 = vmatprep.mubr.f32.mxu0 0.0
    %4238 = vmatmul.mubr.f32.gmra.mrb[0].mxu0 %v4080
    %v4239 = vpop.f32.mrb[0].mxu0
    %v4240 = vadd.f32 0.0, %v4239
    %v4241 = vpop.f32.mrb[0].mxu0
    %4242 = vmatprep.mubr.f32.mxu0 0.0
    %4243 = vmatmul.mubr.f32.gmra.mrb[0].mxu0 %v4083
    %v4244 = vpop.f32.mrb[0].mxu0
    %v4245 = vadd.f32 0.0, %v4244
    %v4246 = vpop.f32.mrb[0].mxu0
    %4247 = vmatprep.mubr.f32.mxu0 0.0
    %4248 = vmatmul.mubr.f32.gmra.mrb[0].mxu0 %v4086
    %v4249 = vpop.f32.mrb[0].mxu0
    %v4250 = vadd.f32 0.0, %v4249
    %v4251 = vpop.f32.mrb[0].mxu0
    %4252 = vdwg.mxu0
    %v4253 = vsel %vm1568, %v4155, 0.0
    %v4254 = vsel %vm1568, %v4160, 0.0
    %v4255 = vadd.f32 %v4253, %v4254
    %v4256 = vsel %vm1568, %v4165, 0.0
    %v4257 = vadd.f32 %v4255, %v4256
    %v4258 = vsel %vm1568, %v4170, 0.0
    %v4259 = vadd.f32 %v4257, %v4258
    %v4260 = vsel %vm1568, %v4175, 0.0
    %v4261 = vadd.f32 %v4259, %v4260
    %v4262 = vsel %vm1568, %v4180, 0.0
    %v4263 = vadd.f32 %v4261, %v4262
    %v4264 = vsel %vm1568, %v4185, 0.0
    %v4265 = vadd.f32 %v4263, %v4264
    %v4266 = vsel %vm1568, %v4190, 0.0
    %v4267 = vadd.f32 %v4265, %v4266
    %v4268 = vsel %vm1568, %v4195, 0.0
    %v4269 = vadd.f32 %v4267, %v4268
    %v4270 = vsel %vm1568, %v4200, 0.0
    %v4271 = vadd.f32 %v4269, %v4270
    %v4272 = vsel %vm1568, %v4205, 0.0
    %v4273 = vadd.f32 %v4271, %v4272
    %v4274 = vsel %vm1568, %v4210, 0.0
    %v4275 = vadd.f32 %v4273, %v4274
    %v4276 = vsel %vm1568, %v4215, 0.0
    %v4277 = vadd.f32 %v4275, %v4276
    %v4278 = vsel %vm1568, %v4220, 0.0
    %v4279 = vadd.f32 %v4277, %v4278
    %v4280 = vsel %vm1568, %v4225, 0.0
    %v4281 = vadd.f32 %v4279, %v4280
    %v4282 = vsel %vm1568, %v4230, 0.0
    %v4283 = vadd.f32 %v4281, %v4282
    %v4284 = vsel %vm1568, %v4235, 0.0
    %v4285 = vadd.f32 %v4283, %v4284
    %v4286 = vsel %vm1568, %v4240, 0.0
    %v4287 = vadd.f32 %v4285, %v4286
    %v4288 = vsel %vm1568, %v4245, 0.0
    %v4289 = vadd.f32 %v4287, %v4288
    %v4290 = vsel %vm1568, %v4250, 0.0
    %v4291 = vadd.f32 %v4289, %v4290
    %v4292 = vrot.slane %v4291, 4
    %v4293 = vadd.f32 %v4291, %v4292
    %v4294 = vrot.slane %v4293, 2
    %v4295 = vadd.f32 %v4293, %v4294
    %v4296 = vrot.slane %v4295, 1
    %v4297 = vadd.f32 %v4295, %v4296
    %v4298 = vmul.f32 %v4297, 0.00625
    %v4299 = vmul.f32 %v4155, %v4155
    %v4300 = vmul.f32 %v4160, %v4160
    %v4301 = vmul.f32 %v4165, %v4165
    %v4302 = vmul.f32 %v4170, %v4170
    %v4303 = vmul.f32 %v4175, %v4175
    %v4304 = vmul.f32 %v4180, %v4180
    %v4305 = vmul.f32 %v4185, %v4185
    %v4306 = vmul.f32 %v4190, %v4190
    %v4307 = vmul.f32 %v4195, %v4195
    %v4308 = vmul.f32 %v4200, %v4200
    %v4309 = vmul.f32 %v4205, %v4205
    %v4310 = vmul.f32 %v4210, %v4210
    %v4311 = vmul.f32 %v4215, %v4215
    %v4312 = vmul.f32 %v4220, %v4220
    %v4313 = vmul.f32 %v4225, %v4225
    %v4314 = vmul.f32 %v4230, %v4230
    %v4315 = vmul.f32 %v4235, %v4235
    %v4316 = vmul.f32 %v4240, %v4240
    %v4317 = vmul.f32 %v4245, %v4245
    %v4318 = vmul.f32 %v4250, %v4250
    %v4319 = vsel %vm1568, %v4299, 0.0
    %v4320 = vsel %vm1568, %v4300, 0.0
    %v4321 = vadd.f32 %v4319, %v4320
    %v4322 = vsel %vm1568, %v4301, 0.0
    %v4323 = vadd.f32 %v4321, %v4322
    %v4324 = vsel %vm1568, %v4302, 0.0
    %v4325 = vadd.f32 %v4323, %v4324
    %v4326 = vsel %vm1568, %v4303, 0.0
    %v4327 = vadd.f32 %v4325, %v4326
    %v4328 = vsel %vm1568, %v4304, 0.0
    %v4329 = vadd.f32 %v4327, %v4328
    %v4330 = vsel %vm1568, %v4305, 0.0
    %v4331 = vadd.f32 %v4329, %v4330
    %v4332 = vsel %vm1568, %v4306, 0.0
    %v4333 = vadd.f32 %v4331, %v4332
    %v4334 = vsel %vm1568, %v4307, 0.0
    %v4335 = vadd.f32 %v4333, %v4334
    %v4336 = vsel %vm1568, %v4308, 0.0
    %v4337 = vadd.f32 %v4335, %v4336
    %v4338 = vsel %vm1568, %v4309, 0.0
    %v4339 = vadd.f32 %v4337, %v4338
    %v4340 = vsel %vm1568, %v4310, 0.0
    %v4341 = vadd.f32 %v4339, %v4340
    %v4342 = vsel %vm1568, %v4311, 0.0
    %v4343 = vadd.f32 %v4341, %v4342
    %v4344 = vsel %vm1568, %v4312, 0.0
    %v4345 = vadd.f32 %v4343, %v4344
    %v4346 = vsel %vm1568, %v4313, 0.0
    %v4347 = vadd.f32 %v4345, %v4346
    %v4348 = vsel %vm1568, %v4314, 0.0
    %v4349 = vadd.f32 %v4347, %v4348
    %v4350 = vsel %vm1568, %v4315, 0.0
    %v4351 = vadd.f32 %v4349, %v4350
    %v4352 = vsel %vm1568, %v4316, 0.0
    %v4353 = vadd.f32 %v4351, %v4352
    %v4354 = vsel %vm1568, %v4317, 0.0
    %v4355 = vadd.f32 %v4353, %v4354
    %v4356 = vsel %vm1568, %v4318, 0.0
    %v4357 = vadd.f32 %v4355, %v4356
    %v4358 = vrot.slane %v4357, 4
    %v4359 = vadd.f32 %v4357, %v4358
    %v4360 = vrot.slane %v4359, 2
    %v4361 = vadd.f32 %v4359, %v4360
    %v4362 = vrot.slane %v4361, 1
    %v4363 = vadd.f32 %v4361, %v4362
    %v4364 = vmul.f32 %v4363, 0.00625
    %v4365 = vmul.f32 %v4298, %v4298
    %v4366 = vsub.f32 %v4364, %v4365
    %v4367 = vmax.f32 %v4366, 0.0
    %v4368 = vadd.f32 %v4367, 1e-05
    %v4369 = vrsqrt.pop %v4368
    %v4370 = vmul.f32 %v3122, %v4369
    %v4371 = vmul.f32 %v4298, %v4370
    %v4372 = vsub.f32 %v3123, %v4371
    %v4374 = vlaneseq
    %v4375 = vshrl.u32 %v4374, 7
    %v4376 = vsub.s32 0, %v4375
    %v4377 = vrot.slane %v4370, %v4376
    %v4379 = vmul.f32 %v4155, %v4377
    %v4380 = vmul.f32 %v4160, %v4377
    %v4381 = vmul.f32 %v4165, %v4377
    %v4382 = vmul.f32 %v4170, %v4377
    %v4383 = vmul.f32 %v4175, %v4377
    %v4384 = vmul.f32 %v4180, %v4377
    %v4385 = vmul.f32 %v4185, %v4377
    %v4386 = vmul.f32 %v4190, %v4377
    %v4387 = vmul.f32 %v4195, %v4377
    %v4388 = vmul.f32 %v4200, %v4377
    %v4389 = vmul.f32 %v4205, %v4377
    %v4390 = vmul.f32 %v4210, %v4377
    %v4391 = vmul.f32 %v4215, %v4377
    %v4392 = vmul.f32 %v4220, %v4377
    %v4393 = vmul.f32 %v4225, %v4377
    %v4394 = vmul.f32 %v4230, %v4377
    %v4395 = vmul.f32 %v4235, %v4377
    %v4396 = vmul.f32 %v4240, %v4377
    %v4397 = vmul.f32 %v4245, %v4377
    %v4398 = vmul.f32 %v4250, %v4377
    %v4400 = vlaneseq
    %v4401 = vshrl.u32 %v4400, 7
    %v4402 = vsub.s32 0, %v4401
    %v4403 = vrot.slane %v4372, %v4402
    %v4405 = vadd.f32 %v4379, %v4403
    %v4406 = vadd.f32 %v4380, %v4403
    %v4407 = vadd.f32 %v4381, %v4403
    %v4408 = vadd.f32 %v4382, %v4403
    %v4409 = vadd.f32 %v4383, %v4403
    %v4410 = vadd.f32 %v4384, %v4403
    %v4411 = vadd.f32 %v4385, %v4403
    %v4412 = vadd.f32 %v4386, %v4403
    %v4413 = vadd.f32 %v4387, %v4403
    %v4414 = vadd.f32 %v4388, %v4403
    %v4415 = vadd.f32 %v4389, %v4403
    %v4416 = vadd.f32 %v4390, %v4403
    %v4417 = vadd.f32 %v4391, %v4403
    %v4418 = vadd.f32 %v4392, %v4403
    %v4419 = vadd.f32 %v4393, %v4403
    %v4420 = vadd.f32 %v4394, %v4403
    %v4421 = vadd.f32 %v4395, %v4403
    %v4422 = vadd.f32 %v4396, %v4403
    %v4423 = vadd.f32 %v4397, %v4403
    %v4424 = vadd.f32 %v4398, %v4403
    %v4425 = vmul.f32 %v4405, 0.2
    %v4426 = vmul.f32 %v4406, 0.2
    %v4427 = vmul.f32 %v4407, 0.2
    %v4428 = vmul.f32 %v4408, 0.2
    %v4429 = vmul.f32 %v4409, 0.2
    %v4430 = vmul.f32 %v4410, 0.2
    %v4431 = vmul.f32 %v4411, 0.2
    %v4432 = vmul.f32 %v4412, 0.2
    %v4433 = vmul.f32 %v4413, 0.2
    %v4434 = vmul.f32 %v4414, 0.2
    %v4435 = vmul.f32 %v4415, 0.2
    %v4436 = vmul.f32 %v4416, 0.2
    %v4437 = vmul.f32 %v4417, 0.2
    %v4438 = vmul.f32 %v4418, 0.2
    %v4439 = vmul.f32 %v4419, 0.2
    %v4440 = vmul.f32 %v4420, 0.2
    %v4441 = vmul.f32 %v4421, 0.2
    %v4442 = vmul.f32 %v4422, 0.2
    %v4443 = vmul.f32 %v4423, 0.2
    %v4444 = vmul.f32 %v4424, 0.2
    %v4445 = vmax.f32 %v4405, %v4425
    %v4446 = vmax.f32 %v4406, %v4426
    %v4447 = vmax.f32 %v4407, %v4427
    %v4448 = vmax.f32 %v4408, %v4428
    %v4449 = vmax.f32 %v4409, %v4429
    %v4450 = vmax.f32 %v4410, %v4430
    %v4451 = vmax.f32 %v4411, %v4431
    %v4452 = vmax.f32 %v4412, %v4432
    %v4453 = vmax.f32 %v4413, %v4433
    %v4454 = vmax.f32 %v4414, %v4434
    %v4455 = vmax.f32 %v4415, %v4435
    %v4456 = vmax.f32 %v4416, %v4436
    %v4457 = vmax.f32 %v4417, %v4437
    %v4458 = vmax.f32 %v4418, %v4438
    %v4459 = vmax.f32 %v4419, %v4439
    %v4460 = vmax.f32 %v4420, %v4440
    %v4461 = vmax.f32 %v4421, %v4441
    %v4462 = vmax.f32 %v4422, %v4442
    %v4463 = vmax.f32 %v4423, %v4443
    %v4464 = vmax.f32 %v4424, %v4444
    %v4465 = vld [vmem:[%s5] sm:$0xff]
    %v4466 = vld [vmem:[%s5 + $0x8] sm:$0xff]
    %v4467 = vld [vmem:[%s5 + $0x10] sm:$0xff]
    %v4468 = vld [vmem:[%s5 + $0x18] sm:$0xff]
    %v4469 = vld [vmem:[%s5 + $0x20] sm:$0xff]
    %v4470 = vld [vmem:[%s5 + $0x28] sm:$0xff]
    %v4471 = vld [vmem:[%s5 + $0x30] sm:$0xff]
    %v4472 = vld [vmem:[%s5 + $0x38] sm:$0xff]
    %v4473 = vld [vmem:[%s6] sm:$0x1]
    %v4474 = vld [vmem:[%s7] sm:$0x1]
    %vm4475 = vcmask 654336
    %v4477 = vsel %vm4475, %v242, 0
    %v4480 = vsel %vm4475, %v245, 0
    %v4483 = vsel %vm4475, %v248, 0
    %v4486 = vsel %vm4475, %v251, 0
    %v4489 = vsel %vm4475, %v254, 0
    %4491 = vmatprep.subr.mxu0 0.0
    %4492 = vmatpush1.msra.mxu0 %v4445
    %4493 = vmatprep.subr.mxu0 0.0
    %4494 = vmatpush1.msra.mxu0 %v4446
    %4495 = vmatprep.subr.mxu0 0.0
    %4496 = vmatpush1.msra.mxu0 %v4447
    %4497 = vmatprep.subr.mxu0 0.0
    %4498 = vmatpush1.msra.mxu0 %v4448
    %4499 = vmatprep.subr.mxu0 0.0
    %4500 = vmatpush1.msra.mxu0 %v4449
    %4501 = vmatprep.subr.mxu0 0.0
    %4502 = vmatpush1.msra.mxu0 %v4450
    %4503 = vmatprep.subr.mxu0 0.0
    %4504 = vmatpush1.msra.mxu0 %v4451
    %4505 = vmatprep.subr.mxu0 0.0
    %4506 = vmatpush1.msra.mxu0 %v4452
    %4507 = vmatprep.subr.mxu0 0.0
    %4508 = vmatpush1.msra.mxu0 %v4453
    %4509 = vmatprep.subr.mxu0 0.0
    %4510 = vmatpush1.msra.mxu0 %v4454
    %4511 = vmatprep.subr.mxu0 0.0
    %4512 = vmatpush1.msra.mxu0 0.0
    %4513 = vmatprep.subr.mxu0 0.0
    %4514 = vmatpush1.msra.mxu0 0.0
    %4515 = vmatprep.subr.mxu0 0.0
    %4516 = vmatpush1.msra.mxu0 0.0
    %4517 = vmatprep.subr.mxu0 0.0
    %4518 = vmatpush1.msra.mxu0 0.0
    %4519 = vmatprep.subr.mxu0 0.0
    %4520 = vmatpush1.msra.mxu0 0.0
    %4521 = vmatprep.subr.mxu0 0.0
    %4522 = vmatpush1.msra.mxu0 0.0
    %4523 = vmatprep.subr.mxu0 0.0
    %4524 = vmatpush1.msra.mxu0 0.0
    %4525 = vmatprep.subr.mxu0 0.0
    %4526 = vmatpush1.msra.mxu0 0.0
    %4527 = vmatprep.subr.mxu0 0.0
    %4528 = vmatpush1.msra.mxu0 0.0
    %4529 = vmatprep.subr.mxu0 0.0
    %4530 = vmatpush1.msra.mxu0 0.0
    %4531 = vmatprep.subr.mxu0 0.0
    %4532 = vmatpush1.msra.mxu0 0.0
    %4533 = vmatprep.subr.mxu0 0.0
    %4534 = vmatpush1.msra.mxu0 0.0
    %4535 = vmatprep.subr.mxu0 0.0
    %4536 = vmatpush1.msra.mxu0 0.0
    %4537 = vmatprep.subr.mxu0 0.0
    %4538 = vmatpush1.msra.mxu0 0.0
    %4539 = vmatprep.subr.mxu0 0.0
    %4540 = vmatpush1.msra.mxu0 0.0
    %4541 = vmatprep.subr.mxu0 0.0
    %4542 = vmatpush1.msra.mxu0 0.0
    %4543 = vmatprep.subr.mxu0 0.0
    %4544 = vmatpush1.msra.mxu0 0.0
    %4545 = vmatprep.subr.mxu0 0.0
    %4546 = vmatpush1.msra.mxu0 0.0
    %4547 = vmatprep.subr.mxu0 0.0
    %4548 = vmatpush1.msra.mxu0 0.0
    %4549 = vmatprep.subr.mxu0 0.0
    %4550 = vmatpush1.msra.mxu0 0.0
    %4551 = vmatprep.subr.mxu0 0.0
    %4552 = vmatpush1.msra.mxu0 0.0
    %4553 = vmatprep.subr.mxu0 0.0
    %4554 = vmatpush1.msra.mxu0 0.0
    %4555 = vmatprep.mubr.f32.mxu0 0.0
    %4556 = vmatmul.mubr.f32.gmra.mrb[0].mxu0 %v4477
    %v4557 = vpop.f32.mrb[0].mxu0
    %v4558 = vadd.f32 0.0, %v4557
    %v4559 = vpop.f32.mrb[0].mxu0
    %4560 = vmatprep.mubr.f32.mxu0 0.0
    %4561 = vmatmul.mubr.f32.gmra.mrb[0].mxu0 %v4480
    %v4562 = vpop.f32.mrb[0].mxu0
    %v4563 = vadd.f32 0.0, %v4562
    %v4564 = vpop.f32.mrb[0].mxu0
    %4565 = vmatprep.mubr.f32.mxu0 0.0
    %4566 = vmatmul.mubr.f32.gmra.mrb[0].mxu0 %v4483
    %v4567 = vpop.f32.mrb[0].mxu0
    %v4568 = vadd.f32 0.0, %v4567
    %v4569 = vpop.f32.mrb[0].mxu0
    %4570 = vmatprep.mubr.f32.mxu0 0.0
    %4571 = vmatmul.mubr.f32.gmra.mrb[0].mxu0 %v4486
    %v4572 = vpop.f32.mrb[0].mxu0
    %v4573 = vadd.f32 0.0, %v4572
    %v4574 = vpop.f32.mrb[0].mxu0
    %4575 = vmatprep.mubr.f32.mxu0 0.0
    %4576 = vmatmul.mubr.f32.gmra.mrb[0].mxu0 %v4489
    %v4577 = vpop.f32.mrb[0].mxu0
    %v4578 = vadd.f32 0.0, %v4577
    %v4579 = vpop.f32.mrb[0].mxu0
    %4580 = vdwg.mxu0
    %v4582 = vsel %vm4475, %v382, 0
    %v4585 = vsel %vm4475, %v385, 0
    %v4588 = vsel %vm4475, %v388, 0
    %v4591 = vsel %vm4475, %v391, 0
    %v4594 = vsel %vm4475, %v394, 0
    %4596 = vmatprep.subr.mxu0 0.0
    %4597 = vmatpush1.msra.mxu0 %v4445
    %4598 = vmatprep.subr.mxu0 0.0
    %4599 = vmatpush1.msra.mxu0 %v4446
    %4600 = vmatprep.subr.mxu0 0.0
    %4601 = vmatpush1.msra.mxu0 %v4447
    %4602 = vmatprep.subr.mxu0 0.0
    %4603 = vmatpush1.msra.mxu0 %v4448
    %4604 = vmatprep.subr.mxu0 0.0
    %4605 = vmatpush1.msra.mxu0 %v4449
    %4606 = vmatprep.subr.mxu0 0.0
    %4607 = vmatpush1.msra.mxu0 %v4450
    %4608 = vmatprep.subr.mxu0 0.0
    %4609 = vmatpush1.msra.mxu0 %v4451
    %4610 = vmatprep.subr.mxu0 0.0
    %4611 = vmatpush1.msra.mxu0 %v4452
    %4612 = vmatprep.subr.mxu0 0.0
    %4613 = vmatpush1.msra.mxu0 %v4453
    %4614 = vmatprep.subr.mxu0 0.0
    %4615 = vmatpush1.msra.mxu0 %v4454
    %4616 = vmatprep.subr.mxu0 0.0
    %4617 = vmatpush1.msra.mxu0 0.0
    %4618 = vmatprep.subr.mxu0 0.0
    %4619 = vmatpush1.msra.mxu0 0.0
    %4620 = vmatprep.subr.mxu0 0.0
    %4621 = vmatpush1.msra.mxu0 0.0
    %4622 = vmatprep.subr.mxu0 0.0
    %4623 = vmatpush1.msra.mxu0 0.0
    %4624 = vmatprep.subr.mxu0 0.0
    %4625 = vmatpush1.msra.mxu0 0.0
    %4626 = vmatprep.subr.mxu0 0.0
    %4627 = vmatpush1.msra.mxu0 0.0
    %4628 = vmatprep.subr.mxu0 0.0
    %4629 = vmatpush1.msra.mxu0 0.0
    %4630 = vmatprep.subr.mxu0 0.0
    %4631 = vmatpush1.msra.mxu0 0.0
    %4632 = vmatprep.subr.mxu0 0.0
    %4633 = vmatpush1.msra.mxu0 0.0
    %4634 = vmatprep.subr.mxu0 0.0
    %4635 = vmatpush1.msra.mxu0 0.0
    %4636 = vmatprep.subr.mxu0 0.0
    %4637 = vmatpush1.msra.mxu0 0.0
    %4638 = vmatprep.subr.mxu0 0.0
    %4639 = vmatpush1.msra.mxu0 0.0
    %4640 = vmatprep.subr.mxu0 0.0
    %4641 = vmatpush1.msra.mxu0 0.0
    %4642 = vmatprep.subr.mxu0 0.0
    %4643 = vmatpush1.msra.mxu0 0.0
    %4644 = vmatprep.subr.mxu0 0.0
    %4645 = vmatpush1.msra.mxu0 0.0
    %4646 = vmatprep.subr.mxu0 0.0
    %4647 = vmatpush1.msra.mxu0 0.0
    %4648 = vmatprep.subr.mxu0 0.0
    %4649 = vmatpush1.msra.mxu0 0.0
    %4650 = vmatprep.subr.mxu0 0.0
    %4651 = vmatpush1.msra.mxu0 0.0
    %4652 = vmatprep.subr.mxu0 0.0
    %4653 = vmatpush1.msra.mxu0 0.0
    %4654 = vmatprep.subr.mxu0 0.0
    %4655 = vmatpush1.msra.mxu0 0.0
    %4656 = vmatprep.subr.mxu0 0.0
    %4657 = vmatpush1.msra.mxu0 0.0
    %4658 = vmatprep.subr.mxu0 0.0
    %4659 = vmatpush1.msra.mxu0 0.0
    %4660 = vmatprep.mubr.f32.mxu0 0.0
    %4661 = vmatmul.mubr.f32.gmra.mrb[0].mxu0 %v4582
    %v4662 = vpop.f32.mrb[0].mxu0
    %v4663 = vadd.f32 0.0, %v4662
    %v4664 = vpop.f32.mrb[0].mxu0
    %4665 = vmatprep.mubr.f32.mxu0 0.0
    %4666 = vmatmul.mubr.f32.gmra.mrb[0].mxu0 %v4585
    %v4667 = vpop.f32.mrb[0].mxu0
    %v4668 = vadd.f32 0.0, %v4667
    %v4669 = vpop.f32.mrb[0].mxu0
    %4670 = vmatprep.mubr.f32.mxu0 0.0
    %4671 = vmatmul.mubr.f32.gmra.mrb[0].mxu0 %v4588
    %v4672 = vpop.f32.mrb[0].mxu0
    %v4673 = vadd.f32 0.0, %v4672
    %v4674 = vpop.f32.mrb[0].mxu0
    %4675 = vmatprep.mubr.f32.mxu0 0.0
    %4676 = vmatmul.mubr.f32.gmra.mrb[0].mxu0 %v4591
    %v4677 = vpop.f32.mrb[0].mxu0
    %v4678 = vadd.f32 0.0, %v4677
    %v4679 = vpop.f32.mrb[0].mxu0
    %4680 = vmatprep.mubr.f32.mxu0 0.0
    %4681 = vmatmul.mubr.f32.gmra.mrb[0].mxu0 %v4594
    %v4682 = vpop.f32.mrb[0].mxu0
    %v4683 = vadd.f32 0.0, %v4682
    %v4684 = vpop.f32.mrb[0].mxu0
    %4685 = vdwg.mxu0
    %v4691 = vrot.slane %v4663, 7
    %v4692 = vrot.slane %v4668, 7
    %v4693 = vsel %vm1243, %v4691, %v4692
    %v4694 = vrot.slane %v4673, 7
    %v4695 = vsel %vm1243, %v4692, %v4694
    %v4696 = vrot.slane %v4678, 7
    %v4697 = vsel %vm1243, %v4694, %v4696
    %v4698 = vrot.slane %v4683, 7
    %v4699 = vsel %vm1243, %v4696, %v4698
    %v4705 = vsel %vm1243, 0.0, %v4691
    %v4711 = vrot.slane %v4558, 1
    %v4712 = vrot.slane %v4563, 1
    %v4713 = vsel %vm1324, %v4711, %v4712
    %v4714 = vrot.slane %v4568, 1
    %v4715 = vsel %vm1324, %v4712, %v4714
    %v4716 = vrot.slane %v4573, 1
    %v4717 = vsel %vm1324, %v4714, %v4716
    %v4718 = vrot.slane %v4578, 1
    %v4719 = vsel %vm1324, %v4716, %v4718
    %v4721 = vsel %vm1324, %v4718, 0.0
    %4722 = vrot.lane.b32.xlu0 %v4558, 16
    %v4723 = vpop.permute.xlu0 %4722
    %4724 = vrot.lane.b32.xlu0 %v4563, 16
    %v4725 = vpop.permute.xlu0 %4724
    %4726 = vrot.lane.b32.xlu0 %v4568, 16
    %v4727 = vpop.permute.xlu0 %4726
    %4728 = vrot.lane.b32.xlu0 %v4573, 16
    %v4729 = vpop.permute.xlu0 %4728
    %4730 = vrot.lane.b32.xlu0 %v4578, 16
    %v4731 = vpop.permute.xlu0 %4730
    %4737 = vrot.lane.b32.xlu0 %v4663, 32
    %v4738 = vpop.permute.xlu0 %4737
    %4739 = vrot.lane.b32.xlu0 %v4668, 32
    %v4740 = vpop.permute.xlu0 %4739
    %4741 = vrot.lane.b32.xlu0 %v4673, 32
    %v4742 = vpop.permute.xlu0 %4741
    %4743 = vrot.lane.b32.xlu0 %v4678, 32
    %v4744 = vpop.permute.xlu0 %4743
    %4745 = vrot.lane.b32.xlu0 %v4683, 32
    %v4746 = vpop.permute.xlu0 %4745
    %4753 = vrot.lane.b32.xlu0 %v4713, 48
    %v4754 = vpop.permute.xlu0 %4753
    %4755 = vrot.lane.b32.xlu0 %v4715, 48
    %v4756 = vpop.permute.xlu0 %4755
    %4757 = vrot.lane.b32.xlu0 %v4717, 48
    %v4758 = vpop.permute.xlu0 %4757
    %4759 = vrot.lane.b32.xlu0 %v4719, 48
    %v4760 = vpop.permute.xlu0 %4759
    %4761 = vrot.lane.b32.xlu0 %v4721, 48
    %v4762 = vpop.permute.xlu0 %4761
    %v4768 = vsel %vm1568, %v4705, %v4723
    %v4769 = vsel %vm1568, %v4693, %v4725
    %v4770 = vsel %vm1568, %v4695, %v4727
    %v4771 = vsel %vm1568, %v4697, %v4729
    %v4772 = vsel %vm1568, %v4699, %v4731
    %v4773 = vsel %vm2652, %v4768, %v4738
    %v4774 = vsel %vm2652, %v4769, %v4740
    %v4775 = vsel %vm2652, %v4770, %v4742
    %v4776 = vsel %vm2652, %v4771, %v4744
    %v4777 = vsel %vm2652, %v4772, %v4746
    %vm4778 = vcmask 392192
    %v4779 = vsel %vm4778, %v4773, %v4754
    %v4780 = vsel %vm4778, %v4774, %v4756
    %v4781 = vsel %vm4778, %v4775, %v4758
    %v4782 = vsel %vm4778, %v4776, %v4760
    %v4783 = vsel %vm4778, %v4777, %v4762
    %4784 = vmatprep.subr.mxu0 0.0
    %4785 = vmatpush1.msra.mxu0 %v4455
    %4786 = vmatprep.subr.mxu0 0.0
    %4787 = vmatpush1.msra.mxu0 %v4456
    %4788 = vmatprep.subr.mxu0 0.0
    %4789 = vmatpush1.msra.mxu0 %v4457
    %4790 = vmatprep.subr.mxu0 0.0
    %4791 = vmatpush1.msra.mxu0 %v4458
    %4792 = vmatprep.subr.mxu0 0.0
    %4793 = vmatpush1.msra.mxu0 %v4459
    %4794 = vmatprep.subr.mxu0 0.0
    %4795 = vmatpush1.msra.mxu0 %v4460
    %4796 = vmatprep.subr.mxu0 0.0
    %4797 = vmatpush1.msra.mxu0 %v4461
    %4798 = vmatprep.subr.mxu0 0.0
    %4799 = vmatpush1.msra.mxu0 %v4462
    %4800 = vmatprep.subr.mxu0 0.0
    %4801 = vmatpush1.msra.mxu0 %v4463
    %4802 = vmatprep.subr.mxu0 0.0
    %4803 = vmatpush1.msra.mxu0 %v4464
    %4804 = vmatprep.subr.mxu0 0.0
    %4805 = vmatpush1.msra.mxu0 0.0
    %4806 = vmatprep.subr.mxu0 0.0
    %4807 = vmatpush1.msra.mxu0 0.0
    %4808 = vmatprep.subr.mxu0 0.0
    %4809 = vmatpush1.msra.mxu0 0.0
    %4810 = vmatprep.subr.mxu0 0.0
    %4811 = vmatpush1.msra.mxu0 0.0
    %4812 = vmatprep.subr.mxu0 0.0
    %4813 = vmatpush1.msra.mxu0 0.0
    %4814 = vmatprep.subr.mxu0 0.0
    %4815 = vmatpush1.msra.mxu0 0.0
    %4816 = vmatprep.subr.mxu0 0.0
    %4817 = vmatpush1.msra.mxu0 0.0
    %4818 = vmatprep.subr.mxu0 0.0
    %4819 = vmatpush1.msra.mxu0 0.0
    %4820 = vmatprep.subr.mxu0 0.0
    %4821 = vmatpush1.msra.mxu0 0.0
    %4822 = vmatprep.subr.mxu0 0.0
    %4823 = vmatpush1.msra.mxu0 0.0
    %4824 = vmatprep.subr.mxu0 0.0
    %4825 = vmatpush1.msra.mxu0 0.0
    %4826 = vmatprep.subr.mxu0 0.0
    %4827 = vmatpush1.msra.mxu0 0.0
    %4828 = vmatprep.subr.mxu0 0.0
    %4829 = vmatpush1.msra.mxu0 0.0
    %4830 = vmatprep.subr.mxu0 0.0
    %4831 = vmatpush1.msra.mxu0 0.0
    %4832 = vmatprep.subr.mxu0 0.0
    %4833 = vmatpush1.msra.mxu0 0.0
    %4834 = vmatprep.subr.mxu0 0.0
    %4835 = vmatpush1.msra.mxu0 0.0
    %4836 = vmatprep.subr.mxu0 0.0
    %4837 = vmatpush1.msra.mxu0 0.0
    %4838 = vmatprep.subr.mxu0 0.0
    %4839 = vmatpush1.msra.mxu0 0.0
    %4840 = vmatprep.subr.mxu0 0.0
    %4841 = vmatpush1.msra.mxu0 0.0
    %4842 = vmatprep.subr.mxu0 0.0
    %4843 = vmatpush1.msra.mxu0 0.0
    %4844 = vmatprep.subr.mxu0 0.0
    %4845 = vmatpush1.msra.mxu0 0.0
    %4846 = vmatprep.subr.mxu0 0.0
    %4847 = vmatpush1.msra.mxu0 0.0
    %4848 = vmatprep.mubr.f32.mxu0 0.0
    %4849 = vmatmul.mubr.f32.gmra.mrb[0].mxu0 %v4477
    %v4850 = vpop.f32.mrb[0].mxu0
    %v4851 = vadd.f32 0.0, %v4850
    %v4852 = vpop.f32.mrb[0].mxu0
    %4853 = vmatprep.mubr.f32.mxu0 0.0
    %4854 = vmatmul.mubr.f32.gmra.mrb[0].mxu0 %v4480
    %v4855 = vpop.f32.mrb[0].mxu0
    %v4856 = vadd.f32 0.0, %v4855
    %v4857 = vpop.f32.mrb[0].mxu0
    %4858 = vmatprep.mubr.f32.mxu0 0.0
    %4859 = vmatmul.mubr.f32.gmra.mrb[0].mxu0 %v4483
    %v4860 = vpop.f32.mrb[0].mxu0
    %v4861 = vadd.f32 0.0, %v4860
    %v4862 = vpop.f32.mrb[0].mxu0
    %4863 = vmatprep.mubr.f32.mxu0 0.0
    %4864 = vmatmul.mubr.f32.gmra.mrb[0].mxu0 %v4486
    %v4865 = vpop.f32.mrb[0].mxu0
    %v4866 = vadd.f32 0.0, %v4865
    %v4867 = vpop.f32.mrb[0].mxu0
    %4868 = vmatprep.mubr.f32.mxu0 0.0
    %4869 = vmatmul.mubr.f32.gmra.mrb[0].mxu0 %v4489
    %v4870 = vpop.f32.mrb[0].mxu0
    %v4871 = vadd.f32 0.0, %v4870
    %v4872 = vpop.f32.mrb[0].mxu0
    %4873 = vdwg.mxu0
    %4874 = vmatprep.subr.mxu0 0.0
    %4875 = vmatpush1.msra.mxu0 %v4455
    %4876 = vmatprep.subr.mxu0 0.0
    %4877 = vmatpush1.msra.mxu0 %v4456
    %4878 = vmatprep.subr.mxu0 0.0
    %4879 = vmatpush1.msra.mxu0 %v4457
    %4880 = vmatprep.subr.mxu0 0.0
    %4881 = vmatpush1.msra.mxu0 %v4458
    %4882 = vmatprep.subr.mxu0 0.0
    %4883 = vmatpush1.msra.mxu0 %v4459
    %4884 = vmatprep.subr.mxu0 0.0
    %4885 = vmatpush1.msra.mxu0 %v4460
    %4886 = vmatprep.subr.mxu0 0.0
    %4887 = vmatpush1.msra.mxu0 %v4461
    %4888 = vmatprep.subr.mxu0 0.0
    %4889 = vmatpush1.msra.mxu0 %v4462
    %4890 = vmatprep.subr.mxu0 0.0
    %4891 = vmatpush1.msra.mxu0 %v4463
    %4892 = vmatprep.subr.mxu0 0.0
    %4893 = vmatpush1.msra.mxu0 %v4464
    %4894 = vmatprep.subr.mxu0 0.0
    %4895 = vmatpush1.msra.mxu0 0.0
    %4896 = vmatprep.subr.mxu0 0.0
    %4897 = vmatpush1.msra.mxu0 0.0
    %4898 = vmatprep.subr.mxu0 0.0
    %4899 = vmatpush1.msra.mxu0 0.0
    %4900 = vmatprep.subr.mxu0 0.0
    %4901 = vmatpush1.msra.mxu0 0.0
    %4902 = vmatprep.subr.mxu0 0.0
    %4903 = vmatpush1.msra.mxu0 0.0
    %4904 = vmatprep.subr.mxu0 0.0
    %4905 = vmatpush1.msra.mxu0 0.0
    %4906 = vmatprep.subr.mxu0 0.0
    %4907 = vmatpush1.msra.mxu0 0.0
    %4908 = vmatprep.subr.mxu0 0.0
    %4909 = vmatpush1.msra.mxu0 0.0
    %4910 = vmatprep.subr.mxu0 0.0
    %4911 = vmatpush1.msra.mxu0 0.0
    %4912 = vmatprep.subr.mxu0 0.0
    %4913 = vmatpush1.msra.mxu0 0.0
    %4914 = vmatprep.subr.mxu0 0.0
    %4915 = vmatpush1.msra.mxu0 0.0
    %4916 = vmatprep.subr.mxu0 0.0
    %4917 = vmatpush1.msra.mxu0 0.0
    %4918 = vmatprep.subr.mxu0 0.0
    %4919 = vmatpush1.msra.mxu0 0.0
    %4920 = vmatprep.subr.mxu0 0.0
    %4921 = vmatpush1.msra.mxu0 0.0
    %4922 = vmatprep.subr.mxu0 0.0
    %4923 = vmatpush1.msra.mxu0 0.0
    %4924 = vmatprep.subr.mxu0 0.0
    %4925 = vmatpush1.msra.mxu0 0.0
    %4926 = vmatprep.subr.mxu0 0.0
    %4927 = vmatpush1.msra.mxu0 0.0
    %4928 = vmatprep.subr.mxu0 0.0
    %4929 = vmatpush1.msra.mxu0 0.0
    %4930 = vmatprep.subr.mxu0 0.0
    %4931 = vmatpush1.msra.mxu0 0.0
    %4932 = vmatprep.subr.mxu0 0.0
    %4933 = vmatpush1.msra.mxu0 0.0
    %4934 = vmatprep.subr.mxu0 0.0
    %4935 = vmatpush1.msra.mxu0 0.0
    %4936 = vmatprep.subr.mxu0 0.0
    %4937 = vmatpush1.msra.mxu0 0.0
    %4938 = vmatprep.mubr.f32.mxu0 0.0
    %4939 = vmatmul.mubr.f32.gmra.mrb[0].mxu0 %v4582
    %v4940 = vpop.f32.mrb[0].mxu0
    %v4941 = vadd.f32 0.0, %v4940
    %v4942 = vpop.f32.mrb[0].mxu0
    %4943 = vmatprep.mubr.f32.mxu0 0.0
    %4944 = vmatmul.mubr.f32.gmra.mrb[0].mxu0 %v4585
    %v4945 = vpop.f32.mrb[0].mxu0
    %v4946 = vadd.f32 0.0, %v4945
    %v4947 = vpop.f32.mrb[0].mxu0
    %4948 = vmatprep.mubr.f32.mxu0 0.0
    %4949 = vmatmul.mubr.f32.gmra.mrb[0].mxu0 %v4588
    %v4950 = vpop.f32.mrb[0].mxu0
    %v4951 = vadd.f32 0.0, %v4950
    %v4952 = vpop.f32.mrb[0].mxu0
    %4953 = vmatprep.mubr.f32.mxu0 0.0
    %4954 = vmatmul.mubr.f32.gmra.mrb[0].mxu0 %v4591
    %v4955 = vpop.f32.mrb[0].mxu0
    %v4956 = vadd.f32 0.0, %v4955
    %v4957 = vpop.f32.mrb[0].mxu0
    %4958 = vmatprep.mubr.f32.mxu0 0.0
    %4959 = vmatmul.mubr.f32.gmra.mrb[0].mxu0 %v4594
    %v4960 = vpop.f32.mrb[0].mxu0
    %v4961 = vadd.f32 0.0, %v4960
    %v4962 = vpop.f32.mrb[0].mxu0
    %4963 = vdwg.mxu0
    %v4969 = vrot.slane %v4941, 7
    %v4970 = vrot.slane %v4946, 7
    %v4971 = vsel %vm1243, %v4969, %v4970
    %v4972 = vrot.slane %v4951, 7
    %v4973 = vsel %vm1243, %v4970, %v4972
    %v4974 = vrot.slane %v4956, 7
    %v4975 = vsel %vm1243, %v4972, %v4974
    %v4976 = vrot.slane %v4961, 7
    %v4977 = vsel %vm1243, %v4974, %v4976
    %v4983 = vsel %vm1243, 0.0, %v4969
    %v4989 = vrot.slane %v4851, 1
    %v4990 = vrot.slane %v4856, 1
    %v4991 = vsel %vm1324, %v4989, %v4990
    %v4992 = vrot.slane %v4861, 1
    %v4993 = vsel %vm1324, %v4990, %v4992
    %v4994 = vrot.slane %v4866, 1
    %v4995 = vsel %vm1324, %v4992, %v4994
    %v4996 = vrot.slane %v4871, 1
    %v4997 = vsel %vm1324, %v4994, %v4996
    %v4999 = vsel %vm1324, %v4996, 0.0
    %5000 = vrot.lane.b32.xlu0 %v4851, 16
    %v5001 = vpop.permute.xlu0 %5000
    %5002 = vrot.lane.b32.xlu0 %v4856, 16
    %v5003 = vpop.permute.xlu0 %5002
    %5004 = vrot.lane.b32.xlu0 %v4861, 16
    %v5005 = vpop.permute.xlu0 %5004
    %5006 = vrot.lane.b32.xlu0 %v4866, 16
    %v5007 = vpop.permute.xlu0 %5006
    %5008 = vrot.lane.b32.xlu0 %v4871, 16
    %v5009 = vpop.permute.xlu0 %5008
    %5015 = vrot.lane.b32.xlu0 %v4941, 32
    %v5016 = vpop.permute.xlu0 %5015
    %5017 = vrot.lane.b32.xlu0 %v4946, 32
    %v5018 = vpop.permute.xlu0 %5017
    %5019 = vrot.lane.b32.xlu0 %v4951, 32
    %v5020 = vpop.permute.xlu0 %5019
    %5021 = vrot.lane.b32.xlu0 %v4956, 32
    %v5022 = vpop.permute.xlu0 %5021
    %5023 = vrot.lane.b32.xlu0 %v4961, 32
    %v5024 = vpop.permute.xlu0 %5023
    %5031 = vrot.lane.b32.xlu0 %v4991, 48
    %v5032 = vpop.permute.xlu0 %5031
    %5033 = vrot.lane.b32.xlu0 %v4993, 48
    %v5034 = vpop.permute.xlu0 %5033
    %5035 = vrot.lane.b32.xlu0 %v4995, 48
    %v5036 = vpop.permute.xlu0 %5035
    %5037 = vrot.lane.b32.xlu0 %v4997, 48
    %v5038 = vpop.permute.xlu0 %5037
    %5039 = vrot.lane.b32.xlu0 %v4999, 48
    %v5040 = vpop.permute.xlu0 %5039
    %v5046 = vsel %vm1568, %v4983, %v5001
    %v5047 = vsel %vm1568, %v4971, %v5003
    %v5048 = vsel %vm1568, %v4973, %v5005
    %v5049 = vsel %vm1568, %v4975, %v5007
    %v5050 = vsel %vm1568, %v4977, %v5009
    %v5051 = vsel %vm2652, %v5046, %v5016
    %v5052 = vsel %vm2652, %v5047, %v5018
    %v5053 = vsel %vm2652, %v5048, %v5020
    %v5054 = vsel %vm2652, %v5049, %v5022
    %v5055 = vsel %vm2652, %v5050, %v5024
    %v5056 = vsel %vm4778, %v5051, %v5032
    %v5057 = vsel %vm4778, %v5052, %v5034
    %v5058 = vsel %vm4778, %v5053, %v5036
    %v5059 = vsel %vm4778, %v5054, %v5038
    %v5060 = vsel %vm4778, %v5055, %v5040
    %v5062 = vsel %vm442, %v4779, 0
    %v5065 = vsel %vm442, %v4780, 0
    %v5068 = vsel %vm442, %v4781, 0
    %v5071 = vsel %vm442, %v4782, 0
    %v5074 = vsel %vm442, %v4783, 0
    %v5077 = vsel %vm442, %v5056, 0
    %v5080 = vsel %vm442, %v5057, 0
    %v5083 = vsel %vm442, %v5058, 0
    %v5086 = vsel %vm442, %v5059, 0
    %v5089 = vsel %vm442, %v5060, 0
    %5091 = vmatprep.subr.mxu0 0.0
    %5092 = vmatpush1.msra.mxu0 %v4465
    %5093 = vmatprep.subr.mxu0 0.0
    %5094 = vmatpush1.msra.mxu0 %v4466
    %5095 = vmatprep.subr.mxu0 0.0
    %5096 = vmatpush1.msra.mxu0 %v4467
    %5097 = vmatprep.subr.mxu0 0.0
    %5098 = vmatpush1.msra.mxu0 %v4468
    %5099 = vmatprep.subr.mxu0 0.0
    %5100 = vmatpush1.msra.mxu0 %v4469
    %5101 = vmatprep.subr.mxu0 0.0
    %5102 = vmatpush1.msra.mxu0 %v4470
    %5103 = vmatprep.subr.mxu0 0.0
    %5104 = vmatpush1.msra.mxu0 %v4471
    %5105 = vmatprep.subr.mxu0 0.0
    %5106 = vmatpush1.msra.mxu0 %v4472
    %5107 = vmatprep.subr.mxu0 0.0
    %5108 = vmatpush1.msra.mxu0 0.0
    %5109 = vmatprep.subr.mxu0 0.0
    %5110 = vmatpush1.msra.mxu0 0.0
    %5111 = vmatprep.subr.mxu0 0.0
    %5112 = vmatpush1.msra.mxu0 0.0
    %5113 = vmatprep.subr.mxu0 0.0
    %5114 = vmatpush1.msra.mxu0 0.0
    %5115 = vmatprep.subr.mxu0 0.0
    %5116 = vmatpush1.msra.mxu0 0.0
    %5117 = vmatprep.subr.mxu0 0.0
    %5118 = vmatpush1.msra.mxu0 0.0
    %5119 = vmatprep.subr.mxu0 0.0
    %5120 = vmatpush1.msra.mxu0 0.0
    %5121 = vmatprep.subr.mxu0 0.0
    %5122 = vmatpush1.msra.mxu0 0.0
    %5123 = vmatprep.subr.mxu0 0.0
    %5124 = vmatpush1.msra.mxu0 0.0
    %5125 = vmatprep.subr.mxu0 0.0
    %5126 = vmatpush1.msra.mxu0 0.0
    %5127 = vmatprep.subr.mxu0 0.0
    %5128 = vmatpush1.msra.mxu0 0.0
    %5129 = vmatprep.subr.mxu0 0.0
    %5130 = vmatpush1.msra.mxu0 0.0
    %5131 = vmatprep.subr.mxu0 0.0
    %5132 = vmatpush1.msra.mxu0 0.0
    %5133 = vmatprep.subr.mxu0 0.0
    %5134 = vmatpush1.msra.mxu0 0.0
    %5135 = vmatprep.subr.mxu0 0.0
    %5136 = vmatpush1.msra.mxu0 0.0
    %5137 = vmatprep.subr.mxu0 0.0
    %5138 = vmatpush1.msra.mxu0 0.0
    %5139 = vmatprep.subr.mxu0 0.0
    %5140 = vmatpush1.msra.mxu0 0.0
    %5141 = vmatprep.subr.mxu0 0.0
    %5142 = vmatpush1.msra.mxu0 0.0
    %5143 = vmatprep.subr.mxu0 0.0
    %5144 = vmatpush1.msra.mxu0 0.0
    %5145 = vmatprep.subr.mxu0 0.0
    %5146 = vmatpush1.msra.mxu0 0.0
    %5147 = vmatprep.subr.mxu0 0.0
    %5148 = vmatpush1.msra.mxu0 0.0
    %5149 = vmatprep.subr.mxu0 0.0
    %5150 = vmatpush1.msra.mxu0 0.0
    %5151 = vmatprep.subr.mxu0 0.0
    %5152 = vmatpush1.msra.mxu0 0.0
    %5153 = vmatprep.subr.mxu0 0.0
    %5154 = vmatpush1.msra.mxu0 0.0
    %5155 = vmatprep.mubr.f32.mxu0 0.0
    %5156 = vmatmul.mubr.f32.gmra.mrb[0].mxu0 %v5062
    %v5157 = vpop.f32.mrb[0].mxu0
    %v5158 = vadd.f32 0.0, %v5157
    %v5159 = vpop.f32.mrb[0].mxu0
    %5160 = vmatprep.mubr.f32.mxu0 0.0
    %5161 = vmatmul.mubr.f32.gmra.mrb[0].mxu0 %v5065
    %v5162 = vpop.f32.mrb[0].mxu0
    %v5163 = vadd.f32 0.0, %v5162
    %v5164 = vpop.f32.mrb[0].mxu0
    %5165 = vmatprep.mubr.f32.mxu0 0.0
    %5166 = vmatmul.mubr.f32.gmra.mrb[0].mxu0 %v5068
    %v5167 = vpop.f32.mrb[0].mxu0
    %v5168 = vadd.f32 0.0, %v5167
    %v5169 = vpop.f32.mrb[0].mxu0
    %5170 = vmatprep.mubr.f32.mxu0 0.0
    %5171 = vmatmul.mubr.f32.gmra.mrb[0].mxu0 %v5071
    %v5172 = vpop.f32.mrb[0].mxu0
    %v5173 = vadd.f32 0.0, %v5172
    %v5174 = vpop.f32.mrb[0].mxu0
    %5175 = vmatprep.mubr.f32.mxu0 0.0
    %5176 = vmatmul.mubr.f32.gmra.mrb[0].mxu0 %v5074
    %v5177 = vpop.f32.mrb[0].mxu0
    %v5178 = vadd.f32 0.0, %v5177
    %v5179 = vpop.f32.mrb[0].mxu0
    %5180 = vmatprep.mubr.f32.mxu0 0.0
    %5181 = vmatmul.mubr.f32.gmra.mrb[0].mxu0 %v5077
    %v5182 = vpop.f32.mrb[0].mxu0
    %v5183 = vadd.f32 0.0, %v5182
    %v5184 = vpop.f32.mrb[0].mxu0
    %5185 = vmatprep.mubr.f32.mxu0 0.0
    %5186 = vmatmul.mubr.f32.gmra.mrb[0].mxu0 %v5080
    %v5187 = vpop.f32.mrb[0].mxu0
    %v5188 = vadd.f32 0.0, %v5187
    %v5189 = vpop.f32.mrb[0].mxu0
    %5190 = vmatprep.mubr.f32.mxu0 0.0
    %5191 = vmatmul.mubr.f32.gmra.mrb[0].mxu0 %v5083
    %v5192 = vpop.f32.mrb[0].mxu0
    %v5193 = vadd.f32 0.0, %v5192
    %v5194 = vpop.f32.mrb[0].mxu0
    %5195 = vmatprep.mubr.f32.mxu0 0.0
    %5196 = vmatmul.mubr.f32.gmra.mrb[0].mxu0 %v5086
    %v5197 = vpop.f32.mrb[0].mxu0
    %v5198 = vadd.f32 0.0, %v5197
    %v5199 = vpop.f32.mrb[0].mxu0
    %5200 = vmatprep.mubr.f32.mxu0 0.0
    %5201 = vmatmul.mubr.f32.gmra.mrb[0].mxu0 %v5089
    %v5202 = vpop.f32.mrb[0].mxu0
    %v5203 = vadd.f32 0.0, %v5202
    %v5204 = vpop.f32.mrb[0].mxu0
    %5205 = vdwg.mxu0
    %v5206 = vsel %vm2652, %v5158, 0.0
    %v5207 = vsel %vm2652, %v5163, 0.0
    %v5208 = vadd.f32 %v5206, %v5207
    %v5209 = vsel %vm2652, %v5168, 0.0
    %v5210 = vadd.f32 %v5208, %v5209
    %v5211 = vsel %vm2652, %v5173, 0.0
    %v5212 = vadd.f32 %v5210, %v5211
    %v5213 = vsel %vm2652, %v5178, 0.0
    %v5214 = vadd.f32 %v5212, %v5213
    %v5215 = vsel %vm2652, %v5183, 0.0
    %v5216 = vadd.f32 %v5214, %v5215
    %v5217 = vsel %vm2652, %v5188, 0.0
    %v5218 = vadd.f32 %v5216, %v5217
    %v5219 = vsel %vm2652, %v5193, 0.0
    %v5220 = vadd.f32 %v5218, %v5219
    %v5221 = vsel %vm2652, %v5198, 0.0
    %v5222 = vadd.f32 %v5220, %v5221
    %v5223 = vsel %vm2652, %v5203, 0.0
    %v5224 = vadd.f32 %v5222, %v5223
    %v5225 = vrot.slane %v5224, 4
    %v5226 = vadd.f32 %v5224, %v5225
    %v5227 = vrot.slane %v5226, 2
    %v5228 = vadd.f32 %v5226, %v5227
    %v5229 = vrot.slane %v5228, 1
    %v5230 = vadd.f32 %v5228, %v5229
    %v5231 = vmul.f32 %v5230, 0.0125
    %v5232 = vmul.f32 %v5158, %v5158
    %v5233 = vmul.f32 %v5163, %v5163
    %v5234 = vmul.f32 %v5168, %v5168
    %v5235 = vmul.f32 %v5173, %v5173
    %v5236 = vmul.f32 %v5178, %v5178
    %v5237 = vmul.f32 %v5183, %v5183
    %v5238 = vmul.f32 %v5188, %v5188
    %v5239 = vmul.f32 %v5193, %v5193
    %v5240 = vmul.f32 %v5198, %v5198
    %v5241 = vmul.f32 %v5203, %v5203
    %v5242 = vsel %vm2652, %v5232, 0.0
    %v5243 = vsel %vm2652, %v5233, 0.0
    %v5244 = vadd.f32 %v5242, %v5243
    %v5245 = vsel %vm2652, %v5234, 0.0
    %v5246 = vadd.f32 %v5244, %v5245
    %v5247 = vsel %vm2652, %v5235, 0.0
    %v5248 = vadd.f32 %v5246, %v5247
    %v5249 = vsel %vm2652, %v5236, 0.0
    %v5250 = vadd.f32 %v5248, %v5249
    %v5251 = vsel %vm2652, %v5237, 0.0
    %v5252 = vadd.f32 %v5250, %v5251
    %v5253 = vsel %vm2652, %v5238, 0.0
    %v5254 = vadd.f32 %v5252, %v5253
    %v5255 = vsel %vm2652, %v5239, 0.0
    %v5256 = vadd.f32 %v5254, %v5255
    %v5257 = vsel %vm2652, %v5240, 0.0
    %v5258 = vadd.f32 %v5256, %v5257
    %v5259 = vsel %vm2652, %v5241, 0.0
    %v5260 = vadd.f32 %v5258, %v5259
    %v5261 = vrot.slane %v5260, 4
    %v5262 = vadd.f32 %v5260, %v5261
    %v5263 = vrot.slane %v5262, 2
    %v5264 = vadd.f32 %v5262, %v5263
    %v5265 = vrot.slane %v5264, 1
    %v5266 = vadd.f32 %v5264, %v5265
    %v5267 = vmul.f32 %v5266, 0.0125
    %v5268 = vmul.f32 %v5231, %v5231
    %v5269 = vsub.f32 %v5267, %v5268
    %v5270 = vmax.f32 %v5269, 0.0
    %v5271 = vadd.f32 %v5270, 1e-05
    %v5272 = vrsqrt.pop %v5271
    %v5273 = vmul.f32 %v4473, %v5272
    %v5274 = vmul.f32 %v5231, %v5273
    %v5275 = vsub.f32 %v4474, %v5274
    %v5277 = vlaneseq
    %v5278 = vshrl.u32 %v5277, 7
    %v5279 = vsub.s32 0, %v5278
    %v5280 = vrot.slane %v5273, %v5279
    %v5282 = vmul.f32 %v5158, %v5280
    %v5283 = vmul.f32 %v5163, %v5280
    %v5284 = vmul.f32 %v5168, %v5280
    %v5285 = vmul.f32 %v5173, %v5280
    %v5286 = vmul.f32 %v5178, %v5280
    %v5287 = vmul.f32 %v5183, %v5280
    %v5288 = vmul.f32 %v5188, %v5280
    %v5289 = vmul.f32 %v5193, %v5280
    %v5290 = vmul.f32 %v5198, %v5280
    %v5291 = vmul.f32 %v5203, %v5280
    %v5293 = vlaneseq
    %v5294 = vshrl.u32 %v5293, 7
    %v5295 = vsub.s32 0, %v5294
    %v5296 = vrot.slane %v5275, %v5295
    %v5298 = vadd.f32 %v5282, %v5296
    %v5299 = vadd.f32 %v5283, %v5296
    %v5300 = vadd.f32 %v5284, %v5296
    %v5301 = vadd.f32 %v5285, %v5296
    %v5302 = vadd.f32 %v5286, %v5296
    %v5303 = vadd.f32 %v5287, %v5296
    %v5304 = vadd.f32 %v5288, %v5296
    %v5305 = vadd.f32 %v5289, %v5296
    %v5306 = vadd.f32 %v5290, %v5296
    %v5307 = vadd.f32 %v5291, %v5296
    %v5308 = vmul.f32 %v5298, 0.2
    %v5309 = vmul.f32 %v5299, 0.2
    %v5310 = vmul.f32 %v5300, 0.2
    %v5311 = vmul.f32 %v5301, 0.2
    %v5312 = vmul.f32 %v5302, 0.2
    %v5313 = vmul.f32 %v5303, 0.2
    %v5314 = vmul.f32 %v5304, 0.2
    %v5315 = vmul.f32 %v5305, 0.2
    %v5316 = vmul.f32 %v5306, 0.2
    %v5317 = vmul.f32 %v5307, 0.2
    %v5318 = vmax.f32 %v5298, %v5308
    %v5319 = vmax.f32 %v5299, %v5309
    %v5320 = vmax.f32 %v5300, %v5310
    %v5321 = vmax.f32 %v5301, %v5311
    %v5322 = vmax.f32 %v5302, %v5312
    %v5323 = vmax.f32 %v5303, %v5313
    %v5324 = vmax.f32 %v5304, %v5314
    %v5325 = vmax.f32 %v5305, %v5315
    %v5326 = vmax.f32 %v5306, %v5316
    %v5327 = vmax.f32 %v5307, %v5317
    %v5328 = vld [vmem:[%s8] sm:$0xf]
    %v5329 = vld [vmem:[%s8 + $0x4] sm:$0xf]
    %v5330 = vld [vmem:[%s8 + $0x8] sm:$0xf]
    %v5331 = vld [vmem:[%s8 + $0xc] sm:$0xf]
    %v5332 = vld [vmem:[%s8 + $0x10] sm:$0xf]
    %v5333 = vld [vmem:[%s8 + $0x14] sm:$0xf]
    %v5334 = vld [vmem:[%s8 + $0x18] sm:$0xf]
    %v5335 = vld [vmem:[%s8 + $0x1c] sm:$0xf]
    %v5336 = vld [vmem:[%s8 + $0x20] sm:$0xf]
    %v5337 = vld [vmem:[%s8 + $0x24] sm:$0xf]
    %v5338 = vld [vmem:[%s8 + $0x28] sm:$0xf]
    %v5339 = vld [vmem:[%s8 + $0x2c] sm:$0xf]
    %v5340 = vld [vmem:[%s8 + $0x30] sm:$0xf]
    %v5341 = vld [vmem:[%s8 + $0x34] sm:$0xf]
    %v5342 = vld [vmem:[%s8 + $0x38] sm:$0xf]
    %v5343 = vld [vmem:[%s8 + $0x3c] sm:$0xf]
    %v5344 = vld [vmem:[%s9] sm:$0x1]
    %v5345 = vld [vmem:[%s10] sm:$0x1]
    %vm5346 = vcmask 326656
    %v5347 = vsel %vm5346, %v242, 0
    %v5349 = vsel %vm5346, %v245, 0
    %v5351 = vsel %vm5346, %v248, 0
    %5353 = vmatprep.subr.mxu0 0.0
    %5354 = vmatpush1.msra.mxu0 %v5318
    %5355 = vmatprep.subr.mxu0 0.0
    %5356 = vmatpush1.msra.mxu0 %v5319
    %5357 = vmatprep.subr.mxu0 0.0
    %5358 = vmatpush1.msra.mxu0 %v5320
    %5359 = vmatprep.subr.mxu0 0.0
    %5360 = vmatpush1.msra.mxu0 %v5321
    %5361 = vmatprep.subr.mxu0 0.0
    %5362 = vmatpush1.msra.mxu0 %v5322
    %5363 = vmatprep.subr.mxu0 0.0
    %5364 = vmatpush1.msra.mxu0 0.0
    %5365 = vmatprep.subr.mxu0 0.0
    %5366 = vmatpush1.msra.mxu0 0.0
    %5367 = vmatprep.subr.mxu0 0.0
    %5368 = vmatpush1.msra.mxu0 0.0
    %5369 = vmatprep.subr.mxu0 0.0
    %5370 = vmatpush1.msra.mxu0 0.0
    %5371 = vmatprep.subr.mxu0 0.0
    %5372 = vmatpush1.msra.mxu0 0.0
    %5373 = vmatprep.subr.mxu0 0.0
    %5374 = vmatpush1.msra.mxu0 0.0
    %5375 = vmatprep.subr.mxu0 0.0
    %5376 = vmatpush1.msra.mxu0 0.0
    %5377 = vmatprep.subr.mxu0 0.0
    %5378 = vmatpush1.msra.mxu0 0.0
    %5379 = vmatprep.subr.mxu0 0.0
    %5380 = vmatpush1.msra.mxu0 0.0
    %5381 = vmatprep.subr.mxu0 0.0
    %5382 = vmatpush1.msra.mxu0 0.0
    %5383 = vmatprep.subr.mxu0 0.0
    %5384 = vmatpush1.msra.mxu0 0.0
    %5385 = vmatprep.subr.mxu0 0.0
    %5386 = vmatpush1.msra.mxu0 0.0
    %5387 = vmatprep.subr.mxu0 0.0
    %5388 = vmatpush1.msra.mxu0 0.0
    %5389 = vmatprep.subr.mxu0 0.0
    %5390 = vmatpush1.msra.mxu0 0.0
    %5391 = vmatprep.subr.mxu0 0.0
    %5392 = vmatpush1.msra.mxu0 0.0
    %5393 = vmatprep.subr.mxu0 0.0
    %5394 = vmatpush1.msra.mxu0 0.0
    %5395 = vmatprep.subr.mxu0 0.0
    %5396 = vmatpush1.msra.mxu0 0.0
    %5397 = vmatprep.subr.mxu0 0.0
    %5398 = vmatpush1.msra.mxu0 0.0
    %5399 = vmatprep.subr.mxu0 0.0
    %5400 = vmatpush1.msra.mxu0 0.0
    %5401 = vmatprep.subr.mxu0 0.0
    %5402 = vmatpush1.msra.mxu0 0.0
    %5403 = vmatprep.subr.mxu0 0.0
    %5404 = vmatpush1.msra.mxu0 0.0
    %5405 = vmatprep.subr.mxu0 0.0
    %5406 = vmatpush1.msra.mxu0 0.0
    %5407 = vmatprep.subr.mxu0 0.0
    %5408 = vmatpush1.msra.mxu0 0.0
    %5409 = vmatprep.subr.mxu0 0.0
    %5410 = vmatpush1.msra.mxu0 0.0
    %5411 = vmatprep.subr.mxu0 0.0
    %5412 = vmatpush1.msra.mxu0 0.0
    %5413 = vmatprep.subr.mxu0 0.0
    %5414 = vmatpush1.msra.mxu0 0.0
    %5415 = vmatprep.subr.mxu0 0.0
    %5416 = vmatpush1.msra.mxu0 0.0
    %5417 = vmatprep.mubr.f32.mxu0 0.0
    %5418 = vmatmul.mubr.f32.gmra.mrb[0].mxu0 %v5347
    %v5419 = vpop.f32.mrb[0].mxu0
    %v5420 = vadd.f32 0.0, %v5419
    %v5421 = vpop.f32.mrb[0].mxu0
    %5422 = vmatprep.mubr.f32.mxu0 0.0
    %5423 = vmatmul.mubr.f32.gmra.mrb[0].mxu0 %v5349
    %v5424 = vpop.f32.mrb[0].mxu0
    %v5425 = vadd.f32 0.0, %v5424
    %v5426 = vpop.f32.mrb[0].mxu0
    %5427 = vmatprep.mubr.f32.mxu0 0.0
    %5428 = vmatmul.mubr.f32.gmra.mrb[0].mxu0 %v5351
    %v5429 = vpop.f32.mrb[0].mxu0
    %v5430 = vadd.f32 0.0, %v5429
    %v5431 = vpop.f32.mrb[0].mxu0
    %5432 = vdwg.mxu0
    %v5433 = vsel %vm5346, %v382, 0
    %v5435 = vsel %vm5346, %v385, 0
    %v5437 = vsel %vm5346, %v388, 0
    %5439 = vmatprep.subr.mxu0 0.0
    %5440 = vmatpush1.msra.mxu0 %v5318
    %5441 = vmatprep.subr.mxu0 0.0
    %5442 = vmatpush1.msra.mxu0 %v5319
    %5443 = vmatprep.subr.mxu0 0.0
    %5444 = vmatpush1.msra.mxu0 %v5320
    %5445 = vmatprep.subr.mxu0 0.0
    %5446 = vmatpush1.msra.mxu0 %v5321
    %5447 = vmatprep.subr.mxu0 0.0
    %5448 = vmatpush1.msra.mxu0 %v5322
    %5449 = vmatprep.subr.mxu0 0.0
    %5450 = vmatpush1.msra.mxu0 0.0
    %5451 = vmatprep.subr.mxu0 0.0
    %5452 = vmatpush1.msra.mxu0 0.0
    %5453 = vmatprep.subr.mxu0 0.0
    %5454 = vmatpush1.msra.mxu0 0.0
    %5455 = vmatprep.subr.mxu0 0.0
    %5456 = vmatpush1.msra.mxu0 0.0
    %5457 = vmatprep.subr.mxu0 0.0
    %5458 = vmatpush1.msra.mxu0 0.0
    %5459 = vmatprep.subr.mxu0 0.0
    %5460 = vmatpush1.msra.mxu0 0.0
    %5461 = vmatprep.subr.mxu0 0.0
    %5462 = vmatpush1.msra.mxu0 0.0
    %5463 = vmatprep.subr.mxu0 0.0
    %5464 = vmatpush1.msra.mxu0 0.0
    %5465 = vmatprep.subr.mxu0 0.0
    %5466 = vmatpush1.msra.mxu0 0.0
    %5467 = vmatprep.subr.mxu0 0.0
    %5468 = vmatpush1.msra.mxu0 0.0
    %5469 = vmatprep.subr.mxu0 0.0
    %5470 = vmatpush1.msra.mxu0 0.0
    %5471 = vmatprep.subr.mxu0 0.0
    %5472 = vmatpush1.msra.mxu0 0.0
    %5473 = vmatprep.subr.mxu0 0.0
    %5474 = vmatpush1.msra.mxu0 0.0
    %5475 = vmatprep.subr.mxu0 0.0
    %5476 = vmatpush1.msra.mxu0 0.0
    %5477 = vmatprep.subr.mxu0 0.0
    %5478 = vmatpush1.msra.mxu0 0.0
    %5479 = vmatprep.subr.mxu0 0.0
    %5480 = vmatpush1.msra.mxu0 0.0
    %5481 = vmatprep.subr.mxu0 0.0
    %5482 = vmatpush1.msra.mxu0 0.0
    %5483 = vmatprep.subr.mxu0 0.0
    %5484 = vmatpush1.msra.mxu0 0.0
    %5485 = vmatprep.subr.mxu0 0.0
    %5486 = vmatpush1.msra.mxu0 0.0
    %5487 = vmatprep.subr.mxu0 0.0
    %5488 = vmatpush1.msra.mxu0 0.0
    %5489 = vmatprep.subr.mxu0 0.0
    %5490 = vmatpush1.msra.mxu0 0.0
    %5491 = vmatprep.subr.mxu0 0.0
    %5492 = vmatpush1.msra.mxu0 0.0
    %5493 = vmatprep.subr.mxu0 0.0
    %5494 = vmatpush1.msra.mxu0 0.0
    %5495 = vmatprep.subr.mxu0 0.0
    %5496 = vmatpush1.msra.mxu0 0.0
    %5497 = vmatprep.subr.mxu0 0.0
    %5498 = vmatpush1.msra.mxu0 0.0
    %5499 = vmatprep.subr.mxu0 0.0
    %5500 = vmatpush1.msra.mxu0 0.0
    %5501 = vmatprep.subr.mxu0 0.0
    %5502 = vmatpush1.msra.mxu0 0.0
    %5503 = vmatprep.mubr.f32.mxu0 0.0
    %5504 = vmatmul.mubr.f32.gmra.mrb[0].mxu0 %v5433
    %v5505 = vpop.f32.mrb[0].mxu0
    %v5506 = vadd.f32 0.0, %v5505
    %v5507 = vpop.f32.mrb[0].mxu0
    %5508 = vmatprep.mubr.f32.mxu0 0.0
    %5509 = vmatmul.mubr.f32.gmra.mrb[0].mxu0 %v5435
    %v5510 = vpop.f32.mrb[0].mxu0
    %v5511 = vadd.f32 0.0, %v5510
    %v5512 = vpop.f32.mrb[0].mxu0
    %5513 = vmatprep.mubr.f32.mxu0 0.0
    %5514 = vmatmul.mubr.f32.gmra.mrb[0].mxu0 %v5437
    %v5515 = vpop.f32.mrb[0].mxu0
    %v5516 = vadd.f32 0.0, %v5515
    %v5517 = vpop.f32.mrb[0].mxu0
    %5518 = vdwg.mxu0
    %v5522 = vrot.slane %v5506, 7
    %v5523 = vrot.slane %v5511, 7
    %v5524 = vsel %vm1243, %v5522, %v5523
    %v5525 = vrot.slane %v5516, 7
    %v5526 = vsel %vm1243, %v5523, %v5525
    %v5530 = vsel %vm1243, 0.0, %v5522
    %v5534 = vrot.slane %v5420, 1
    %v5535 = vrot.slane %v5425, 1
    %v5536 = vsel %vm1324, %v5534, %v5535
    %v5537 = vrot.slane %v5430, 1
    %v5538 = vsel %vm1324, %v5535, %v5537
    %vm5540 = vcmask 1042432
    %v5541 = vsel %vm5540, %v5537, 0.0
    %5542 = vrot.lane.b32.xlu0 %v5420, 32
    %v5543 = vpop.permute.xlu0 %5542
    %5544 = vrot.lane.b32.xlu0 %v5425, 32
    %v5545 = vpop.permute.xlu0 %5544
    %5546 = vrot.lane.b32.xlu0 %v5430, 32
    %v5547 = vpop.permute.xlu0 %5546
    %5551 = vrot.lane.b32.xlu0 %v5506, 64
    %v5552 = vpop.permute.xlu0 %5551
    %5553 = vrot.lane.b32.xlu0 %v5511, 64
    %v5554 = vpop.permute.xlu0 %5553
    %5555 = vrot.lane.b32.xlu0 %v5516, 64
    %v5556 = vpop.permute.xlu0 %5555
    %5561 = vrot.lane.b32.xlu0 %v5536, 96
    %v5562 = vpop.permute.xlu0 %5561
    %5563 = vrot.lane.b32.xlu0 %v5538, 96
    %v5564 = vpop.permute.xlu0 %5563
    %5565 = vrot.lane.b32.xlu0 %v5541, 96
    %v5566 = vpop.permute.xlu0 %5565
    %v5570 = vsel %vm2652, %v5530, %v5543
    %v5571 = vsel %vm2652, %v5524, %v5545
    %v5572 = vsel %vm2652, %v5526, %v5547
    %v5573 = vsel %vm442, %v5570, %v5552
    %v5574 = vsel %vm442, %v5571, %v5554
    %v5575 = vsel %vm442, %v5572, %v5556
    %vm5576 = vcmask 785408
    %v5577 = vsel %vm5576, %v5573, %v5562
    %v5578 = vsel %vm5576, %v5574, %v5564
    %v5579 = vsel %vm5576, %v5575, %v5566
    %5580 = vmatprep.subr.mxu0 0.0
    %5581 = vmatpush1.msra.mxu0 %v5323
    %5582 = vmatprep.subr.mxu0 0.0
    %5583 = vmatpush1.msra.mxu0 %v5324
    %5584 = vmatprep.subr.mxu0 0.0
    %5585 = vmatpush1.msra.mxu0 %v5325
    %5586 = vmatprep.subr.mxu0 0.0
    %5587 = vmatpush1.msra.mxu0 %v5326
    %5588 = vmatprep.subr.mxu0 0.0
    %5589 = vmatpush1.msra.mxu0 %v5327
    %5590 = vmatprep.subr.mxu0 0.0
    %5591 = vmatpush1.msra.mxu0 0.0
    %5592 = vmatprep.subr.mxu0 0.0
    %5593 = vmatpush1.msra.mxu0 0.0
    %5594 = vmatprep.subr.mxu0 0.0
    %5595 = vmatpush1.msra.mxu0 0.0
    %5596 = vmatprep.subr.mxu0 0.0
    %5597 = vmatpush1.msra.mxu0 0.0
    %5598 = vmatprep.subr.mxu0 0.0
    %5599 = vmatpush1.msra.mxu0 0.0
    %5600 = vmatprep.subr.mxu0 0.0
    %5601 = vmatpush1.msra.mxu0 0.0
    %5602 = vmatprep.subr.mxu0 0.0
    %5603 = vmatpush1.msra.mxu0 0.0
    %5604 = vmatprep.subr.mxu0 0.0
    %5605 = vmatpush1.msra.mxu0 0.0
    %5606 = vmatprep.subr.mxu0 0.0
    %5607 = vmatpush1.msra.mxu0 0.0
    %5608 = vmatprep.subr.mxu0 0.0
    %5609 = vmatpush1.msra.mxu0 0.0
    %5610 = vmatprep.subr.mxu0 0.0
    %5611 = vmatpush1.msra.mxu0 0.0
    %5612 = vmatprep.subr.mxu0 0.0
    %5613 = vmatpush1.msra.mxu0 0.0
    %5614 = vmatprep.subr.mxu0 0.0
    %5615 = vmatpush1.msra.mxu0 0.0
    %5616 = vmatprep.subr.mxu0 0.0
    %5617 = vmatpush1.msra.mxu0 0.0
    %5618 = vmatprep.subr.mxu0 0.0
    %5619 = vmatpush1.msra.mxu0 0.0
    %5620 = vmatprep.subr.mxu0 0.0
    %5621 = vmatpush1.msra.mxu0 0.0
    %5622 = vmatprep.subr.mxu0 0.0
    %5623 = vmatpush1.msra.mxu0 0.0
    %5624 = vmatprep.subr.mxu0 0.0
    %5625 = vmatpush1.msra.mxu0 0.0
    %5626 = vmatprep.subr.mxu0 0.0
    %5627 = vmatpush1.msra.mxu0 0.0
    %5628 = vmatprep.subr.mxu0 0.0
    %5629 = vmatpush1.msra.mxu0 0.0
    %5630 = vmatprep.subr.mxu0 0.0
    %5631 = vmatpush1.msra.mxu0 0.0
    %5632 = vmatprep.subr.mxu0 0.0
    %5633 = vmatpush1.msra.mxu0 0.0
    %5634 = vmatprep.subr.mxu0 0.0
    %5635 = vmatpush1.msra.mxu0 0.0
    %5636 = vmatprep.subr.mxu0 0.0
    %5637 = vmatpush1.msra.mxu0 0.0
    %5638 = vmatprep.subr.mxu0 0.0
    %5639 = vmatpush1.msra.mxu0 0.0
    %5640 = vmatprep.subr.mxu0 0.0
    %5641 = vmatpush1.msra.mxu0 0.0
    %5642 = vmatprep.subr.mxu0 0.0
    %5643 = vmatpush1.msra.mxu0 0.0
    %5644 = vmatprep.mubr.f32.mxu0 0.0
    %5645 = vmatmul.mubr.f32.gmra.mrb[0].mxu0 %v5347
    %v5646 = vpop.f32.mrb[0].mxu0
    %v5647 = vadd.f32 0.0, %v5646
    %v5648 = vpop.f32.mrb[0].mxu0
    %5649 = vmatprep.mubr.f32.mxu0 0.0
    %5650 = vmatmul.mubr.f32.gmra.mrb[0].mxu0 %v5349
    %v5651 = vpop.f32.mrb[0].mxu0
    %v5652 = vadd.f32 0.0, %v5651
    %v5653 = vpop.f32.mrb[0].mxu0
    %5654 = vmatprep.mubr.f32.mxu0 0.0
    %5655 = vmatmul.mubr.f32.gmra.mrb[0].mxu0 %v5351
    %v5656 = vpop.f32.mrb[0].mxu0
    %v5657 = vadd.f32 0.0, %v5656
    %v5658 = vpop.f32.mrb[0].mxu0
    %5659 = vdwg.mxu0
    %5660 = vmatprep.subr.mxu0 0.0
    %5661 = vmatpush1.msra.mxu0 %v5323
    %5662 = vmatprep.subr.mxu0 0.0
    %5663 = vmatpush1.msra.mxu0 %v5324
    %5664 = vmatprep.subr.mxu0 0.0
    %5665 = vmatpush1.msra.mxu0 %v5325
    %5666 = vmatprep.subr.mxu0 0.0
    %5667 = vmatpush1.msra.mxu0 %v5326
    %5668 = vmatprep.subr.mxu0 0.0
    %5669 = vmatpush1.msra.mxu0 %v5327
    %5670 = vmatprep.subr.mxu0 0.0
    %5671 = vmatpush1.msra.mxu0 0.0
    %5672 = vmatprep.subr.mxu0 0.0
    %5673 = vmatpush1.msra.mxu0 0.0
    %5674 = vmatprep.subr.mxu0 0.0
    %5675 = vmatpush1.msra.mxu0 0.0
    %5676 = vmatprep.subr.mxu0 0.0
    %5677 = vmatpush1.msra.mxu0 0.0
    %5678 = vmatprep.subr.mxu0 0.0
    %5679 = vmatpush1.msra.mxu0 0.0
    %5680 = vmatprep.subr.mxu0 0.0
    %5681 = vmatpush1.msra.mxu0 0.0
    %5682 = vmatprep.subr.mxu0 0.0
    %5683 = vmatpush1.msra.mxu0 0.0
    %5684 = vmatprep.subr.mxu0 0.0
    %5685 = vmatpush1.msra.mxu0 0.0
    %5686 = vmatprep.subr.mxu0 0.0
    %5687 = vmatpush1.msra.mxu0 0.0
    %5688 = vmatprep.subr.mxu0 0.0
    %5689 = vmatpush1.msra.mxu0 0.0
    %5690 = vmatprep.subr.mxu0 0.0
    %5691 = vmatpush1.msra.mxu0 0.0
    %5692 = vmatprep.subr.mxu0 0.0
    %5693 = vmatpush1.msra.mxu0 0.0
    %5694 = vmatprep.subr.mxu0 0.0
    %5695 = vmatpush1.msra.mxu0 0.0
    %5696 = vmatprep.subr.mxu0 0.0
    %5697 = vmatpush1.msra.mxu0 0.0
    %5698 = vmatprep.subr.mxu0 0.0
    %5699 = vmatpush1.msra.mxu0 0.0
    %5700 = vmatprep.subr.mxu0 0.0
    %5701 = vmatpush1.msra.mxu0 0.0
    %5702 = vmatprep.subr.mxu0 0.0
    %5703 = vmatpush1.msra.mxu0 0.0
    %5704 = vmatprep.subr.mxu0 0.0
    %5705 = vmatpush1.msra.mxu0 0.0
    %5706 = vmatprep.subr.mxu0 0.0
    %5707 = vmatpush1.msra.mxu0 0.0
    %5708 = vmatprep.subr.mxu0 0.0
    %5709 = vmatpush1.msra.mxu0 0.0
    %5710 = vmatprep.subr.mxu0 0.0
    %5711 = vmatpush1.msra.mxu0 0.0
    %5712 = vmatprep.subr.mxu0 0.0
    %5713 = vmatpush1.msra.mxu0 0.0
    %5714 = vmatprep.subr.mxu0 0.0
    %5715 = vmatpush1.msra.mxu0 0.0
    %5716 = vmatprep.subr.mxu0 0.0
    %5717 = vmatpush1.msra.mxu0 0.0
    %5718 = vmatprep.subr.mxu0 0.0
    %5719 = vmatpush1.msra.mxu0 0.0
    %5720 = vmatprep.subr.mxu0 0.0
    %5721 = vmatpush1.msra.mxu0 0.0
    %5722 = vmatprep.subr.mxu0 0.0
    %5723 = vmatpush1.msra.mxu0 0.0
    %5724 = vmatprep.mubr.f32.mxu0 0.0
    %5725 = vmatmul.mubr.f32.gmra.mrb[0].mxu0 %v5433
    %v5726 = vpop.f32.mrb[0].mxu0
    %v5727 = vadd.f32 0.0, %v5726
    %v5728 = vpop.f32.mrb[0].mxu0
    %5729 = vmatprep.mubr.f32.mxu0 0.0
    %5730 = vmatmul.mubr.f32.gmra.mrb[0].mxu0 %v5435
    %v5731 = vpop.f32.mrb[0].mxu0
    %v5732 = vadd.f32 0.0, %v5731
    %v5733 = vpop.f32.mrb[0].mxu0
    %5734 = vmatprep.mubr.f32.mxu0 0.0
    %5735 = vmatmul.mubr.f32.gmra.mrb[0].mxu0 %v5437
    %v5736 = vpop.f32.mrb[0].mxu0
    %v5737 = vadd.f32 0.0, %v5736
    %v5738 = vpop.f32.mrb[0].mxu0
    %5739 = vdwg.mxu0
    %v5743 = vrot.slane %v5727, 7
    %v5744 = vrot.slane %v5732, 7
    %v5745 = vsel %vm1243, %v5743, %v5744
    %v5746 = vrot.slane %v5737, 7
    %v5747 = vsel %vm1243, %v5744, %v5746
    %v5751 = vsel %vm1243, 0.0, %v5743
    %v5755 = vrot.slane %v5647, 1
    %v5756 = vrot.slane %v5652, 1
    %v5757 = vsel %vm1324, %v5755, %v5756
    %v5758 = vrot.slane %v5657, 1
    %v5759 = vsel %vm1324, %v5756, %v5758
    %v5761 = vsel %vm5540, %v5758, 0.0
    %5762 = vrot.lane.b32.xlu0 %v5647, 32
    %v5763 = vpop.permute.xlu0 %5762
    %5764 = vrot.lane.b32.xlu0 %v5652, 32
    %v5765 = vpop.permute.xlu0 %5764
    %5766 = vrot.lane.b32.xlu0 %v5657, 32
    %v5767 = vpop.permute.xlu0 %5766
    %5771 = vrot.lane.b32.xlu0 %v5727, 64
    %v5772 = vpop.permute.xlu0 %5771
    %5773 = vrot.lane.b32.xlu0 %v5732, 64
    %v5774 = vpop.permute.xlu0 %5773
    %5775 = vrot.lane.b32.xlu0 %v5737, 64
    %v5776 = vpop.permute.xlu0 %5775
    %5781 = vrot.lane.b32.xlu0 %v5757, 96
    %v5782 = vpop.permute.xlu0 %5781
    %5783 = vrot.lane.b32.xlu0 %v5759, 96
    %v5784 = vpop.permute.xlu0 %5783
    %5785 = vrot.lane.b32.xlu0 %v5761, 96
    %v5786 = vpop.permute.xlu0 %5785
    %v5790 = vsel %vm2652, %v5751, %v5763
    %v5791 = vsel %vm2652, %v5745, %v5765
    %v5792 = vsel %vm2652, %v5747, %v5767
    %v5793 = vsel %vm442, %v5790, %v5772
    %v5794 = vsel %vm442, %v5791, %v5774
    %v5795 = vsel %vm442, %v5792, %v5776
    %v5796 = vsel %vm5576, %v5793, %v5782
    %v5797 = vsel %vm5576, %v5794, %v5784
    %v5798 = vsel %vm5576, %v5795, %v5786
    %vm5802 = vcmask 1043456
    %v5803 = vrot.slane %v5796, 4
    %v5804 = vrot.slane %v5797, 4
    %v5805 = vsel %vm5802, %v5803, %v5804
    %v5806 = vrot.slane %v5798, 4
    %v5807 = vsel %vm5802, %v5804, %v5806
    %v5811 = vsel %vm5802, %v5579, %v5803
    %v5812 = vpack.c.bf16 %v5578, %v5577
    %v5813 = vpack.c.bf16 %v5805, %v5811
    %v5814 = vpack.c.bf16 %v5807, %v5807
    %v5831 = vunpack.c.l.b16 %v5328
    %v5832 = vunpack.c.l.b16 %v5329
    %v5833 = vunpack.c.l.b16 %v5330
    %v5834 = vunpack.c.l.b16 %v5331
    %v5835 = vunpack.c.l.b16 %v5332
    %v5836 = vunpack.c.l.b16 %v5333
    %v5837 = vunpack.c.l.b16 %v5334
    %v5838 = vunpack.c.l.b16 %v5335
    %v5839 = vunpack.c.l.b16 %v5336
    %v5840 = vunpack.c.l.b16 %v5337
    %v5841 = vunpack.c.l.b16 %v5338
    %v5842 = vunpack.c.l.b16 %v5339
    %v5843 = vunpack.c.l.b16 %v5340
    %v5844 = vunpack.c.l.b16 %v5341
    %v5845 = vunpack.c.l.b16 %v5342
    %v5846 = vunpack.c.l.b16 %v5343
    %v5847 = vpack.c.b16 %v5832, %v5831
    %v5848 = vpack.c.b16 %v5834, %v5833
    %v5849 = vpack.c.b16 %v5836, %v5835
    %v5850 = vpack.c.b16 %v5838, %v5837
    %v5851 = vpack.c.b16 %v5840, %v5839
    %v5852 = vpack.c.b16 %v5842, %v5841
    %v5853 = vpack.c.b16 %v5844, %v5843
    %v5854 = vpack.c.b16 %v5846, %v5845
    %5863 = vmatprep.subr.bf16.mxu0 0
    %5864 = vmatpush1.bf16.msra.mxu0 %v5847
    %5865 = vmatprep.subr.bf16.mxu0 0
    %5866 = vmatpush1.bf16.msra.mxu0 %v5848
    %5867 = vmatprep.subr.bf16.mxu0 0
    %5868 = vmatpush1.bf16.msra.mxu0 %v5849
    %5869 = vmatprep.subr.bf16.mxu0 0
    %5870 = vmatpush1.bf16.msra.mxu0 %v5850
    %5871 = vmatprep.subr.bf16.mxu0 0
    %5872 = vmatpush1.bf16.msra.mxu0 %v5851
    %5873 = vmatprep.subr.bf16.mxu0 0
    %5874 = vmatpush1.bf16.msra.mxu0 %v5852
    %5875 = vmatprep.subr.bf16.mxu0 0
    %5876 = vmatpush1.bf16.msra.mxu0 %v5853
    %5877 = vmatprep.subr.bf16.mxu0 0
    %5878 = vmatpush1.bf16.msra.mxu0 %v5854
    %5879 = vmatprep.subr.bf16.mxu0 0
    %5880 = vmatpush1.bf16.msra.mxu0 0
    %5881 = vmatprep.subr.bf16.mxu0 0
    %5882 = vmatpush1.bf16.msra.mxu0 0
    %5883 = vmatprep.subr.bf16.mxu0 0
    %5884 = vmatpush1.bf16.msra.mxu0 0
    %5885 = vmatprep.subr.bf16.mxu0 0
    %5886 = vmatpush1.bf16.msra.mxu0 0
    %5887 = vmatprep.subr.bf16.mxu0 0
    %5888 = vmatpush1.bf16.msra.mxu0 0
    %5889 = vmatprep.subr.bf16.mxu0 0
    %5890 = vmatpush1.bf16.msra.mxu0 0
    %5891 = vmatprep.subr.bf16.mxu0 0
    %5892 = vmatpush1.bf16.msra.mxu0 0
    %5893 = vmatprep.subr.bf16.mxu0 0
    %5894 = vmatpush1.bf16.msra.mxu0 0
    %5895 = vmatprep.mubr.bf16.mxu0 0
    %5896 = vmatmul.mubr.bf16.gmra.mrb[0].mxu0 %v5812
    %v5897 = vpop.f32.mrb[0].mxu0
    %v5898 = vadd.f32 0.0, %v5897
    %v5899 = vpop.f32.mrb[0].mxu0
    %v5900 = vpop.f32.mrb[0].mxu0
    %v5901 = vadd.f32 0.0, %v5900
    %v5902 = vpop.f32.mrb[0].mxu0
    %5903 = vmatprep.mubr.bf16.mxu0 0
    %5904 = vmatmul.mubr.bf16.gmra.mrb[0].mxu0 %v5813
    %v5905 = vpop.f32.mrb[0].mxu0
    %v5906 = vadd.f32 0.0, %v5905
    %v5907 = vpop.f32.mrb[0].mxu0
    %v5908 = vpop.f32.mrb[0].mxu0
    %v5909 = vadd.f32 0.0, %v5908
    %v5910 = vpop.f32.mrb[0].mxu0
    %5911 = vmatprep.mubr.bf16.mxu0 0
    %5912 = vmatmul.mubr.bf16.gmra.mrb[0].mxu0 %v5814
    %v5913 = vpop.f32.mrb[0].mxu0
    %v5914 = vadd.f32 0.0, %v5913
    %v5915 = vpop.f32.mrb[0].mxu0
    %v5916 = vpop.f32.mrb[0].mxu0
    %v5917 = vpop.f32.mrb[0].mxu0
    %5918 = vdwg.mxu0
    %v5919 = vsel %vm442, %v5898, 0.0
    %v5920 = vsel %vm442, %v5901, 0.0
    %v5921 = vadd.f32 %v5919, %v5920
    %v5922 = vsel %vm442, %v5906, 0.0
    %v5923 = vadd.f32 %v5921, %v5922
    %v5924 = vsel %vm442, %v5909, 0.0
    %v5925 = vadd.f32 %v5923, %v5924
    %v5926 = vsel %vm442, %v5914, 0.0
    %v5927 = vadd.f32 %v5925, %v5926
    %v5928 = vrot.slane %v5927, 4
    %v5929 = vadd.f32 %v5927, %v5928
    %v5930 = vrot.slane %v5929, 2
    %v5931 = vadd.f32 %v5929, %v5930
    %v5932 = vrot.slane %v5931, 1
    %v5933 = vadd.f32 %v5931, %v5932
    %v5934 = vmul.f32 %v5933, 0.025
    %v5935 = vmul.f32 %v5898, %v5898
    %v5936 = vmul.f32 %v5901, %v5901
    %v5937 = vmul.f32 %v5906, %v5906
    %v5938 = vmul.f32 %v5909, %v5909
    %v5939 = vmul.f32 %v5914, %v5914
    %v5940 = vsel %vm442, %v5935, 0.0
    %v5941 = vsel %vm442, %v5936, 0.0
    %v5942 = vadd.f32 %v5940, %v5941
    %v5943 = vsel %vm442, %v5937, 0.0
    %v5944 = vadd.f32 %v5942, %v5943
    %v5945 = vsel %vm442, %v5938, 0.0
    %v5946 = vadd.f32 %v5944, %v5945
    %v5947 = vsel %vm442, %v5939, 0.0
    %v5948 = vadd.f32 %v5946, %v5947
    %v5949 = vrot.slane %v5948, 4
    %v5950 = vadd.f32 %v5948, %v5949
    %v5951 = vrot.slane %v5950, 2
    %v5952 = vadd.f32 %v5950, %v5951
    %v5953 = vrot.slane %v5952, 1
    %v5954 = vadd.f32 %v5952, %v5953
    %v5955 = vmul.f32 %v5954, 0.025
    %v5956 = vmul.f32 %v5934, %v5934
    %v5957 = vsub.f32 %v5955, %v5956
    %v5958 = vmax.f32 %v5957, 0.0
    %v5959 = vadd.f32 %v5958, 1e-05
    %v5960 = vrsqrt.pop %v5959
    %v5961 = vmul.f32 %v5344, %v5960
    %v5962 = vmul.f32 %v5934, %v5961
    %v5963 = vsub.f32 %v5345, %v5962
    %v5965 = vlaneseq
    %v5966 = vshrl.u32 %v5965, 7
    %v5967 = vsub.s32 0, %v5966
    %v5968 = vrot.slane %v5961, %v5967
    %v5970 = vmul.f32 %v5898, %v5968
    %v5971 = vmul.f32 %v5901, %v5968
    %v5972 = vmul.f32 %v5906, %v5968
    %v5973 = vmul.f32 %v5909, %v5968
    %v5974 = vmul.f32 %v5914, %v5968
    %v5976 = vlaneseq
    %v5977 = vshrl.u32 %v5976, 7
    %v5978 = vsub.s32 0, %v5977
    %v5979 = vrot.slane %v5963, %v5978
    %v5981 = vadd.f32 %v5970, %v5979
    %v5982 = vadd.f32 %v5971, %v5979
    %v5983 = vadd.f32 %v5972, %v5979
    %v5984 = vadd.f32 %v5973, %v5979
    %v5985 = vadd.f32 %v5974, %v5979
    %v5986 = vmul.f32 %v5981, 0.2
    %v5987 = vmul.f32 %v5982, 0.2
    %v5988 = vmul.f32 %v5983, 0.2
    %v5989 = vmul.f32 %v5984, 0.2
    %v5990 = vmul.f32 %v5985, 0.2
    %v5991 = vmax.f32 %v5981, %v5986
    %v5992 = vmax.f32 %v5982, %v5987
    %v5993 = vmax.f32 %v5983, %v5988
    %v5994 = vmax.f32 %v5984, %v5989
    %v5995 = vmax.f32 %v5985, %v5990
    %v5996 = vld [vmem:[%s11] sm:$0xf]
    %v5997 = vld [vmem:[%s11 + $0x4] sm:$0xf]
    %v5998 = vld [vmem:[%s11 + $0x8] sm:$0xf]
    %v5999 = vld [vmem:[%s11 + $0xc] sm:$0xf]
    %v6000 = vld [vmem:[%s11 + $0x10] sm:$0xf]
    %v6001 = vld [vmem:[%s11 + $0x14] sm:$0xf]
    %v6002 = vld [vmem:[%s11 + $0x18] sm:$0xf]
    %v6003 = vld [vmem:[%s11 + $0x1c] sm:$0xf]
    %v6004 = vld [vmem:[%s11 + $0x20] sm:$0xf]
    %v6005 = vld [vmem:[%s11 + $0x24] sm:$0xf]
    %v6006 = vld [vmem:[%s11 + $0x28] sm:$0xf]
    %v6007 = vld [vmem:[%s11 + $0x2c] sm:$0xf]
    %v6008 = vld [vmem:[%s11 + $0x30] sm:$0xf]
    %v6009 = vld [vmem:[%s11 + $0x34] sm:$0xf]
    %v6010 = vld [vmem:[%s11 + $0x38] sm:$0xf]
    %v6011 = vld [vmem:[%s11 + $0x3c] sm:$0xf]
    %v6012 = vld [vmem:[%s11 + $0x40] sm:$0xf]
    %v6013 = vld [vmem:[%s11 + $0x44] sm:$0xf]
    %v6014 = vld [vmem:[%s11 + $0x48] sm:$0xf]
    %v6015 = vld [vmem:[%s11 + $0x4c] sm:$0xf]
    %v6016 = vld [vmem:[%s11 + $0x50] sm:$0xf]
    %v6017 = vld [vmem:[%s11 + $0x54] sm:$0xf]
    %v6018 = vld [vmem:[%s11 + $0x58] sm:$0xf]
    %v6019 = vld [vmem:[%s11 + $0x5c] sm:$0xf]
    %v6020 = vld [vmem:[%s11 + $0x60] sm:$0xf]
    %v6021 = vld [vmem:[%s11 + $0x64] sm:$0xf]
    %v6022 = vld [vmem:[%s11 + $0x68] sm:$0xf]
    %v6023 = vld [vmem:[%s11 + $0x6c] sm:$0xf]
    %v6024 = vld [vmem:[%s11 + $0x70] sm:$0xf]
    %v6025 = vld [vmem:[%s11 + $0x74] sm:$0xf]
    %v6026 = vld [vmem:[%s11 + $0x78] sm:$0xf]
    %v6027 = vld [vmem:[%s11 + $0x7c] sm:$0xf]
    %v6028 = vld [vmem:[%s12] sm:$0x1]
    %v6029 = vld [vmem:[%s13] sm:$0x1]
    %vm6030 = vcmask 162816
    %v6031 = vsel %vm6030, %v242, 0
    %v6033 = vsel %vm6030, %v245, 0
    %v6036 = vsel %vm5802, %v5993, 0
    %6038 = vmatprep.subr.mxu0 0.0
    %6039 = vmatpush1.msra.mxu0 %v5991
    %6040 = vmatprep.subr.mxu0 0.0
    %6041 = vmatpush1.msra.mxu0 %v5992
    %6042 = vmatprep.subr.mxu0 0.0
    %6043 = vmatpush1.msra.mxu0 %v6036
    %6044 = vmatprep.subr.mxu0 0.0
    %6045 = vmatpush1.msra.mxu0 0.0
    %6046 = vmatprep.subr.mxu0 0.0
    %6047 = vmatpush1.msra.mxu0 0.0
    %6048 = vmatprep.subr.mxu0 0.0
    %6049 = vmatpush1.msra.mxu0 0.0
    %6050 = vmatprep.subr.mxu0 0.0
    %6051 = vmatpush1.msra.mxu0 0.0
    %6052 = vmatprep.subr.mxu0 0.0
    %6053 = vmatpush1.msra.mxu0 0.0
    %6054 = vmatprep.subr.mxu0 0.0
    %6055 = vmatpush1.msra.mxu0 0.0
    %6056 = vmatprep.subr.mxu0 0.0
    %6057 = vmatpush1.msra.mxu0 0.0
    %6058 = vmatprep.subr.mxu0 0.0
    %6059 = vmatpush1.msra.mxu0 0.0
    %6060 = vmatprep.subr.mxu0 0.0
    %6061 = vmatpush1.msra.mxu0 0.0
    %6062 = vmatprep.subr.mxu0 0.0
    %6063 = vmatpush1.msra.mxu0 0.0
    %6064 = vmatprep.subr.mxu0 0.0
    %6065 = vmatpush1.msra.mxu0 0.0
    %6066 = vmatprep.subr.mxu0 0.0
    %6067 = vmatpush1.msra.mxu0 0.0
    %6068 = vmatprep.subr.mxu0 0.0
    %6069 = vmatpush1.msra.mxu0 0.0
    %6070 = vmatprep.subr.mxu0 0.0
    %6071 = vmatpush1.msra.mxu0 0.0
    %6072 = vmatprep.subr.mxu0 0.0
    %6073 = vmatpush1.msra.mxu0 0.0
    %6074 = vmatprep.subr.mxu0 0.0
    %6075 = vmatpush1.msra.mxu0 0.0
    %6076 = vmatprep.subr.mxu0 0.0
    %6077 = vmatpush1.msra.mxu0 0.0
    %6078 = vmatprep.subr.mxu0 0.0
    %6079 = vmatpush1.msra.mxu0 0.0
    %6080 = vmatprep.subr.mxu0 0.0
    %6081 = vmatpush1.msra.mxu0 0.0
    %6082 = vmatprep.subr.mxu0 0.0
    %6083 = vmatpush1.msra.mxu0 0.0
    %6084 = vmatprep.subr.mxu0 0.0
    %6085 = vmatpush1.msra.mxu0 0.0
    %6086 = vmatprep.subr.mxu0 0.0
    %6087 = vmatpush1.msra.mxu0 0.0
    %6088 = vmatprep.subr.mxu0 0.0
    %6089 = vmatpush1.msra.mxu0 0.0
    %6090 = vmatprep.subr.mxu0 0.0
    %6091 = vmatpush1.msra.mxu0 0.0
    %6092 = vmatprep.subr.mxu0 0.0
    %6093 = vmatpush1.msra.mxu0 0.0
    %6094 = vmatprep.subr.mxu0 0.0
    %6095 = vmatpush1.msra.mxu0 0.0
    %6096 = vmatprep.subr.mxu0 0.0
    %6097 = vmatpush1.msra.mxu0 0.0
    %6098 = vmatprep.subr.mxu0 0.0
    %6099 = vmatpush1.msra.mxu0 0.0
    %6100 = vmatprep.subr.mxu0 0.0
    %6101 = vmatpush1.msra.mxu0 0.0
    %6102 = vmatprep.mubr.f32.mxu0 0.0
    %6103 = vmatmul.mubr.f32.gmra.mrb[0].mxu0 %v6031
    %v6104 = vpop.f32.mrb[0].mxu0
    %v6105 = vadd.f32 0.0, %v6104
    %v6106 = vpop.f32.mrb[0].mxu0
    %6107 = vmatprep.mubr.f32.mxu0 0.0
    %6108 = vmatmul.mubr.f32.gmra.mrb[0].mxu0 %v6033
    %v6109 = vpop.f32.mrb[0].mxu0
    %v6110 = vadd.f32 0.0, %v6109
    %v6111 = vpop.f32.mrb[0].mxu0
    %6112 = vdwg.mxu0
    %v6113 = vsel %vm6030, %v382, 0
    %v6115 = vsel %vm6030, %v385, 0
    %6117 = vmatprep.subr.mxu0 0.0
    %6118 = vmatpush1.msra.mxu0 %v5991
    %6119 = vmatprep.subr.mxu0 0.0
    %6120 = vmatpush1.msra.mxu0 %v5992
    %6121 = vmatprep.subr.mxu0 0.0
    %6122 = vmatpush1.msra.mxu0 %v6036
    %6123 = vmatprep.subr.mxu0 0.0
    %6124 = vmatpush1.msra.mxu0 0.0
    %6125 = vmatprep.subr.mxu0 0.0
    %6126 = vmatpush1.msra.mxu0 0.0
    %6127 = vmatprep.subr.mxu0 0.0
    %6128 = vmatpush1.msra.mxu0 0.0
    %6129 = vmatprep.subr.mxu0 0.0
    %6130 = vmatpush1.msra.mxu0 0.0
    %6131 = vmatprep.subr.mxu0 0.0
    %6132 = vmatpush1.msra.mxu0 0.0
    %6133 = vmatprep.subr.mxu0 0.0
    %6134 = vmatpush1.msra.mxu0 0.0
    %6135 = vmatprep.subr.mxu0 0.0
    %6136 = vmatpush1.msra.mxu0 0.0
    %6137 = vmatprep.subr.mxu0 0.0
    %6138 = vmatpush1.msra.mxu0 0.0
    %6139 = vmatprep.subr.mxu0 0.0
    %6140 = vmatpush1.msra.mxu0 0.0
    %6141 = vmatprep.subr.mxu0 0.0
    %6142 = vmatpush1.msra.mxu0 0.0
    %6143 = vmatprep.subr.mxu0 0.0
    %6144 = vmatpush1.msra.mxu0 0.0
    %6145 = vmatprep.subr.mxu0 0.0
    %6146 = vmatpush1.msra.mxu0 0.0
    %6147 = vmatprep.subr.mxu0 0.0
    %6148 = vmatpush1.msra.mxu0 0.0
    %6149 = vmatprep.subr.mxu0 0.0
    %6150 = vmatpush1.msra.mxu0 0.0
    %6151 = vmatprep.subr.mxu0 0.0
    %6152 = vmatpush1.msra.mxu0 0.0
    %6153 = vmatprep.subr.mxu0 0.0
    %6154 = vmatpush1.msra.mxu0 0.0
    %6155 = vmatprep.subr.mxu0 0.0
    %6156 = vmatpush1.msra.mxu0 0.0
    %6157 = vmatprep.subr.mxu0 0.0
    %6158 = vmatpush1.msra.mxu0 0.0
    %6159 = vmatprep.subr.mxu0 0.0
    %6160 = vmatpush1.msra.mxu0 0.0
    %6161 = vmatprep.subr.mxu0 0.0
    %6162 = vmatpush1.msra.mxu0 0.0
    %6163 = vmatprep.subr.mxu0 0.0
    %6164 = vmatpush1.msra.mxu0 0.0
    %6165 = vmatprep.subr.mxu0 0.0
    %6166 = vmatpush1.msra.mxu0 0.0
    %6167 = vmatprep.subr.mxu0 0.0
    %6168 = vmatpush1.msra.mxu0 0.0
    %6169 = vmatprep.subr.mxu0 0.0
    %6170 = vmatpush1.msra.mxu0 0.0
    %6171 = vmatprep.subr.mxu0 0.0
    %6172 = vmatpush1.msra.mxu0 0.0
    %6173 = vmatprep.subr.mxu0 0.0
    %6174 = vmatpush1.msra.mxu0 0.0
    %6175 = vmatprep.subr.mxu0 0.0
    %6176 = vmatpush1.msra.mxu0 0.0
    %6177 = vmatprep.subr.mxu0 0.0
    %6178 = vmatpush1.msra.mxu0 0.0
    %6179 = vmatprep.subr.mxu0 0.0
    %6180 = vmatpush1.msra.mxu0 0.0
    %6181 = vmatprep.mubr.f32.mxu0 0.0
    %6182 = vmatmul.mubr.f32.gmra.mrb[0].mxu0 %v6113
    %v6183 = vpop.f32.mrb[0].mxu0
    %v6184 = vadd.f32 0.0, %v6183
    %v6185 = vpop.f32.mrb[0].mxu0
    %6186 = vmatprep.mubr.f32.mxu0 0.0
    %6187 = vmatmul.mubr.f32.gmra.mrb[0].mxu0 %v6115
    %v6188 = vpop.f32.mrb[0].mxu0
    %v6189 = vadd.f32 0.0, %v6188
    %v6190 = vpop.f32.mrb[0].mxu0
    %6191 = vdwg.mxu0
    %v6194 = vrot.slane %v6184, 7
    %v6195 = vrot.slane %v6189, 7
    %v6196 = vsel %vm1243, %v6194, %v6195
    %v6199 = vsel %vm1243, 0.0, %v6194
    %v6202 = vrot.slane %v6105, 1
    %v6203 = vrot.slane %v6110, 1
    %v6204 = vsel %vm1324, %v6202, %v6203
    %v6206 = vsel %vm1243, %v6203, 0.0
    %6207 = vrot.lane.b32.xlu0 %v6105, 64
    %v6208 = vpop.permute.xlu0 %6207
    %6209 = vrot.lane.b32.xlu0 %v6110, 64
    %v6210 = vpop.permute.xlu0 %6209
    %6214 = vrot.lane.b32.xlu0 %v6204, 64
    %v6215 = vpop.permute.xlu0 %6214
    %6216 = vrot.lane.b32.xlu0 %v6206, 64
    %v6217 = vpop.permute.xlu0 %6216
    %v6220 = vsel %vm442, %v6199, %v6208
    %v6221 = vsel %vm442, %v6196, %v6210
    %v6222 = vsel %vm442, %v6184, %v6215
    %v6223 = vsel %vm442, %v6189, %v6217
    %v6226 = vrot.slane %v5993, 4
    %v6227 = vrot.slane %v5994, 4
    %v6228 = vsel %vm5802, %v6226, %v6227
    %v6229 = vrot.slane %v5995, 4
    %v6230 = vsel %vm5802, %v6227, %v6229
    %v6233 = vsel %vm5802, %v6229, 0
    %6235 = vmatprep.subr.mxu0 0.0
    %6236 = vmatpush1.msra.mxu0 %v6228
    %6237 = vmatprep.subr.mxu0 0.0
    %6238 = vmatpush1.msra.mxu0 %v6230
    %6239 = vmatprep.subr.mxu0 0.0
    %6240 = vmatpush1.msra.mxu0 %v6233
    %6241 = vmatprep.subr.mxu0 0.0
    %6242 = vmatpush1.msra.mxu0 0.0
    %6243 = vmatprep.subr.mxu0 0.0
    %6244 = vmatpush1.msra.mxu0 0.0
    %6245 = vmatprep.subr.mxu0 0.0
    %6246 = vmatpush1.msra.mxu0 0.0
    %6247 = vmatprep.subr.mxu0 0.0
    %6248 = vmatpush1.msra.mxu0 0.0
    %6249 = vmatprep.subr.mxu0 0.0
    %6250 = vmatpush1.msra.mxu0 0.0
    %6251 = vmatprep.subr.mxu0 0.0
    %6252 = vmatpush1.msra.mxu0 0.0
    %6253 = vmatprep.subr.mxu0 0.0
    %6254 = vmatpush1.msra.mxu0 0.0
    %6255 = vmatprep.subr.mxu0 0.0
    %6256 = vmatpush1.msra.mxu0 0.0
    %6257 = vmatprep.subr.mxu0 0.0
    %6258 = vmatpush1.msra.mxu0 0.0
    %6259 = vmatprep.subr.mxu0 0.0
    %6260 = vmatpush1.msra.mxu0 0.0
    %6261 = vmatprep.subr.mxu0 0.0
    %6262 = vmatpush1.msra.mxu0 0.0
    %6263 = vmatprep.subr.mxu0 0.0
    %6264 = vmatpush1.msra.mxu0 0.0
    %6265 = vmatprep.subr.mxu0 0.0
    %6266 = vmatpush1.msra.mxu0 0.0
    %6267 = vmatprep.subr.mxu0 0.0
    %6268 = vmatpush1.msra.mxu0 0.0
    %6269 = vmatprep.subr.mxu0 0.0
    %6270 = vmatpush1.msra.mxu0 0.0
    %6271 = vmatprep.subr.mxu0 0.0
    %6272 = vmatpush1.msra.mxu0 0.0
    %6273 = vmatprep.subr.mxu0 0.0
    %6274 = vmatpush1.msra.mxu0 0.0
    %6275 = vmatprep.subr.mxu0 0.0
    %6276 = vmatpush1.msra.mxu0 0.0
    %6277 = vmatprep.subr.mxu0 0.0
    %6278 = vmatpush1.msra.mxu0 0.0
    %6279 = vmatprep.subr.mxu0 0.0
    %6280 = vmatpush1.msra.mxu0 0.0
    %6281 = vmatprep.subr.mxu0 0.0
    %6282 = vmatpush1.msra.mxu0 0.0
    %6283 = vmatprep.subr.mxu0 0.0
    %6284 = vmatpush1.msra.mxu0 0.0
    %6285 = vmatprep.subr.mxu0 0.0
    %6286 = vmatpush1.msra.mxu0 0.0
    %6287 = vmatprep.subr.mxu0 0.0
    %6288 = vmatpush1.msra.mxu0 0.0
    %6289 = vmatprep.subr.mxu0 0.0
    %6290 = vmatpush1.msra.mxu0 0.0
    %6291 = vmatprep.subr.mxu0 0.0
    %6292 = vmatpush1.msra.mxu0 0.0
    %6293 = vmatprep.subr.mxu0 0.0
    %6294 = vmatpush1.msra.mxu0 0.0
    %6295 = vmatprep.subr.mxu0 0.0
    %6296 = vmatpush1.msra.mxu0 0.0
    %6297 = vmatprep.subr.mxu0 0.0
    %6298 = vmatpush1.msra.mxu0 0.0
    %6299 = vmatprep.mubr.f32.mxu0 0.0
    %6300 = vmatmul.mubr.f32.gmra.mrb[0].mxu0 %v6031
    %v6301 = vpop.f32.mrb[0].mxu0
    %v6302 = vadd.f32 0.0, %v6301
    %v6303 = vpop.f32.mrb[0].mxu0
    %6304 = vmatprep.mubr.f32.mxu0 0.0
    %6305 = vmatmul.mubr.f32.gmra.mrb[0].mxu0 %v6033
    %v6306 = vpop.f32.mrb[0].mxu0
    %v6307 = vadd.f32 0.0, %v6306
    %v6308 = vpop.f32.mrb[0].mxu0
    %6309 = vdwg.mxu0
    %6310 = vmatprep.subr.mxu0 0.0
    %6311 = vmatpush1.msra.mxu0 %v6228
    %6312 = vmatprep.subr.mxu0 0.0
    %6313 = vmatpush1.msra.mxu0 %v6230
    %6314 = vmatprep.subr.mxu0 0.0
    %6315 = vmatpush1.msra.mxu0 %v6233
    %6316 = vmatprep.subr.mxu0 0.0
    %6317 = vmatpush1.msra.mxu0 0.0
    %6318 = vmatprep.subr.mxu0 0.0
    %6319 = vmatpush1.msra.mxu0 0.0
    %6320 = vmatprep.subr.mxu0 0.0
    %6321 = vmatpush1.msra.mxu0 0.0
    %6322 = vmatprep.subr.mxu0 0.0
    %6323 = vmatpush1.msra.mxu0 0.0
    %6324 = vmatprep.subr.mxu0 0.0
    %6325 = vmatpush1.msra.mxu0 0.0
    %6326 = vmatprep.subr.mxu0 0.0
    %6327 = vmatpush1.msra.mxu0 0.0
    %6328 = vmatprep.subr.mxu0 0.0
    %6329 = vmatpush1.msra.mxu0 0.0
    %6330 = vmatprep.subr.mxu0 0.0
    %6331 = vmatpush1.msra.mxu0 0.0
    %6332 = vmatprep.subr.mxu0 0.0
    %6333 = vmatpush1.msra.mxu0 0.0
    %6334 = vmatprep.subr.mxu0 0.0
    %6335 = vmatpush1.msra.mxu0 0.0
    %6336 = vmatprep.subr.mxu0 0.0
    %6337 = vmatpush1.msra.mxu0 0.0
    %6338 = vmatprep.subr.mxu0 0.0
    %6339 = vmatpush1.msra.mxu0 0.0
    %6340 = vmatprep.subr.mxu0 0.0
    %6341 = vmatpush1.msra.mxu0 0.0
    %6342 = vmatprep.subr.mxu0 0.0
    %6343 = vmatpush1.msra.mxu0 0.0
    %6344 = vmatprep.subr.mxu0 0.0
    %6345 = vmatpush1.msra.mxu0 0.0
    %6346 = vmatprep.subr.mxu0 0.0
    %6347 = vmatpush1.msra.mxu0 0.0
    %6348 = vmatprep.subr.mxu0 0.0
    %6349 = vmatpush1.msra.mxu0 0.0
    %6350 = vmatprep.subr.mxu0 0.0
    %6351 = vmatpush1.msra.mxu0 0.0
    %6352 = vmatprep.subr.mxu0 0.0
    %6353 = vmatpush1.msra.mxu0 0.0
    %6354 = vmatprep.subr.mxu0 0.0
    %6355 = vmatpush1.msra.mxu0 0.0
    %6356 = vmatprep.subr.mxu0 0.0
    %6357 = vmatpush1.msra.mxu0 0.0
    %6358 = vmatprep.subr.mxu0 0.0
    %6359 = vmatpush1.msra.mxu0 0.0
    %6360 = vmatprep.subr.mxu0 0.0
    %6361 = vmatpush1.msra.mxu0 0.0
    %6362 = vmatprep.subr.mxu0 0.0
    %6363 = vmatpush1.msra.mxu0 0.0
    %6364 = vmatprep.subr.mxu0 0.0
    %6365 = vmatpush1.msra.mxu0 0.0
    %6366 = vmatprep.subr.mxu0 0.0
    %6367 = vmatpush1.msra.mxu0 0.0
    %6368 = vmatprep.subr.mxu0 0.0
    %6369 = vmatpush1.msra.mxu0 0.0
    %6370 = vmatprep.subr.mxu0 0.0
    %6371 = vmatpush1.msra.mxu0 0.0
    %6372 = vmatprep.subr.mxu0 0.0
    %6373 = vmatpush1.msra.mxu0 0.0
    %6374 = vmatprep.mubr.f32.mxu0 0.0
    %6375 = vmatmul.mubr.f32.gmra.mrb[0].mxu0 %v6113
    %v6376 = vpop.f32.mrb[0].mxu0
    %v6377 = vadd.f32 0.0, %v6376
    %v6378 = vpop.f32.mrb[0].mxu0
    %6379 = vmatprep.mubr.f32.mxu0 0.0
    %6380 = vmatmul.mubr.f32.gmra.mrb[0].mxu0 %v6115
    %v6381 = vpop.f32.mrb[0].mxu0
    %v6382 = vadd.f32 0.0, %v6381
    %v6383 = vpop.f32.mrb[0].mxu0
    %6384 = vdwg.mxu0
    %v6387 = vrot.slane %v6377, 7
    %v6388 = vrot.slane %v6382, 7
    %v6389 = vsel %vm1243, %v6387, %v6388
    %v6392 = vsel %vm1243, 0.0, %v6387
    %v6395 = vrot.slane %v6302, 1
    %v6396 = vrot.slane %v6307, 1
    %v6397 = vsel %vm1324, %v6395, %v6396
    %v6399 = vsel %vm1243, %v6396, 0.0
    %6400 = vrot.lane.b32.xlu0 %v6302, 64
    %v6401 = vpop.permute.xlu0 %6400
    %6402 = vrot.lane.b32.xlu0 %v6307, 64
    %v6403 = vpop.permute.xlu0 %6402
    %6407 = vrot.lane.b32.xlu0 %v6397, 64
    %v6408 = vpop.permute.xlu0 %6407
    %6409 = vrot.lane.b32.xlu0 %v6399, 64
    %v6410 = vpop.permute.xlu0 %6409
    %v6413 = vsel %vm442, %v6392, %v6401
    %v6414 = vsel %vm442, %v6389, %v6403
    %v6415 = vsel %vm442, %v6377, %v6408
    %v6416 = vsel %vm442, %v6382, %v6410
    %vm6421 = vcmask 1041408
    %v6422 = vrot.slane %v6413, 6
    %v6423 = vrot.slane %v6415, 6
    %v6424 = vrot.slane %v6414, 6
    %v6425 = vsel %vm6421, %v6422, %v6424
    %v6426 = vrot.slane %v6416, 6
    %v6427 = vsel %vm6421, %v6423, %v6426
    %v6432 = vsel %vm6421, %v6221, %v6422
    %v6433 = vsel %vm6421, %v6223, %v6423
    %v6434 = vpack.c.bf16 %v6432, %v6220
    %v6435 = vpack.c.bf16 %v6433, %v6222
    %v6436 = vpack.c.bf16 %v6425, %v6425
    %v6437 = vpack.c.bf16 %v6427, %v6427
    %v6470 = vunpack.c.l.b16 %v5996
    %v6471 = vunpack.c.l.b16 %v5997
    %v6472 = vunpack.c.l.b16 %v5998
    %v6473 = vunpack.c.l.b16 %v5999
    %v6474 = vunpack.c.l.b16 %v6000
    %v6475 = vunpack.c.l.b16 %v6001
    %v6476 = vunpack.c.l.b16 %v6002
    %v6477 = vunpack.c.l.b16 %v6003
    %v6478 = vunpack.c.l.b16 %v6004
    %v6479 = vunpack.c.l.b16 %v6005
    %v6480 = vunpack.c.l.b16 %v6006
    %v6481 = vunpack.c.l.b16 %v6007
    %v6482 = vunpack.c.l.b16 %v6008
    %v6483 = vunpack.c.l.b16 %v6009
    %v6484 = vunpack.c.l.b16 %v6010
    %v6485 = vunpack.c.l.b16 %v6011
    %v6486 = vunpack.c.l.b16 %v6012
    %v6487 = vunpack.c.l.b16 %v6013
    %v6488 = vunpack.c.l.b16 %v6014
    %v6489 = vunpack.c.l.b16 %v6015
    %v6490 = vunpack.c.l.b16 %v6016
    %v6491 = vunpack.c.l.b16 %v6017
    %v6492 = vunpack.c.l.b16 %v6018
    %v6493 = vunpack.c.l.b16 %v6019
    %v6494 = vunpack.c.l.b16 %v6020
    %v6495 = vunpack.c.l.b16 %v6021
    %v6496 = vunpack.c.l.b16 %v6022
    %v6497 = vunpack.c.l.b16 %v6023
    %v6498 = vunpack.c.l.b16 %v6024
    %v6499 = vunpack.c.l.b16 %v6025
    %v6500 = vunpack.c.l.b16 %v6026
    %v6501 = vunpack.c.l.b16 %v6027
    %v6502 = vpack.c.b16 %v6471, %v6470
    %v6503 = vpack.c.b16 %v6473, %v6472
    %v6504 = vpack.c.b16 %v6475, %v6474
    %v6505 = vpack.c.b16 %v6477, %v6476
    %v6506 = vpack.c.b16 %v6479, %v6478
    %v6507 = vpack.c.b16 %v6481, %v6480
    %v6508 = vpack.c.b16 %v6483, %v6482
    %v6509 = vpack.c.b16 %v6485, %v6484
    %v6510 = vpack.c.b16 %v6487, %v6486
    %v6511 = vpack.c.b16 %v6489, %v6488
    %v6512 = vpack.c.b16 %v6491, %v6490
    %v6513 = vpack.c.b16 %v6493, %v6492
    %v6514 = vpack.c.b16 %v6495, %v6494
    %v6515 = vpack.c.b16 %v6497, %v6496
    %v6516 = vpack.c.b16 %v6499, %v6498
    %v6517 = vpack.c.b16 %v6501, %v6500
    %6534 = vmatprep.subr.bf16.mxu0 0
    %6535 = vmatpush1.bf16.msra.mxu0 %v6502
    %6536 = vmatprep.subr.bf16.mxu0 0
    %6537 = vmatpush1.bf16.msra.mxu0 %v6503
    %6538 = vmatprep.subr.bf16.mxu0 0
    %6539 = vmatpush1.bf16.msra.mxu0 %v6504
    %6540 = vmatprep.subr.bf16.mxu0 0
    %6541 = vmatpush1.bf16.msra.mxu0 %v6505
    %6542 = vmatprep.subr.bf16.mxu0 0
    %6543 = vmatpush1.bf16.msra.mxu0 %v6506
    %6544 = vmatprep.subr.bf16.mxu0 0
    %6545 = vmatpush1.bf16.msra.mxu0 %v6507
    %6546 = vmatprep.subr.bf16.mxu0 0
    %6547 = vmatpush1.bf16.msra.mxu0 %v6508
    %6548 = vmatprep.subr.bf16.mxu0 0
    %6549 = vmatpush1.bf16.msra.mxu0 %v6509
    %6550 = vmatprep.subr.bf16.mxu0 0
    %6551 = vmatpush1.bf16.msra.mxu0 %v6510
    %6552 = vmatprep.subr.bf16.mxu0 0
    %6553 = vmatpush1.bf16.msra.mxu0 %v6511
    %6554 = vmatprep.subr.bf16.mxu0 0
    %6555 = vmatpush1.bf16.msra.mxu0 %v6512
    %6556 = vmatprep.subr.bf16.mxu0 0
    %6557 = vmatpush1.bf16.msra.mxu0 %v6513
    %6558 = vmatprep.subr.bf16.mxu0 0
    %6559 = vmatpush1.bf16.msra.mxu0 %v6514
    %6560 = vmatprep.subr.bf16.mxu0 0
    %6561 = vmatpush1.bf16.msra.mxu0 %v6515
    %6562 = vmatprep.subr.bf16.mxu0 0
    %6563 = vmatpush1.bf16.msra.mxu0 %v6516
    %6564 = vmatprep.subr.bf16.mxu0 0
    %6565 = vmatpush1.bf16.msra.mxu0 %v6517
    %6566 = vmatprep.mubr.bf16.mxu0 %v6435
    %6567 = vmatmul.mubr.bf16.gmra.mrb[0].mxu0 %v6434
    %v6568 = vpop.f32.mrb[0].mxu0
    %v6569 = vadd.f32 0.0, %v6568
    %v6570 = vpop.f32.mrb[0].mxu0
    %v6571 = vpop.f32.mrb[0].mxu0
    %v6572 = vadd.f32 0.0, %v6571
    %v6573 = vpop.f32.mrb[0].mxu0
    %6574 = vmatprep.mubr.bf16.mxu0 %v6437
    %6575 = vmatmul.mubr.bf16.gmra.mrb[0].mxu0 %v6436
    %v6576 = vpop.f32.mrb[0].mxu0
    %v6577 = vadd.f32 0.0, %v6576
    %v6578 = vpop.f32.mrb[0].mxu0
    %v6579 = vpop.f32.mrb[0].mxu0
    %v6580 = vpop.f32.mrb[0].mxu0
    %6581 = vdwg.mxu0
    %v6582 = vadd.f32 %v6569, %v6572
    %v6583 = vsel %vm5802, %v6577, 0.0
    %v6584 = vadd.f32 %v6582, %v6583
    %v6585 = vrot.slane %v6584, 4
    %v6586 = vadd.f32 %v6584, %v6585
    %v6587 = vrot.slane %v6586, 2
    %v6588 = vadd.f32 %v6586, %v6587
    %v6589 = vrot.slane %v6588, 1
    %v6590 = vadd.f32 %v6588, %v6589
    %v6591 = vmul.f32 %v6590, 0.05
    %v6592 = vmul.f32 %v6569, %v6569
    %v6593 = vmul.f32 %v6572, %v6572
    %v6594 = vmul.f32 %v6577, %v6577
    %v6595 = vadd.f32 %v6592, %v6593
    %v6596 = vsel %vm5802, %v6594, 0.0
    %v6597 = vadd.f32 %v6595, %v6596
    %v6598 = vrot.slane %v6597, 4
    %v6599 = vadd.f32 %v6597, %v6598
    %v6600 = vrot.slane %v6599, 2
    %v6601 = vadd.f32 %v6599, %v6600
    %v6602 = vrot.slane %v6601, 1
    %v6603 = vadd.f32 %v6601, %v6602
    %v6604 = vmul.f32 %v6603, 0.05
    %v6605 = vmul.f32 %v6591, %v6591
    %v6606 = vsub.f32 %v6604, %v6605
    %v6607 = vmax.f32 %v6606, 0.0
    %v6608 = vadd.f32 %v6607, 1e-05
    %v6609 = vrsqrt.pop %v6608
    %v6610 = vmul.f32 %v6028, %v6609
    %v6611 = vmul.f32 %v6591, %v6610
    %v6612 = vsub.f32 %v6029, %v6611
    %v6614 = vlaneseq
    %v6615 = vshrl.u32 %v6614, 7
    %v6616 = vsub.s32 0, %v6615
    %v6617 = vrot.slane %v6610, %v6616
    %v6619 = vmul.f32 %v6569, %v6617
    %v6620 = vmul.f32 %v6572, %v6617
    %v6621 = vmul.f32 %v6577, %v6617
    %v6623 = vlaneseq
    %v6624 = vshrl.u32 %v6623, 7
    %v6625 = vsub.s32 0, %v6624
    %v6626 = vrot.slane %v6612, %v6625
    %v6628 = vadd.f32 %v6619, %v6626
    %v6629 = vadd.f32 %v6620, %v6626
    %v6630 = vadd.f32 %v6621, %v6626
    %v6631 = vmul.f32 %v6628, 0.2
    %v6632 = vmul.f32 %v6629, 0.2
    %v6633 = vmul.f32 %v6630, 0.2
    %v6634 = vmax.f32 %v6628, %v6631
    %v6635 = vmax.f32 %v6629, %v6632
    %v6636 = vmax.f32 %v6630, %v6633
    %v6637 = vld [vmem:[%s14] sm:$0xf]
    %v6638 = vld [vmem:[%s14 + $0x4] sm:$0xf]
    %v6639 = vld [vmem:[%s14 + $0x8] sm:$0xf]
    %v6640 = vld [vmem:[%s14 + $0xc] sm:$0xf]
    %v6641 = vld [vmem:[%s14 + $0x10] sm:$0xf]
    %v6642 = vld [vmem:[%s14 + $0x14] sm:$0xf]
    %v6643 = vld [vmem:[%s14 + $0x18] sm:$0xf]
    %v6644 = vld [vmem:[%s14 + $0x1c] sm:$0xf]
    %v6645 = vld [vmem:[%s14 + $0x20] sm:$0xf]
    %v6646 = vld [vmem:[%s14 + $0x24] sm:$0xf]
    %v6647 = vld [vmem:[%s14 + $0x28] sm:$0xf]
    %v6648 = vld [vmem:[%s14 + $0x2c] sm:$0xf]
    %v6649 = vld [vmem:[%s14 + $0x30] sm:$0xf]
    %v6650 = vld [vmem:[%s14 + $0x34] sm:$0xf]
    %v6651 = vld [vmem:[%s14 + $0x38] sm:$0xf]
    %v6652 = vld [vmem:[%s14 + $0x3c] sm:$0xf]
    %v6653 = vld [vmem:[%s14 + $0x40] sm:$0xf]
    %v6654 = vld [vmem:[%s14 + $0x44] sm:$0xf]
    %v6655 = vld [vmem:[%s14 + $0x48] sm:$0xf]
    %v6656 = vld [vmem:[%s14 + $0x4c] sm:$0xf]
    %v6657 = vld [vmem:[%s14 + $0x50] sm:$0xf]
    %v6658 = vld [vmem:[%s14 + $0x54] sm:$0xf]
    %v6659 = vld [vmem:[%s14 + $0x58] sm:$0xf]
    %v6660 = vld [vmem:[%s14 + $0x5c] sm:$0xf]
    %v6661 = vld [vmem:[%s14 + $0x60] sm:$0xf]
    %v6662 = vld [vmem:[%s14 + $0x64] sm:$0xf]
    %v6663 = vld [vmem:[%s14 + $0x68] sm:$0xf]
    %v6664 = vld [vmem:[%s14 + $0x6c] sm:$0xf]
    %v6665 = vld [vmem:[%s14 + $0x70] sm:$0xf]
    %v6666 = vld [vmem:[%s14 + $0x74] sm:$0xf]
    %v6667 = vld [vmem:[%s14 + $0x78] sm:$0xf]
    %v6668 = vld [vmem:[%s14 + $0x7c] sm:$0xf]
    %v6669 = vld [vmem:[%s14 + $0x80] sm:$0xf]
    %v6670 = vld [vmem:[%s14 + $0x84] sm:$0xf]
    %v6671 = vld [vmem:[%s14 + $0x88] sm:$0xf]
    %v6672 = vld [vmem:[%s14 + $0x8c] sm:$0xf]
    %v6673 = vld [vmem:[%s14 + $0x90] sm:$0xf]
    %v6674 = vld [vmem:[%s14 + $0x94] sm:$0xf]
    %v6675 = vld [vmem:[%s14 + $0x98] sm:$0xf]
    %v6676 = vld [vmem:[%s14 + $0x9c] sm:$0xf]
    %v6677 = vld [vmem:[%s14 + $0xa0] sm:$0xf]
    %v6678 = vld [vmem:[%s14 + $0xa4] sm:$0xf]
    %v6679 = vld [vmem:[%s14 + $0xa8] sm:$0xf]
    %v6680 = vld [vmem:[%s14 + $0xac] sm:$0xf]
    %v6681 = vld [vmem:[%s14 + $0xb0] sm:$0xf]
    %v6682 = vld [vmem:[%s14 + $0xb4] sm:$0xf]
    %v6683 = vld [vmem:[%s14 + $0xb8] sm:$0xf]
    %v6684 = vld [vmem:[%s14 + $0xbc] sm:$0xf]
    %v6685 = vld [vmem:[%s14 + $0xc0] sm:$0xf]
    %v6686 = vld [vmem:[%s14 + $0xc4] sm:$0xf]
    %v6687 = vld [vmem:[%s14 + $0xc8] sm:$0xf]
    %v6688 = vld [vmem:[%s14 + $0xcc] sm:$0xf]
    %v6689 = vld [vmem:[%s14 + $0xd0] sm:$0xf]
    %v6690 = vld [vmem:[%s14 + $0xd4] sm:$0xf]
    %v6691 = vld [vmem:[%s14 + $0xd8] sm:$0xf]
    %v6692 = vld [vmem:[%s14 + $0xdc] sm:$0xf]
    %v6693 = vld [vmem:[%s14 + $0xe0] sm:$0xf]
    %v6694 = vld [vmem:[%s14 + $0xe4] sm:$0xf]
    %v6695 = vld [vmem:[%s14 + $0xe8] sm:$0xf]
    %v6696 = vld [vmem:[%s14 + $0xec] sm:$0xf]
    %v6697 = vld [vmem:[%s14 + $0xf0] sm:$0xf]
    %v6698 = vld [vmem:[%s14 + $0xf4] sm:$0xf]
    %v6699 = vld [vmem:[%s14 + $0xf8] sm:$0xf]
    %v6700 = vld [vmem:[%s14 + $0xfc] sm:$0xf]
    %v6701 = vld [vmem:[%s14 + $0x100] sm:$0xf]
    %v6702 = vld [vmem:[%s14 + $0x104] sm:$0xf]
    %v6703 = vld [vmem:[%s14 + $0x108] sm:$0xf]
    %v6704 = vld [vmem:[%s14 + $0x10c] sm:$0xf]
    %v6705 = vld [vmem:[%s14 + $0x110] sm:$0xf]
    %v6706 = vld [vmem:[%s14 + $0x114] sm:$0xf]
    %v6707 = vld [vmem:[%s14 + $0x118] sm:$0xf]
    %v6708 = vld [vmem:[%s14 + $0x11c] sm:$0xf]
    %v6709 = vld [vmem:[%s14 + $0x120] sm:$0xf]
    %v6710 = vld [vmem:[%s14 + $0x124] sm:$0xf]
    %v6711 = vld [vmem:[%s14 + $0x128] sm:$0xf]
    %v6712 = vld [vmem:[%s14 + $0x12c] sm:$0xf]
    %v6713 = vld [vmem:[%s14 + $0x130] sm:$0xf]
    %v6714 = vld [vmem:[%s14 + $0x134] sm:$0xf]
    %v6715 = vld [vmem:[%s14 + $0x138] sm:$0xf]
    %v6716 = vld [vmem:[%s14 + $0x13c] sm:$0xf]
    %v6717 = vld [vmem:[%s14 + $0x140] sm:$0xf]
    %v6718 = vld [vmem:[%s14 + $0x144] sm:$0xf]
    %v6719 = vld [vmem:[%s14 + $0x148] sm:$0xf]
    %v6720 = vld [vmem:[%s14 + $0x14c] sm:$0xf]
    %v6721 = vld [vmem:[%s14 + $0x150] sm:$0xf]
    %v6722 = vld [vmem:[%s14 + $0x154] sm:$0xf]
    %v6723 = vld [vmem:[%s14 + $0x158] sm:$0xf]
    %v6724 = vld [vmem:[%s14 + $0x15c] sm:$0xf]
    %v6725 = vld [vmem:[%s14 + $0x160] sm:$0xf]
    %v6726 = vld [vmem:[%s14 + $0x164] sm:$0xf]
    %v6727 = vld [vmem:[%s14 + $0x168] sm:$0xf]
    %v6728 = vld [vmem:[%s14 + $0x16c] sm:$0xf]
    %v6729 = vld [vmem:[%s14 + $0x170] sm:$0xf]
    %v6730 = vld [vmem:[%s14 + $0x174] sm:$0xf]
    %v6731 = vld [vmem:[%s14 + $0x178] sm:$0xf]
    %v6732 = vld [vmem:[%s14 + $0x17c] sm:$0xf]
    %v6733 = vld [vmem:[%s14 + $0x180] sm:$0xf]
    %v6734 = vld [vmem:[%s14 + $0x184] sm:$0xf]
    %v6735 = vld [vmem:[%s14 + $0x188] sm:$0xf]
    %v6736 = vld [vmem:[%s14 + $0x18c] sm:$0xf]
    %v6737 = vld [vmem:[%s14 + $0x190] sm:$0xf]
    %v6738 = vld [vmem:[%s14 + $0x194] sm:$0xf]
    %v6739 = vld [vmem:[%s14 + $0x198] sm:$0xf]
    %v6740 = vld [vmem:[%s14 + $0x19c] sm:$0xf]
    %v6741 = vld [vmem:[%s14 + $0x1a0] sm:$0xf]
    %v6742 = vld [vmem:[%s14 + $0x1a4] sm:$0xf]
    %v6743 = vld [vmem:[%s14 + $0x1a8] sm:$0xf]
    %v6744 = vld [vmem:[%s14 + $0x1ac] sm:$0xf]
    %v6745 = vld [vmem:[%s14 + $0x1b0] sm:$0xf]
    %v6746 = vld [vmem:[%s14 + $0x1b4] sm:$0xf]
    %v6747 = vld [vmem:[%s14 + $0x1b8] sm:$0xf]
    %v6748 = vld [vmem:[%s14 + $0x1bc] sm:$0xf]
    %v6749 = vld [vmem:[%s14 + $0x1c0] sm:$0xf]
    %v6750 = vld [vmem:[%s14 + $0x1c4] sm:$0xf]
    %v6751 = vld [vmem:[%s14 + $0x1c8] sm:$0xf]
    %v6752 = vld [vmem:[%s14 + $0x1cc] sm:$0xf]
    %v6753 = vld [vmem:[%s14 + $0x1d0] sm:$0xf]
    %v6754 = vld [vmem:[%s14 + $0x1d4] sm:$0xf]
    %v6755 = vld [vmem:[%s14 + $0x1d8] sm:$0xf]
    %v6756 = vld [vmem:[%s14 + $0x1dc] sm:$0xf]
    %v6757 = vld [vmem:[%s14 + $0x1e0] sm:$0xf]
    %v6758 = vld [vmem:[%s14 + $0x1e4] sm:$0xf]
    %v6759 = vld [vmem:[%s14 + $0x1e8] sm:$0xf]
    %v6760 = vld [vmem:[%s14 + $0x1ec] sm:$0xf]
    %v6761 = vld [vmem:[%s14 + $0x1f0] sm:$0xf]
    %v6762 = vld [vmem:[%s14 + $0x1f4] sm:$0xf]
    %v6763 = vld [vmem:[%s14 + $0x1f8] sm:$0xf]
    %v6764 = vld [vmem:[%s14 + $0x1fc] sm:$0xf]
    %v6765 = vld [vmem:[%s14 + $0x200] sm:$0xf]
    %v6766 = vld [vmem:[%s14 + $0x204] sm:$0xf]
    %v6767 = vld [vmem:[%s14 + $0x208] sm:$0xf]
    %v6768 = vld [vmem:[%s14 + $0x20c] sm:$0xf]
    %v6769 = vld [vmem:[%s14 + $0x210] sm:$0xf]
    %v6770 = vld [vmem:[%s14 + $0x214] sm:$0xf]
    %v6771 = vld [vmem:[%s14 + $0x218] sm:$0xf]
    %v6772 = vld [vmem:[%s14 + $0x21c] sm:$0xf]
    %v6773 = vld [vmem:[%s14 + $0x220] sm:$0xf]
    %v6774 = vld [vmem:[%s14 + $0x224] sm:$0xf]
    %v6775 = vld [vmem:[%s14 + $0x228] sm:$0xf]
    %v6776 = vld [vmem:[%s14 + $0x22c] sm:$0xf]
    %v6777 = vld [vmem:[%s14 + $0x230] sm:$0xf]
    %v6778 = vld [vmem:[%s14 + $0x234] sm:$0xf]
    %v6779 = vld [vmem:[%s14 + $0x238] sm:$0xf]
    %v6780 = vld [vmem:[%s14 + $0x23c] sm:$0xf]
    %v6781 = vld [vmem:[%s14 + $0x240] sm:$0xf]
    %v6782 = vld [vmem:[%s14 + $0x244] sm:$0xf]
    %v6783 = vld [vmem:[%s14 + $0x248] sm:$0xf]
    %v6784 = vld [vmem:[%s14 + $0x24c] sm:$0xf]
    %v6785 = vld [vmem:[%s14 + $0x250] sm:$0xf]
    %v6786 = vld [vmem:[%s14 + $0x254] sm:$0xf]
    %v6787 = vld [vmem:[%s14 + $0x258] sm:$0xf]
    %v6788 = vld [vmem:[%s14 + $0x25c] sm:$0xf]
    %v6789 = vld [vmem:[%s14 + $0x260] sm:$0xf]
    %v6790 = vld [vmem:[%s14 + $0x264] sm:$0xf]
    %v6791 = vld [vmem:[%s14 + $0x268] sm:$0xf]
    %v6792 = vld [vmem:[%s14 + $0x26c] sm:$0xf]
    %v6793 = vld [vmem:[%s14 + $0x270] sm:$0xf]
    %v6794 = vld [vmem:[%s14 + $0x274] sm:$0xf]
    %v6795 = vld [vmem:[%s14 + $0x278] sm:$0xf]
    %v6796 = vld [vmem:[%s14 + $0x27c] sm:$0xf]
    %v6798 = vrot.slane %v6634, 1
    %v6800 = vrot.slane %v6634, 2
    %v6802 = vrot.slane %v6634, 3
    %v6804 = vrot.slane %v6634, 4
    %v6806 = vrot.slane %v6634, 5
    %v6808 = vrot.slane %v6634, 6
    %v6810 = vrot.slane %v6634, 7
    %v6813 = vrot.slane %v6635, 1
    %v6815 = vrot.slane %v6635, 2
    %v6816 = vrot.slane %v6635, 3
    %v6817 = vrot.slane %v6635, 4
    %v6818 = vrot.slane %v6635, 5
    %v6820 = vrot.slane %v6636, 6
    %v6821 = vrot.slane %v6636, 7
    %v6822 = vrot.slane %v6636, 1
    %v6823 = vrot.slane %v6813, 1
    %v6824 = vrot.slane %v6815, 1
    %v6825 = vrot.slane %v6816, 1
    %v6826 = vrot.slane %v6817, 1
    %v6827 = vrot.slane %v6818, 1
    %v6828 = vrot.slane %v6820, 1
    %v6829 = vrot.slane %v6821, 1
    %v6830 = vrot.slane %v6822, 1
    %v6840 = vsel %vm1243, %v6634, %v6813
    %v6841 = vsel %vm1243, %v6798, %v6823
    %v6842 = vsel %vm1243, %v6800, %v6824
    %v6843 = vsel %vm1243, %v6802, %v6825
    %v6844 = vsel %vm1243, %v6804, %v6826
    %v6845 = vsel %vm1243, %v6806, %v6827
    %v6846 = vsel %vm1243, %v6808, %v6828
    %v6847 = vsel %vm1243, %v6810, %v6829
    %v6848 = vsel %vm1243, %v6635, %v6822
    %v6849 = vsel %vm1243, %v6813, %v6830
    %v6850 = vpack.c.bf16 %v6840, %v6840
    %v6851 = vpack.c.bf16 %v6841, %v6841
    %v6852 = vpack.c.bf16 %v6842, %v6842
    %v6853 = vpack.c.bf16 %v6843, %v6843
    %v6854 = vpack.c.bf16 %v6844, %v6844
    %v6855 = vpack.c.bf16 %v6845, %v6845
    %v6856 = vpack.c.bf16 %v6846, %v6846
    %v6857 = vpack.c.bf16 %v6847, %v6847
    %v6858 = vpack.c.bf16 %v6848, %v6848
    %v6859 = vpack.c.bf16 %v6849, %v6849
    %v7020 = vunpack.c.l.b16 %v6637
    %v7021 = vunpack.c.l.b16 %v6638
    %v7022 = vunpack.c.l.b16 %v6639
    %v7023 = vunpack.c.l.b16 %v6640
    %v7024 = vunpack.c.l.b16 %v6641
    %v7025 = vunpack.c.l.b16 %v6642
    %v7026 = vunpack.c.l.b16 %v6643
    %v7027 = vunpack.c.l.b16 %v6644
    %v7028 = vunpack.c.l.b16 %v6645
    %v7029 = vunpack.c.l.b16 %v6646
    %v7030 = vunpack.c.l.b16 %v6647
    %v7031 = vunpack.c.l.b16 %v6648
    %v7032 = vunpack.c.l.b16 %v6649
    %v7033 = vunpack.c.l.b16 %v6650
    %v7034 = vunpack.c.l.b16 %v6651
    %v7035 = vunpack.c.l.b16 %v6652
    %v7036 = vunpack.c.l.b16 %v6653
    %v7037 = vunpack.c.l.b16 %v6654
    %v7038 = vunpack.c.l.b16 %v6655
    %v7039 = vunpack.c.l.b16 %v6656
    %v7040 = vunpack.c.l.b16 %v6657
    %v7041 = vunpack.c.l.b16 %v6658
    %v7042 = vunpack.c.l.b16 %v6659
    %v7043 = vunpack.c.l.b16 %v6660
    %v7044 = vunpack.c.l.b16 %v6661
    %v7045 = vunpack.c.l.b16 %v6662
    %v7046 = vunpack.c.l.b16 %v6663
    %v7047 = vunpack.c.l.b16 %v6664
    %v7048 = vunpack.c.l.b16 %v6665
    %v7049 = vunpack.c.l.b16 %v6666
    %v7050 = vunpack.c.l.b16 %v6667
    %v7051 = vunpack.c.l.b16 %v6668
    %v7052 = vunpack.c.l.b16 %v6669
    %v7053 = vunpack.c.l.b16 %v6670
    %v7054 = vunpack.c.l.b16 %v6671
    %v7055 = vunpack.c.l.b16 %v6672
    %v7056 = vunpack.c.l.b16 %v6673
    %v7057 = vunpack.c.l.b16 %v6674
    %v7058 = vunpack.c.l.b16 %v6675
    %v7059 = vunpack.c.l.b16 %v6676
    %v7060 = vunpack.c.l.b16 %v6677
    %v7061 = vunpack.c.l.b16 %v6678
    %v7062 = vunpack.c.l.b16 %v6679
    %v7063 = vunpack.c.l.b16 %v6680
    %v7064 = vunpack.c.l.b16 %v6681
    %v7065 = vunpack.c.l.b16 %v6682
    %v7066 = vunpack.c.l.b16 %v6683
    %v7067 = vunpack.c.l.b16 %v6684
    %v7068 = vunpack.c.l.b16 %v6685
    %v7069 = vunpack.c.l.b16 %v6686
    %v7070 = vunpack.c.l.b16 %v6687
    %v7071 = vunpack.c.l.b16 %v6688
    %v7072 = vunpack.c.l.b16 %v6689
    %v7073 = vunpack.c.l.b16 %v6690
    %v7074 = vunpack.c.l.b16 %v6691
    %v7075 = vunpack.c.l.b16 %v6692
    %v7076 = vunpack.c.l.b16 %v6693
    %v7077 = vunpack.c.l.b16 %v6694
    %v7078 = vunpack.c.l.b16 %v6695
    %v7079 = vunpack.c.l.b16 %v6696
    %v7080 = vunpack.c.l.b16 %v6697
    %v7081 = vunpack.c.l.b16 %v6698
    %v7082 = vunpack.c.l.b16 %v6699
    %v7083 = vunpack.c.l.b16 %v6700
    %v7084 = vunpack.c.l.b16 %v6701
    %v7085 = vunpack.c.l.b16 %v6702
    %v7086 = vunpack.c.l.b16 %v6703
    %v7087 = vunpack.c.l.b16 %v6704
    %v7088 = vunpack.c.l.b16 %v6705
    %v7089 = vunpack.c.l.b16 %v6706
    %v7090 = vunpack.c.l.b16 %v6707
    %v7091 = vunpack.c.l.b16 %v6708
    %v7092 = vunpack.c.l.b16 %v6709
    %v7093 = vunpack.c.l.b16 %v6710
    %v7094 = vunpack.c.l.b16 %v6711
    %v7095 = vunpack.c.l.b16 %v6712
    %v7096 = vunpack.c.l.b16 %v6713
    %v7097 = vunpack.c.l.b16 %v6714
    %v7098 = vunpack.c.l.b16 %v6715
    %v7099 = vunpack.c.l.b16 %v6716
    %v7100 = vunpack.c.l.b16 %v6717
    %v7101 = vunpack.c.l.b16 %v6718
    %v7102 = vunpack.c.l.b16 %v6719
    %v7103 = vunpack.c.l.b16 %v6720
    %v7104 = vunpack.c.l.b16 %v6721
    %v7105 = vunpack.c.l.b16 %v6722
    %v7106 = vunpack.c.l.b16 %v6723
    %v7107 = vunpack.c.l.b16 %v6724
    %v7108 = vunpack.c.l.b16 %v6725
    %v7109 = vunpack.c.l.b16 %v6726
    %v7110 = vunpack.c.l.b16 %v6727
    %v7111 = vunpack.c.l.b16 %v6728
    %v7112 = vunpack.c.l.b16 %v6729
    %v7113 = vunpack.c.l.b16 %v6730
    %v7114 = vunpack.c.l.b16 %v6731
    %v7115 = vunpack.c.l.b16 %v6732
    %v7116 = vunpack.c.l.b16 %v6733
    %v7117 = vunpack.c.l.b16 %v6734
    %v7118 = vunpack.c.l.b16 %v6735
    %v7119 = vunpack.c.l.b16 %v6736
    %v7120 = vunpack.c.l.b16 %v6737
    %v7121 = vunpack.c.l.b16 %v6738
    %v7122 = vunpack.c.l.b16 %v6739
    %v7123 = vunpack.c.l.b16 %v6740
    %v7124 = vunpack.c.l.b16 %v6741
    %v7125 = vunpack.c.l.b16 %v6742
    %v7126 = vunpack.c.l.b16 %v6743
    %v7127 = vunpack.c.l.b16 %v6744
    %v7128 = vunpack.c.l.b16 %v6745
    %v7129 = vunpack.c.l.b16 %v6746
    %v7130 = vunpack.c.l.b16 %v6747
    %v7131 = vunpack.c.l.b16 %v6748
    %v7132 = vunpack.c.l.b16 %v6749
    %v7133 = vunpack.c.l.b16 %v6750
    %v7134 = vunpack.c.l.b16 %v6751
    %v7135 = vunpack.c.l.b16 %v6752
    %v7136 = vunpack.c.l.b16 %v6753
    %v7137 = vunpack.c.l.b16 %v6754
    %v7138 = vunpack.c.l.b16 %v6755
    %v7139 = vunpack.c.l.b16 %v6756
    %v7140 = vunpack.c.l.b16 %v6757
    %v7141 = vunpack.c.l.b16 %v6758
    %v7142 = vunpack.c.l.b16 %v6759
    %v7143 = vunpack.c.l.b16 %v6760
    %v7144 = vunpack.c.l.b16 %v6761
    %v7145 = vunpack.c.l.b16 %v6762
    %v7146 = vunpack.c.l.b16 %v6763
    %v7147 = vunpack.c.l.b16 %v6764
    %v7148 = vunpack.c.l.b16 %v6765
    %v7149 = vunpack.c.l.b16 %v6766
    %v7150 = vunpack.c.l.b16 %v6767
    %v7151 = vunpack.c.l.b16 %v6768
    %v7152 = vunpack.c.l.b16 %v6769
    %v7153 = vunpack.c.l.b16 %v6770
    %v7154 = vunpack.c.l.b16 %v6771
    %v7155 = vunpack.c.l.b16 %v6772
    %v7156 = vunpack.c.l.b16 %v6773
    %v7157 = vunpack.c.l.b16 %v6774
    %v7158 = vunpack.c.l.b16 %v6775
    %v7159 = vunpack.c.l.b16 %v6776
    %v7160 = vunpack.c.l.b16 %v6777
    %v7161 = vunpack.c.l.b16 %v6778
    %v7162 = vunpack.c.l.b16 %v6779
    %v7163 = vunpack.c.l.b16 %v6780
    %v7164 = vunpack.c.l.b16 %v6781
    %v7165 = vunpack.c.l.b16 %v6782
    %v7166 = vunpack.c.l.b16 %v6783
    %v7167 = vunpack.c.l.b16 %v6784
    %v7168 = vunpack.c.l.b16 %v6785
    %v7169 = vunpack.c.l.b16 %v6786
    %v7170 = vunpack.c.l.b16 %v6787
    %v7171 = vunpack.c.l.b16 %v6788
    %v7172 = vunpack.c.l.b16 %v6789
    %v7173 = vunpack.c.l.b16 %v6790
    %v7174 = vunpack.c.l.b16 %v6791
    %v7175 = vunpack.c.l.b16 %v6792
    %v7176 = vunpack.c.l.b16 %v6793
    %v7177 = vunpack.c.l.b16 %v6794
    %v7178 = vunpack.c.l.b16 %v6795
    %v7179 = vunpack.c.l.b16 %v6796
    %v7180 = vpack.c.b16 %v7021, %v7020
    %v7181 = vpack.c.b16 %v7023, %v7022
    %v7182 = vpack.c.b16 %v7025, %v7024
    %v7183 = vpack.c.b16 %v7027, %v7026
    %v7184 = vpack.c.b16 %v7029, %v7028
    %v7185 = vpack.c.b16 %v7031, %v7030
    %v7186 = vpack.c.b16 %v7033, %v7032
    %v7187 = vpack.c.b16 %v7035, %v7034
    %v7188 = vpack.c.b16 %v7037, %v7036
    %v7189 = vpack.c.b16 %v7039, %v7038
    %v7190 = vpack.c.b16 %v7041, %v7040
    %v7191 = vpack.c.b16 %v7043, %v7042
    %v7192 = vpack.c.b16 %v7045, %v7044
    %v7193 = vpack.c.b16 %v7047, %v7046
    %v7194 = vpack.c.b16 %v7049, %v7048
    %v7195 = vpack.c.b16 %v7051, %v7050
    %v7196 = vpack.c.b16 %v7053, %v7052
    %v7197 = vpack.c.b16 %v7055, %v7054
    %v7198 = vpack.c.b16 %v7057, %v7056
    %v7199 = vpack.c.b16 %v7059, %v7058
    %v7200 = vpack.c.b16 %v7061, %v7060
    %v7201 = vpack.c.b16 %v7063, %v7062
    %v7202 = vpack.c.b16 %v7065, %v7064
    %v7203 = vpack.c.b16 %v7067, %v7066
    %v7204 = vpack.c.b16 %v7069, %v7068
    %v7205 = vpack.c.b16 %v7071, %v7070
    %v7206 = vpack.c.b16 %v7073, %v7072
    %v7207 = vpack.c.b16 %v7075, %v7074
    %v7208 = vpack.c.b16 %v7077, %v7076
    %v7209 = vpack.c.b16 %v7079, %v7078
    %v7210 = vpack.c.b16 %v7081, %v7080
    %v7211 = vpack.c.b16 %v7083, %v7082
    %v7212 = vpack.c.b16 %v7085, %v7084
    %v7213 = vpack.c.b16 %v7087, %v7086
    %v7214 = vpack.c.b16 %v7089, %v7088
    %v7215 = vpack.c.b16 %v7091, %v7090
    %v7216 = vpack.c.b16 %v7093, %v7092
    %v7217 = vpack.c.b16 %v7095, %v7094
    %v7218 = vpack.c.b16 %v7097, %v7096
    %v7219 = vpack.c.b16 %v7099, %v7098
    %v7220 = vpack.c.b16 %v7101, %v7100
    %v7221 = vpack.c.b16 %v7103, %v7102
    %v7222 = vpack.c.b16 %v7105, %v7104
    %v7223 = vpack.c.b16 %v7107, %v7106
    %v7224 = vpack.c.b16 %v7109, %v7108
    %v7225 = vpack.c.b16 %v7111, %v7110
    %v7226 = vpack.c.b16 %v7113, %v7112
    %v7227 = vpack.c.b16 %v7115, %v7114
    %v7228 = vpack.c.b16 %v7117, %v7116
    %v7229 = vpack.c.b16 %v7119, %v7118
    %v7230 = vpack.c.b16 %v7121, %v7120
    %v7231 = vpack.c.b16 %v7123, %v7122
    %v7232 = vpack.c.b16 %v7125, %v7124
    %v7233 = vpack.c.b16 %v7127, %v7126
    %v7234 = vpack.c.b16 %v7129, %v7128
    %v7235 = vpack.c.b16 %v7131, %v7130
    %v7236 = vpack.c.b16 %v7133, %v7132
    %v7237 = vpack.c.b16 %v7135, %v7134
    %v7238 = vpack.c.b16 %v7137, %v7136
    %v7239 = vpack.c.b16 %v7139, %v7138
    %v7240 = vpack.c.b16 %v7141, %v7140
    %v7241 = vpack.c.b16 %v7143, %v7142
    %v7242 = vpack.c.b16 %v7145, %v7144
    %v7243 = vpack.c.b16 %v7147, %v7146
    %v7244 = vpack.c.b16 %v7149, %v7148
    %v7245 = vpack.c.b16 %v7151, %v7150
    %v7246 = vpack.c.b16 %v7153, %v7152
    %v7247 = vpack.c.b16 %v7155, %v7154
    %v7248 = vpack.c.b16 %v7157, %v7156
    %v7249 = vpack.c.b16 %v7159, %v7158
    %v7250 = vpack.c.b16 %v7161, %v7160
    %v7251 = vpack.c.b16 %v7163, %v7162
    %v7252 = vpack.c.b16 %v7165, %v7164
    %v7253 = vpack.c.b16 %v7167, %v7166
    %v7254 = vpack.c.b16 %v7169, %v7168
    %v7255 = vpack.c.b16 %v7171, %v7170
    %v7256 = vpack.c.b16 %v7173, %v7172
    %v7257 = vpack.c.b16 %v7175, %v7174
    %v7258 = vpack.c.b16 %v7177, %v7176
    %v7259 = vpack.c.b16 %v7179, %v7178
    %7340 = vmatprep.subr.bf16.mxu0 0
    %7341 = vmatpush1.bf16.msra.mxu0 %v7180
    %7342 = vmatprep.subr.bf16.mxu0 0
    %7343 = vmatpush1.bf16.msra.mxu0 %v7181
    %7344 = vmatprep.subr.bf16.mxu0 0
    %7345 = vmatpush1.bf16.msra.mxu0 %v7182
    %7346 = vmatprep.subr.bf16.mxu0 0
    %7347 = vmatpush1.bf16.msra.mxu0 %v7183
    %7348 = vmatprep.subr.bf16.mxu0 0
    %7349 = vmatpush1.bf16.msra.mxu0 %v7184
    %7350 = vmatprep.subr.bf16.mxu0 0
    %7351 = vmatpush1.bf16.msra.mxu0 %v7185
    %7352 = vmatprep.subr.bf16.mxu0 0
    %7353 = vmatpush1.bf16.msra.mxu0 %v7186
    %7354 = vmatprep.subr.bf16.mxu0 0
    %7355 = vmatpush1.bf16.msra.mxu0 %v7187
    %7356 = vmatprep.subr.bf16.mxu0 0
    %7357 = vmatpush1.bf16.msra.mxu0 %v7188
    %7358 = vmatprep.subr.bf16.mxu0 0
    %7359 = vmatpush1.bf16.msra.mxu0 %v7189
    %7360 = vmatprep.subr.bf16.mxu0 0
    %7361 = vmatpush1.bf16.msra.mxu0 %v7190
    %7362 = vmatprep.subr.bf16.mxu0 0
    %7363 = vmatpush1.bf16.msra.mxu0 %v7191
    %7364 = vmatprep.subr.bf16.mxu0 0
    %7365 = vmatpush1.bf16.msra.mxu0 %v7192
    %7366 = vmatprep.subr.bf16.mxu0 0
    %7367 = vmatpush1.bf16.msra.mxu0 %v7193
    %7368 = vmatprep.subr.bf16.mxu0 0
    %7369 = vmatpush1.bf16.msra.mxu0 %v7194
    %7370 = vmatprep.subr.bf16.mxu0 0
    %7371 = vmatpush1.bf16.msra.mxu0 %v7195
    %7372 = vmatprep.mubr.bf16.mxu0 %v6851
    %7373 = vmatmul.mubr.bf16.gmra.mrb[0].mxu0 %v6850
    %v7374 = vpop.f32.mrb[0].mxu0
    %v7375 = vadd.f32 0.0, %v7374
    %v7376 = vpop.f32.mrb[0].mxu0
    %v7377 = vpop.f32.mrb[0].mxu0
    %v7378 = vpop.f32.mrb[0].mxu0
    %7379 = vdwg.mxu0
    %7380 = vmatprep.subr.bf16.mxu0 0
    %7381 = vmatpush1.bf16.msra.mxu0 %v7196
    %7382 = vmatprep.subr.bf16.mxu0 0
    %7383 = vmatpush1.bf16.msra.mxu0 %v7197
    %7384 = vmatprep.subr.bf16.mxu0 0
    %7385 = vmatpush1.bf16.msra.mxu0 %v7198
    %7386 = vmatprep.subr.bf16.mxu0 0
    %7387 = vmatpush1.bf16.msra.mxu0 %v7199
    %7388 = vmatprep.subr.bf16.mxu0 0
    %7389 = vmatpush1.bf16.msra.mxu0 %v7200
    %7390 = vmatprep.subr.bf16.mxu0 0
    %7391 = vmatpush1.bf16.msra.mxu0 %v7201
    %7392 = vmatprep.subr.bf16.mxu0 0
    %7393 = vmatpush1.bf16.msra.mxu0 %v7202
    %7394 = vmatprep.subr.bf16.mxu0 0
    %7395 = vmatpush1.bf16.msra.mxu0 %v7203
    %7396 = vmatprep.subr.bf16.mxu0 0
    %7397 = vmatpush1.bf16.msra.mxu0 %v7204
    %7398 = vmatprep.subr.bf16.mxu0 0
    %7399 = vmatpush1.bf16.msra.mxu0 %v7205
    %7400 = vmatprep.subr.bf16.mxu0 0
    %7401 = vmatpush1.bf16.msra.mxu0 %v7206
    %7402 = vmatprep.subr.bf16.mxu0 0
    %7403 = vmatpush1.bf16.msra.mxu0 %v7207
    %7404 = vmatprep.subr.bf16.mxu0 0
    %7405 = vmatpush1.bf16.msra.mxu0 %v7208
    %7406 = vmatprep.subr.bf16.mxu0 0
    %7407 = vmatpush1.bf16.msra.mxu0 %v7209
    %7408 = vmatprep.subr.bf16.mxu0 0
    %7409 = vmatpush1.bf16.msra.mxu0 %v7210
    %7410 = vmatprep.subr.bf16.mxu0 0
    %7411 = vmatpush1.bf16.msra.mxu0 %v7211
    %7412 = vmatprep.mubr.bf16.mxu0 %v6853
    %7413 = vmatmul.mubr.bf16.gmra.mrb[0].mxu0 %v6852
    %v7414 = vpop.f32.mrb[0].mxu0
    %v7415 = vadd.f32 %v7375, %v7414
    %v7416 = vpop.f32.mrb[0].mxu0
    %v7417 = vpop.f32.mrb[0].mxu0
    %v7418 = vpop.f32.mrb[0].mxu0
    %7419 = vdwg.mxu0
    %7420 = vmatprep.subr.bf16.mxu0 0
    %7421 = vmatpush1.bf16.msra.mxu0 %v7212
    %7422 = vmatprep.subr.bf16.mxu0 0
    %7423 = vmatpush1.bf16.msra.mxu0 %v7213
    %7424 = vmatprep.subr.bf16.mxu0 0
    %7425 = vmatpush1.bf16.msra.mxu0 %v7214
    %7426 = vmatprep.subr.bf16.mxu0 0
    %7427 = vmatpush1.bf16.msra.mxu0 %v7215
    %7428 = vmatprep.subr.bf16.mxu0 0
    %7429 = vmatpush1.bf16.msra.mxu0 %v7216
    %7430 = vmatprep.subr.bf16.mxu0 0
    %7431 = vmatpush1.bf16.msra.mxu0 %v7217
    %7432 = vmatprep.subr.bf16.mxu0 0
    %7433 = vmatpush1.bf16.msra.mxu0 %v7218
    %7434 = vmatprep.subr.bf16.mxu0 0
    %7435 = vmatpush1.bf16.msra.mxu0 %v7219
    %7436 = vmatprep.subr.bf16.mxu0 0
    %7437 = vmatpush1.bf16.msra.mxu0 %v7220
    %7438 = vmatprep.subr.bf16.mxu0 0
    %7439 = vmatpush1.bf16.msra.mxu0 %v7221
    %7440 = vmatprep.subr.bf16.mxu0 0
    %7441 = vmatpush1.bf16.msra.mxu0 %v7222
    %7442 = vmatprep.subr.bf16.mxu0 0
    %7443 = vmatpush1.bf16.msra.mxu0 %v7223
    %7444 = vmatprep.subr.bf16.mxu0 0
    %7445 = vmatpush1.bf16.msra.mxu0 %v7224
    %7446 = vmatprep.subr.bf16.mxu0 0
    %7447 = vmatpush1.bf16.msra.mxu0 %v7225
    %7448 = vmatprep.subr.bf16.mxu0 0
    %7449 = vmatpush1.bf16.msra.mxu0 %v7226
    %7450 = vmatprep.subr.bf16.mxu0 0
    %7451 = vmatpush1.bf16.msra.mxu0 %v7227
    %7452 = vmatprep.mubr.bf16.mxu0 %v6855
    %7453 = vmatmul.mubr.bf16.gmra.mrb[0].mxu0 %v6854
    %v7454 = vpop.f32.mrb[0].mxu0
    %v7455 = vadd.f32 %v7415, %v7454
    %v7456 = vpop.f32.mrb[0].mxu0
    %v7457 = vpop.f32.mrb[0].mxu0
    %v7458 = vpop.f32.mrb[0].mxu0
    %7459 = vdwg.mxu0
    %7460 = vmatprep.subr.bf16.mxu0 0
    %7461 = vmatpush1.bf16.msra.mxu0 %v7228
    %7462 = vmatprep.subr.bf16.mxu0 0
    %7463 = vmatpush1.bf16.msra.mxu0 %v7229
    %7464 = vmatprep.subr.bf16.mxu0 0
    %7465 = vmatpush1.bf16.msra.mxu0 %v7230
    %7466 = vmatprep.subr.bf16.mxu0 0
    %7467 = vmatpush1.bf16.msra.mxu0 %v7231
    %7468 = vmatprep.subr.bf16.mxu0 0
    %7469 = vmatpush1.bf16.msra.mxu0 %v7232
    %7470 = vmatprep.subr.bf16.mxu0 0
    %7471 = vmatpush1.bf16.msra.mxu0 %v7233
    %7472 = vmatprep.subr.bf16.mxu0 0
    %7473 = vmatpush1.bf16.msra.mxu0 %v7234
    %7474 = vmatprep.subr.bf16.mxu0 0
    %7475 = vmatpush1.bf16.msra.mxu0 %v7235
    %7476 = vmatprep.subr.bf16.mxu0 0
    %7477 = vmatpush1.bf16.msra.mxu0 %v7236
    %7478 = vmatprep.subr.bf16.mxu0 0
    %7479 = vmatpush1.bf16.msra.mxu0 %v7237
    %7480 = vmatprep.subr.bf16.mxu0 0
    %7481 = vmatpush1.bf16.msra.mxu0 %v7238
    %7482 = vmatprep.subr.bf16.mxu0 0
    %7483 = vmatpush1.bf16.msra.mxu0 %v7239
    %7484 = vmatprep.subr.bf16.mxu0 0
    %7485 = vmatpush1.bf16.msra.mxu0 %v7240
    %7486 = vmatprep.subr.bf16.mxu0 0
    %7487 = vmatpush1.bf16.msra.mxu0 %v7241
    %7488 = vmatprep.subr.bf16.mxu0 0
    %7489 = vmatpush1.bf16.msra.mxu0 %v7242
    %7490 = vmatprep.subr.bf16.mxu0 0
    %7491 = vmatpush1.bf16.msra.mxu0 %v7243
    %7492 = vmatprep.mubr.bf16.mxu0 %v6857
    %7493 = vmatmul.mubr.bf16.gmra.mrb[0].mxu0 %v6856
    %v7494 = vpop.f32.mrb[0].mxu0
    %v7495 = vadd.f32 %v7455, %v7494
    %v7496 = vpop.f32.mrb[0].mxu0
    %v7497 = vpop.f32.mrb[0].mxu0
    %v7498 = vpop.f32.mrb[0].mxu0
    %7499 = vdwg.mxu0
    %7500 = vmatprep.subr.bf16.mxu0 0
    %7501 = vmatpush1.bf16.msra.mxu0 %v7244
    %7502 = vmatprep.subr.bf16.mxu0 0
    %7503 = vmatpush1.bf16.msra.mxu0 %v7245
    %7504 = vmatprep.subr.bf16.mxu0 0
    %7505 = vmatpush1.bf16.msra.mxu0 %v7246
    %7506 = vmatprep.subr.bf16.mxu0 0
    %7507 = vmatpush1.bf16.msra.mxu0 %v7247
    %7508 = vmatprep.subr.bf16.mxu0 0
    %7509 = vmatpush1.bf16.msra.mxu0 %v7248
    %7510 = vmatprep.subr.bf16.mxu0 0
    %7511 = vmatpush1.bf16.msra.mxu0 %v7249
    %7512 = vmatprep.subr.bf16.mxu0 0
    %7513 = vmatpush1.bf16.msra.mxu0 %v7250
    %7514 = vmatprep.subr.bf16.mxu0 0
    %7515 = vmatpush1.bf16.msra.mxu0 %v7251
    %7516 = vmatprep.subr.bf16.mxu0 0
    %7517 = vmatpush1.bf16.msra.mxu0 %v7252
    %7518 = vmatprep.subr.bf16.mxu0 0
    %7519 = vmatpush1.bf16.msra.mxu0 %v7253
    %7520 = vmatprep.subr.bf16.mxu0 0
    %7521 = vmatpush1.bf16.msra.mxu0 %v7254
    %7522 = vmatprep.subr.bf16.mxu0 0
    %7523 = vmatpush1.bf16.msra.mxu0 %v7255
    %7524 = vmatprep.subr.bf16.mxu0 0
    %7525 = vmatpush1.bf16.msra.mxu0 %v7256
    %7526 = vmatprep.subr.bf16.mxu0 0
    %7527 = vmatpush1.bf16.msra.mxu0 %v7257
    %7528 = vmatprep.subr.bf16.mxu0 0
    %7529 = vmatpush1.bf16.msra.mxu0 %v7258
    %7530 = vmatprep.subr.bf16.mxu0 0
    %7531 = vmatpush1.bf16.msra.mxu0 %v7259
    %7532 = vmatprep.mubr.bf16.mxu0 %v6859
    %7533 = vmatmul.mubr.bf16.gmra.mrb[0].mxu0 %v6858
    %v7534 = vpop.f32.mrb[0].mxu0
    %v7535 = vadd.f32 %v7495, %v7534
    %v7536 = vpop.f32.mrb[0].mxu0
    %v7537 = vpop.f32.mrb[0].mxu0
    %v7538 = vpop.f32.mrb[0].mxu0
    %7539 = vdwg.mxu0
    %vm7540 = vcmask 123904
    %7541 = vst.msk [vmem:[#allocation2] sm:$0x3] %vm7540, %v7535
    // Predicated region
    $region62: #{tpu_custom_call.1} parent=1 // pred_check
      _
    $region63: #{tpu_custom_call.1} parent=1 // pred_check_branch
      %7543 = sbr.rel (0) target = $region65
    $region64: #{tpu_custom_call.1} parent=1 // pred_region
      %s7545 = ssub.s32 32, 32
      %7546 = vsyncadd [#allocation3], %s7545
      %s7548 = sshll.u32 [#allocation2], 4
      %s7549 = int_to_ptr.vmem [resolvable:$true] %s7548
      %7551 = dma.vmem_to_hbm [thread:$0]  %s7549, 32, %s15, [#allocation3]
    $region65: #{tpu_custom_call.1} parent=1 // pred_fallthru
      _
    // Predicated region
    $region66: #{tpu_custom_call.1} parent=1 // pred_check
      _
    $region67: #{tpu_custom_call.1} parent=1 // pred_check_branch
      %7553 = sbr.rel (0) target = $region69
    $region68: #{tpu_custom_call.1} parent=1 // pred_region
      %7554 = dma.done [#allocation3], 32
    $region69: #{tpu_custom_call.1} parent=1 // pred_fallthru
      _
    %7555 = vsyncpa [#allocation3], 1

</llo_original>
